<compile_context>
chip_gen: v7x
topology: tpu7x:2x2x1
jax: 0.10.0
libtpu: 0.0.40
codegen_flags: <defaults>
</compile_context>

<pallas_src>
import jax
import jax.numpy as jnp
import numpy as np
from jax.experimental import pallas as pl
from jax.experimental.pallas import tpu as pltpu

_SLOPE = 0.1   # LeakyReLU negative slope
_PAD = 2       # every layer: padding=2
_STRIDE = 2    # every layer: stride=2


def _round_up(x, m):
    return (x + m - 1) // m * m


def _pick_batch_block(n):
    """Fold batch into the GEMM M dim while keeping >= 2 grid steps (v7x)."""
    for bb in (8, 4, 2):
        if n % bb == 0 and n // bb >= 2:
            return bb
    return 1


def _geometry(c0, h, w, params):
    """Static per-layer shapes. params: [(w (Cout,Cin,KH,KW), b (Cout,)), ...]."""
    geo = []
    ih, iw, cin = h, w, c0
    for wt, _ in params:
        cout, wcin, kh, kw = wt.shape
        assert kh == kw and wcin == cin, (wt.shape, cin)
        oh = (ih + 2 * _PAD - kh) // _STRIDE + 1
        ow = (iw + 2 * _PAD - kw) // _STRIDE + 1
        geo.append(dict(k=kh, cin=cin, cout=cout, ih=ih, iw=iw, oh=oh, ow=ow,
                        m=oh * ow, taps=kh * kw))
        ih, iw, cin = oh, ow, cout
    return geo


def _im2col_layer1(x, k, oh, ow, k_pad):
    """Host im2col for the first conv: NCHW -> (N*OH*OW, k_pad) bf16.
    Columns are ordered (kh, kw, cin) to match _pack_weight."""
    n, c, _, _ = x.shape
    xp = jnp.pad(x, ((0, 0), (0, 0), (_PAD, _PAD), (_PAD, _PAD)))
    taps = []
    for kh in range(k):
        for kw in range(k):
            sl = xp[:, :,
                    kh:kh + _STRIDE * (oh - 1) + 1:_STRIDE,
                    kw:kw + _STRIDE * (ow - 1) + 1:_STRIDE]   # (n, c, oh, ow)
            taps.append(sl.transpose(0, 2, 3, 1))             # (n, oh, ow, c)
    p = jnp.stack(taps, axis=3).reshape(n, oh * ow, k * k * c)
    if k_pad != k * k * c:
        p = jnp.pad(p, ((0, 0), (0, 0), (0, k_pad - k * k * c)))
    return p.reshape(n * oh * ow, k_pad).astype(jnp.bfloat16)


def _pack_weight(wt, k_rows=None):
    """(Cout,Cin,KH,KW) -> (KH*KW*Cin [zero-padded to k_rows], Cout) bf16,
    rows ordered (kh, kw, cin) to match the patch columns."""
    cout, cin, kh, kw = wt.shape
    wm = wt.transpose(2, 3, 1, 0).reshape(kh * kw * cin, cout)
    if k_rows is not None and k_rows != wm.shape[0]:
        wm = jnp.pad(wm, ((0, k_rows - wm.shape[0]), (0, 0)))
    return wm.astype(jnp.bfloat16)


def _gather_matrix(ih, iw, oh, ow, k):
    """Host-built 0/1 matrix G (k*k*oh*ow, ih*iw): row (t*M + m) selects the
    input pixel read by tap t of output position m; an all-zero row encodes
    the conv zero padding."""
    m = oh * ow
    g = np.zeros((k * k * m, ih * iw), np.float32)
    for kh in range(k):
        for kw in range(k):
            t = kh * k + kw
            for r in range(oh):
                src_r = _STRIDE * r + kh - _PAD
                if not 0 <= src_r < ih:
                    continue
                for cc in range(ow):
                    src_c = _STRIDE * cc + kw - _PAD
                    if not 0 <= src_c < iw:
                        continue
                    g[t * m + r * ow + cc, src_r * iw + src_c] = 1.0
    return jnp.asarray(g, jnp.bfloat16)


@jax.jit
def cnn_backbone_forward(x_spectrogram, params):
    """x_spectrogram: (N, C, H, W) f32; params: [(w, b), ...] (PyTorch layout)."""
    n, c0, h, w = x_spectrogram.shape
    geo = _geometry(c0, h, w, params)
    n_layers = len(geo)
    bblk = _pick_batch_block(n)
    m_list = [g['m'] for g in geo]
    taps_list = [g['taps'] for g in geo]
    m_last = m_list[-1]
    c_last = geo[-1]['cout']

    # ---------------- host-side packing (boundary only) ---------------------
    k1 = geo[0]['taps'] * geo[0]['cin']
    k1p = _round_up(k1, 8)
    x_patches = _im2col_layer1(x_spectrogram, geo[0]['k'], geo[0]['oh'],
                               geo[0]['ow'], k1p)              # (N*M1, k1p) bf16

    operands = [x_patches]
    in_specs = [pl.BlockSpec((bblk * m_list[0], k1p), lambda i: (i, 0))]

    w1 = _pack_weight(params[0][0], k1p)
    b1 = params[0][1].reshape(1, -1).astype(jnp.float32)
    operands += [w1, b1]
    in_specs += [pl.BlockSpec(w1.shape, lambda i: (0, 0)),
                 pl.BlockSpec(b1.shape, lambda i: (0, 0))]
    for l in range(1, n_layers):
        gl = geo[l]
        gm = _gather_matrix(gl['ih'], gl['iw'], gl['oh'], gl['ow'], gl['k'])
        wm = _pack_weight(params[l][0])
        bm = params[l][1].reshape(1, -1).astype(jnp.float32)
        operands += [gm, wm, bm]
        in_specs += [pl.BlockSpec(gm.shape, lambda i: (0, 0)),
                     pl.BlockSpec(wm.shape, lambda i: (0, 0)),
                     pl.BlockSpec(bm.shape, lambda i: (0, 0))]

    # ---------------- fused kernel: all layers for one batch block ----------
    def kernel(x_ref, *refs):
        o_ref = refs[-1]
        ops = refs[:-1]
        # layer 1: host im2col patches -> GEMM -> bias + LeakyReLU -> bf16
        acc = jnp.dot(x_ref[...], ops[0][...],
                      preferred_element_type=jnp.float32) + ops[1][...]
        act = jnp.where(acc >= 0.0, acc, _SLOPE * acc).astype(jnp.bfloat16)
        idx = 2
        for l in range(1, n_layers):
            gm = ops[idx][...]          # (taps*M_l, M_{l-1}) bf16, 0/1 gather
            wm = ops[idx + 1][...]      # (taps*C_{l-1}, C_l)   bf16
            bv = ops[idx + 2][...]      # (1, C_l)              f32
            idx += 3
            mp, mc, t = m_list[l - 1], m_list[l], taps_list[l]
            per_b = []
            for bb in range(bblk):
                a_b = act[bb * mp:(bb + 1) * mp, :]
                # exact bf16 gather of previous activations (0/1 matrix)
                z = jnp.dot(gm, a_b,
                            preferred_element_type=jnp.float32
                            ).astype(jnp.bfloat16)              # (t*mc, C_prev)
                # fold tap row-blocks into the GEMM K dim (dense M, no waste)
                per_b.append(jnp.concatenate(
                    [z[tt * mc:(tt + 1) * mc, :] for tt in range(t)], axis=-1))
            patches = per_b[0] if bblk == 1 else jnp.concatenate(per_b, axis=0)
            # conv GEMM on the MXU (bf16 in, f32 accumulate) + bias + LeakyReLU
            acc = jnp.dot(patches, wm, preferred_element_type=jnp.float32) + bv
            act_f32 = jnp.where(acc >= 0.0, acc, _SLOPE * acc)
            if l + 1 < n_layers:
                act = act_f32.astype(jnp.bfloat16)   # bf16 inter-layer carry
            else:
                for bb in range(bblk):
                    o_ref[bb] = act_f32[bb * m_last:(bb + 1) * m_last, :]

    out = pl.pallas_call(
        kernel,
        out_shape=jax.ShapeDtypeStruct((n, m_last, c_last), jnp.float32),
        grid_spec=pltpu.PrefetchScalarGridSpec(
            num_scalar_prefetch=0,
            grid=(n // bblk,),
            in_specs=in_specs,
            out_specs=pl.BlockSpec((bblk, m_last, c_last), lambda i: (i, 0, 0)),
        ),
        compiler_params=pltpu.CompilerParams(
            dimension_semantics=("parallel",)),
    )(*operands)

    # Boundary layout conversion only: (N, OH*OW, C) -> NCHW.
    out = out.reshape(n, geo[-1]['oh'], geo[-1]['ow'], c_last)
    return out.transpose(0, 3, 1, 2)


# -----------------------------------------------------------------------------
# Pure-JAX f32 reference (conv -> bias -> LeakyReLU, stride 2, pad 2 per layer)
# -----------------------------------------------------------------------------
def cnn_backbone_reference(x, params):
    y = x
    for wt, bs in params:
        y = jax.lax.conv_general_dilated(
            y, wt, window_strides=(_STRIDE, _STRIDE),
            padding=((_PAD, _PAD), (_PAD, _PAD)),
            dimension_numbers=('NCHW', 'OIHW', 'NCHW'),
            precision=jax.lax.Precision.HIGHEST)
        y = y + bs[None, :, None, None]
        y = jnp.where(y >= 0.0, y, _SLOPE * y)
    return y


# -----------------------------------------------------------------------------
# CNNBackbone parameters: 5 strided convs (LeakyReLU(0.1) after each).
# -----------------------------------------------------------------------------
def init_cnn_backbone_params(key, spectrogram_channels=1, out_dim=256):
    cfg = [
        (spectrogram_channels, 16, 5),   # enc1: 5x5, stride 2, pad 2
        (16, 32, 4),                     # enc2: 4x4, stride 2, pad 2
        (32, 64, 4),                     # enc3
        (64, 128, 4),                    # enc4
        (128, out_dim, 4),               # enc5
    ]
    params = []
    for cin, cout, k in cfg:
        key, wk, bk = jax.random.split(key, 3)
        fan_in = cin * k * k
        wt = jax.random.normal(wk, (cout, cin, k, k), jnp.float32) / jnp.sqrt(fan_in)
        bs = jax.random.normal(bk, (cout,), jnp.float32) * 0.01
        params.append((wt, bs))
    return params


if __name__ == "__main__":
    key = jax.random.PRNGKey(0)
    key, xk = jax.random.split(key)

    # NCHW spectrogram input: batch=2, channels=1, 32x32 spatial.
    x = jax.random.normal(xk, (2, 1, 32, 32), jnp.float32)
    params = init_cnn_backbone_params(key, spectrogram_channels=1, out_dim=256)

    out = jax.block_until_ready(cnn_backbone_forward(x, params))
    assert out.shape == (2, 256, 2, 2), out.shape
    assert out.dtype == jnp.float32

    # Numerical check against the pure-JAX f32 reference (bf16 MXU tolerance).
    ref = jax.block_until_ready(cnn_backbone_reference(x, params))
    np.testing.assert_allclose(np.asarray(out), np.asarray(ref),
                               rtol=5e-2, atol=2.5e-2)
    print("KERNEL_OK")
</pallas_src>

<mosaic_0001>
module attributes {stable_mosaic.version = 11 : i64} {
  func.func @kernel(%arg0: i32, %arg1: memref<256x32xbf16, #tpu.memory_space<vmem>>, %arg2: memref<32x16xbf16, #tpu.memory_space<vmem>>, %arg3: memref<1x16xf32, #tpu.memory_space<vmem>>, %arg4: memref<1296x256xbf16, #tpu.memory_space<vmem>>, %arg5: memref<256x32xbf16, #tpu.memory_space<vmem>>, %arg6: memref<1x32xf32, #tpu.memory_space<vmem>>, %arg7: memref<400x81xbf16, #tpu.memory_space<vmem>>, %arg8: memref<512x64xbf16, #tpu.memory_space<vmem>>, %arg9: memref<1x64xf32, #tpu.memory_space<vmem>>, %arg10: memref<144x25xbf16, #tpu.memory_space<vmem>>, %arg11: memref<1024x128xbf16, #tpu.memory_space<vmem>>, %arg12: memref<1x128xf32, #tpu.memory_space<vmem>>, %arg13: memref<64x9xbf16, #tpu.memory_space<vmem>>, %arg14: memref<2048x256xbf16, #tpu.memory_space<vmem>>, %arg15: memref<1x256xf32, #tpu.memory_space<vmem>>, %arg16: memref<1x4x256xf32, #tpu.memory_space<vmem>>) attributes {dimension_semantics = [#tpu.dimension_semantics<parallel>], iteration_bounds = array<i64: 2>, scalar_prefetch = 0 : i64, scratch_operands = 0 : i64, tpu.core_type = #tpu.core_type<tc>, window_params = [{transform_indices = @transform_0, window_bounds = array<i64: 256, 32>}, {pipeline_mode = #tpu.pipeline_mode<synchronous>, transform_indices = @transform_1, window_bounds = array<i64: 32, 16>}, {pipeline_mode = #tpu.pipeline_mode<synchronous>, transform_indices = @transform_2, window_bounds = array<i64: 1, 16>}, {pipeline_mode = #tpu.pipeline_mode<synchronous>, transform_indices = @transform_3, window_bounds = array<i64: 1296, 256>}, {pipeline_mode = #tpu.pipeline_mode<synchronous>, transform_indices = @transform_4, window_bounds = array<i64: 256, 32>}, {pipeline_mode = #tpu.pipeline_mode<synchronous>, transform_indices = @transform_5, window_bounds = array<i64: 1, 32>}, {pipeline_mode = #tpu.pipeline_mode<synchronous>, transform_indices = @transform_6, window_bounds = array<i64: 400, 81>}, {pipeline_mode = #tpu.pipeline_mode<synchronous>, transform_indices = @transform_7, window_bounds = array<i64: 512, 64>}, {pipeline_mode = #tpu.pipeline_mode<synchronous>, transform_indices = @transform_8, window_bounds = array<i64: 1, 64>}, {pipeline_mode = #tpu.pipeline_mode<synchronous>, transform_indices = @transform_9, window_bounds = array<i64: 144, 25>}, {pipeline_mode = #tpu.pipeline_mode<synchronous>, transform_indices = @transform_10, window_bounds = array<i64: 1024, 128>}, {pipeline_mode = #tpu.pipeline_mode<synchronous>, transform_indices = @transform_11, window_bounds = array<i64: 1, 128>}, {pipeline_mode = #tpu.pipeline_mode<synchronous>, transform_indices = @transform_12, window_bounds = array<i64: 64, 9>}, {pipeline_mode = #tpu.pipeline_mode<synchronous>, transform_indices = @transform_13, window_bounds = array<i64: 2048, 256>}, {pipeline_mode = #tpu.pipeline_mode<synchronous>, transform_indices = @transform_14, window_bounds = array<i64: 1, 256>}, {transform_indices = @transform_15, window_bounds = array<i64: 1, 4, 256>}]} {
    %c0 = arith.constant 0 : index
    %c0_0 = arith.constant 0 : index
    %0 = vector.load %arg1[%c0, %c0_0] : memref<256x32xbf16, #tpu.memory_space<vmem>>, vector<256x32xbf16>
    %c0_1 = arith.constant 0 : index
    %c0_2 = arith.constant 0 : index
    %1 = vector.load %arg2[%c0_1, %c0_2] : memref<32x16xbf16, #tpu.memory_space<vmem>>, vector<32x16xbf16>
    %cst = arith.constant dense<0.000000e+00> : vector<256x16xf32>
    %2 = tpu.matmul %0, %1, %cst {dimension_numbers = #tpu.dot_dimension_numbers<[1], [0], [0], [1], [0, 0, 1, 1], [], []>} : vector<256x32xbf16>, vector<32x16xbf16>, vector<256x16xf32> -> vector<256x16xf32>
    %c0_3 = arith.constant 0 : index
    %c0_4 = arith.constant 0 : index
    %3 = vector.load %arg3[%c0_3, %c0_4] : memref<1x16xf32, #tpu.memory_space<vmem>>, vector<1x16xf32>
    %4 = vector.broadcast %3 : vector<1x16xf32> to vector<256x16xf32>
    %5 = arith.addf %2, %4 : vector<256x16xf32>
    %cst_5 = arith.constant 0.000000e+00 : f32
    %6 = vector.broadcast %cst_5 : f32 to vector<256x16xf32>
    %7 = arith.cmpf oge, %5, %6 : vector<256x16xf32>
    %cst_6 = arith.constant 1.000000e-01 : f32
    %8 = vector.broadcast %cst_6 : f32 to vector<256x16xf32>
    %9 = arith.mulf %8, %5 : vector<256x16xf32>
    %10 = arith.select %7, %5, %9 : vector<256x16xi1>, vector<256x16xf32>
    %11 = arith.truncf %10 : vector<256x16xf32> to vector<256x16xbf16>
    %c0_7 = arith.constant 0 : index
    %c0_8 = arith.constant 0 : index
    %12 = vector.load %arg4[%c0_7, %c0_8] : memref<1296x256xbf16, #tpu.memory_space<vmem>>, vector<1296x256xbf16>
    %c0_9 = arith.constant 0 : index
    %c0_10 = arith.constant 0 : index
    %13 = vector.load %arg5[%c0_9, %c0_10] : memref<256x32xbf16, #tpu.memory_space<vmem>>, vector<256x32xbf16>
    %c0_11 = arith.constant 0 : index
    %c0_12 = arith.constant 0 : index
    %14 = vector.load %arg6[%c0_11, %c0_12] : memref<1x32xf32, #tpu.memory_space<vmem>>, vector<1x32xf32>
    %cst_13 = arith.constant dense<0.000000e+00> : vector<1296x16xf32>
    %15 = tpu.matmul %12, %11, %cst_13 {dimension_numbers = #tpu.dot_dimension_numbers<[1], [0], [0], [1], [0, 0, 1, 1], [], []>} : vector<1296x256xbf16>, vector<256x16xbf16>, vector<1296x16xf32> -> vector<1296x16xf32>
    %16 = arith.truncf %15 : vector<1296x16xf32> to vector<1296x16xbf16>
    %17 = vector.extract_strided_slice %16 {offsets = [0, 0], sizes = [81, 16], strides = [1, 1]} : vector<1296x16xbf16> to vector<81x16xbf16>
    %18 = vector.extract_strided_slice %16 {offsets = [81, 0], sizes = [81, 16], strides = [1, 1]} : vector<1296x16xbf16> to vector<81x16xbf16>
    %19 = vector.extract_strided_slice %16 {offsets = [162, 0], sizes = [81, 16], strides = [1, 1]} : vector<1296x16xbf16> to vector<81x16xbf16>
    %20 = vector.extract_strided_slice %16 {offsets = [243, 0], sizes = [81, 16], strides = [1, 1]} : vector<1296x16xbf16> to vector<81x16xbf16>
    %21 = vector.extract_strided_slice %16 {offsets = [324, 0], sizes = [81, 16], strides = [1, 1]} : vector<1296x16xbf16> to vector<81x16xbf16>
    %22 = vector.extract_strided_slice %16 {offsets = [405, 0], sizes = [81, 16], strides = [1, 1]} : vector<1296x16xbf16> to vector<81x16xbf16>
    %23 = vector.extract_strided_slice %16 {offsets = [486, 0], sizes = [81, 16], strides = [1, 1]} : vector<1296x16xbf16> to vector<81x16xbf16>
    %24 = vector.extract_strided_slice %16 {offsets = [567, 0], sizes = [81, 16], strides = [1, 1]} : vector<1296x16xbf16> to vector<81x16xbf16>
    %25 = vector.extract_strided_slice %16 {offsets = [648, 0], sizes = [81, 16], strides = [1, 1]} : vector<1296x16xbf16> to vector<81x16xbf16>
    %26 = vector.extract_strided_slice %16 {offsets = [729, 0], sizes = [81, 16], strides = [1, 1]} : vector<1296x16xbf16> to vector<81x16xbf16>
    %27 = vector.extract_strided_slice %16 {offsets = [810, 0], sizes = [81, 16], strides = [1, 1]} : vector<1296x16xbf16> to vector<81x16xbf16>
    %28 = vector.extract_strided_slice %16 {offsets = [891, 0], sizes = [81, 16], strides = [1, 1]} : vector<1296x16xbf16> to vector<81x16xbf16>
    %29 = vector.extract_strided_slice %16 {offsets = [972, 0], sizes = [81, 16], strides = [1, 1]} : vector<1296x16xbf16> to vector<81x16xbf16>
    %30 = vector.extract_strided_slice %16 {offsets = [1053, 0], sizes = [81, 16], strides = [1, 1]} : vector<1296x16xbf16> to vector<81x16xbf16>
    %31 = vector.extract_strided_slice %16 {offsets = [1134, 0], sizes = [81, 16], strides = [1, 1]} : vector<1296x16xbf16> to vector<81x16xbf16>
    %32 = vector.extract_strided_slice %16 {offsets = [1215, 0], sizes = [81, 16], strides = [1, 1]} : vector<1296x16xbf16> to vector<81x16xbf16>
    %33 = tpu.concatenate %17, %18, %19, %20, %21, %22, %23, %24, %25, %26, %27, %28, %29, %30, %31, %32 in 1 : vector<81x16xbf16>, vector<81x16xbf16>, vector<81x16xbf16>, vector<81x16xbf16>, vector<81x16xbf16>, vector<81x16xbf16>, vector<81x16xbf16>, vector<81x16xbf16>, vector<81x16xbf16>, vector<81x16xbf16>, vector<81x16xbf16>, vector<81x16xbf16>, vector<81x16xbf16>, vector<81x16xbf16>, vector<81x16xbf16>, vector<81x16xbf16> -> vector<81x256xbf16>
    %cst_14 = arith.constant dense<0.000000e+00> : vector<81x32xf32>
    %34 = tpu.matmul %33, %13, %cst_14 {dimension_numbers = #tpu.dot_dimension_numbers<[1], [0], [0], [1], [0, 0, 1, 1], [], []>} : vector<81x256xbf16>, vector<256x32xbf16>, vector<81x32xf32> -> vector<81x32xf32>
    %35 = vector.broadcast %14 : vector<1x32xf32> to vector<81x32xf32>
    %36 = arith.addf %34, %35 : vector<81x32xf32>
    %cst_15 = arith.constant 0.000000e+00 : f32
    %37 = vector.broadcast %cst_15 : f32 to vector<81x32xf32>
    %38 = arith.cmpf oge, %36, %37 : vector<81x32xf32>
    %cst_16 = arith.constant 1.000000e-01 : f32
    %39 = vector.broadcast %cst_16 : f32 to vector<81x32xf32>
    %40 = arith.mulf %39, %36 : vector<81x32xf32>
    %41 = arith.select %38, %36, %40 : vector<81x32xi1>, vector<81x32xf32>
    %42 = arith.truncf %41 : vector<81x32xf32> to vector<81x32xbf16>
    %c0_17 = arith.constant 0 : index
    %c0_18 = arith.constant 0 : index
    %43 = vector.load %arg7[%c0_17, %c0_18] : memref<400x81xbf16, #tpu.memory_space<vmem>>, vector<400x81xbf16>
    %c0_19 = arith.constant 0 : index
    %c0_20 = arith.constant 0 : index
    %44 = vector.load %arg8[%c0_19, %c0_20] : memref<512x64xbf16, #tpu.memory_space<vmem>>, vector<512x64xbf16>
    %c0_21 = arith.constant 0 : index
    %c0_22 = arith.constant 0 : index
    %45 = vector.load %arg9[%c0_21, %c0_22] : memref<1x64xf32, #tpu.memory_space<vmem>>, vector<1x64xf32>
    %cst_23 = arith.constant dense<0.000000e+00> : vector<400x32xf32>
    %46 = tpu.matmul %43, %42, %cst_23 {dimension_numbers = #tpu.dot_dimension_numbers<[1], [0], [0], [1], [0, 0, 1, 1], [], []>} : vector<400x81xbf16>, vector<81x32xbf16>, vector<400x32xf32> -> vector<400x32xf32>
    %47 = arith.truncf %46 : vector<400x32xf32> to vector<400x32xbf16>
    %48 = vector.extract_strided_slice %47 {offsets = [0, 0], sizes = [25, 32], strides = [1, 1]} : vector<400x32xbf16> to vector<25x32xbf16>
    %49 = vector.extract_strided_slice %47 {offsets = [25, 0], sizes = [25, 32], strides = [1, 1]} : vector<400x32xbf16> to vector<25x32xbf16>
    %50 = vector.extract_strided_slice %47 {offsets = [50, 0], sizes = [25, 32], strides = [1, 1]} : vector<400x32xbf16> to vector<25x32xbf16>
    %51 = vector.extract_strided_slice %47 {offsets = [75, 0], sizes = [25, 32], strides = [1, 1]} : vector<400x32xbf16> to vector<25x32xbf16>
    %52 = vector.extract_strided_slice %47 {offsets = [100, 0], sizes = [25, 32], strides = [1, 1]} : vector<400x32xbf16> to vector<25x32xbf16>
    %53 = vector.extract_strided_slice %47 {offsets = [125, 0], sizes = [25, 32], strides = [1, 1]} : vector<400x32xbf16> to vector<25x32xbf16>
    %54 = vector.extract_strided_slice %47 {offsets = [150, 0], sizes = [25, 32], strides = [1, 1]} : vector<400x32xbf16> to vector<25x32xbf16>
    %55 = vector.extract_strided_slice %47 {offsets = [175, 0], sizes = [25, 32], strides = [1, 1]} : vector<400x32xbf16> to vector<25x32xbf16>
    %56 = vector.extract_strided_slice %47 {offsets = [200, 0], sizes = [25, 32], strides = [1, 1]} : vector<400x32xbf16> to vector<25x32xbf16>
    %57 = vector.extract_strided_slice %47 {offsets = [225, 0], sizes = [25, 32], strides = [1, 1]} : vector<400x32xbf16> to vector<25x32xbf16>
    %58 = vector.extract_strided_slice %47 {offsets = [250, 0], sizes = [25, 32], strides = [1, 1]} : vector<400x32xbf16> to vector<25x32xbf16>
    %59 = vector.extract_strided_slice %47 {offsets = [275, 0], sizes = [25, 32], strides = [1, 1]} : vector<400x32xbf16> to vector<25x32xbf16>
    %60 = vector.extract_strided_slice %47 {offsets = [300, 0], sizes = [25, 32], strides = [1, 1]} : vector<400x32xbf16> to vector<25x32xbf16>
    %61 = vector.extract_strided_slice %47 {offsets = [325, 0], sizes = [25, 32], strides = [1, 1]} : vector<400x32xbf16> to vector<25x32xbf16>
    %62 = vector.extract_strided_slice %47 {offsets = [350, 0], sizes = [25, 32], strides = [1, 1]} : vector<400x32xbf16> to vector<25x32xbf16>
    %63 = vector.extract_strided_slice %47 {offsets = [375, 0], sizes = [25, 32], strides = [1, 1]} : vector<400x32xbf16> to vector<25x32xbf16>
    %64 = tpu.concatenate %48, %49, %50, %51, %52, %53, %54, %55, %56, %57, %58, %59, %60, %61, %62, %63 in 1 : vector<25x32xbf16>, vector<25x32xbf16>, vector<25x32xbf16>, vector<25x32xbf16>, vector<25x32xbf16>, vector<25x32xbf16>, vector<25x32xbf16>, vector<25x32xbf16>, vector<25x32xbf16>, vector<25x32xbf16>, vector<25x32xbf16>, vector<25x32xbf16>, vector<25x32xbf16>, vector<25x32xbf16>, vector<25x32xbf16>, vector<25x32xbf16> -> vector<25x512xbf16>
    %cst_24 = arith.constant dense<0.000000e+00> : vector<25x64xf32>
    %65 = tpu.matmul %64, %44, %cst_24 {dimension_numbers = #tpu.dot_dimension_numbers<[1], [0], [0], [1], [0, 0, 1, 1], [], []>} : vector<25x512xbf16>, vector<512x64xbf16>, vector<25x64xf32> -> vector<25x64xf32>
    %66 = vector.broadcast %45 : vector<1x64xf32> to vector<25x64xf32>
    %67 = arith.addf %65, %66 : vector<25x64xf32>
    %cst_25 = arith.constant 0.000000e+00 : f32
    %68 = vector.broadcast %cst_25 : f32 to vector<25x64xf32>
    %69 = arith.cmpf oge, %67, %68 : vector<25x64xf32>
    %cst_26 = arith.constant 1.000000e-01 : f32
    %70 = vector.broadcast %cst_26 : f32 to vector<25x64xf32>
    %71 = arith.mulf %70, %67 : vector<25x64xf32>
    %72 = arith.select %69, %67, %71 : vector<25x64xi1>, vector<25x64xf32>
    %73 = arith.truncf %72 : vector<25x64xf32> to vector<25x64xbf16>
    %c0_27 = arith.constant 0 : index
    %c0_28 = arith.constant 0 : index
    %74 = vector.load %arg10[%c0_27, %c0_28] : memref<144x25xbf16, #tpu.memory_space<vmem>>, vector<144x25xbf16>
    %c0_29 = arith.constant 0 : index
    %c0_30 = arith.constant 0 : index
    %75 = vector.load %arg11[%c0_29, %c0_30] : memref<1024x128xbf16, #tpu.memory_space<vmem>>, vector<1024x128xbf16>
    %c0_31 = arith.constant 0 : index
    %c0_32 = arith.constant 0 : index
    %76 = vector.load %arg12[%c0_31, %c0_32] : memref<1x128xf32, #tpu.memory_space<vmem>>, vector<1x128xf32>
    %cst_33 = arith.constant dense<0.000000e+00> : vector<144x64xf32>
    %77 = tpu.matmul %74, %73, %cst_33 {dimension_numbers = #tpu.dot_dimension_numbers<[1], [0], [0], [1], [0, 0, 1, 1], [], []>} : vector<144x25xbf16>, vector<25x64xbf16>, vector<144x64xf32> -> vector<144x64xf32>
    %78 = arith.truncf %77 : vector<144x64xf32> to vector<144x64xbf16>
    %79 = vector.extract_strided_slice %78 {offsets = [0, 0], sizes = [9, 64], strides = [1, 1]} : vector<144x64xbf16> to vector<9x64xbf16>
    %80 = vector.extract_strided_slice %78 {offsets = [9, 0], sizes = [9, 64], strides = [1, 1]} : vector<144x64xbf16> to vector<9x64xbf16>
    %81 = vector.extract_strided_slice %78 {offsets = [18, 0], sizes = [9, 64], strides = [1, 1]} : vector<144x64xbf16> to vector<9x64xbf16>
    %82 = vector.extract_strided_slice %78 {offsets = [27, 0], sizes = [9, 64], strides = [1, 1]} : vector<144x64xbf16> to vector<9x64xbf16>
    %83 = vector.extract_strided_slice %78 {offsets = [36, 0], sizes = [9, 64], strides = [1, 1]} : vector<144x64xbf16> to vector<9x64xbf16>
    %84 = vector.extract_strided_slice %78 {offsets = [45, 0], sizes = [9, 64], strides = [1, 1]} : vector<144x64xbf16> to vector<9x64xbf16>
    %85 = vector.extract_strided_slice %78 {offsets = [54, 0], sizes = [9, 64], strides = [1, 1]} : vector<144x64xbf16> to vector<9x64xbf16>
    %86 = vector.extract_strided_slice %78 {offsets = [63, 0], sizes = [9, 64], strides = [1, 1]} : vector<144x64xbf16> to vector<9x64xbf16>
    %87 = vector.extract_strided_slice %78 {offsets = [72, 0], sizes = [9, 64], strides = [1, 1]} : vector<144x64xbf16> to vector<9x64xbf16>
    %88 = vector.extract_strided_slice %78 {offsets = [81, 0], sizes = [9, 64], strides = [1, 1]} : vector<144x64xbf16> to vector<9x64xbf16>
    %89 = vector.extract_strided_slice %78 {offsets = [90, 0], sizes = [9, 64], strides = [1, 1]} : vector<144x64xbf16> to vector<9x64xbf16>
    %90 = vector.extract_strided_slice %78 {offsets = [99, 0], sizes = [9, 64], strides = [1, 1]} : vector<144x64xbf16> to vector<9x64xbf16>
    %91 = vector.extract_strided_slice %78 {offsets = [108, 0], sizes = [9, 64], strides = [1, 1]} : vector<144x64xbf16> to vector<9x64xbf16>
    %92 = vector.extract_strided_slice %78 {offsets = [117, 0], sizes = [9, 64], strides = [1, 1]} : vector<144x64xbf16> to vector<9x64xbf16>
    %93 = vector.extract_strided_slice %78 {offsets = [126, 0], sizes = [9, 64], strides = [1, 1]} : vector<144x64xbf16> to vector<9x64xbf16>
    %94 = vector.extract_strided_slice %78 {offsets = [135, 0], sizes = [9, 64], strides = [1, 1]} : vector<144x64xbf16> to vector<9x64xbf16>
    %95 = tpu.concatenate %79, %80, %81, %82, %83, %84, %85, %86, %87, %88, %89, %90, %91, %92, %93, %94 in 1 : vector<9x64xbf16>, vector<9x64xbf16>, vector<9x64xbf16>, vector<9x64xbf16>, vector<9x64xbf16>, vector<9x64xbf16>, vector<9x64xbf16>, vector<9x64xbf16>, vector<9x64xbf16>, vector<9x64xbf16>, vector<9x64xbf16>, vector<9x64xbf16>, vector<9x64xbf16>, vector<9x64xbf16>, vector<9x64xbf16>, vector<9x64xbf16> -> vector<9x1024xbf16>
    %cst_34 = arith.constant dense<0.000000e+00> : vector<9x128xf32>
    %96 = tpu.matmul %95, %75, %cst_34 {dimension_numbers = #tpu.dot_dimension_numbers<[1], [0], [0], [1], [0, 0, 1, 1], [], []>} : vector<9x1024xbf16>, vector<1024x128xbf16>, vector<9x128xf32> -> vector<9x128xf32>
    %97 = vector.broadcast %76 : vector<1x128xf32> to vector<9x128xf32>
    %98 = arith.addf %96, %97 : vector<9x128xf32>
    %cst_35 = arith.constant 0.000000e+00 : f32
    %99 = vector.broadcast %cst_35 : f32 to vector<9x128xf32>
    %100 = arith.cmpf oge, %98, %99 : vector<9x128xf32>
    %cst_36 = arith.constant 1.000000e-01 : f32
    %101 = vector.broadcast %cst_36 : f32 to vector<9x128xf32>
    %102 = arith.mulf %101, %98 : vector<9x128xf32>
    %103 = arith.select %100, %98, %102 : vector<9x128xi1>, vector<9x128xf32>
    %104 = arith.truncf %103 : vector<9x128xf32> to vector<9x128xbf16>
    %c0_37 = arith.constant 0 : index
    %c0_38 = arith.constant 0 : index
    %105 = vector.load %arg13[%c0_37, %c0_38] : memref<64x9xbf16, #tpu.memory_space<vmem>>, vector<64x9xbf16>
    %c0_39 = arith.constant 0 : index
    %c0_40 = arith.constant 0 : index
    %106 = vector.load %arg14[%c0_39, %c0_40] : memref<2048x256xbf16, #tpu.memory_space<vmem>>, vector<2048x256xbf16>
    %c0_41 = arith.constant 0 : index
    %c0_42 = arith.constant 0 : index
    %107 = vector.load %arg15[%c0_41, %c0_42] : memref<1x256xf32, #tpu.memory_space<vmem>>, vector<1x256xf32>
    %cst_43 = arith.constant dense<0.000000e+00> : vector<64x128xf32>
    %108 = tpu.matmul %105, %104, %cst_43 {dimension_numbers = #tpu.dot_dimension_numbers<[1], [0], [0], [1], [0, 0, 1, 1], [], []>} : vector<64x9xbf16>, vector<9x128xbf16>, vector<64x128xf32> -> vector<64x128xf32>
    %109 = arith.truncf %108 : vector<64x128xf32> to vector<64x128xbf16>
    %110 = vector.extract_strided_slice %109 {offsets = [0, 0], sizes = [4, 128], strides = [1, 1]} : vector<64x128xbf16> to vector<4x128xbf16>
    %111 = vector.extract_strided_slice %109 {offsets = [4, 0], sizes = [4, 128], strides = [1, 1]} : vector<64x128xbf16> to vector<4x128xbf16>
    %112 = vector.extract_strided_slice %109 {offsets = [8, 0], sizes = [4, 128], strides = [1, 1]} : vector<64x128xbf16> to vector<4x128xbf16>
    %113 = vector.extract_strided_slice %109 {offsets = [12, 0], sizes = [4, 128], strides = [1, 1]} : vector<64x128xbf16> to vector<4x128xbf16>
    %114 = vector.extract_strided_slice %109 {offsets = [16, 0], sizes = [4, 128], strides = [1, 1]} : vector<64x128xbf16> to vector<4x128xbf16>
    %115 = vector.extract_strided_slice %109 {offsets = [20, 0], sizes = [4, 128], strides = [1, 1]} : vector<64x128xbf16> to vector<4x128xbf16>
    %116 = vector.extract_strided_slice %109 {offsets = [24, 0], sizes = [4, 128], strides = [1, 1]} : vector<64x128xbf16> to vector<4x128xbf16>
    %117 = vector.extract_strided_slice %109 {offsets = [28, 0], sizes = [4, 128], strides = [1, 1]} : vector<64x128xbf16> to vector<4x128xbf16>
    %118 = vector.extract_strided_slice %109 {offsets = [32, 0], sizes = [4, 128], strides = [1, 1]} : vector<64x128xbf16> to vector<4x128xbf16>
    %119 = vector.extract_strided_slice %109 {offsets = [36, 0], sizes = [4, 128], strides = [1, 1]} : vector<64x128xbf16> to vector<4x128xbf16>
    %120 = vector.extract_strided_slice %109 {offsets = [40, 0], sizes = [4, 128], strides = [1, 1]} : vector<64x128xbf16> to vector<4x128xbf16>
    %121 = vector.extract_strided_slice %109 {offsets = [44, 0], sizes = [4, 128], strides = [1, 1]} : vector<64x128xbf16> to vector<4x128xbf16>
    %122 = vector.extract_strided_slice %109 {offsets = [48, 0], sizes = [4, 128], strides = [1, 1]} : vector<64x128xbf16> to vector<4x128xbf16>
    %123 = vector.extract_strided_slice %109 {offsets = [52, 0], sizes = [4, 128], strides = [1, 1]} : vector<64x128xbf16> to vector<4x128xbf16>
    %124 = vector.extract_strided_slice %109 {offsets = [56, 0], sizes = [4, 128], strides = [1, 1]} : vector<64x128xbf16> to vector<4x128xbf16>
    %125 = vector.extract_strided_slice %109 {offsets = [60, 0], sizes = [4, 128], strides = [1, 1]} : vector<64x128xbf16> to vector<4x128xbf16>
    %126 = tpu.concatenate %110, %111, %112, %113, %114, %115, %116, %117, %118, %119, %120, %121, %122, %123, %124, %125 in 1 : vector<4x128xbf16>, vector<4x128xbf16>, vector<4x128xbf16>, vector<4x128xbf16>, vector<4x128xbf16>, vector<4x128xbf16>, vector<4x128xbf16>, vector<4x128xbf16>, vector<4x128xbf16>, vector<4x128xbf16>, vector<4x128xbf16>, vector<4x128xbf16>, vector<4x128xbf16>, vector<4x128xbf16>, vector<4x128xbf16>, vector<4x128xbf16> -> vector<4x2048xbf16>
    %cst_44 = arith.constant dense<0.000000e+00> : vector<4x256xf32>
    %127 = tpu.matmul %126, %106, %cst_44 {dimension_numbers = #tpu.dot_dimension_numbers<[1], [0], [0], [1], [0, 0, 1, 1], [], []>} : vector<4x2048xbf16>, vector<2048x256xbf16>, vector<4x256xf32> -> vector<4x256xf32>
    %128 = vector.broadcast %107 : vector<1x256xf32> to vector<4x256xf32>
    %129 = arith.addf %127, %128 : vector<4x256xf32>
    %cst_45 = arith.constant 0.000000e+00 : f32
    %130 = vector.broadcast %cst_45 : f32 to vector<4x256xf32>
    %131 = arith.cmpf oge, %129, %130 : vector<4x256xf32>
    %cst_46 = arith.constant 1.000000e-01 : f32
    %132 = vector.broadcast %cst_46 : f32 to vector<4x256xf32>
    %133 = arith.mulf %132, %129 : vector<4x256xf32>
    %134 = arith.select %131, %129, %133 : vector<4x256xi1>, vector<4x256xf32>
    %c0_47 = arith.constant 0 : index
    %c0_48 = arith.constant 0 : index
    %c0_49 = arith.constant 0 : index
    %135 = vector.load %arg16[%c0_47, %c0_48, %c0_49] : memref<1x4x256xf32, #tpu.memory_space<vmem>>, vector<1x4x256xf32>
    %136 = vector.shape_cast %135 : vector<1x4x256xf32> to vector<4x256xf32>
    %137 = vector.shape_cast %134 : vector<4x256xf32> to vector<1x4x256xf32>
    tpu.vector_store %arg16[%c0_47, %c0_48, %c0_49], %137 {strides = array<i32>} : memref<1x4x256xf32, #tpu.memory_space<vmem>>, vector<1x4x256xf32>,
    return
  }
  func.func @transform_0(%arg0: i32) -> (i32, i32) {
    %c0_i32 = arith.constant 0 : i32
    %c0_i32_0 = arith.constant 0 : i32
    return %arg0, %c0_i32 : i32, i32
  }
  func.func @transform_1(%arg0: i32) -> (i32, i32) {
    %c0_i32 = arith.constant 0 : i32
    %c0_i32_0 = arith.constant 0 : i32
    %c0_i32_1 = arith.constant 0 : i32
    return %c0_i32, %c0_i32_0 : i32, i32
  }
  func.func @transform_2(%arg0: i32) -> (i32, i32) {
    %c0_i32 = arith.constant 0 : i32
    %c0_i32_0 = arith.constant 0 : i32
    %c0_i32_1 = arith.constant 0 : i32
    return %c0_i32, %c0_i32_0 : i32, i32
  }
  func.func @transform_3(%arg0: i32) -> (i32, i32) {
    %c0_i32 = arith.constant 0 : i32
    %c0_i32_0 = arith.constant 0 : i32
    %c0_i32_1 = arith.constant 0 : i32
    return %c0_i32, %c0_i32_0 : i32, i32
  }
  func.func @transform_4(%arg0: i32) -> (i32, i32) {
    %c0_i32 = arith.constant 0 : i32
    %c0_i32_0 = arith.constant 0 : i32
    %c0_i32_1 = arith.constant 0 : i32
    return %c0_i32, %c0_i32_0 : i32, i32
  }
  func.func @transform_5(%arg0: i32) -> (i32, i32) {
    %c0_i32 = arith.constant 0 : i32
    %c0_i32_0 = arith.constant 0 : i32
    %c0_i32_1 = arith.constant 0 : i32
    return %c0_i32, %c0_i32_0 : i32, i32
  }
  func.func @transform_6(%arg0: i32) -> (i32, i32) {
    %c0_i32 = arith.constant 0 : i32
    %c0_i32_0 = arith.constant 0 : i32
    %c0_i32_1 = arith.constant 0 : i32
    return %c0_i32, %c0_i32_0 : i32, i32
  }
  func.func @transform_7(%arg0: i32) -> (i32, i32) {
    %c0_i32 = arith.constant 0 : i32
    %c0_i32_0 = arith.constant 0 : i32
    %c0_i32_1 = arith.constant 0 : i32
    return %c0_i32, %c0_i32_0 : i32, i32
  }
  func.func @transform_8(%arg0: i32) -> (i32, i32) {
    %c0_i32 = arith.constant 0 : i32
    %c0_i32_0 = arith.constant 0 : i32
    %c0_i32_1 = arith.constant 0 : i32
    return %c0_i32, %c0_i32_0 : i32, i32
  }
  func.func @transform_9(%arg0: i32) -> (i32, i32) {
    %c0_i32 = arith.constant 0 : i32
    %c0_i32_0 = arith.constant 0 : i32
    %c0_i32_1 = arith.constant 0 : i32
    return %c0_i32, %c0_i32_0 : i32, i32
  }
  func.func @transform_10(%arg0: i32) -> (i32, i32) {
    %c0_i32 = arith.constant 0 : i32
    %c0_i32_0 = arith.constant 0 : i32
    %c0_i32_1 = arith.constant 0 : i32
    return %c0_i32, %c0_i32_0 : i32, i32
  }
  func.func @transform_11(%arg0: i32) -> (i32, i32) {
    %c0_i32 = arith.constant 0 : i32
    %c0_i32_0 = arith.constant 0 : i32
    %c0_i32_1 = arith.constant 0 : i32
    return %c0_i32, %c0_i32_0 : i32, i32
  }
  func.func @transform_12(%arg0: i32) -> (i32, i32) {
    %c0_i32 = arith.constant 0 : i32
    %c0_i32_0 = arith.constant 0 : i32
    %c0_i32_1 = arith.constant 0 : i32
    return %c0_i32, %c0_i32_0 : i32, i32
  }
  func.func @transform_13(%arg0: i32) -> (i32, i32) {
    %c0_i32 = arith.constant 0 : i32
    %c0_i32_0 = arith.constant 0 : i32
    %c0_i32_1 = arith.constant 0 : i32
    return %c0_i32, %c0_i32_0 : i32, i32
  }
  func.func @transform_14(%arg0: i32) -> (i32, i32) {
    %c0_i32 = arith.constant 0 : i32
    %c0_i32_0 = arith.constant 0 : i32
    %c0_i32_1 = arith.constant 0 : i32
    return %c0_i32, %c0_i32_0 : i32, i32
  }
  func.func @transform_15(%arg0: i32) -> (i32, i32, i32) {
    %c0_i32 = arith.constant 0 : i32
    %c0_i32_0 = arith.constant 0 : i32
    %c0_i32_1 = arith.constant 0 : i32
    return %arg0, %c0_i32, %c0_i32_0 : i32, i32, i32
  }
}

</mosaic_0001>

<llo_original>
// kernel: cnn_backbone_forward.1
$region0: #{cnn_backbone_forward.1}
  #allocation0 [shape = 'u32[]', space=smem, size = 0x4, offset = 0x4, fixed_abs, tag = 'smem constant byte address 0x4 - core index']
  #allocation1 [shape = 'u32[144,128]{1,0:T(1,128)}', space=vmem, size = 0x12000, scoped, tag = 'internal scratch']
  %s0 = inlined_call_operand.vmem [shape: bf16[512,32], index: 0, kind: input, shape index: {}]
  %s1 = inlined_call_operand.vmem [shape: bf16[32,16], index: 1, kind: input, shape index: {}]
  %s2 = inlined_call_operand.vmem [shape: f32[1,16], index: 2, kind: input, shape index: {}]
  %s3 = inlined_call_operand.vmem [shape: bf16[1296,256], index: 3, kind: input, shape index: {}]
  %s4 = inlined_call_operand.vmem [shape: bf16[256,32], index: 4, kind: input, shape index: {}]
  %s5 = inlined_call_operand.vmem [shape: f32[1,32], index: 5, kind: input, shape index: {}]
  %s6 = inlined_call_operand.vmem [shape: bf16[400,81], index: 6, kind: input, shape index: {}]
  %s7 = inlined_call_operand.vmem [shape: bf16[512,64], index: 7, kind: input, shape index: {}]
  %s8 = inlined_call_operand.vmem [shape: f32[1,64], index: 8, kind: input, shape index: {}]
  %s9 = inlined_call_operand.vmem [shape: bf16[144,25], index: 9, kind: input, shape index: {}]
  %s10 = inlined_call_operand.vmem [shape: bf16[1024,128], index: 10, kind: input, shape index: {}]
  %s11 = inlined_call_operand.vmem [shape: f32[1,128], index: 11, kind: input, shape index: {}]
  %s12 = inlined_call_operand.vmem [shape: bf16[64,9], index: 12, kind: input, shape index: {}]
  %s13 = inlined_call_operand.vmem [shape: bf16[2048,256], index: 13, kind: input, shape index: {}]
  %s14 = inlined_call_operand.vmem [shape: f32[1,256], index: 14, kind: input, shape index: {}]
  %s15 = inlined_call_operand.vmem [shape: f32[2,4,256], index: 15, kind: output, shape index: {}]
  %s16 = sld [smem:[#allocation0]]
  $region93: #{cnn_backbone_forward.1} parent=0
    _
  %s18 = ssub.s32 1, %s16
  %s19 = scalar_select 0, %s18, %s16
  loop: start=0, step=1, limit=4
  $region2: #{cnn_backbone_forward.1} parent=0 // loop_pre_header
    _
  $region3: #{cnn_backbone_forward.1} parent=0 // loop_header
    %s21 = sphi 0, %s25
    %p22 = scmp.ge.s32.totalorder %s21, 4
    %s31 = sphi 0, %s33
    %s34 = sphi 0, %s31
    %s35 = sphi 0, %s34
    %s51 = sphi 0, %s35
    %s55 = sphi 0, %s55
    %s57 = sphi 0, %s55
    %s58 = sphi 0, %s57
    %s72 = sphi 0, %s58
    %s76 = sphi 0, %s76
    %s78 = sphi 0, %s76
    %s79 = sphi 0, %s78
    %s93 = sphi 0, %s79
    %s97 = sphi 0, %s97
    %s99 = sphi 0, %s97
    %s100 = sphi 0, %s99
    %s114 = sphi 0, %s100
    %s118 = sphi 0, %s118
    %s120 = sphi 0, %s118
    %s121 = sphi 0, %s120
    %s135 = sphi 0, %s121
    %s139 = sphi 0, %s139
    %s141 = sphi 0, %s139
    %s142 = sphi 0, %s141
    %s156 = sphi 0, %s142
    %s160 = sphi 0, %s160
    %s162 = sphi 0, %s160
    %s163 = sphi 0, %s162
    %s177 = sphi 0, %s163
    %s181 = sphi 0, %s181
    %s183 = sphi 0, %s181
    %s184 = sphi 0, %s183
    %s198 = sphi 0, %s184
    %s202 = sphi 0, %s202
    %s204 = sphi 0, %s202
    %s205 = sphi 0, %s204
    %s219 = sphi 0, %s205
    %s223 = sphi 0, %s223
    %s225 = sphi 0, %s223
    %s226 = sphi 0, %s225
    %s240 = sphi 0, %s226
    %s244 = sphi 0, %s244
    %s246 = sphi 0, %s244
    %s247 = sphi 0, %s246
    %s261 = sphi 0, %s247
    %s265 = sphi 0, %s265
    %s267 = sphi 0, %s265
    %s268 = sphi 0, %s267
    %s282 = sphi 0, %s268
    %s286 = sphi 0, %s286
    %s288 = sphi 0, %s286
    %s289 = sphi 0, %s288
    %s303 = sphi 0, %s289
    %s307 = sphi 0, %s307
    %s309 = sphi 0, %s307
    %s310 = sphi 0, %s309
    %s324 = sphi 0, %s310
    %s328 = sphi 0, %s328
    %s330 = sphi 0, %s328
    %s331 = sphi 0, %s330
    %s345 = sphi 0, %s331
    %s351 = sphi 0, %s353
    %s354 = sphi 0, %s351
    %s355 = sphi 0, %s354
    %s371 = sphi 0, %s355
  $region4: #{cnn_backbone_forward.1} parent=0 // loop_header_branch
    %24 = sbr.rel (%p22) target = $region8
  $region5: #{cnn_backbone_forward.1} parent=0 // loop_body
    %s26 = ssub.s32 %s21, 1
    %s27 = ssub.s32 %s21, 2
    %s28 = sadd.s32 %s21, 1
    %s29 = ssub.s32 %s21, %s28
    %p30 = scmp.eq.s32.totalorder %s29, 0
    %s32 = sadd.s32 %s31, 1
    %s33 = scalar_select %p30, %s31, %s32
    %p36 = pneg %p30
    %p37 = scmp.eq.s32.totalorder %s21, 1
    %p38 = por %p36, %p37
    %p39 = scmp.ne.s32.totalorder %s31, %s34
    %p40 = scmp.eq.s32.totalorder %s21, 0
    %p41 = por %p39, %p40
    %p42 = scmp.ne.s32.totalorder %s31, %s34
    %p43 = scmp.eq.s32.totalorder %s26, 1
    %p44 = por %p42, %p43
    %p45 = scmp.ne.s32.totalorder %s34, %s35
    %p46 = scmp.eq.s32.totalorder %s26, 0
    %p47 = por %p45, %p46
    %p48 = scmp.ne.s32.totalorder %s34, %s35
    %p49 = scmp.eq.s32.totalorder %s27, 1
    %p50 = por %p48, %p49
    %p52 = scmp.ne.s32.totalorder %s35, %s51
    %p53 = scmp.eq.s32.totalorder %s27, 0
    %p54 = por %p52, %p53
    %s56 = sadd.s32 %s55, 1
    %p59 = scmp.eq.s32.totalorder %s21, 1
    %p60 = scmp.ne.s32.totalorder %s55, %s57
    %p61 = scmp.eq.s32.totalorder %s21, 0
    %p62 = por %p60, %p61
    %p63 = scmp.ne.s32.totalorder %s55, %s57
    %p64 = scmp.eq.s32.totalorder %s26, 1
    %p65 = por %p63, %p64
    %p66 = scmp.ne.s32.totalorder %s57, %s58
    %p67 = scmp.eq.s32.totalorder %s26, 0
    %p68 = por %p66, %p67
    %p69 = scmp.ne.s32.totalorder %s57, %s58
    %p70 = scmp.eq.s32.totalorder %s27, 1
    %p71 = por %p69, %p70
    %p73 = scmp.ne.s32.totalorder %s58, %s72
    %p74 = scmp.eq.s32.totalorder %s27, 0
    %p75 = por %p73, %p74
    %s77 = sadd.s32 %s76, 1
    %p80 = scmp.eq.s32.totalorder %s21, 1
    %p81 = scmp.ne.s32.totalorder %s76, %s78
    %p82 = scmp.eq.s32.totalorder %s21, 0
    %p83 = por %p81, %p82
    %p84 = scmp.ne.s32.totalorder %s76, %s78
    %p85 = scmp.eq.s32.totalorder %s26, 1
    %p86 = por %p84, %p85
    %p87 = scmp.ne.s32.totalorder %s78, %s79
    %p88 = scmp.eq.s32.totalorder %s26, 0
    %p89 = por %p87, %p88
    %p90 = scmp.ne.s32.totalorder %s78, %s79
    %p91 = scmp.eq.s32.totalorder %s27, 1
    %p92 = por %p90, %p91
    %p94 = scmp.ne.s32.totalorder %s79, %s93
    %p95 = scmp.eq.s32.totalorder %s27, 0
    %p96 = por %p94, %p95
    %s98 = sadd.s32 %s97, 1
    %p101 = scmp.eq.s32.totalorder %s21, 1
    %p102 = scmp.ne.s32.totalorder %s97, %s99
    %p103 = scmp.eq.s32.totalorder %s21, 0
    %p104 = por %p102, %p103
    %p105 = scmp.ne.s32.totalorder %s97, %s99
    %p106 = scmp.eq.s32.totalorder %s26, 1
    %p107 = por %p105, %p106
    %p108 = scmp.ne.s32.totalorder %s99, %s100
    %p109 = scmp.eq.s32.totalorder %s26, 0
    %p110 = por %p108, %p109
    %p111 = scmp.ne.s32.totalorder %s99, %s100
    %p112 = scmp.eq.s32.totalorder %s27, 1
    %p113 = por %p111, %p112
    %p115 = scmp.ne.s32.totalorder %s100, %s114
    %p116 = scmp.eq.s32.totalorder %s27, 0
    %p117 = por %p115, %p116
    %s119 = sadd.s32 %s118, 1
    %p122 = scmp.eq.s32.totalorder %s21, 1
    %p123 = scmp.ne.s32.totalorder %s118, %s120
    %p124 = scmp.eq.s32.totalorder %s21, 0
    %p125 = por %p123, %p124
    %p126 = scmp.ne.s32.totalorder %s118, %s120
    %p127 = scmp.eq.s32.totalorder %s26, 1
    %p128 = por %p126, %p127
    %p129 = scmp.ne.s32.totalorder %s120, %s121
    %p130 = scmp.eq.s32.totalorder %s26, 0
    %p131 = por %p129, %p130
    %p132 = scmp.ne.s32.totalorder %s120, %s121
    %p133 = scmp.eq.s32.totalorder %s27, 1
    %p134 = por %p132, %p133
    %p136 = scmp.ne.s32.totalorder %s121, %s135
    %p137 = scmp.eq.s32.totalorder %s27, 0
    %p138 = por %p136, %p137
    %s140 = sadd.s32 %s139, 1
    %p143 = scmp.eq.s32.totalorder %s21, 1
    %p144 = scmp.ne.s32.totalorder %s139, %s141
    %p145 = scmp.eq.s32.totalorder %s21, 0
    %p146 = por %p144, %p145
    %p147 = scmp.ne.s32.totalorder %s139, %s141
    %p148 = scmp.eq.s32.totalorder %s26, 1
    %p149 = por %p147, %p148
    %p150 = scmp.ne.s32.totalorder %s141, %s142
    %p151 = scmp.eq.s32.totalorder %s26, 0
    %p152 = por %p150, %p151
    %p153 = scmp.ne.s32.totalorder %s141, %s142
    %p154 = scmp.eq.s32.totalorder %s27, 1
    %p155 = por %p153, %p154
    %p157 = scmp.ne.s32.totalorder %s142, %s156
    %p158 = scmp.eq.s32.totalorder %s27, 0
    %p159 = por %p157, %p158
    %s161 = sadd.s32 %s160, 1
    %p164 = scmp.eq.s32.totalorder %s21, 1
    %p165 = scmp.ne.s32.totalorder %s160, %s162
    %p166 = scmp.eq.s32.totalorder %s21, 0
    %p167 = por %p165, %p166
    %p168 = scmp.ne.s32.totalorder %s160, %s162
    %p169 = scmp.eq.s32.totalorder %s26, 1
    %p170 = por %p168, %p169
    %p171 = scmp.ne.s32.totalorder %s162, %s163
    %p172 = scmp.eq.s32.totalorder %s26, 0
    %p173 = por %p171, %p172
    %p174 = scmp.ne.s32.totalorder %s162, %s163
    %p175 = scmp.eq.s32.totalorder %s27, 1
    %p176 = por %p174, %p175
    %p178 = scmp.ne.s32.totalorder %s163, %s177
    %p179 = scmp.eq.s32.totalorder %s27, 0
    %p180 = por %p178, %p179
    %s182 = sadd.s32 %s181, 1
    %p185 = scmp.eq.s32.totalorder %s21, 1
    %p186 = scmp.ne.s32.totalorder %s181, %s183
    %p187 = scmp.eq.s32.totalorder %s21, 0
    %p188 = por %p186, %p187
    %p189 = scmp.ne.s32.totalorder %s181, %s183
    %p190 = scmp.eq.s32.totalorder %s26, 1
    %p191 = por %p189, %p190
    %p192 = scmp.ne.s32.totalorder %s183, %s184
    %p193 = scmp.eq.s32.totalorder %s26, 0
    %p194 = por %p192, %p193
    %p195 = scmp.ne.s32.totalorder %s183, %s184
    %p196 = scmp.eq.s32.totalorder %s27, 1
    %p197 = por %p195, %p196
    %p199 = scmp.ne.s32.totalorder %s184, %s198
    %p200 = scmp.eq.s32.totalorder %s27, 0
    %p201 = por %p199, %p200
    %s203 = sadd.s32 %s202, 1
    %p206 = scmp.eq.s32.totalorder %s21, 1
    %p207 = scmp.ne.s32.totalorder %s202, %s204
    %p208 = scmp.eq.s32.totalorder %s21, 0
    %p209 = por %p207, %p208
    %p210 = scmp.ne.s32.totalorder %s202, %s204
    %p211 = scmp.eq.s32.totalorder %s26, 1
    %p212 = por %p210, %p211
    %p213 = scmp.ne.s32.totalorder %s204, %s205
    %p214 = scmp.eq.s32.totalorder %s26, 0
    %p215 = por %p213, %p214
    %p216 = scmp.ne.s32.totalorder %s204, %s205
    %p217 = scmp.eq.s32.totalorder %s27, 1
    %p218 = por %p216, %p217
    %p220 = scmp.ne.s32.totalorder %s205, %s219
    %p221 = scmp.eq.s32.totalorder %s27, 0
    %p222 = por %p220, %p221
    %s224 = sadd.s32 %s223, 1
    %p227 = scmp.eq.s32.totalorder %s21, 1
    %p228 = scmp.ne.s32.totalorder %s223, %s225
    %p229 = scmp.eq.s32.totalorder %s21, 0
    %p230 = por %p228, %p229
    %p231 = scmp.ne.s32.totalorder %s223, %s225
    %p232 = scmp.eq.s32.totalorder %s26, 1
    %p233 = por %p231, %p232
    %p234 = scmp.ne.s32.totalorder %s225, %s226
    %p235 = scmp.eq.s32.totalorder %s26, 0
    %p236 = por %p234, %p235
    %p237 = scmp.ne.s32.totalorder %s225, %s226
    %p238 = scmp.eq.s32.totalorder %s27, 1
    %p239 = por %p237, %p238
    %p241 = scmp.ne.s32.totalorder %s226, %s240
    %p242 = scmp.eq.s32.totalorder %s27, 0
    %p243 = por %p241, %p242
    %s245 = sadd.s32 %s244, 1
    %p248 = scmp.eq.s32.totalorder %s21, 1
    %p249 = scmp.ne.s32.totalorder %s244, %s246
    %p250 = scmp.eq.s32.totalorder %s21, 0
    %p251 = por %p249, %p250
    %p252 = scmp.ne.s32.totalorder %s244, %s246
    %p253 = scmp.eq.s32.totalorder %s26, 1
    %p254 = por %p252, %p253
    %p255 = scmp.ne.s32.totalorder %s246, %s247
    %p256 = scmp.eq.s32.totalorder %s26, 0
    %p257 = por %p255, %p256
    %p258 = scmp.ne.s32.totalorder %s246, %s247
    %p259 = scmp.eq.s32.totalorder %s27, 1
    %p260 = por %p258, %p259
    %p262 = scmp.ne.s32.totalorder %s247, %s261
    %p263 = scmp.eq.s32.totalorder %s27, 0
    %p264 = por %p262, %p263
    %s266 = sadd.s32 %s265, 1
    %p269 = scmp.eq.s32.totalorder %s21, 1
    %p270 = scmp.ne.s32.totalorder %s265, %s267
    %p271 = scmp.eq.s32.totalorder %s21, 0
    %p272 = por %p270, %p271
    %p273 = scmp.ne.s32.totalorder %s265, %s267
    %p274 = scmp.eq.s32.totalorder %s26, 1
    %p275 = por %p273, %p274
    %p276 = scmp.ne.s32.totalorder %s267, %s268
    %p277 = scmp.eq.s32.totalorder %s26, 0
    %p278 = por %p276, %p277
    %p279 = scmp.ne.s32.totalorder %s267, %s268
    %p280 = scmp.eq.s32.totalorder %s27, 1
    %p281 = por %p279, %p280
    %p283 = scmp.ne.s32.totalorder %s268, %s282
    %p284 = scmp.eq.s32.totalorder %s27, 0
    %p285 = por %p283, %p284
    %s287 = sadd.s32 %s286, 1
    %p290 = scmp.eq.s32.totalorder %s21, 1
    %p291 = scmp.ne.s32.totalorder %s286, %s288
    %p292 = scmp.eq.s32.totalorder %s21, 0
    %p293 = por %p291, %p292
    %p294 = scmp.ne.s32.totalorder %s286, %s288
    %p295 = scmp.eq.s32.totalorder %s26, 1
    %p296 = por %p294, %p295
    %p297 = scmp.ne.s32.totalorder %s288, %s289
    %p298 = scmp.eq.s32.totalorder %s26, 0
    %p299 = por %p297, %p298
    %p300 = scmp.ne.s32.totalorder %s288, %s289
    %p301 = scmp.eq.s32.totalorder %s27, 1
    %p302 = por %p300, %p301
    %p304 = scmp.ne.s32.totalorder %s289, %s303
    %p305 = scmp.eq.s32.totalorder %s27, 0
    %p306 = por %p304, %p305
    %s308 = sadd.s32 %s307, 1
    %p311 = scmp.eq.s32.totalorder %s21, 1
    %p312 = scmp.ne.s32.totalorder %s307, %s309
    %p313 = scmp.eq.s32.totalorder %s21, 0
    %p314 = por %p312, %p313
    %p315 = scmp.ne.s32.totalorder %s307, %s309
    %p316 = scmp.eq.s32.totalorder %s26, 1
    %p317 = por %p315, %p316
    %p318 = scmp.ne.s32.totalorder %s309, %s310
    %p319 = scmp.eq.s32.totalorder %s26, 0
    %p320 = por %p318, %p319
    %p321 = scmp.ne.s32.totalorder %s309, %s310
    %p322 = scmp.eq.s32.totalorder %s27, 1
    %p323 = por %p321, %p322
    %p325 = scmp.ne.s32.totalorder %s310, %s324
    %p326 = scmp.eq.s32.totalorder %s27, 0
    %p327 = por %p325, %p326
    %s329 = sadd.s32 %s328, 1
    %p332 = scmp.eq.s32.totalorder %s21, 1
    %p333 = scmp.ne.s32.totalorder %s328, %s330
    %p334 = scmp.eq.s32.totalorder %s21, 0
    %p335 = por %p333, %p334
    %p336 = scmp.ne.s32.totalorder %s328, %s330
    %p337 = scmp.eq.s32.totalorder %s26, 1
    %p338 = por %p336, %p337
    %p339 = scmp.ne.s32.totalorder %s330, %s331
    %p340 = scmp.eq.s32.totalorder %s26, 0
    %p341 = por %p339, %p340
    %p342 = scmp.ne.s32.totalorder %s330, %s331
    %p343 = scmp.eq.s32.totalorder %s27, 1
    %p344 = por %p342, %p343
    %p346 = scmp.ne.s32.totalorder %s331, %s345
    %p347 = scmp.eq.s32.totalorder %s27, 0
    %p348 = por %p346, %p347
    %s349 = ssub.s32 %s21, %s28
    %p350 = scmp.eq.s32.totalorder %s349, 0
    %s352 = sadd.s32 %s351, 1
    %s353 = scalar_select %p350, %s351, %s352
    %p356 = pneg %p350
    %p357 = scmp.eq.s32.totalorder %s21, 1
    %p358 = por %p356, %p357
    %p359 = scmp.ne.s32.totalorder %s351, %s354
    %p360 = scmp.eq.s32.totalorder %s21, 0
    %p361 = por %p359, %p360
    %p362 = scmp.ne.s32.totalorder %s351, %s354
    %p363 = scmp.eq.s32.totalorder %s26, 1
    %p364 = por %p362, %p363
    %p365 = scmp.ne.s32.totalorder %s354, %s355
    %p366 = scmp.eq.s32.totalorder %s26, 0
    %p367 = por %p365, %p366
    %p368 = scmp.ne.s32.totalorder %s354, %s355
    %p369 = scmp.eq.s32.totalorder %s27, 1
    %p370 = por %p368, %p369
    %p372 = scmp.ne.s32.totalorder %s355, %s371
    %p373 = scmp.eq.s32.totalorder %s27, 0
    %p374 = por %p372, %p373
    %p375 = scmp.le.s32.totalorder 1, %s21
    %p376 = scmp.lt.s32.totalorder %s21, 3
    %p377 = pnand %p375, %p376
    %p378 = pneg %p377
    // Predicated region
    $region9: #{cnn_backbone_forward.1} parent=5 // pred_check
      _
    $region10: #{cnn_backbone_forward.1} parent=5 // pred_check_branch
      %380 = sbr.rel (%p377) target = $region12
    $region11: #{cnn_backbone_forward.1} parent=5 // pred_region
      %s381 = ssub.s32 %s21, 1
      // Predicated region
      $region13: #{cnn_backbone_forward.1} parent=11 // pred_check
        %p382 = pneg %p68
      $region14: #{cnn_backbone_forward.1} parent=11 // pred_check_branch
        %384 = sbr.rel (%p382) target = $region16
      $region15: #{cnn_backbone_forward.1} parent=11 // pred_region
        _
      $region16: #{cnn_backbone_forward.1} parent=11 // pred_fallthru
        _
      // Predicated region
      $region17: #{cnn_backbone_forward.1} parent=11 // pred_check
        %p385 = pneg %p89
      $region18: #{cnn_backbone_forward.1} parent=11 // pred_check_branch
        %387 = sbr.rel (%p385) target = $region20
      $region19: #{cnn_backbone_forward.1} parent=11 // pred_region
        _
      $region20: #{cnn_backbone_forward.1} parent=11 // pred_fallthru
        _
      // Predicated region
      $region21: #{cnn_backbone_forward.1} parent=11 // pred_check
        %p388 = pneg %p110
      $region22: #{cnn_backbone_forward.1} parent=11 // pred_check_branch
        %390 = sbr.rel (%p388) target = $region24
      $region23: #{cnn_backbone_forward.1} parent=11 // pred_region
        _
      $region24: #{cnn_backbone_forward.1} parent=11 // pred_fallthru
        _
      // Predicated region
      $region25: #{cnn_backbone_forward.1} parent=11 // pred_check
        %p391 = pneg %p131
      $region26: #{cnn_backbone_forward.1} parent=11 // pred_check_branch
        %393 = sbr.rel (%p391) target = $region28
      $region27: #{cnn_backbone_forward.1} parent=11 // pred_region
        _
      $region28: #{cnn_backbone_forward.1} parent=11 // pred_fallthru
        _
      // Predicated region
      $region29: #{cnn_backbone_forward.1} parent=11 // pred_check
        %p394 = pneg %p152
      $region30: #{cnn_backbone_forward.1} parent=11 // pred_check_branch
        %396 = sbr.rel (%p394) target = $region32
      $region31: #{cnn_backbone_forward.1} parent=11 // pred_region
        _
      $region32: #{cnn_backbone_forward.1} parent=11 // pred_fallthru
        _
      // Predicated region
      $region33: #{cnn_backbone_forward.1} parent=11 // pred_check
        %p397 = pneg %p173
      $region34: #{cnn_backbone_forward.1} parent=11 // pred_check_branch
        %399 = sbr.rel (%p397) target = $region36
      $region35: #{cnn_backbone_forward.1} parent=11 // pred_region
        _
      $region36: #{cnn_backbone_forward.1} parent=11 // pred_fallthru
        _
      // Predicated region
      $region37: #{cnn_backbone_forward.1} parent=11 // pred_check
        %p400 = pneg %p194
      $region38: #{cnn_backbone_forward.1} parent=11 // pred_check_branch
        %402 = sbr.rel (%p400) target = $region40
      $region39: #{cnn_backbone_forward.1} parent=11 // pred_region
        _
      $region40: #{cnn_backbone_forward.1} parent=11 // pred_fallthru
        _
      // Predicated region
      $region41: #{cnn_backbone_forward.1} parent=11 // pred_check
        %p403 = pneg %p215
      $region42: #{cnn_backbone_forward.1} parent=11 // pred_check_branch
        %405 = sbr.rel (%p403) target = $region44
      $region43: #{cnn_backbone_forward.1} parent=11 // pred_region
        _
      $region44: #{cnn_backbone_forward.1} parent=11 // pred_fallthru
        _
      // Predicated region
      $region45: #{cnn_backbone_forward.1} parent=11 // pred_check
        %p406 = pneg %p236
      $region46: #{cnn_backbone_forward.1} parent=11 // pred_check_branch
        %408 = sbr.rel (%p406) target = $region48
      $region47: #{cnn_backbone_forward.1} parent=11 // pred_region
        _
      $region48: #{cnn_backbone_forward.1} parent=11 // pred_fallthru
        _
      // Predicated region
      $region49: #{cnn_backbone_forward.1} parent=11 // pred_check
        %p409 = pneg %p257
      $region50: #{cnn_backbone_forward.1} parent=11 // pred_check_branch
        %411 = sbr.rel (%p409) target = $region52
      $region51: #{cnn_backbone_forward.1} parent=11 // pred_region
        _
      $region52: #{cnn_backbone_forward.1} parent=11 // pred_fallthru
        _
      // Predicated region
      $region53: #{cnn_backbone_forward.1} parent=11 // pred_check
        %p412 = pneg %p278
      $region54: #{cnn_backbone_forward.1} parent=11 // pred_check_branch
        %414 = sbr.rel (%p412) target = $region56
      $region55: #{cnn_backbone_forward.1} parent=11 // pred_region
        _
      $region56: #{cnn_backbone_forward.1} parent=11 // pred_fallthru
        _
      // Predicated region
      $region57: #{cnn_backbone_forward.1} parent=11 // pred_check
        %p415 = pneg %p299
      $region58: #{cnn_backbone_forward.1} parent=11 // pred_check_branch
        %417 = sbr.rel (%p415) target = $region60
      $region59: #{cnn_backbone_forward.1} parent=11 // pred_region
        _
      $region60: #{cnn_backbone_forward.1} parent=11 // pred_fallthru
        _
      // Predicated region
      $region61: #{cnn_backbone_forward.1} parent=11 // pred_check
        %p418 = pneg %p320
      $region62: #{cnn_backbone_forward.1} parent=11 // pred_check_branch
        %420 = sbr.rel (%p418) target = $region64
      $region63: #{cnn_backbone_forward.1} parent=11 // pred_region
        _
      $region64: #{cnn_backbone_forward.1} parent=11 // pred_fallthru
        _
      // Predicated region
      $region65: #{cnn_backbone_forward.1} parent=11 // pred_check
        %p421 = pneg %p341
      $region66: #{cnn_backbone_forward.1} parent=11 // pred_check_branch
        %423 = sbr.rel (%p421) target = $region68
      $region67: #{cnn_backbone_forward.1} parent=11 // pred_region
        _
      $region68: #{cnn_backbone_forward.1} parent=11 // pred_fallthru
        _
    $region12: #{cnn_backbone_forward.1} parent=5 // pred_fallthru
      _
    %p424 = scmp.lt.s32.totalorder %s21, 2
    // Predicated region
    $region69: #{cnn_backbone_forward.1} parent=5 // pred_check
      %p425 = pneg %p424
    $region70: #{cnn_backbone_forward.1} parent=5 // pred_check_branch
      %427 = sbr.rel (%p425) target = $region72
    $region71: #{cnn_backbone_forward.1} parent=5 // pred_region
      // Predicated region
      $region73: #{cnn_backbone_forward.1} parent=71 // pred_check
        %p428 = pneg %p41
      $region74: #{cnn_backbone_forward.1} parent=71 // pred_check_branch
        %430 = sbr.rel (%p428) target = $region76
      $region75: #{cnn_backbone_forward.1} parent=71 // pred_region
        %s431 = smul.u32 32, %s21
        %p432 = scmp.lt.s32.totalorder %s431, 63
        %s433 = scalar_select %p432, %s431, 63
        %s434 = smul.addr %s433, 4
        %s435 = scalar_lea.vmem %s0, %s434
        %s436 = smul.u32 32, %s21
      $region76: #{cnn_backbone_forward.1} parent=71 // pred_fallthru
        _
    $region72: #{cnn_backbone_forward.1} parent=5 // pred_fallthru
      _
    %p437 = scmp.le.s32.totalorder 1, %s21
    %p438 = scmp.lt.s32.totalorder %s21, 3
    %p439 = pnand %p437, %p438
    %p440 = pneg %p439
    // Predicated region
    $region77: #{cnn_backbone_forward.1} parent=5 // pred_check
      _
    $region78: #{cnn_backbone_forward.1} parent=5 // pred_check_branch
      %442 = sbr.rel (%p439) target = $region80
    $region79: #{cnn_backbone_forward.1} parent=5 // pred_region
      %s443 = ssub.s32 %s21, 1
      %s444 = smul.u32 32, %s26
      %p445 = scmp.lt.s32.totalorder %s444, 63
      %s446 = scalar_select %p445, %s444, 63
      %s447 = smul.addr %s446, 4
      %s448 = scalar_lea.vmem %s0, %s447
      %p449 = pneg %p47
      %p450 = pneg %p44
      %p451 = pneg %p68
      %p452 = pneg %p65
      %p453 = pneg %p89
      %p454 = pneg %p86
      %p455 = pneg %p110
      %p456 = pneg %p107
      %p457 = pneg %p131
      %p458 = pneg %p128
      %p459 = pneg %p152
      %p460 = pneg %p149
      %p461 = pneg %p173
      %p462 = pneg %p170
      %p463 = pneg %p194
      %p464 = pneg %p191
      %p465 = pneg %p215
      %p466 = pneg %p212
      %p467 = pneg %p236
      %p468 = pneg %p233
      %p469 = pneg %p257
      %p470 = pneg %p254
      %p471 = pneg %p278
      %p472 = pneg %p275
      %p473 = pneg %p299
      %p474 = pneg %p296
      %p475 = pneg %p320
      %p476 = pneg %p317
      %p477 = pneg %p341
      %p478 = pneg %p338
      %p479 = pneg %p367
      %p480 = pneg %p364
      %p481 = scmp.lt.s32.totalorder %s26, 1
      %s482 = scalar_select %p481, %s26, 1
      %s483 = smul.addr %s482, 2
      %s484 = smul.addr %s483, 4
      %s485 = scalar_lea.vmem %s15, %s484
      %s486 = smul.u32 32, %s26
      %p487 = scmp.lt.s32.totalorder %s486, 63
      %s488 = scalar_select %p487, %s486, 63
      %s489 = smul.addr %s488, 4
      %s490 = scalar_lea.vmem %s0, %s489
      %s491 = smul.u32 32, %s26
      %p492 = scmp.lt.s32.totalorder %s26, 1
      %s493 = scalar_select %p492, %s26, 1
      %s494 = smul.addr %s493, 2
      %s495 = smul.addr %s494, 4
      %s496 = scalar_lea.vmem %s15, %s495
      %v498 = vld [vmem:[%s490] sm:$0xf]
      %v499 = vld [vmem:[%s490 + $0x4] sm:$0xf]
      %v500 = vld [vmem:[%s490 + $0x8] sm:$0xf]
      %v501 = vld [vmem:[%s490 + $0xc] sm:$0xf]
      %v502 = vld [vmem:[%s490 + $0x10] sm:$0xf]
      %v503 = vld [vmem:[%s490 + $0x14] sm:$0xf]
      %v504 = vld [vmem:[%s490 + $0x18] sm:$0xf]
      %v505 = vld [vmem:[%s490 + $0x1c] sm:$0xf]
      %v506 = vld [vmem:[%s490 + $0x20] sm:$0xf]
      %v507 = vld [vmem:[%s490 + $0x24] sm:$0xf]
      %v508 = vld [vmem:[%s490 + $0x28] sm:$0xf]
      %v509 = vld [vmem:[%s490 + $0x2c] sm:$0xf]
      %v510 = vld [vmem:[%s490 + $0x30] sm:$0xf]
      %v511 = vld [vmem:[%s490 + $0x34] sm:$0xf]
      %v512 = vld [vmem:[%s490 + $0x38] sm:$0xf]
      %v513 = vld [vmem:[%s490 + $0x3c] sm:$0xf]
      %v514 = vld [vmem:[%s490 + $0x40] sm:$0xf]
      %v515 = vld [vmem:[%s490 + $0x44] sm:$0xf]
      %v516 = vld [vmem:[%s490 + $0x48] sm:$0xf]
      %v517 = vld [vmem:[%s490 + $0x4c] sm:$0xf]
      %v518 = vld [vmem:[%s490 + $0x50] sm:$0xf]
      %v519 = vld [vmem:[%s490 + $0x54] sm:$0xf]
      %v520 = vld [vmem:[%s490 + $0x58] sm:$0xf]
      %v521 = vld [vmem:[%s490 + $0x5c] sm:$0xf]
      %v522 = vld [vmem:[%s490 + $0x60] sm:$0xf]
      %v523 = vld [vmem:[%s490 + $0x64] sm:$0xf]
      %v524 = vld [vmem:[%s490 + $0x68] sm:$0xf]
      %v525 = vld [vmem:[%s490 + $0x6c] sm:$0xf]
      %v526 = vld [vmem:[%s490 + $0x70] sm:$0xf]
      %v527 = vld [vmem:[%s490 + $0x74] sm:$0xf]
      %v528 = vld [vmem:[%s490 + $0x78] sm:$0xf]
      %v529 = vld [vmem:[%s490 + $0x7c] sm:$0xf]
      %v530 = vld [vmem:[%s1] sm:$0xf]
      %v531 = vld [vmem:[%s1 + $0x4] sm:$0xf]
      %v532 = vld [vmem:[%s1 + $0x8] sm:$0xf]
      %v533 = vld [vmem:[%s1 + $0xc] sm:$0xf]
      %v534 = vld [vmem:[%s2] sm:$0x1]
      %v536 = vlaneseq
      %v537 = vshrl.u32 %v536, 7
      %v538 = vsub.s32 0, %v537
      %v539 = vrot.slane %v534, %v538
      %v573 = vunpack.c.l.b16 %v498
      %v574 = vunpack.c.l.b16 %v499
      %v575 = vunpack.c.l.b16 %v500
      %v576 = vunpack.c.l.b16 %v501
      %v577 = vunpack.c.l.b16 %v502
      %v578 = vunpack.c.l.b16 %v503
      %v579 = vunpack.c.l.b16 %v504
      %v580 = vunpack.c.l.b16 %v505
      %v581 = vunpack.c.l.b16 %v506
      %v582 = vunpack.c.l.b16 %v507
      %v583 = vunpack.c.l.b16 %v508
      %v584 = vunpack.c.l.b16 %v509
      %v585 = vunpack.c.l.b16 %v510
      %v586 = vunpack.c.l.b16 %v511
      %v587 = vunpack.c.l.b16 %v512
      %v588 = vunpack.c.l.b16 %v513
      %v589 = vunpack.c.l.b16 %v514
      %v590 = vunpack.c.l.b16 %v515
      %v591 = vunpack.c.l.b16 %v516
      %v592 = vunpack.c.l.b16 %v517
      %v593 = vunpack.c.l.b16 %v518
      %v594 = vunpack.c.l.b16 %v519
      %v595 = vunpack.c.l.b16 %v520
      %v596 = vunpack.c.l.b16 %v521
      %v597 = vunpack.c.l.b16 %v522
      %v598 = vunpack.c.l.b16 %v523
      %v599 = vunpack.c.l.b16 %v524
      %v600 = vunpack.c.l.b16 %v525
      %v601 = vunpack.c.l.b16 %v526
      %v602 = vunpack.c.l.b16 %v527
      %v603 = vunpack.c.l.b16 %v528
      %v604 = vunpack.c.l.b16 %v529
      %v605 = vpack.c.b16 %v574, %v573
      %v606 = vpack.c.b16 %v576, %v575
      %v607 = vpack.c.b16 %v578, %v577
      %v608 = vpack.c.b16 %v580, %v579
      %v609 = vpack.c.b16 %v582, %v581
      %v610 = vpack.c.b16 %v584, %v583
      %v611 = vpack.c.b16 %v586, %v585
      %v612 = vpack.c.b16 %v588, %v587
      %v613 = vpack.c.b16 %v590, %v589
      %v614 = vpack.c.b16 %v592, %v591
      %v615 = vpack.c.b16 %v594, %v593
      %v616 = vpack.c.b16 %v596, %v595
      %v617 = vpack.c.b16 %v598, %v597
      %v618 = vpack.c.b16 %v600, %v599
      %v619 = vpack.c.b16 %v602, %v601
      %v620 = vpack.c.b16 %v604, %v603
      %v625 = vunpack.c.l.b16 %v530
      %v626 = vunpack.c.l.b16 %v531
      %v627 = vunpack.c.l.b16 %v532
      %v628 = vunpack.c.l.b16 %v533
      %v629 = vpack.c.b16 %v626, %v625
      %v630 = vpack.c.b16 %v628, %v627
      %vm633 = vcmask 261120
      %v635 = vsel %vm633, %v605, 0
      %v638 = vsel %vm633, %v606, 0
      %v641 = vsel %vm633, %v607, 0
      %v644 = vsel %vm633, %v608, 0
      %v647 = vsel %vm633, %v609, 0
      %v650 = vsel %vm633, %v610, 0
      %v653 = vsel %vm633, %v611, 0
      %v656 = vsel %vm633, %v612, 0
      %v659 = vsel %vm633, %v613, 0
      %v662 = vsel %vm633, %v614, 0
      %v665 = vsel %vm633, %v615, 0
      %v668 = vsel %vm633, %v616, 0
      %v671 = vsel %vm633, %v617, 0
      %v674 = vsel %vm633, %v618, 0
      %v677 = vsel %vm633, %v619, 0
      %v680 = vsel %vm633, %v620, 0
      %682 = vmatprep.subr.bf16.mxu0 0
      %683 = vmatpush1.bf16.msra.mxu0 %v629
      %684 = vmatprep.subr.bf16.mxu0 0
      %685 = vmatpush1.bf16.msra.mxu0 %v630
      %686 = vmatprep.subr.bf16.mxu0 0
      %687 = vmatpush1.bf16.msra.mxu0 0
      %688 = vmatprep.subr.bf16.mxu0 0
      %689 = vmatpush1.bf16.msra.mxu0 0
      %690 = vmatprep.subr.bf16.mxu0 0
      %691 = vmatpush1.bf16.msra.mxu0 0
      %692 = vmatprep.subr.bf16.mxu0 0
      %693 = vmatpush1.bf16.msra.mxu0 0
      %694 = vmatprep.subr.bf16.mxu0 0
      %695 = vmatpush1.bf16.msra.mxu0 0
      %696 = vmatprep.subr.bf16.mxu0 0
      %697 = vmatpush1.bf16.msra.mxu0 0
      %698 = vmatprep.subr.bf16.mxu0 0
      %699 = vmatpush1.bf16.msra.mxu0 0
      %700 = vmatprep.subr.bf16.mxu0 0
      %701 = vmatpush1.bf16.msra.mxu0 0
      %702 = vmatprep.subr.bf16.mxu0 0
      %703 = vmatpush1.bf16.msra.mxu0 0
      %704 = vmatprep.subr.bf16.mxu0 0
      %705 = vmatpush1.bf16.msra.mxu0 0
      %706 = vmatprep.subr.bf16.mxu0 0
      %707 = vmatpush1.bf16.msra.mxu0 0
      %708 = vmatprep.subr.bf16.mxu0 0
      %709 = vmatpush1.bf16.msra.mxu0 0
      %710 = vmatprep.subr.bf16.mxu0 0
      %711 = vmatpush1.bf16.msra.mxu0 0
      %712 = vmatprep.subr.bf16.mxu0 0
      %713 = vmatpush1.bf16.msra.mxu0 0
      %714 = vmatprep.mubr.bf16.mxu0 0
      %715 = vmatmul.mubr.bf16.gmra.mrb[0].mxu0 %v635
      %v716 = vpop.f32.mrb[0].mxu0
      %v717 = vadd.f32 %v539, %v716
      %v718 = vpop.f32.mrb[0].mxu0
      %v719 = vpop.f32.mrb[0].mxu0
      %v720 = vadd.f32 %v539, %v719
      %v721 = vpop.f32.mrb[0].mxu0
      %722 = vmatprep.mubr.bf16.mxu0 0
      %723 = vmatmul.mubr.bf16.gmra.mrb[0].mxu0 %v638
      %v724 = vpop.f32.mrb[0].mxu0
      %v725 = vadd.f32 %v539, %v724
      %v726 = vpop.f32.mrb[0].mxu0
      %v727 = vpop.f32.mrb[0].mxu0
      %v728 = vadd.f32 %v539, %v727
      %v729 = vpop.f32.mrb[0].mxu0
      %730 = vmatprep.mubr.bf16.mxu0 0
      %731 = vmatmul.mubr.bf16.gmra.mrb[0].mxu0 %v641
      %v732 = vpop.f32.mrb[0].mxu0
      %v733 = vadd.f32 %v539, %v732
      %v734 = vpop.f32.mrb[0].mxu0
      %v735 = vpop.f32.mrb[0].mxu0
      %v736 = vadd.f32 %v539, %v735
      %v737 = vpop.f32.mrb[0].mxu0
      %738 = vmatprep.mubr.bf16.mxu0 0
      %739 = vmatmul.mubr.bf16.gmra.mrb[0].mxu0 %v644
      %v740 = vpop.f32.mrb[0].mxu0
      %v741 = vadd.f32 %v539, %v740
      %v742 = vpop.f32.mrb[0].mxu0
      %v743 = vpop.f32.mrb[0].mxu0
      %v744 = vadd.f32 %v539, %v743
      %v745 = vpop.f32.mrb[0].mxu0
      %746 = vmatprep.mubr.bf16.mxu0 0
      %747 = vmatmul.mubr.bf16.gmra.mrb[0].mxu0 %v647
      %v748 = vpop.f32.mrb[0].mxu0
      %v749 = vadd.f32 %v539, %v748
      %v750 = vpop.f32.mrb[0].mxu0
      %v751 = vpop.f32.mrb[0].mxu0
      %v752 = vadd.f32 %v539, %v751
      %v753 = vpop.f32.mrb[0].mxu0
      %754 = vmatprep.mubr.bf16.mxu0 0
      %755 = vmatmul.mubr.bf16.gmra.mrb[0].mxu0 %v650
      %v756 = vpop.f32.mrb[0].mxu0
      %v757 = vadd.f32 %v539, %v756
      %v758 = vpop.f32.mrb[0].mxu0
      %v759 = vpop.f32.mrb[0].mxu0
      %v760 = vadd.f32 %v539, %v759
      %v761 = vpop.f32.mrb[0].mxu0
      %762 = vmatprep.mubr.bf16.mxu0 0
      %763 = vmatmul.mubr.bf16.gmra.mrb[0].mxu0 %v653
      %v764 = vpop.f32.mrb[0].mxu0
      %v765 = vadd.f32 %v539, %v764
      %v766 = vpop.f32.mrb[0].mxu0
      %v767 = vpop.f32.mrb[0].mxu0
      %v768 = vadd.f32 %v539, %v767
      %v769 = vpop.f32.mrb[0].mxu0
      %770 = vmatprep.mubr.bf16.mxu0 0
      %771 = vmatmul.mubr.bf16.gmra.mrb[0].mxu0 %v656
      %v772 = vpop.f32.mrb[0].mxu0
      %v773 = vadd.f32 %v539, %v772
      %v774 = vpop.f32.mrb[0].mxu0
      %v775 = vpop.f32.mrb[0].mxu0
      %v776 = vadd.f32 %v539, %v775
      %v777 = vpop.f32.mrb[0].mxu0
      %778 = vmatprep.mubr.bf16.mxu0 0
      %779 = vmatmul.mubr.bf16.gmra.mrb[0].mxu0 %v659
      %v780 = vpop.f32.mrb[0].mxu0
      %v781 = vadd.f32 %v539, %v780
      %v782 = vpop.f32.mrb[0].mxu0
      %v783 = vpop.f32.mrb[0].mxu0
      %v784 = vadd.f32 %v539, %v783
      %v785 = vpop.f32.mrb[0].mxu0
      %786 = vmatprep.mubr.bf16.mxu0 0
      %787 = vmatmul.mubr.bf16.gmra.mrb[0].mxu0 %v662
      %v788 = vpop.f32.mrb[0].mxu0
      %v789 = vadd.f32 %v539, %v788
      %v790 = vpop.f32.mrb[0].mxu0
      %v791 = vpop.f32.mrb[0].mxu0
      %v792 = vadd.f32 %v539, %v791
      %v793 = vpop.f32.mrb[0].mxu0
      %794 = vmatprep.mubr.bf16.mxu0 0
      %795 = vmatmul.mubr.bf16.gmra.mrb[0].mxu0 %v665
      %v796 = vpop.f32.mrb[0].mxu0
      %v797 = vadd.f32 %v539, %v796
      %v798 = vpop.f32.mrb[0].mxu0
      %v799 = vpop.f32.mrb[0].mxu0
      %v800 = vadd.f32 %v539, %v799
      %v801 = vpop.f32.mrb[0].mxu0
      %802 = vmatprep.mubr.bf16.mxu0 0
      %803 = vmatmul.mubr.bf16.gmra.mrb[0].mxu0 %v668
      %v804 = vpop.f32.mrb[0].mxu0
      %v805 = vadd.f32 %v539, %v804
      %v806 = vpop.f32.mrb[0].mxu0
      %v807 = vpop.f32.mrb[0].mxu0
      %v808 = vadd.f32 %v539, %v807
      %v809 = vpop.f32.mrb[0].mxu0
      %810 = vmatprep.mubr.bf16.mxu0 0
      %811 = vmatmul.mubr.bf16.gmra.mrb[0].mxu0 %v671
      %v812 = vpop.f32.mrb[0].mxu0
      %v813 = vadd.f32 %v539, %v812
      %v814 = vpop.f32.mrb[0].mxu0
      %v815 = vpop.f32.mrb[0].mxu0
      %v816 = vadd.f32 %v539, %v815
      %v817 = vpop.f32.mrb[0].mxu0
      %818 = vmatprep.mubr.bf16.mxu0 0
      %819 = vmatmul.mubr.bf16.gmra.mrb[0].mxu0 %v674
      %v820 = vpop.f32.mrb[0].mxu0
      %v821 = vadd.f32 %v539, %v820
      %v822 = vpop.f32.mrb[0].mxu0
      %v823 = vpop.f32.mrb[0].mxu0
      %v824 = vadd.f32 %v539, %v823
      %v825 = vpop.f32.mrb[0].mxu0
      %826 = vmatprep.mubr.bf16.mxu0 0
      %827 = vmatmul.mubr.bf16.gmra.mrb[0].mxu0 %v677
      %v828 = vpop.f32.mrb[0].mxu0
      %v829 = vadd.f32 %v539, %v828
      %v830 = vpop.f32.mrb[0].mxu0
      %v831 = vpop.f32.mrb[0].mxu0
      %v832 = vadd.f32 %v539, %v831
      %v833 = vpop.f32.mrb[0].mxu0
      %834 = vmatprep.mubr.bf16.mxu0 0
      %835 = vmatmul.mubr.bf16.gmra.mrb[0].mxu0 %v680
      %v836 = vpop.f32.mrb[0].mxu0
      %v837 = vadd.f32 %v539, %v836
      %v838 = vpop.f32.mrb[0].mxu0
      %v839 = vpop.f32.mrb[0].mxu0
      %v840 = vadd.f32 %v539, %v839
      %v841 = vpop.f32.mrb[0].mxu0
      %842 = vdwg.mxu0
      %vm843 = vcmp.ge.f32.partialorder %v717, 0.0
      %vm844 = vcmp.ge.f32.partialorder %v720, 0.0
      %vm845 = vcmp.ge.f32.partialorder %v725, 0.0
      %vm846 = vcmp.ge.f32.partialorder %v728, 0.0
      %vm847 = vcmp.ge.f32.partialorder %v733, 0.0
      %vm848 = vcmp.ge.f32.partialorder %v736, 0.0
      %vm849 = vcmp.ge.f32.partialorder %v741, 0.0
      %vm850 = vcmp.ge.f32.partialorder %v744, 0.0
      %vm851 = vcmp.ge.f32.partialorder %v749, 0.0
      %vm852 = vcmp.ge.f32.partialorder %v752, 0.0
      %vm853 = vcmp.ge.f32.partialorder %v757, 0.0
      %vm854 = vcmp.ge.f32.partialorder %v760, 0.0
      %vm855 = vcmp.ge.f32.partialorder %v765, 0.0
      %vm856 = vcmp.ge.f32.partialorder %v768, 0.0
      %vm857 = vcmp.ge.f32.partialorder %v773, 0.0
      %vm858 = vcmp.ge.f32.partialorder %v776, 0.0
      %vm859 = vcmp.ge.f32.partialorder %v781, 0.0
      %vm860 = vcmp.ge.f32.partialorder %v784, 0.0
      %vm861 = vcmp.ge.f32.partialorder %v789, 0.0
      %vm862 = vcmp.ge.f32.partialorder %v792, 0.0
      %vm863 = vcmp.ge.f32.partialorder %v797, 0.0
      %vm864 = vcmp.ge.f32.partialorder %v800, 0.0
      %vm865 = vcmp.ge.f32.partialorder %v805, 0.0
      %vm866 = vcmp.ge.f32.partialorder %v808, 0.0
      %vm867 = vcmp.ge.f32.partialorder %v813, 0.0
      %vm868 = vcmp.ge.f32.partialorder %v816, 0.0
      %vm869 = vcmp.ge.f32.partialorder %v821, 0.0
      %vm870 = vcmp.ge.f32.partialorder %v824, 0.0
      %vm871 = vcmp.ge.f32.partialorder %v829, 0.0
      %vm872 = vcmp.ge.f32.partialorder %v832, 0.0
      %vm873 = vcmp.ge.f32.partialorder %v837, 0.0
      %vm874 = vcmp.ge.f32.partialorder %v840, 0.0
      %v875 = vmul.f32 %v717, 0.1
      %v876 = vmul.f32 %v720, 0.1
      %v877 = vmul.f32 %v725, 0.1
      %v878 = vmul.f32 %v728, 0.1
      %v879 = vmul.f32 %v733, 0.1
      %v880 = vmul.f32 %v736, 0.1
      %v881 = vmul.f32 %v741, 0.1
      %v882 = vmul.f32 %v744, 0.1
      %v883 = vmul.f32 %v749, 0.1
      %v884 = vmul.f32 %v752, 0.1
      %v885 = vmul.f32 %v757, 0.1
      %v886 = vmul.f32 %v760, 0.1
      %v887 = vmul.f32 %v765, 0.1
      %v888 = vmul.f32 %v768, 0.1
      %v889 = vmul.f32 %v773, 0.1
      %v890 = vmul.f32 %v776, 0.1
      %v891 = vmul.f32 %v781, 0.1
      %v892 = vmul.f32 %v784, 0.1
      %v893 = vmul.f32 %v789, 0.1
      %v894 = vmul.f32 %v792, 0.1
      %v895 = vmul.f32 %v797, 0.1
      %v896 = vmul.f32 %v800, 0.1
      %v897 = vmul.f32 %v805, 0.1
      %v898 = vmul.f32 %v808, 0.1
      %v899 = vmul.f32 %v813, 0.1
      %v900 = vmul.f32 %v816, 0.1
      %v901 = vmul.f32 %v821, 0.1
      %v902 = vmul.f32 %v824, 0.1
      %v903 = vmul.f32 %v829, 0.1
      %v904 = vmul.f32 %v832, 0.1
      %v905 = vmul.f32 %v837, 0.1
      %v906 = vmul.f32 %v840, 0.1
      %v907 = vsel %vm843, %v717, %v875
      %v908 = vsel %vm844, %v720, %v876
      %v909 = vsel %vm845, %v725, %v877
      %v910 = vsel %vm846, %v728, %v878
      %v911 = vsel %vm847, %v733, %v879
      %v912 = vsel %vm848, %v736, %v880
      %v913 = vsel %vm849, %v741, %v881
      %v914 = vsel %vm850, %v744, %v882
      %v915 = vsel %vm851, %v749, %v883
      %v916 = vsel %vm852, %v752, %v884
      %v917 = vsel %vm853, %v757, %v885
      %v918 = vsel %vm854, %v760, %v886
      %v919 = vsel %vm855, %v765, %v887
      %v920 = vsel %vm856, %v768, %v888
      %v921 = vsel %vm857, %v773, %v889
      %v922 = vsel %vm858, %v776, %v890
      %v923 = vsel %vm859, %v781, %v891
      %v924 = vsel %vm860, %v784, %v892
      %v925 = vsel %vm861, %v789, %v893
      %v926 = vsel %vm862, %v792, %v894
      %v927 = vsel %vm863, %v797, %v895
      %v928 = vsel %vm864, %v800, %v896
      %v929 = vsel %vm865, %v805, %v897
      %v930 = vsel %vm866, %v808, %v898
      %v931 = vsel %vm867, %v813, %v899
      %v932 = vsel %vm868, %v816, %v900
      %v933 = vsel %vm869, %v821, %v901
      %v934 = vsel %vm870, %v824, %v902
      %v935 = vsel %vm871, %v829, %v903
      %v936 = vsel %vm872, %v832, %v904
      %v937 = vsel %vm873, %v837, %v905
      %v938 = vsel %vm874, %v840, %v906
      %v939 = vpack.c.bf16 %v908, %v907
      %v940 = vpack.c.bf16 %v910, %v909
      %v941 = vpack.c.bf16 %v912, %v911
      %v942 = vpack.c.bf16 %v914, %v913
      %v943 = vpack.c.bf16 %v916, %v915
      %v944 = vpack.c.bf16 %v918, %v917
      %v945 = vpack.c.bf16 %v920, %v919
      %v946 = vpack.c.bf16 %v922, %v921
      %v947 = vpack.c.bf16 %v924, %v923
      %v948 = vpack.c.bf16 %v926, %v925
      %v949 = vpack.c.bf16 %v928, %v927
      %v950 = vpack.c.bf16 %v930, %v929
      %v951 = vpack.c.bf16 %v932, %v931
      %v952 = vpack.c.bf16 %v934, %v933
      %v953 = vpack.c.bf16 %v936, %v935
      %v954 = vpack.c.bf16 %v938, %v937
      %v955 = vld [vmem:[%s3] sm:$0xff]
      %v956 = vld [vmem:[%s3 + $0x8] sm:$0xff]
      %v957 = vld [vmem:[%s3 + $0x10] sm:$0xff]
      %v958 = vld [vmem:[%s3 + $0x18] sm:$0xff]
      %v959 = vld [vmem:[%s3 + $0x20] sm:$0xff]
      %v960 = vld [vmem:[%s3 + $0x28] sm:$0xff]
      %v961 = vld [vmem:[%s3 + $0x30] sm:$0xff]
      %v962 = vld [vmem:[%s3 + $0x38] sm:$0xff]
      %v963 = vld [vmem:[%s3 + $0x40] sm:$0xff]
      %v964 = vld [vmem:[%s3 + $0x48] sm:$0xff]
      %v965 = vld [vmem:[%s3 + $0x50] sm:$0xff]
      %v966 = vld [vmem:[%s3 + $0x58] sm:$0xff]
      %v967 = vld [vmem:[%s3 + $0x60] sm:$0xff]
      %v968 = vld [vmem:[%s3 + $0x68] sm:$0xff]
      %v969 = vld [vmem:[%s3 + $0x70] sm:$0xff]
      %v970 = vld [vmem:[%s3 + $0x78] sm:$0xff]
      %v971 = vld [vmem:[%s3 + $0x80] sm:$0xff]
      %v972 = vld [vmem:[%s3 + $0x88] sm:$0xff]
      %v973 = vld [vmem:[%s3 + $0x90] sm:$0xff]
      %v974 = vld [vmem:[%s3 + $0x98] sm:$0xff]
      %v975 = vld [vmem:[%s3 + $0xa0] sm:$0xff]
      %v976 = vld [vmem:[%s3 + $0xa8] sm:$0xff]
      %v977 = vld [vmem:[%s3 + $0xb0] sm:$0xff]
      %v978 = vld [vmem:[%s3 + $0xb8] sm:$0xff]
      %v979 = vld [vmem:[%s3 + $0xc0] sm:$0xff]
      %v980 = vld [vmem:[%s3 + $0xc8] sm:$0xff]
      %v981 = vld [vmem:[%s3 + $0xd0] sm:$0xff]
      %v982 = vld [vmem:[%s3 + $0xd8] sm:$0xff]
      %v983 = vld [vmem:[%s3 + $0xe0] sm:$0xff]
      %v984 = vld [vmem:[%s3 + $0xe8] sm:$0xff]
      %v985 = vld [vmem:[%s3 + $0xf0] sm:$0xff]
      %v986 = vld [vmem:[%s3 + $0xf8] sm:$0xff]
      %v987 = vld [vmem:[%s3 + $0x100] sm:$0xff]
      %v988 = vld [vmem:[%s3 + $0x108] sm:$0xff]
      %v989 = vld [vmem:[%s3 + $0x110] sm:$0xff]
      %v990 = vld [vmem:[%s3 + $0x118] sm:$0xff]
      %v991 = vld [vmem:[%s3 + $0x120] sm:$0xff]
      %v992 = vld [vmem:[%s3 + $0x128] sm:$0xff]
      %v993 = vld [vmem:[%s3 + $0x130] sm:$0xff]
      %v994 = vld [vmem:[%s3 + $0x138] sm:$0xff]
      %v995 = vld [vmem:[%s3 + $0x140] sm:$0xff]
      %v996 = vld [vmem:[%s3 + $0x148] sm:$0xff]
      %v997 = vld [vmem:[%s3 + $0x150] sm:$0xff]
      %v998 = vld [vmem:[%s3 + $0x158] sm:$0xff]
      %v999 = vld [vmem:[%s3 + $0x160] sm:$0xff]
      %v1000 = vld [vmem:[%s3 + $0x168] sm:$0xff]
      %v1001 = vld [vmem:[%s3 + $0x170] sm:$0xff]
      %v1002 = vld [vmem:[%s3 + $0x178] sm:$0xff]
      %v1003 = vld [vmem:[%s3 + $0x180] sm:$0xff]
      %v1004 = vld [vmem:[%s3 + $0x188] sm:$0xff]
      %v1005 = vld [vmem:[%s3 + $0x190] sm:$0xff]
      %v1006 = vld [vmem:[%s3 + $0x198] sm:$0xff]
      %v1007 = vld [vmem:[%s3 + $0x1a0] sm:$0xff]
      %v1008 = vld [vmem:[%s3 + $0x1a8] sm:$0xff]
      %v1009 = vld [vmem:[%s3 + $0x1b0] sm:$0xff]
      %v1010 = vld [vmem:[%s3 + $0x1b8] sm:$0xff]
      %v1011 = vld [vmem:[%s3 + $0x1c0] sm:$0xff]
      %v1012 = vld [vmem:[%s3 + $0x1c8] sm:$0xff]
      %v1013 = vld [vmem:[%s3 + $0x1d0] sm:$0xff]
      %v1014 = vld [vmem:[%s3 + $0x1d8] sm:$0xff]
      %v1015 = vld [vmem:[%s3 + $0x1e0] sm:$0xff]
      %v1016 = vld [vmem:[%s3 + $0x1e8] sm:$0xff]
      %v1017 = vld [vmem:[%s3 + $0x1f0] sm:$0xff]
      %v1018 = vld [vmem:[%s3 + $0x1f8] sm:$0xff]
      %v1019 = vld [vmem:[%s3 + $0x200] sm:$0xff]
      %v1020 = vld [vmem:[%s3 + $0x208] sm:$0xff]
      %v1021 = vld [vmem:[%s3 + $0x210] sm:$0xff]
      %v1022 = vld [vmem:[%s3 + $0x218] sm:$0xff]
      %v1023 = vld [vmem:[%s3 + $0x220] sm:$0xff]
      %v1024 = vld [vmem:[%s3 + $0x228] sm:$0xff]
      %v1025 = vld [vmem:[%s3 + $0x230] sm:$0xff]
      %v1026 = vld [vmem:[%s3 + $0x238] sm:$0xff]
      %v1027 = vld [vmem:[%s3 + $0x240] sm:$0xff]
      %v1028 = vld [vmem:[%s3 + $0x248] sm:$0xff]
      %v1029 = vld [vmem:[%s3 + $0x250] sm:$0xff]
      %v1030 = vld [vmem:[%s3 + $0x258] sm:$0xff]
      %v1031 = vld [vmem:[%s3 + $0x260] sm:$0xff]
      %v1032 = vld [vmem:[%s3 + $0x268] sm:$0xff]
      %v1033 = vld [vmem:[%s3 + $0x270] sm:$0xff]
      %v1034 = vld [vmem:[%s3 + $0x278] sm:$0xff]
      %v1035 = vld [vmem:[%s3 + $0x280] sm:$0xff]
      %v1036 = vld [vmem:[%s3 + $0x288] sm:$0xff]
      %v1037 = vld [vmem:[%s3 + $0x290] sm:$0xff]
      %v1038 = vld [vmem:[%s3 + $0x298] sm:$0xff]
      %v1039 = vld [vmem:[%s3 + $0x2a0] sm:$0xff]
      %v1040 = vld [vmem:[%s3 + $0x2a8] sm:$0xff]
      %v1041 = vld [vmem:[%s3 + $0x2b0] sm:$0xff]
      %v1042 = vld [vmem:[%s3 + $0x2b8] sm:$0xff]
      %v1043 = vld [vmem:[%s3 + $0x2c0] sm:$0xff]
      %v1044 = vld [vmem:[%s3 + $0x2c8] sm:$0xff]
      %v1045 = vld [vmem:[%s3 + $0x2d0] sm:$0xff]
      %v1046 = vld [vmem:[%s3 + $0x2d8] sm:$0xff]
      %v1047 = vld [vmem:[%s3 + $0x2e0] sm:$0xff]
      %v1048 = vld [vmem:[%s3 + $0x2e8] sm:$0xff]
      %v1049 = vld [vmem:[%s3 + $0x2f0] sm:$0xff]
      %v1050 = vld [vmem:[%s3 + $0x2f8] sm:$0xff]
      %v1051 = vld [vmem:[%s3 + $0x300] sm:$0xff]
      %v1052 = vld [vmem:[%s3 + $0x308] sm:$0xff]
      %v1053 = vld [vmem:[%s3 + $0x310] sm:$0xff]
      %v1054 = vld [vmem:[%s3 + $0x318] sm:$0xff]
      %v1055 = vld [vmem:[%s3 + $0x320] sm:$0xff]
      %v1056 = vld [vmem:[%s3 + $0x328] sm:$0xff]
      %v1057 = vld [vmem:[%s3 + $0x330] sm:$0xff]
      %v1058 = vld [vmem:[%s3 + $0x338] sm:$0xff]
      %v1059 = vld [vmem:[%s3 + $0x340] sm:$0xff]
      %v1060 = vld [vmem:[%s3 + $0x348] sm:$0xff]
      %v1061 = vld [vmem:[%s3 + $0x350] sm:$0xff]
      %v1062 = vld [vmem:[%s3 + $0x358] sm:$0xff]
      %v1063 = vld [vmem:[%s3 + $0x360] sm:$0xff]
      %v1064 = vld [vmem:[%s3 + $0x368] sm:$0xff]
      %v1065 = vld [vmem:[%s3 + $0x370] sm:$0xff]
      %v1066 = vld [vmem:[%s3 + $0x378] sm:$0xff]
      %v1067 = vld [vmem:[%s3 + $0x380] sm:$0xff]
      %v1068 = vld [vmem:[%s3 + $0x388] sm:$0xff]
      %v1069 = vld [vmem:[%s3 + $0x390] sm:$0xff]
      %v1070 = vld [vmem:[%s3 + $0x398] sm:$0xff]
      %v1071 = vld [vmem:[%s3 + $0x3a0] sm:$0xff]
      %v1072 = vld [vmem:[%s3 + $0x3a8] sm:$0xff]
      %v1073 = vld [vmem:[%s3 + $0x3b0] sm:$0xff]
      %v1074 = vld [vmem:[%s3 + $0x3b8] sm:$0xff]
      %v1075 = vld [vmem:[%s3 + $0x3c0] sm:$0xff]
      %v1076 = vld [vmem:[%s3 + $0x3c8] sm:$0xff]
      %v1077 = vld [vmem:[%s3 + $0x3d0] sm:$0xff]
      %v1078 = vld [vmem:[%s3 + $0x3d8] sm:$0xff]
      %v1079 = vld [vmem:[%s3 + $0x3e0] sm:$0xff]
      %v1080 = vld [vmem:[%s3 + $0x3e8] sm:$0xff]
      %v1081 = vld [vmem:[%s3 + $0x3f0] sm:$0xff]
      %v1082 = vld [vmem:[%s3 + $0x3f8] sm:$0xff]
      %v1083 = vld [vmem:[%s3 + $0x400] sm:$0xff]
      %v1084 = vld [vmem:[%s3 + $0x408] sm:$0xff]
      %v1085 = vld [vmem:[%s3 + $0x410] sm:$0xff]
      %v1086 = vld [vmem:[%s3 + $0x418] sm:$0xff]
      %v1087 = vld [vmem:[%s3 + $0x420] sm:$0xff]
      %v1088 = vld [vmem:[%s3 + $0x428] sm:$0xff]
      %v1089 = vld [vmem:[%s3 + $0x430] sm:$0xff]
      %v1090 = vld [vmem:[%s3 + $0x438] sm:$0xff]
      %v1091 = vld [vmem:[%s3 + $0x440] sm:$0xff]
      %v1092 = vld [vmem:[%s3 + $0x448] sm:$0xff]
      %v1093 = vld [vmem:[%s3 + $0x450] sm:$0xff]
      %v1094 = vld [vmem:[%s3 + $0x458] sm:$0xff]
      %v1095 = vld [vmem:[%s3 + $0x460] sm:$0xff]
      %v1096 = vld [vmem:[%s3 + $0x468] sm:$0xff]
      %v1097 = vld [vmem:[%s3 + $0x470] sm:$0xff]
      %v1098 = vld [vmem:[%s3 + $0x478] sm:$0xff]
      %v1099 = vld [vmem:[%s3 + $0x480] sm:$0xff]
      %v1100 = vld [vmem:[%s3 + $0x488] sm:$0xff]
      %v1101 = vld [vmem:[%s3 + $0x490] sm:$0xff]
      %v1102 = vld [vmem:[%s3 + $0x498] sm:$0xff]
      %v1103 = vld [vmem:[%s3 + $0x4a0] sm:$0xff]
      %v1104 = vld [vmem:[%s3 + $0x4a8] sm:$0xff]
      %v1105 = vld [vmem:[%s3 + $0x4b0] sm:$0xff]
      %v1106 = vld [vmem:[%s3 + $0x4b8] sm:$0xff]
      %v1107 = vld [vmem:[%s3 + $0x4c0] sm:$0xff]
      %v1108 = vld [vmem:[%s3 + $0x4c8] sm:$0xff]
      %v1109 = vld [vmem:[%s3 + $0x4d0] sm:$0xff]
      %v1110 = vld [vmem:[%s3 + $0x4d8] sm:$0xff]
      %v1111 = vld [vmem:[%s3 + $0x4e0] sm:$0xff]
      %v1112 = vld [vmem:[%s3 + $0x4e8] sm:$0xff]
      %v1113 = vld [vmem:[%s3 + $0x4f0] sm:$0xff]
      %v1114 = vld [vmem:[%s3 + $0x4f8] sm:$0xff]
      %v1115 = vld [vmem:[%s3 + $0x500] sm:$0xff]
      %v1116 = vld [vmem:[%s3 + $0x508] sm:$0xff]
      %v1117 = vld [vmem:[%s4] sm:$0xf]
      %v1118 = vld [vmem:[%s4 + $0x4] sm:$0xf]
      %v1119 = vld [vmem:[%s4 + $0x8] sm:$0xf]
      %v1120 = vld [vmem:[%s4 + $0xc] sm:$0xf]
      %v1121 = vld [vmem:[%s4 + $0x10] sm:$0xf]
      %v1122 = vld [vmem:[%s4 + $0x14] sm:$0xf]
      %v1123 = vld [vmem:[%s4 + $0x18] sm:$0xf]
      %v1124 = vld [vmem:[%s4 + $0x1c] sm:$0xf]
      %v1125 = vld [vmem:[%s4 + $0x20] sm:$0xf]
      %v1126 = vld [vmem:[%s4 + $0x24] sm:$0xf]
      %v1127 = vld [vmem:[%s4 + $0x28] sm:$0xf]
      %v1128 = vld [vmem:[%s4 + $0x2c] sm:$0xf]
      %v1129 = vld [vmem:[%s4 + $0x30] sm:$0xf]
      %v1130 = vld [vmem:[%s4 + $0x34] sm:$0xf]
      %v1131 = vld [vmem:[%s4 + $0x38] sm:$0xf]
      %v1132 = vld [vmem:[%s4 + $0x3c] sm:$0xf]
      %v1133 = vld [vmem:[%s4 + $0x40] sm:$0xf]
      %v1134 = vld [vmem:[%s4 + $0x44] sm:$0xf]
      %v1135 = vld [vmem:[%s4 + $0x48] sm:$0xf]
      %v1136 = vld [vmem:[%s4 + $0x4c] sm:$0xf]
      %v1137 = vld [vmem:[%s4 + $0x50] sm:$0xf]
      %v1138 = vld [vmem:[%s4 + $0x54] sm:$0xf]
      %v1139 = vld [vmem:[%s4 + $0x58] sm:$0xf]
      %v1140 = vld [vmem:[%s4 + $0x5c] sm:$0xf]
      %v1141 = vld [vmem:[%s4 + $0x60] sm:$0xf]
      %v1142 = vld [vmem:[%s4 + $0x64] sm:$0xf]
      %v1143 = vld [vmem:[%s4 + $0x68] sm:$0xf]
      %v1144 = vld [vmem:[%s4 + $0x6c] sm:$0xf]
      %v1145 = vld [vmem:[%s4 + $0x70] sm:$0xf]
      %v1146 = vld [vmem:[%s4 + $0x74] sm:$0xf]
      %v1147 = vld [vmem:[%s4 + $0x78] sm:$0xf]
      %v1148 = vld [vmem:[%s4 + $0x7c] sm:$0xf]
      %v1149 = vld [vmem:[%s5] sm:$0x1]
      %v1312 = vunpack.c.l.b16 %v955
      %v1313 = vunpack.c.h.b16 %v955
      %v1314 = vunpack.c.l.b16 %v956
      %v1315 = vunpack.c.h.b16 %v956
      %v1316 = vunpack.c.l.b16 %v957
      %v1317 = vunpack.c.h.b16 %v957
      %v1318 = vunpack.c.l.b16 %v958
      %v1319 = vunpack.c.h.b16 %v958
      %v1320 = vunpack.c.l.b16 %v959
      %v1321 = vunpack.c.h.b16 %v959
      %v1322 = vunpack.c.l.b16 %v960
      %v1323 = vunpack.c.h.b16 %v960
      %v1324 = vunpack.c.l.b16 %v961
      %v1325 = vunpack.c.h.b16 %v961
      %v1326 = vunpack.c.l.b16 %v962
      %v1327 = vunpack.c.h.b16 %v962
      %v1328 = vunpack.c.l.b16 %v963
      %v1329 = vunpack.c.h.b16 %v963
      %v1330 = vunpack.c.l.b16 %v964
      %v1331 = vunpack.c.h.b16 %v964
      %v1332 = vunpack.c.l.b16 %v965
      %v1333 = vunpack.c.h.b16 %v965
      %v1334 = vunpack.c.l.b16 %v966
      %v1335 = vunpack.c.h.b16 %v966
      %v1336 = vunpack.c.l.b16 %v967
      %v1337 = vunpack.c.h.b16 %v967
      %v1338 = vunpack.c.l.b16 %v968
      %v1339 = vunpack.c.h.b16 %v968
      %v1340 = vunpack.c.l.b16 %v969
      %v1341 = vunpack.c.h.b16 %v969
      %v1342 = vunpack.c.l.b16 %v970
      %v1343 = vunpack.c.h.b16 %v970
      %v1344 = vunpack.c.l.b16 %v971
      %v1345 = vunpack.c.h.b16 %v971
      %v1346 = vunpack.c.l.b16 %v972
      %v1347 = vunpack.c.h.b16 %v972
      %v1348 = vunpack.c.l.b16 %v973
      %v1349 = vunpack.c.h.b16 %v973
      %v1350 = vunpack.c.l.b16 %v974
      %v1351 = vunpack.c.h.b16 %v974
      %v1352 = vunpack.c.l.b16 %v975
      %v1353 = vunpack.c.h.b16 %v975
      %v1354 = vunpack.c.l.b16 %v976
      %v1355 = vunpack.c.h.b16 %v976
      %v1356 = vunpack.c.l.b16 %v977
      %v1357 = vunpack.c.h.b16 %v977
      %v1358 = vunpack.c.l.b16 %v978
      %v1359 = vunpack.c.h.b16 %v978
      %v1360 = vunpack.c.l.b16 %v979
      %v1361 = vunpack.c.h.b16 %v979
      %v1362 = vunpack.c.l.b16 %v980
      %v1363 = vunpack.c.h.b16 %v980
      %v1364 = vunpack.c.l.b16 %v981
      %v1365 = vunpack.c.h.b16 %v981
      %v1366 = vunpack.c.l.b16 %v982
      %v1367 = vunpack.c.h.b16 %v982
      %v1368 = vunpack.c.l.b16 %v983
      %v1369 = vunpack.c.h.b16 %v983
      %v1370 = vunpack.c.l.b16 %v984
      %v1371 = vunpack.c.h.b16 %v984
      %v1372 = vunpack.c.l.b16 %v985
      %v1373 = vunpack.c.h.b16 %v985
      %v1374 = vunpack.c.l.b16 %v986
      %v1375 = vunpack.c.h.b16 %v986
      %v1376 = vunpack.c.l.b16 %v987
      %v1377 = vunpack.c.h.b16 %v987
      %v1378 = vunpack.c.l.b16 %v988
      %v1379 = vunpack.c.h.b16 %v988
      %v1380 = vunpack.c.l.b16 %v989
      %v1381 = vunpack.c.h.b16 %v989
      %v1382 = vunpack.c.l.b16 %v990
      %v1383 = vunpack.c.h.b16 %v990
      %v1384 = vunpack.c.l.b16 %v991
      %v1385 = vunpack.c.h.b16 %v991
      %v1386 = vunpack.c.l.b16 %v992
      %v1387 = vunpack.c.h.b16 %v992
      %v1388 = vunpack.c.l.b16 %v993
      %v1389 = vunpack.c.h.b16 %v993
      %v1390 = vunpack.c.l.b16 %v994
      %v1391 = vunpack.c.h.b16 %v994
      %v1392 = vunpack.c.l.b16 %v995
      %v1393 = vunpack.c.h.b16 %v995
      %v1394 = vunpack.c.l.b16 %v996
      %v1395 = vunpack.c.h.b16 %v996
      %v1396 = vunpack.c.l.b16 %v997
      %v1397 = vunpack.c.h.b16 %v997
      %v1398 = vunpack.c.l.b16 %v998
      %v1399 = vunpack.c.h.b16 %v998
      %v1400 = vunpack.c.l.b16 %v999
      %v1401 = vunpack.c.h.b16 %v999
      %v1402 = vunpack.c.l.b16 %v1000
      %v1403 = vunpack.c.h.b16 %v1000
      %v1404 = vunpack.c.l.b16 %v1001
      %v1405 = vunpack.c.h.b16 %v1001
      %v1406 = vunpack.c.l.b16 %v1002
      %v1407 = vunpack.c.h.b16 %v1002
      %v1408 = vunpack.c.l.b16 %v1003
      %v1409 = vunpack.c.h.b16 %v1003
      %v1410 = vunpack.c.l.b16 %v1004
      %v1411 = vunpack.c.h.b16 %v1004
      %v1412 = vunpack.c.l.b16 %v1005
      %v1413 = vunpack.c.h.b16 %v1005
      %v1414 = vunpack.c.l.b16 %v1006
      %v1415 = vunpack.c.h.b16 %v1006
      %v1416 = vunpack.c.l.b16 %v1007
      %v1417 = vunpack.c.h.b16 %v1007
      %v1418 = vunpack.c.l.b16 %v1008
      %v1419 = vunpack.c.h.b16 %v1008
      %v1420 = vunpack.c.l.b16 %v1009
      %v1421 = vunpack.c.h.b16 %v1009
      %v1422 = vunpack.c.l.b16 %v1010
      %v1423 = vunpack.c.h.b16 %v1010
      %v1424 = vunpack.c.l.b16 %v1011
      %v1425 = vunpack.c.h.b16 %v1011
      %v1426 = vunpack.c.l.b16 %v1012
      %v1427 = vunpack.c.h.b16 %v1012
      %v1428 = vunpack.c.l.b16 %v1013
      %v1429 = vunpack.c.h.b16 %v1013
      %v1430 = vunpack.c.l.b16 %v1014
      %v1431 = vunpack.c.h.b16 %v1014
      %v1432 = vunpack.c.l.b16 %v1015
      %v1433 = vunpack.c.h.b16 %v1015
      %v1434 = vunpack.c.l.b16 %v1016
      %v1435 = vunpack.c.h.b16 %v1016
      %v1436 = vunpack.c.l.b16 %v1017
      %v1437 = vunpack.c.h.b16 %v1017
      %v1438 = vunpack.c.l.b16 %v1018
      %v1439 = vunpack.c.h.b16 %v1018
      %v1440 = vunpack.c.l.b16 %v1019
      %v1441 = vunpack.c.h.b16 %v1019
      %v1442 = vunpack.c.l.b16 %v1020
      %v1443 = vunpack.c.h.b16 %v1020
      %v1444 = vunpack.c.l.b16 %v1021
      %v1445 = vunpack.c.h.b16 %v1021
      %v1446 = vunpack.c.l.b16 %v1022
      %v1447 = vunpack.c.h.b16 %v1022
      %v1448 = vunpack.c.l.b16 %v1023
      %v1449 = vunpack.c.h.b16 %v1023
      %v1450 = vunpack.c.l.b16 %v1024
      %v1451 = vunpack.c.h.b16 %v1024
      %v1452 = vunpack.c.l.b16 %v1025
      %v1453 = vunpack.c.h.b16 %v1025
      %v1454 = vunpack.c.l.b16 %v1026
      %v1455 = vunpack.c.h.b16 %v1026
      %v1456 = vunpack.c.l.b16 %v1027
      %v1457 = vunpack.c.h.b16 %v1027
      %v1458 = vunpack.c.l.b16 %v1028
      %v1459 = vunpack.c.h.b16 %v1028
      %v1460 = vunpack.c.l.b16 %v1029
      %v1461 = vunpack.c.h.b16 %v1029
      %v1462 = vunpack.c.l.b16 %v1030
      %v1463 = vunpack.c.h.b16 %v1030
      %v1464 = vunpack.c.l.b16 %v1031
      %v1465 = vunpack.c.h.b16 %v1031
      %v1466 = vunpack.c.l.b16 %v1032
      %v1467 = vunpack.c.h.b16 %v1032
      %v1468 = vunpack.c.l.b16 %v1033
      %v1469 = vunpack.c.h.b16 %v1033
      %v1470 = vunpack.c.l.b16 %v1034
      %v1471 = vunpack.c.h.b16 %v1034
      %v1472 = vunpack.c.l.b16 %v1035
      %v1473 = vunpack.c.h.b16 %v1035
      %v1474 = vunpack.c.l.b16 %v1036
      %v1475 = vunpack.c.h.b16 %v1036
      %v1476 = vunpack.c.l.b16 %v1037
      %v1477 = vunpack.c.h.b16 %v1037
      %v1478 = vunpack.c.l.b16 %v1038
      %v1479 = vunpack.c.h.b16 %v1038
      %v1480 = vunpack.c.l.b16 %v1039
      %v1481 = vunpack.c.h.b16 %v1039
      %v1482 = vunpack.c.l.b16 %v1040
      %v1483 = vunpack.c.h.b16 %v1040
      %v1484 = vunpack.c.l.b16 %v1041
      %v1485 = vunpack.c.h.b16 %v1041
      %v1486 = vunpack.c.l.b16 %v1042
      %v1487 = vunpack.c.h.b16 %v1042
      %v1488 = vunpack.c.l.b16 %v1043
      %v1489 = vunpack.c.h.b16 %v1043
      %v1490 = vunpack.c.l.b16 %v1044
      %v1491 = vunpack.c.h.b16 %v1044
      %v1492 = vunpack.c.l.b16 %v1045
      %v1493 = vunpack.c.h.b16 %v1045
      %v1494 = vunpack.c.l.b16 %v1046
      %v1495 = vunpack.c.h.b16 %v1046
      %v1496 = vunpack.c.l.b16 %v1047
      %v1497 = vunpack.c.h.b16 %v1047
      %v1498 = vunpack.c.l.b16 %v1048
      %v1499 = vunpack.c.h.b16 %v1048
      %v1500 = vunpack.c.l.b16 %v1049
      %v1501 = vunpack.c.h.b16 %v1049
      %v1502 = vunpack.c.l.b16 %v1050
      %v1503 = vunpack.c.h.b16 %v1050
      %v1504 = vunpack.c.l.b16 %v1051
      %v1505 = vunpack.c.h.b16 %v1051
      %v1506 = vunpack.c.l.b16 %v1052
      %v1507 = vunpack.c.h.b16 %v1052
      %v1508 = vunpack.c.l.b16 %v1053
      %v1509 = vunpack.c.h.b16 %v1053
      %v1510 = vunpack.c.l.b16 %v1054
      %v1511 = vunpack.c.h.b16 %v1054
      %v1512 = vunpack.c.l.b16 %v1055
      %v1513 = vunpack.c.h.b16 %v1055
      %v1514 = vunpack.c.l.b16 %v1056
      %v1515 = vunpack.c.h.b16 %v1056
      %v1516 = vunpack.c.l.b16 %v1057
      %v1517 = vunpack.c.h.b16 %v1057
      %v1518 = vunpack.c.l.b16 %v1058
      %v1519 = vunpack.c.h.b16 %v1058
      %v1520 = vunpack.c.l.b16 %v1059
      %v1521 = vunpack.c.h.b16 %v1059
      %v1522 = vunpack.c.l.b16 %v1060
      %v1523 = vunpack.c.h.b16 %v1060
      %v1524 = vunpack.c.l.b16 %v1061
      %v1525 = vunpack.c.h.b16 %v1061
      %v1526 = vunpack.c.l.b16 %v1062
      %v1527 = vunpack.c.h.b16 %v1062
      %v1528 = vunpack.c.l.b16 %v1063
      %v1529 = vunpack.c.h.b16 %v1063
      %v1530 = vunpack.c.l.b16 %v1064
      %v1531 = vunpack.c.h.b16 %v1064
      %v1532 = vunpack.c.l.b16 %v1065
      %v1533 = vunpack.c.h.b16 %v1065
      %v1534 = vunpack.c.l.b16 %v1066
      %v1535 = vunpack.c.h.b16 %v1066
      %v1536 = vunpack.c.l.b16 %v1067
      %v1537 = vunpack.c.h.b16 %v1067
      %v1538 = vunpack.c.l.b16 %v1068
      %v1539 = vunpack.c.h.b16 %v1068
      %v1540 = vunpack.c.l.b16 %v1069
      %v1541 = vunpack.c.h.b16 %v1069
      %v1542 = vunpack.c.l.b16 %v1070
      %v1543 = vunpack.c.h.b16 %v1070
      %v1544 = vunpack.c.l.b16 %v1071
      %v1545 = vunpack.c.h.b16 %v1071
      %v1546 = vunpack.c.l.b16 %v1072
      %v1547 = vunpack.c.h.b16 %v1072
      %v1548 = vunpack.c.l.b16 %v1073
      %v1549 = vunpack.c.h.b16 %v1073
      %v1550 = vunpack.c.l.b16 %v1074
      %v1551 = vunpack.c.h.b16 %v1074
      %v1552 = vunpack.c.l.b16 %v1075
      %v1553 = vunpack.c.h.b16 %v1075
      %v1554 = vunpack.c.l.b16 %v1076
      %v1555 = vunpack.c.h.b16 %v1076
      %v1556 = vunpack.c.l.b16 %v1077
      %v1557 = vunpack.c.h.b16 %v1077
      %v1558 = vunpack.c.l.b16 %v1078
      %v1559 = vunpack.c.h.b16 %v1078
      %v1560 = vunpack.c.l.b16 %v1079
      %v1561 = vunpack.c.h.b16 %v1079
      %v1562 = vunpack.c.l.b16 %v1080
      %v1563 = vunpack.c.h.b16 %v1080
      %v1564 = vunpack.c.l.b16 %v1081
      %v1565 = vunpack.c.h.b16 %v1081
      %v1566 = vunpack.c.l.b16 %v1082
      %v1567 = vunpack.c.h.b16 %v1082
      %v1568 = vunpack.c.l.b16 %v1083
      %v1569 = vunpack.c.h.b16 %v1083
      %v1570 = vunpack.c.l.b16 %v1084
      %v1571 = vunpack.c.h.b16 %v1084
      %v1572 = vunpack.c.l.b16 %v1085
      %v1573 = vunpack.c.h.b16 %v1085
      %v1574 = vunpack.c.l.b16 %v1086
      %v1575 = vunpack.c.h.b16 %v1086
      %v1576 = vunpack.c.l.b16 %v1087
      %v1577 = vunpack.c.h.b16 %v1087
      %v1578 = vunpack.c.l.b16 %v1088
      %v1579 = vunpack.c.h.b16 %v1088
      %v1580 = vunpack.c.l.b16 %v1089
      %v1581 = vunpack.c.h.b16 %v1089
      %v1582 = vunpack.c.l.b16 %v1090
      %v1583 = vunpack.c.h.b16 %v1090
      %v1584 = vunpack.c.l.b16 %v1091
      %v1585 = vunpack.c.h.b16 %v1091
      %v1586 = vunpack.c.l.b16 %v1092
      %v1587 = vunpack.c.h.b16 %v1092
      %v1588 = vunpack.c.l.b16 %v1093
      %v1589 = vunpack.c.h.b16 %v1093
      %v1590 = vunpack.c.l.b16 %v1094
      %v1591 = vunpack.c.h.b16 %v1094
      %v1592 = vunpack.c.l.b16 %v1095
      %v1593 = vunpack.c.h.b16 %v1095
      %v1594 = vunpack.c.l.b16 %v1096
      %v1595 = vunpack.c.h.b16 %v1096
      %v1596 = vunpack.c.l.b16 %v1097
      %v1597 = vunpack.c.h.b16 %v1097
      %v1598 = vunpack.c.l.b16 %v1098
      %v1599 = vunpack.c.h.b16 %v1098
      %v1600 = vunpack.c.l.b16 %v1099
      %v1601 = vunpack.c.h.b16 %v1099
      %v1602 = vunpack.c.l.b16 %v1100
      %v1603 = vunpack.c.h.b16 %v1100
      %v1604 = vunpack.c.l.b16 %v1101
      %v1605 = vunpack.c.h.b16 %v1101
      %v1606 = vunpack.c.l.b16 %v1102
      %v1607 = vunpack.c.h.b16 %v1102
      %v1608 = vunpack.c.l.b16 %v1103
      %v1609 = vunpack.c.h.b16 %v1103
      %v1610 = vunpack.c.l.b16 %v1104
      %v1611 = vunpack.c.h.b16 %v1104
      %v1612 = vunpack.c.l.b16 %v1105
      %v1613 = vunpack.c.h.b16 %v1105
      %v1614 = vunpack.c.l.b16 %v1106
      %v1615 = vunpack.c.h.b16 %v1106
      %v1616 = vunpack.c.l.b16 %v1107
      %v1617 = vunpack.c.h.b16 %v1107
      %v1618 = vunpack.c.l.b16 %v1108
      %v1619 = vunpack.c.h.b16 %v1108
      %v1620 = vunpack.c.l.b16 %v1109
      %v1621 = vunpack.c.h.b16 %v1109
      %v1622 = vunpack.c.l.b16 %v1110
      %v1623 = vunpack.c.h.b16 %v1110
      %v1624 = vunpack.c.l.b16 %v1111
      %v1625 = vunpack.c.h.b16 %v1111
      %v1626 = vunpack.c.l.b16 %v1112
      %v1627 = vunpack.c.h.b16 %v1112
      %v1628 = vunpack.c.l.b16 %v1113
      %v1629 = vunpack.c.h.b16 %v1113
      %v1630 = vunpack.c.l.b16 %v1114
      %v1631 = vunpack.c.h.b16 %v1114
      %v1632 = vunpack.c.l.b16 %v1115
      %v1633 = vunpack.c.h.b16 %v1115
      %v1634 = vunpack.c.l.b16 %v1116
      %v1635 = vunpack.c.h.b16 %v1116
      %v1636 = vpack.c.b16 %v1314, %v1312
      %v1637 = vpack.c.b16 %v1315, %v1313
      %v1638 = vpack.c.b16 %v1318, %v1316
      %v1639 = vpack.c.b16 %v1319, %v1317
      %v1640 = vpack.c.b16 %v1322, %v1320
      %v1641 = vpack.c.b16 %v1323, %v1321
      %v1642 = vpack.c.b16 %v1326, %v1324
      %v1643 = vpack.c.b16 %v1327, %v1325
      %v1644 = vpack.c.b16 %v1330, %v1328
      %v1645 = vpack.c.b16 %v1331, %v1329
      %v1646 = vpack.c.b16 %v1334, %v1332
      %v1647 = vpack.c.b16 %v1335, %v1333
      %v1648 = vpack.c.b16 %v1338, %v1336
      %v1649 = vpack.c.b16 %v1339, %v1337
      %v1650 = vpack.c.b16 %v1342, %v1340
      %v1651 = vpack.c.b16 %v1343, %v1341
      %v1652 = vpack.c.b16 %v1346, %v1344
      %v1653 = vpack.c.b16 %v1347, %v1345
      %v1654 = vpack.c.b16 %v1350, %v1348
      %v1655 = vpack.c.b16 %v1351, %v1349
      %v1656 = vpack.c.b16 %v1354, %v1352
      %v1657 = vpack.c.b16 %v1355, %v1353
      %v1658 = vpack.c.b16 %v1358, %v1356
      %v1659 = vpack.c.b16 %v1359, %v1357
      %v1660 = vpack.c.b16 %v1362, %v1360
      %v1661 = vpack.c.b16 %v1363, %v1361
      %v1662 = vpack.c.b16 %v1366, %v1364
      %v1663 = vpack.c.b16 %v1367, %v1365
      %v1664 = vpack.c.b16 %v1370, %v1368
      %v1665 = vpack.c.b16 %v1371, %v1369
      %v1666 = vpack.c.b16 %v1374, %v1372
      %v1667 = vpack.c.b16 %v1375, %v1373
      %v1668 = vpack.c.b16 %v1378, %v1376
      %v1669 = vpack.c.b16 %v1379, %v1377
      %v1670 = vpack.c.b16 %v1382, %v1380
      %v1671 = vpack.c.b16 %v1383, %v1381
      %v1672 = vpack.c.b16 %v1386, %v1384
      %v1673 = vpack.c.b16 %v1387, %v1385
      %v1674 = vpack.c.b16 %v1390, %v1388
      %v1675 = vpack.c.b16 %v1391, %v1389
      %v1676 = vpack.c.b16 %v1394, %v1392
      %v1677 = vpack.c.b16 %v1395, %v1393
      %v1678 = vpack.c.b16 %v1398, %v1396
      %v1679 = vpack.c.b16 %v1399, %v1397
      %v1680 = vpack.c.b16 %v1402, %v1400
      %v1681 = vpack.c.b16 %v1403, %v1401
      %v1682 = vpack.c.b16 %v1406, %v1404
      %v1683 = vpack.c.b16 %v1407, %v1405
      %v1684 = vpack.c.b16 %v1410, %v1408
      %v1685 = vpack.c.b16 %v1411, %v1409
      %v1686 = vpack.c.b16 %v1414, %v1412
      %v1687 = vpack.c.b16 %v1415, %v1413
      %v1688 = vpack.c.b16 %v1418, %v1416
      %v1689 = vpack.c.b16 %v1419, %v1417
      %v1690 = vpack.c.b16 %v1422, %v1420
      %v1691 = vpack.c.b16 %v1423, %v1421
      %v1692 = vpack.c.b16 %v1426, %v1424
      %v1693 = vpack.c.b16 %v1427, %v1425
      %v1694 = vpack.c.b16 %v1430, %v1428
      %v1695 = vpack.c.b16 %v1431, %v1429
      %v1696 = vpack.c.b16 %v1434, %v1432
      %v1697 = vpack.c.b16 %v1435, %v1433
      %v1698 = vpack.c.b16 %v1438, %v1436
      %v1699 = vpack.c.b16 %v1439, %v1437
      %v1700 = vpack.c.b16 %v1442, %v1440
      %v1701 = vpack.c.b16 %v1443, %v1441
      %v1702 = vpack.c.b16 %v1446, %v1444
      %v1703 = vpack.c.b16 %v1447, %v1445
      %v1704 = vpack.c.b16 %v1450, %v1448
      %v1705 = vpack.c.b16 %v1451, %v1449
      %v1706 = vpack.c.b16 %v1454, %v1452
      %v1707 = vpack.c.b16 %v1455, %v1453
      %v1708 = vpack.c.b16 %v1458, %v1456
      %v1709 = vpack.c.b16 %v1459, %v1457
      %v1710 = vpack.c.b16 %v1462, %v1460
      %v1711 = vpack.c.b16 %v1463, %v1461
      %v1712 = vpack.c.b16 %v1466, %v1464
      %v1713 = vpack.c.b16 %v1467, %v1465
      %v1714 = vpack.c.b16 %v1470, %v1468
      %v1715 = vpack.c.b16 %v1471, %v1469
      %v1716 = vpack.c.b16 %v1474, %v1472
      %v1717 = vpack.c.b16 %v1475, %v1473
      %v1718 = vpack.c.b16 %v1478, %v1476
      %v1719 = vpack.c.b16 %v1479, %v1477
      %v1720 = vpack.c.b16 %v1482, %v1480
      %v1721 = vpack.c.b16 %v1483, %v1481
      %v1722 = vpack.c.b16 %v1486, %v1484
      %v1723 = vpack.c.b16 %v1487, %v1485
      %v1724 = vpack.c.b16 %v1490, %v1488
      %v1725 = vpack.c.b16 %v1491, %v1489
      %v1726 = vpack.c.b16 %v1494, %v1492
      %v1727 = vpack.c.b16 %v1495, %v1493
      %v1728 = vpack.c.b16 %v1498, %v1496
      %v1729 = vpack.c.b16 %v1499, %v1497
      %v1730 = vpack.c.b16 %v1502, %v1500
      %v1731 = vpack.c.b16 %v1503, %v1501
      %v1732 = vpack.c.b16 %v1506, %v1504
      %v1733 = vpack.c.b16 %v1507, %v1505
      %v1734 = vpack.c.b16 %v1510, %v1508
      %v1735 = vpack.c.b16 %v1511, %v1509
      %v1736 = vpack.c.b16 %v1514, %v1512
      %v1737 = vpack.c.b16 %v1515, %v1513
      %v1738 = vpack.c.b16 %v1518, %v1516
      %v1739 = vpack.c.b16 %v1519, %v1517
      %v1740 = vpack.c.b16 %v1522, %v1520
      %v1741 = vpack.c.b16 %v1523, %v1521
      %v1742 = vpack.c.b16 %v1526, %v1524
      %v1743 = vpack.c.b16 %v1527, %v1525
      %v1744 = vpack.c.b16 %v1530, %v1528
      %v1745 = vpack.c.b16 %v1531, %v1529
      %v1746 = vpack.c.b16 %v1534, %v1532
      %v1747 = vpack.c.b16 %v1535, %v1533
      %v1748 = vpack.c.b16 %v1538, %v1536
      %v1749 = vpack.c.b16 %v1539, %v1537
      %v1750 = vpack.c.b16 %v1542, %v1540
      %v1751 = vpack.c.b16 %v1543, %v1541
      %v1752 = vpack.c.b16 %v1546, %v1544
      %v1753 = vpack.c.b16 %v1547, %v1545
      %v1754 = vpack.c.b16 %v1550, %v1548
      %v1755 = vpack.c.b16 %v1551, %v1549
      %v1756 = vpack.c.b16 %v1554, %v1552
      %v1757 = vpack.c.b16 %v1555, %v1553
      %v1758 = vpack.c.b16 %v1558, %v1556
      %v1759 = vpack.c.b16 %v1559, %v1557
      %v1760 = vpack.c.b16 %v1562, %v1560
      %v1761 = vpack.c.b16 %v1563, %v1561
      %v1762 = vpack.c.b16 %v1566, %v1564
      %v1763 = vpack.c.b16 %v1567, %v1565
      %v1764 = vpack.c.b16 %v1570, %v1568
      %v1765 = vpack.c.b16 %v1571, %v1569
      %v1766 = vpack.c.b16 %v1574, %v1572
      %v1767 = vpack.c.b16 %v1575, %v1573
      %v1768 = vpack.c.b16 %v1578, %v1576
      %v1769 = vpack.c.b16 %v1579, %v1577
      %v1770 = vpack.c.b16 %v1582, %v1580
      %v1771 = vpack.c.b16 %v1583, %v1581
      %v1772 = vpack.c.b16 %v1586, %v1584
      %v1773 = vpack.c.b16 %v1587, %v1585
      %v1774 = vpack.c.b16 %v1590, %v1588
      %v1775 = vpack.c.b16 %v1591, %v1589
      %v1776 = vpack.c.b16 %v1594, %v1592
      %v1777 = vpack.c.b16 %v1595, %v1593
      %v1778 = vpack.c.b16 %v1598, %v1596
      %v1779 = vpack.c.b16 %v1599, %v1597
      %v1780 = vpack.c.b16 %v1602, %v1600
      %v1781 = vpack.c.b16 %v1603, %v1601
      %v1782 = vpack.c.b16 %v1606, %v1604
      %v1783 = vpack.c.b16 %v1607, %v1605
      %v1784 = vpack.c.b16 %v1610, %v1608
      %v1785 = vpack.c.b16 %v1611, %v1609
      %v1786 = vpack.c.b16 %v1614, %v1612
      %v1787 = vpack.c.b16 %v1615, %v1613
      %v1788 = vpack.c.b16 %v1618, %v1616
      %v1789 = vpack.c.b16 %v1619, %v1617
      %v1790 = vpack.c.b16 %v1622, %v1620
      %v1791 = vpack.c.b16 %v1623, %v1621
      %v1792 = vpack.c.b16 %v1626, %v1624
      %v1793 = vpack.c.b16 %v1627, %v1625
      %v1794 = vpack.c.b16 %v1630, %v1628
      %v1795 = vpack.c.b16 %v1631, %v1629
      %v1796 = vpack.c.b16 %v1634, %v1632
      %v1797 = vpack.c.b16 %v1635, %v1633
      %1960 = vmatprep.subr.bf16.mxu0 0
      %1961 = vmatpush1.bf16.msra.mxu0 %v939
      %1962 = vmatprep.subr.bf16.mxu0 0
      %1963 = vmatpush1.bf16.msra.mxu0 %v940
      %1964 = vmatprep.subr.bf16.mxu0 0
      %1965 = vmatpush1.bf16.msra.mxu0 %v941
      %1966 = vmatprep.subr.bf16.mxu0 0
      %1967 = vmatpush1.bf16.msra.mxu0 %v942
      %1968 = vmatprep.subr.bf16.mxu0 0
      %1969 = vmatpush1.bf16.msra.mxu0 %v943
      %1970 = vmatprep.subr.bf16.mxu0 0
      %1971 = vmatpush1.bf16.msra.mxu0 %v944
      %1972 = vmatprep.subr.bf16.mxu0 0
      %1973 = vmatpush1.bf16.msra.mxu0 %v945
      %1974 = vmatprep.subr.bf16.mxu0 0
      %1975 = vmatpush1.bf16.msra.mxu0 %v946
      %1976 = vmatprep.subr.bf16.mxu0 0
      %1977 = vmatpush1.bf16.msra.mxu0 %v947
      %1978 = vmatprep.subr.bf16.mxu0 0
      %1979 = vmatpush1.bf16.msra.mxu0 %v948
      %1980 = vmatprep.subr.bf16.mxu0 0
      %1981 = vmatpush1.bf16.msra.mxu0 %v949
      %1982 = vmatprep.subr.bf16.mxu0 0
      %1983 = vmatpush1.bf16.msra.mxu0 %v950
      %1984 = vmatprep.subr.bf16.mxu0 0
      %1985 = vmatpush1.bf16.msra.mxu0 %v951
      %1986 = vmatprep.subr.bf16.mxu0 0
      %1987 = vmatpush1.bf16.msra.mxu0 %v952
      %1988 = vmatprep.subr.bf16.mxu0 0
      %1989 = vmatpush1.bf16.msra.mxu0 %v953
      %1990 = vmatprep.subr.bf16.mxu0 0
      %1991 = vmatpush1.bf16.msra.mxu0 %v954
      %1992 = vmatprep.mubr.bf16.mxu0 %v1637
      %1993 = vmatmul.mubr.bf16.gmra.mrb[0].mxu0 %v1636
      %v1994 = vpop.f32.mrb[0].mxu0
      %v1995 = vadd.f32 0.0, %v1994
      %v1996 = vpop.f32.mrb[0].mxu0
      %v1997 = vpop.f32.mrb[0].mxu0
      %v1998 = vadd.f32 0.0, %v1997
      %v1999 = vpop.f32.mrb[0].mxu0
      %2000 = vmatprep.mubr.bf16.mxu0 %v1639
      %2001 = vmatmul.mubr.bf16.gmra.mrb[0].mxu0 %v1638
      %v2002 = vpop.f32.mrb[0].mxu0
      %v2003 = vadd.f32 0.0, %v2002
      %v2004 = vpop.f32.mrb[0].mxu0
      %v2005 = vpop.f32.mrb[0].mxu0
      %v2006 = vadd.f32 0.0, %v2005
      %v2007 = vpop.f32.mrb[0].mxu0
      %2008 = vmatprep.mubr.bf16.mxu0 %v1641
      %2009 = vmatmul.mubr.bf16.gmra.mrb[0].mxu0 %v1640
      %v2010 = vpop.f32.mrb[0].mxu0
      %v2011 = vadd.f32 0.0, %v2010
      %v2012 = vpop.f32.mrb[0].mxu0
      %v2013 = vpop.f32.mrb[0].mxu0
      %v2014 = vadd.f32 0.0, %v2013
      %v2015 = vpop.f32.mrb[0].mxu0
      %2016 = vmatprep.mubr.bf16.mxu0 %v1643
      %2017 = vmatmul.mubr.bf16.gmra.mrb[0].mxu0 %v1642
      %v2018 = vpop.f32.mrb[0].mxu0
      %v2019 = vadd.f32 0.0, %v2018
      %v2020 = vpop.f32.mrb[0].mxu0
      %v2021 = vpop.f32.mrb[0].mxu0
      %v2022 = vadd.f32 0.0, %v2021
      %v2023 = vpop.f32.mrb[0].mxu0
      %2024 = vmatprep.mubr.bf16.mxu0 %v1645
      %2025 = vmatmul.mubr.bf16.gmra.mrb[0].mxu0 %v1644
      %v2026 = vpop.f32.mrb[0].mxu0
      %v2027 = vadd.f32 0.0, %v2026
      %v2028 = vpop.f32.mrb[0].mxu0
      %v2029 = vpop.f32.mrb[0].mxu0
      %v2030 = vadd.f32 0.0, %v2029
      %v2031 = vpop.f32.mrb[0].mxu0
      %2032 = vmatprep.mubr.bf16.mxu0 %v1647
      %2033 = vmatmul.mubr.bf16.gmra.mrb[0].mxu0 %v1646
      %v2034 = vpop.f32.mrb[0].mxu0
      %v2035 = vadd.f32 0.0, %v2034
      %v2036 = vpop.f32.mrb[0].mxu0
      %v2037 = vpop.f32.mrb[0].mxu0
      %v2038 = vadd.f32 0.0, %v2037
      %v2039 = vpop.f32.mrb[0].mxu0
      %2040 = vmatprep.mubr.bf16.mxu0 %v1649
      %2041 = vmatmul.mubr.bf16.gmra.mrb[0].mxu0 %v1648
      %v2042 = vpop.f32.mrb[0].mxu0
      %v2043 = vadd.f32 0.0, %v2042
      %v2044 = vpop.f32.mrb[0].mxu0
      %v2045 = vpop.f32.mrb[0].mxu0
      %v2046 = vadd.f32 0.0, %v2045
      %v2047 = vpop.f32.mrb[0].mxu0
      %2048 = vmatprep.mubr.bf16.mxu0 %v1651
      %2049 = vmatmul.mubr.bf16.gmra.mrb[0].mxu0 %v1650
      %v2050 = vpop.f32.mrb[0].mxu0
      %v2051 = vadd.f32 0.0, %v2050
      %v2052 = vpop.f32.mrb[0].mxu0
      %v2053 = vpop.f32.mrb[0].mxu0
      %v2054 = vadd.f32 0.0, %v2053
      %v2055 = vpop.f32.mrb[0].mxu0
      %2056 = vmatprep.mubr.bf16.mxu0 %v1653
      %2057 = vmatmul.mubr.bf16.gmra.mrb[0].mxu0 %v1652
      %v2058 = vpop.f32.mrb[0].mxu0
      %v2059 = vadd.f32 0.0, %v2058
      %v2060 = vpop.f32.mrb[0].mxu0
      %v2061 = vpop.f32.mrb[0].mxu0
      %v2062 = vadd.f32 0.0, %v2061
      %v2063 = vpop.f32.mrb[0].mxu0
      %2064 = vmatprep.mubr.bf16.mxu0 %v1655
      %2065 = vmatmul.mubr.bf16.gmra.mrb[0].mxu0 %v1654
      %v2066 = vpop.f32.mrb[0].mxu0
      %v2067 = vadd.f32 0.0, %v2066
      %v2068 = vpop.f32.mrb[0].mxu0
      %v2069 = vpop.f32.mrb[0].mxu0
      %v2070 = vadd.f32 0.0, %v2069
      %v2071 = vpop.f32.mrb[0].mxu0
      %2072 = vmatprep.mubr.bf16.mxu0 %v1657
      %2073 = vmatmul.mubr.bf16.gmra.mrb[0].mxu0 %v1656
      %v2074 = vpop.f32.mrb[0].mxu0
      %v2075 = vadd.f32 0.0, %v2074
      %v2076 = vpop.f32.mrb[0].mxu0
      %v2077 = vpop.f32.mrb[0].mxu0
      %v2078 = vadd.f32 0.0, %v2077
      %v2079 = vpop.f32.mrb[0].mxu0
      %2080 = vmatprep.mubr.bf16.mxu0 %v1659
      %2081 = vmatmul.mubr.bf16.gmra.mrb[0].mxu0 %v1658
      %v2082 = vpop.f32.mrb[0].mxu0
      %v2083 = vadd.f32 0.0, %v2082
      %v2084 = vpop.f32.mrb[0].mxu0
      %v2085 = vpop.f32.mrb[0].mxu0
      %v2086 = vadd.f32 0.0, %v2085
      %v2087 = vpop.f32.mrb[0].mxu0
      %2088 = vmatprep.mubr.bf16.mxu0 %v1661
      %2089 = vmatmul.mubr.bf16.gmra.mrb[0].mxu0 %v1660
      %v2090 = vpop.f32.mrb[0].mxu0
      %v2091 = vadd.f32 0.0, %v2090
      %v2092 = vpop.f32.mrb[0].mxu0
      %v2093 = vpop.f32.mrb[0].mxu0
      %v2094 = vadd.f32 0.0, %v2093
      %v2095 = vpop.f32.mrb[0].mxu0
      %2096 = vmatprep.mubr.bf16.mxu0 %v1663
      %2097 = vmatmul.mubr.bf16.gmra.mrb[0].mxu0 %v1662
      %v2098 = vpop.f32.mrb[0].mxu0
      %v2099 = vadd.f32 0.0, %v2098
      %v2100 = vpop.f32.mrb[0].mxu0
      %v2101 = vpop.f32.mrb[0].mxu0
      %v2102 = vadd.f32 0.0, %v2101
      %v2103 = vpop.f32.mrb[0].mxu0
      %2104 = vmatprep.mubr.bf16.mxu0 %v1665
      %2105 = vmatmul.mubr.bf16.gmra.mrb[0].mxu0 %v1664
      %v2106 = vpop.f32.mrb[0].mxu0
      %v2107 = vadd.f32 0.0, %v2106
      %v2108 = vpop.f32.mrb[0].mxu0
      %v2109 = vpop.f32.mrb[0].mxu0
      %v2110 = vadd.f32 0.0, %v2109
      %v2111 = vpop.f32.mrb[0].mxu0
      %2112 = vmatprep.mubr.bf16.mxu0 %v1667
      %2113 = vmatmul.mubr.bf16.gmra.mrb[0].mxu0 %v1666
      %v2114 = vpop.f32.mrb[0].mxu0
      %v2115 = vadd.f32 0.0, %v2114
      %v2116 = vpop.f32.mrb[0].mxu0
      %v2117 = vpop.f32.mrb[0].mxu0
      %v2118 = vadd.f32 0.0, %v2117
      %v2119 = vpop.f32.mrb[0].mxu0
      %2120 = vmatprep.mubr.bf16.mxu0 %v1669
      %2121 = vmatmul.mubr.bf16.gmra.mrb[0].mxu0 %v1668
      %v2122 = vpop.f32.mrb[0].mxu0
      %v2123 = vadd.f32 0.0, %v2122
      %v2124 = vpop.f32.mrb[0].mxu0
      %v2125 = vpop.f32.mrb[0].mxu0
      %v2126 = vadd.f32 0.0, %v2125
      %v2127 = vpop.f32.mrb[0].mxu0
      %2128 = vmatprep.mubr.bf16.mxu0 %v1671
      %2129 = vmatmul.mubr.bf16.gmra.mrb[0].mxu0 %v1670
      %v2130 = vpop.f32.mrb[0].mxu0
      %v2131 = vadd.f32 0.0, %v2130
      %v2132 = vpop.f32.mrb[0].mxu0
      %v2133 = vpop.f32.mrb[0].mxu0
      %v2134 = vadd.f32 0.0, %v2133
      %v2135 = vpop.f32.mrb[0].mxu0
      %2136 = vmatprep.mubr.bf16.mxu0 %v1673
      %2137 = vmatmul.mubr.bf16.gmra.mrb[0].mxu0 %v1672
      %v2138 = vpop.f32.mrb[0].mxu0
      %v2139 = vadd.f32 0.0, %v2138
      %v2140 = vpop.f32.mrb[0].mxu0
      %v2141 = vpop.f32.mrb[0].mxu0
      %v2142 = vadd.f32 0.0, %v2141
      %v2143 = vpop.f32.mrb[0].mxu0
      %2144 = vmatprep.mubr.bf16.mxu0 %v1675
      %2145 = vmatmul.mubr.bf16.gmra.mrb[0].mxu0 %v1674
      %v2146 = vpop.f32.mrb[0].mxu0
      %v2147 = vadd.f32 0.0, %v2146
      %v2148 = vpop.f32.mrb[0].mxu0
      %v2149 = vpop.f32.mrb[0].mxu0
      %v2150 = vadd.f32 0.0, %v2149
      %v2151 = vpop.f32.mrb[0].mxu0
      %2152 = vmatprep.mubr.bf16.mxu0 %v1677
      %2153 = vmatmul.mubr.bf16.gmra.mrb[0].mxu0 %v1676
      %v2154 = vpop.f32.mrb[0].mxu0
      %v2155 = vadd.f32 0.0, %v2154
      %v2156 = vpop.f32.mrb[0].mxu0
      %v2157 = vpop.f32.mrb[0].mxu0
      %v2158 = vadd.f32 0.0, %v2157
      %v2159 = vpop.f32.mrb[0].mxu0
      %2160 = vmatprep.mubr.bf16.mxu0 %v1679
      %2161 = vmatmul.mubr.bf16.gmra.mrb[0].mxu0 %v1678
      %v2162 = vpop.f32.mrb[0].mxu0
      %v2163 = vadd.f32 0.0, %v2162
      %v2164 = vpop.f32.mrb[0].mxu0
      %v2165 = vpop.f32.mrb[0].mxu0
      %v2166 = vadd.f32 0.0, %v2165
      %v2167 = vpop.f32.mrb[0].mxu0
      %2168 = vmatprep.mubr.bf16.mxu0 %v1681
      %2169 = vmatmul.mubr.bf16.gmra.mrb[0].mxu0 %v1680
      %v2170 = vpop.f32.mrb[0].mxu0
      %v2171 = vadd.f32 0.0, %v2170
      %v2172 = vpop.f32.mrb[0].mxu0
      %v2173 = vpop.f32.mrb[0].mxu0
      %v2174 = vadd.f32 0.0, %v2173
      %v2175 = vpop.f32.mrb[0].mxu0
      %2176 = vmatprep.mubr.bf16.mxu0 %v1683
      %2177 = vmatmul.mubr.bf16.gmra.mrb[0].mxu0 %v1682
      %v2178 = vpop.f32.mrb[0].mxu0
      %v2179 = vadd.f32 0.0, %v2178
      %v2180 = vpop.f32.mrb[0].mxu0
      %v2181 = vpop.f32.mrb[0].mxu0
      %v2182 = vadd.f32 0.0, %v2181
      %v2183 = vpop.f32.mrb[0].mxu0
      %2184 = vmatprep.mubr.bf16.mxu0 %v1685
      %2185 = vmatmul.mubr.bf16.gmra.mrb[0].mxu0 %v1684
      %v2186 = vpop.f32.mrb[0].mxu0
      %v2187 = vadd.f32 0.0, %v2186
      %v2188 = vpop.f32.mrb[0].mxu0
      %v2189 = vpop.f32.mrb[0].mxu0
      %v2190 = vadd.f32 0.0, %v2189
      %v2191 = vpop.f32.mrb[0].mxu0
      %2192 = vmatprep.mubr.bf16.mxu0 %v1687
      %2193 = vmatmul.mubr.bf16.gmra.mrb[0].mxu0 %v1686
      %v2194 = vpop.f32.mrb[0].mxu0
      %v2195 = vadd.f32 0.0, %v2194
      %v2196 = vpop.f32.mrb[0].mxu0
      %v2197 = vpop.f32.mrb[0].mxu0
      %v2198 = vadd.f32 0.0, %v2197
      %v2199 = vpop.f32.mrb[0].mxu0
      %2200 = vmatprep.mubr.bf16.mxu0 %v1689
      %2201 = vmatmul.mubr.bf16.gmra.mrb[0].mxu0 %v1688
      %v2202 = vpop.f32.mrb[0].mxu0
      %v2203 = vadd.f32 0.0, %v2202
      %v2204 = vpop.f32.mrb[0].mxu0
      %v2205 = vpop.f32.mrb[0].mxu0
      %v2206 = vadd.f32 0.0, %v2205
      %v2207 = vpop.f32.mrb[0].mxu0
      %2208 = vmatprep.mubr.bf16.mxu0 %v1691
      %2209 = vmatmul.mubr.bf16.gmra.mrb[0].mxu0 %v1690
      %v2210 = vpop.f32.mrb[0].mxu0
      %v2211 = vadd.f32 0.0, %v2210
      %v2212 = vpop.f32.mrb[0].mxu0
      %v2213 = vpop.f32.mrb[0].mxu0
      %v2214 = vadd.f32 0.0, %v2213
      %v2215 = vpop.f32.mrb[0].mxu0
      %2216 = vmatprep.mubr.bf16.mxu0 %v1693
      %2217 = vmatmul.mubr.bf16.gmra.mrb[0].mxu0 %v1692
      %v2218 = vpop.f32.mrb[0].mxu0
      %v2219 = vadd.f32 0.0, %v2218
      %v2220 = vpop.f32.mrb[0].mxu0
      %v2221 = vpop.f32.mrb[0].mxu0
      %v2222 = vadd.f32 0.0, %v2221
      %v2223 = vpop.f32.mrb[0].mxu0
      %2224 = vmatprep.mubr.bf16.mxu0 %v1695
      %2225 = vmatmul.mubr.bf16.gmra.mrb[0].mxu0 %v1694
      %v2226 = vpop.f32.mrb[0].mxu0
      %v2227 = vadd.f32 0.0, %v2226
      %v2228 = vpop.f32.mrb[0].mxu0
      %v2229 = vpop.f32.mrb[0].mxu0
      %v2230 = vadd.f32 0.0, %v2229
      %v2231 = vpop.f32.mrb[0].mxu0
      %2232 = vmatprep.mubr.bf16.mxu0 %v1697
      %2233 = vmatmul.mubr.bf16.gmra.mrb[0].mxu0 %v1696
      %v2234 = vpop.f32.mrb[0].mxu0
      %v2235 = vadd.f32 0.0, %v2234
      %v2236 = vpop.f32.mrb[0].mxu0
      %v2237 = vpop.f32.mrb[0].mxu0
      %v2238 = vadd.f32 0.0, %v2237
      %v2239 = vpop.f32.mrb[0].mxu0
      %2240 = vmatprep.mubr.bf16.mxu0 %v1699
      %2241 = vmatmul.mubr.bf16.gmra.mrb[0].mxu0 %v1698
      %v2242 = vpop.f32.mrb[0].mxu0
      %v2243 = vadd.f32 0.0, %v2242
      %v2244 = vpop.f32.mrb[0].mxu0
      %v2245 = vpop.f32.mrb[0].mxu0
      %v2246 = vadd.f32 0.0, %v2245
      %v2247 = vpop.f32.mrb[0].mxu0
      %2248 = vmatprep.mubr.bf16.mxu0 %v1701
      %2249 = vmatmul.mubr.bf16.gmra.mrb[0].mxu0 %v1700
      %v2250 = vpop.f32.mrb[0].mxu0
      %v2251 = vadd.f32 0.0, %v2250
      %v2252 = vpop.f32.mrb[0].mxu0
      %v2253 = vpop.f32.mrb[0].mxu0
      %v2254 = vadd.f32 0.0, %v2253
      %v2255 = vpop.f32.mrb[0].mxu0
      %2256 = vmatprep.mubr.bf16.mxu0 %v1703
      %2257 = vmatmul.mubr.bf16.gmra.mrb[0].mxu0 %v1702
      %v2258 = vpop.f32.mrb[0].mxu0
      %v2259 = vadd.f32 0.0, %v2258
      %v2260 = vpop.f32.mrb[0].mxu0
      %v2261 = vpop.f32.mrb[0].mxu0
      %v2262 = vadd.f32 0.0, %v2261
      %v2263 = vpop.f32.mrb[0].mxu0
      %2264 = vmatprep.mubr.bf16.mxu0 %v1705
      %2265 = vmatmul.mubr.bf16.gmra.mrb[0].mxu0 %v1704
      %v2266 = vpop.f32.mrb[0].mxu0
      %v2267 = vadd.f32 0.0, %v2266
      %v2268 = vpop.f32.mrb[0].mxu0
      %v2269 = vpop.f32.mrb[0].mxu0
      %v2270 = vadd.f32 0.0, %v2269
      %v2271 = vpop.f32.mrb[0].mxu0
      %2272 = vmatprep.mubr.bf16.mxu0 %v1707
      %2273 = vmatmul.mubr.bf16.gmra.mrb[0].mxu0 %v1706
      %v2274 = vpop.f32.mrb[0].mxu0
      %v2275 = vadd.f32 0.0, %v2274
      %v2276 = vpop.f32.mrb[0].mxu0
      %v2277 = vpop.f32.mrb[0].mxu0
      %v2278 = vadd.f32 0.0, %v2277
      %v2279 = vpop.f32.mrb[0].mxu0
      %2280 = vmatprep.mubr.bf16.mxu0 %v1709
      %2281 = vmatmul.mubr.bf16.gmra.mrb[0].mxu0 %v1708
      %v2282 = vpop.f32.mrb[0].mxu0
      %v2283 = vadd.f32 0.0, %v2282
      %v2284 = vpop.f32.mrb[0].mxu0
      %v2285 = vpop.f32.mrb[0].mxu0
      %v2286 = vadd.f32 0.0, %v2285
      %v2287 = vpop.f32.mrb[0].mxu0
      %2288 = vmatprep.mubr.bf16.mxu0 %v1711
      %2289 = vmatmul.mubr.bf16.gmra.mrb[0].mxu0 %v1710
      %v2290 = vpop.f32.mrb[0].mxu0
      %v2291 = vadd.f32 0.0, %v2290
      %v2292 = vpop.f32.mrb[0].mxu0
      %v2293 = vpop.f32.mrb[0].mxu0
      %v2294 = vadd.f32 0.0, %v2293
      %v2295 = vpop.f32.mrb[0].mxu0
      %2296 = vmatprep.mubr.bf16.mxu0 %v1713
      %2297 = vmatmul.mubr.bf16.gmra.mrb[0].mxu0 %v1712
      %v2298 = vpop.f32.mrb[0].mxu0
      %v2299 = vadd.f32 0.0, %v2298
      %v2300 = vpop.f32.mrb[0].mxu0
      %v2301 = vpop.f32.mrb[0].mxu0
      %v2302 = vadd.f32 0.0, %v2301
      %v2303 = vpop.f32.mrb[0].mxu0
      %2304 = vmatprep.mubr.bf16.mxu0 %v1715
      %2305 = vmatmul.mubr.bf16.gmra.mrb[0].mxu0 %v1714
      %v2306 = vpop.f32.mrb[0].mxu0
      %v2307 = vadd.f32 0.0, %v2306
      %v2308 = vpop.f32.mrb[0].mxu0
      %v2309 = vpop.f32.mrb[0].mxu0
      %v2310 = vadd.f32 0.0, %v2309
      %v2311 = vpop.f32.mrb[0].mxu0
      %2312 = vmatprep.mubr.bf16.mxu0 %v1717
      %2313 = vmatmul.mubr.bf16.gmra.mrb[0].mxu0 %v1716
      %v2314 = vpop.f32.mrb[0].mxu0
      %v2315 = vadd.f32 0.0, %v2314
      %v2316 = vpop.f32.mrb[0].mxu0
      %v2317 = vpop.f32.mrb[0].mxu0
      %v2318 = vadd.f32 0.0, %v2317
      %v2319 = vpop.f32.mrb[0].mxu0
      %2320 = vmatprep.mubr.bf16.mxu0 %v1719
      %2321 = vmatmul.mubr.bf16.gmra.mrb[0].mxu0 %v1718
      %v2322 = vpop.f32.mrb[0].mxu0
      %v2323 = vadd.f32 0.0, %v2322
      %v2324 = vpop.f32.mrb[0].mxu0
      %v2325 = vpop.f32.mrb[0].mxu0
      %v2326 = vadd.f32 0.0, %v2325
      %v2327 = vpop.f32.mrb[0].mxu0
      %2328 = vmatprep.mubr.bf16.mxu0 %v1721
      %2329 = vmatmul.mubr.bf16.gmra.mrb[0].mxu0 %v1720
      %v2330 = vpop.f32.mrb[0].mxu0
      %v2331 = vadd.f32 0.0, %v2330
      %v2332 = vpop.f32.mrb[0].mxu0
      %v2333 = vpop.f32.mrb[0].mxu0
      %v2334 = vadd.f32 0.0, %v2333
      %v2335 = vpop.f32.mrb[0].mxu0
      %2336 = vmatprep.mubr.bf16.mxu0 %v1723
      %2337 = vmatmul.mubr.bf16.gmra.mrb[0].mxu0 %v1722
      %v2338 = vpop.f32.mrb[0].mxu0
      %v2339 = vadd.f32 0.0, %v2338
      %v2340 = vpop.f32.mrb[0].mxu0
      %v2341 = vpop.f32.mrb[0].mxu0
      %v2342 = vadd.f32 0.0, %v2341
      %v2343 = vpop.f32.mrb[0].mxu0
      %2344 = vmatprep.mubr.bf16.mxu0 %v1725
      %2345 = vmatmul.mubr.bf16.gmra.mrb[0].mxu0 %v1724
      %v2346 = vpop.f32.mrb[0].mxu0
      %v2347 = vadd.f32 0.0, %v2346
      %v2348 = vpop.f32.mrb[0].mxu0
      %v2349 = vpop.f32.mrb[0].mxu0
      %v2350 = vadd.f32 0.0, %v2349
      %v2351 = vpop.f32.mrb[0].mxu0
      %2352 = vmatprep.mubr.bf16.mxu0 %v1727
      %2353 = vmatmul.mubr.bf16.gmra.mrb[0].mxu0 %v1726
      %v2354 = vpop.f32.mrb[0].mxu0
      %v2355 = vadd.f32 0.0, %v2354
      %v2356 = vpop.f32.mrb[0].mxu0
      %v2357 = vpop.f32.mrb[0].mxu0
      %v2358 = vadd.f32 0.0, %v2357
      %v2359 = vpop.f32.mrb[0].mxu0
      %2360 = vmatprep.mubr.bf16.mxu0 %v1729
      %2361 = vmatmul.mubr.bf16.gmra.mrb[0].mxu0 %v1728
      %v2362 = vpop.f32.mrb[0].mxu0
      %v2363 = vadd.f32 0.0, %v2362
      %v2364 = vpop.f32.mrb[0].mxu0
      %v2365 = vpop.f32.mrb[0].mxu0
      %v2366 = vadd.f32 0.0, %v2365
      %v2367 = vpop.f32.mrb[0].mxu0
      %2368 = vmatprep.mubr.bf16.mxu0 %v1731
      %2369 = vmatmul.mubr.bf16.gmra.mrb[0].mxu0 %v1730
      %v2370 = vpop.f32.mrb[0].mxu0
      %v2371 = vadd.f32 0.0, %v2370
      %v2372 = vpop.f32.mrb[0].mxu0
      %v2373 = vpop.f32.mrb[0].mxu0
      %v2374 = vadd.f32 0.0, %v2373
      %v2375 = vpop.f32.mrb[0].mxu0
      %2376 = vmatprep.mubr.bf16.mxu0 %v1733
      %2377 = vmatmul.mubr.bf16.gmra.mrb[0].mxu0 %v1732
      %v2378 = vpop.f32.mrb[0].mxu0
      %v2379 = vadd.f32 0.0, %v2378
      %v2380 = vpop.f32.mrb[0].mxu0
      %v2381 = vpop.f32.mrb[0].mxu0
      %v2382 = vadd.f32 0.0, %v2381
      %v2383 = vpop.f32.mrb[0].mxu0
      %2384 = vmatprep.mubr.bf16.mxu0 %v1735
      %2385 = vmatmul.mubr.bf16.gmra.mrb[0].mxu0 %v1734
      %v2386 = vpop.f32.mrb[0].mxu0
      %v2387 = vadd.f32 0.0, %v2386
      %v2388 = vpop.f32.mrb[0].mxu0
      %v2389 = vpop.f32.mrb[0].mxu0
      %v2390 = vadd.f32 0.0, %v2389
      %v2391 = vpop.f32.mrb[0].mxu0
      %2392 = vmatprep.mubr.bf16.mxu0 %v1737
      %2393 = vmatmul.mubr.bf16.gmra.mrb[0].mxu0 %v1736
      %v2394 = vpop.f32.mrb[0].mxu0
      %v2395 = vadd.f32 0.0, %v2394
      %v2396 = vpop.f32.mrb[0].mxu0
      %v2397 = vpop.f32.mrb[0].mxu0
      %v2398 = vadd.f32 0.0, %v2397
      %v2399 = vpop.f32.mrb[0].mxu0
      %2400 = vmatprep.mubr.bf16.mxu0 %v1739
      %2401 = vmatmul.mubr.bf16.gmra.mrb[0].mxu0 %v1738
      %v2402 = vpop.f32.mrb[0].mxu0
      %v2403 = vadd.f32 0.0, %v2402
      %v2404 = vpop.f32.mrb[0].mxu0
      %v2405 = vpop.f32.mrb[0].mxu0
      %v2406 = vadd.f32 0.0, %v2405
      %v2407 = vpop.f32.mrb[0].mxu0
      %2408 = vmatprep.mubr.bf16.mxu0 %v1741
      %2409 = vmatmul.mubr.bf16.gmra.mrb[0].mxu0 %v1740
      %v2410 = vpop.f32.mrb[0].mxu0
      %v2411 = vadd.f32 0.0, %v2410
      %v2412 = vpop.f32.mrb[0].mxu0
      %v2413 = vpop.f32.mrb[0].mxu0
      %v2414 = vadd.f32 0.0, %v2413
      %v2415 = vpop.f32.mrb[0].mxu0
      %2416 = vmatprep.mubr.bf16.mxu0 %v1743
      %2417 = vmatmul.mubr.bf16.gmra.mrb[0].mxu0 %v1742
      %v2418 = vpop.f32.mrb[0].mxu0
      %v2419 = vadd.f32 0.0, %v2418
      %v2420 = vpop.f32.mrb[0].mxu0
      %v2421 = vpop.f32.mrb[0].mxu0
      %v2422 = vadd.f32 0.0, %v2421
      %v2423 = vpop.f32.mrb[0].mxu0
      %2424 = vmatprep.mubr.bf16.mxu0 %v1745
      %2425 = vmatmul.mubr.bf16.gmra.mrb[0].mxu0 %v1744
      %v2426 = vpop.f32.mrb[0].mxu0
      %v2427 = vadd.f32 0.0, %v2426
      %v2428 = vpop.f32.mrb[0].mxu0
      %v2429 = vpop.f32.mrb[0].mxu0
      %v2430 = vadd.f32 0.0, %v2429
      %v2431 = vpop.f32.mrb[0].mxu0
      %2432 = vmatprep.mubr.bf16.mxu0 %v1747
      %2433 = vmatmul.mubr.bf16.gmra.mrb[0].mxu0 %v1746
      %v2434 = vpop.f32.mrb[0].mxu0
      %v2435 = vadd.f32 0.0, %v2434
      %v2436 = vpop.f32.mrb[0].mxu0
      %v2437 = vpop.f32.mrb[0].mxu0
      %v2438 = vadd.f32 0.0, %v2437
      %v2439 = vpop.f32.mrb[0].mxu0
      %2440 = vmatprep.mubr.bf16.mxu0 %v1749
      %2441 = vmatmul.mubr.bf16.gmra.mrb[0].mxu0 %v1748
      %v2442 = vpop.f32.mrb[0].mxu0
      %v2443 = vadd.f32 0.0, %v2442
      %v2444 = vpop.f32.mrb[0].mxu0
      %v2445 = vpop.f32.mrb[0].mxu0
      %v2446 = vadd.f32 0.0, %v2445
      %v2447 = vpop.f32.mrb[0].mxu0
      %2448 = vmatprep.mubr.bf16.mxu0 %v1751
      %2449 = vmatmul.mubr.bf16.gmra.mrb[0].mxu0 %v1750
      %v2450 = vpop.f32.mrb[0].mxu0
      %v2451 = vadd.f32 0.0, %v2450
      %v2452 = vpop.f32.mrb[0].mxu0
      %v2453 = vpop.f32.mrb[0].mxu0
      %v2454 = vadd.f32 0.0, %v2453
      %v2455 = vpop.f32.mrb[0].mxu0
      %2456 = vmatprep.mubr.bf16.mxu0 %v1753
      %2457 = vmatmul.mubr.bf16.gmra.mrb[0].mxu0 %v1752
      %v2458 = vpop.f32.mrb[0].mxu0
      %v2459 = vadd.f32 0.0, %v2458
      %v2460 = vpop.f32.mrb[0].mxu0
      %v2461 = vpop.f32.mrb[0].mxu0
      %v2462 = vadd.f32 0.0, %v2461
      %v2463 = vpop.f32.mrb[0].mxu0
      %2464 = vmatprep.mubr.bf16.mxu0 %v1755
      %2465 = vmatmul.mubr.bf16.gmra.mrb[0].mxu0 %v1754
      %v2466 = vpop.f32.mrb[0].mxu0
      %v2467 = vadd.f32 0.0, %v2466
      %v2468 = vpop.f32.mrb[0].mxu0
      %v2469 = vpop.f32.mrb[0].mxu0
      %v2470 = vadd.f32 0.0, %v2469
      %v2471 = vpop.f32.mrb[0].mxu0
      %2472 = vmatprep.mubr.bf16.mxu0 %v1757
      %2473 = vmatmul.mubr.bf16.gmra.mrb[0].mxu0 %v1756
      %v2474 = vpop.f32.mrb[0].mxu0
      %v2475 = vadd.f32 0.0, %v2474
      %v2476 = vpop.f32.mrb[0].mxu0
      %v2477 = vpop.f32.mrb[0].mxu0
      %v2478 = vadd.f32 0.0, %v2477
      %v2479 = vpop.f32.mrb[0].mxu0
      %2480 = vmatprep.mubr.bf16.mxu0 %v1759
      %2481 = vmatmul.mubr.bf16.gmra.mrb[0].mxu0 %v1758
      %v2482 = vpop.f32.mrb[0].mxu0
      %v2483 = vadd.f32 0.0, %v2482
      %v2484 = vpop.f32.mrb[0].mxu0
      %v2485 = vpop.f32.mrb[0].mxu0
      %v2486 = vadd.f32 0.0, %v2485
      %v2487 = vpop.f32.mrb[0].mxu0
      %2488 = vmatprep.mubr.bf16.mxu0 %v1761
      %2489 = vmatmul.mubr.bf16.gmra.mrb[0].mxu0 %v1760
      %v2490 = vpop.f32.mrb[0].mxu0
      %v2491 = vadd.f32 0.0, %v2490
      %v2492 = vpop.f32.mrb[0].mxu0
      %v2493 = vpop.f32.mrb[0].mxu0
      %v2494 = vadd.f32 0.0, %v2493
      %v2495 = vpop.f32.mrb[0].mxu0
      %2496 = vmatprep.mubr.bf16.mxu0 %v1763
      %2497 = vmatmul.mubr.bf16.gmra.mrb[0].mxu0 %v1762
      %v2498 = vpop.f32.mrb[0].mxu0
      %v2499 = vadd.f32 0.0, %v2498
      %v2500 = vpop.f32.mrb[0].mxu0
      %v2501 = vpop.f32.mrb[0].mxu0
      %v2502 = vadd.f32 0.0, %v2501
      %v2503 = vpop.f32.mrb[0].mxu0
      %2504 = vmatprep.mubr.bf16.mxu0 %v1765
      %2505 = vmatmul.mubr.bf16.gmra.mrb[0].mxu0 %v1764
      %v2506 = vpop.f32.mrb[0].mxu0
      %v2507 = vadd.f32 0.0, %v2506
      %v2508 = vpop.f32.mrb[0].mxu0
      %v2509 = vpop.f32.mrb[0].mxu0
      %v2510 = vadd.f32 0.0, %v2509
      %v2511 = vpop.f32.mrb[0].mxu0
      %2512 = vmatprep.mubr.bf16.mxu0 %v1767
      %2513 = vmatmul.mubr.bf16.gmra.mrb[0].mxu0 %v1766
      %v2514 = vpop.f32.mrb[0].mxu0
      %v2515 = vadd.f32 0.0, %v2514
      %v2516 = vpop.f32.mrb[0].mxu0
      %v2517 = vpop.f32.mrb[0].mxu0
      %v2518 = vadd.f32 0.0, %v2517
      %v2519 = vpop.f32.mrb[0].mxu0
      %2520 = vmatprep.mubr.bf16.mxu0 %v1769
      %2521 = vmatmul.mubr.bf16.gmra.mrb[0].mxu0 %v1768
      %v2522 = vpop.f32.mrb[0].mxu0
      %v2523 = vadd.f32 0.0, %v2522
      %v2524 = vpop.f32.mrb[0].mxu0
      %v2525 = vpop.f32.mrb[0].mxu0
      %v2526 = vadd.f32 0.0, %v2525
      %v2527 = vpop.f32.mrb[0].mxu0
      %2528 = vmatprep.mubr.bf16.mxu0 %v1771
      %2529 = vmatmul.mubr.bf16.gmra.mrb[0].mxu0 %v1770
      %v2530 = vpop.f32.mrb[0].mxu0
      %v2531 = vadd.f32 0.0, %v2530
      %v2532 = vpop.f32.mrb[0].mxu0
      %v2533 = vpop.f32.mrb[0].mxu0
      %v2534 = vadd.f32 0.0, %v2533
      %v2535 = vpop.f32.mrb[0].mxu0
      %2536 = vmatprep.mubr.bf16.mxu0 %v1773
      %2537 = vmatmul.mubr.bf16.gmra.mrb[0].mxu0 %v1772
      %v2538 = vpop.f32.mrb[0].mxu0
      %v2539 = vadd.f32 0.0, %v2538
      %v2540 = vpop.f32.mrb[0].mxu0
      %v2541 = vpop.f32.mrb[0].mxu0
      %v2542 = vadd.f32 0.0, %v2541
      %v2543 = vpop.f32.mrb[0].mxu0
      %2544 = vmatprep.mubr.bf16.mxu0 %v1775
      %2545 = vmatmul.mubr.bf16.gmra.mrb[0].mxu0 %v1774
      %v2546 = vpop.f32.mrb[0].mxu0
      %v2547 = vadd.f32 0.0, %v2546
      %v2548 = vpop.f32.mrb[0].mxu0
      %v2549 = vpop.f32.mrb[0].mxu0
      %v2550 = vadd.f32 0.0, %v2549
      %v2551 = vpop.f32.mrb[0].mxu0
      %2552 = vmatprep.mubr.bf16.mxu0 %v1777
      %2553 = vmatmul.mubr.bf16.gmra.mrb[0].mxu0 %v1776
      %v2554 = vpop.f32.mrb[0].mxu0
      %v2555 = vadd.f32 0.0, %v2554
      %v2556 = vpop.f32.mrb[0].mxu0
      %v2557 = vpop.f32.mrb[0].mxu0
      %v2558 = vadd.f32 0.0, %v2557
      %v2559 = vpop.f32.mrb[0].mxu0
      %2560 = vmatprep.mubr.bf16.mxu0 %v1779
      %2561 = vmatmul.mubr.bf16.gmra.mrb[0].mxu0 %v1778
      %v2562 = vpop.f32.mrb[0].mxu0
      %v2563 = vadd.f32 0.0, %v2562
      %v2564 = vpop.f32.mrb[0].mxu0
      %v2565 = vpop.f32.mrb[0].mxu0
      %v2566 = vadd.f32 0.0, %v2565
      %v2567 = vpop.f32.mrb[0].mxu0
      %2568 = vmatprep.mubr.bf16.mxu0 %v1781
      %2569 = vmatmul.mubr.bf16.gmra.mrb[0].mxu0 %v1780
      %v2570 = vpop.f32.mrb[0].mxu0
      %v2571 = vadd.f32 0.0, %v2570
      %v2572 = vpop.f32.mrb[0].mxu0
      %v2573 = vpop.f32.mrb[0].mxu0
      %v2574 = vadd.f32 0.0, %v2573
      %v2575 = vpop.f32.mrb[0].mxu0
      %2576 = vmatprep.mubr.bf16.mxu0 %v1783
      %2577 = vmatmul.mubr.bf16.gmra.mrb[0].mxu0 %v1782
      %v2578 = vpop.f32.mrb[0].mxu0
      %v2579 = vadd.f32 0.0, %v2578
      %v2580 = vpop.f32.mrb[0].mxu0
      %v2581 = vpop.f32.mrb[0].mxu0
      %v2582 = vadd.f32 0.0, %v2581
      %v2583 = vpop.f32.mrb[0].mxu0
      %2584 = vmatprep.mubr.bf16.mxu0 %v1785
      %2585 = vmatmul.mubr.bf16.gmra.mrb[0].mxu0 %v1784
      %v2586 = vpop.f32.mrb[0].mxu0
      %v2587 = vadd.f32 0.0, %v2586
      %v2588 = vpop.f32.mrb[0].mxu0
      %v2589 = vpop.f32.mrb[0].mxu0
      %v2590 = vadd.f32 0.0, %v2589
      %v2591 = vpop.f32.mrb[0].mxu0
      %2592 = vmatprep.mubr.bf16.mxu0 %v1787
      %2593 = vmatmul.mubr.bf16.gmra.mrb[0].mxu0 %v1786
      %v2594 = vpop.f32.mrb[0].mxu0
      %v2595 = vadd.f32 0.0, %v2594
      %v2596 = vpop.f32.mrb[0].mxu0
      %v2597 = vpop.f32.mrb[0].mxu0
      %v2598 = vadd.f32 0.0, %v2597
      %v2599 = vpop.f32.mrb[0].mxu0
      %2600 = vmatprep.mubr.bf16.mxu0 %v1789
      %2601 = vmatmul.mubr.bf16.gmra.mrb[0].mxu0 %v1788
      %v2602 = vpop.f32.mrb[0].mxu0
      %v2603 = vadd.f32 0.0, %v2602
      %v2604 = vpop.f32.mrb[0].mxu0
      %v2605 = vpop.f32.mrb[0].mxu0
      %v2606 = vadd.f32 0.0, %v2605
      %v2607 = vpop.f32.mrb[0].mxu0
      %2608 = vmatprep.mubr.bf16.mxu0 %v1791
      %2609 = vmatmul.mubr.bf16.gmra.mrb[0].mxu0 %v1790
      %v2610 = vpop.f32.mrb[0].mxu0
      %v2611 = vadd.f32 0.0, %v2610
      %v2612 = vpop.f32.mrb[0].mxu0
      %v2613 = vpop.f32.mrb[0].mxu0
      %v2614 = vadd.f32 0.0, %v2613
      %v2615 = vpop.f32.mrb[0].mxu0
      %2616 = vmatprep.mubr.bf16.mxu0 %v1793
      %2617 = vmatmul.mubr.bf16.gmra.mrb[0].mxu0 %v1792
      %v2618 = vpop.f32.mrb[0].mxu0
      %v2619 = vadd.f32 0.0, %v2618
      %v2620 = vpop.f32.mrb[0].mxu0
      %v2621 = vpop.f32.mrb[0].mxu0
      %v2622 = vadd.f32 0.0, %v2621
      %v2623 = vpop.f32.mrb[0].mxu0
      %2624 = vmatprep.mubr.bf16.mxu0 %v1795
      %2625 = vmatmul.mubr.bf16.gmra.mrb[0].mxu0 %v1794
      %v2626 = vpop.f32.mrb[0].mxu0
      %v2627 = vadd.f32 0.0, %v2626
      %v2628 = vpop.f32.mrb[0].mxu0
      %v2629 = vpop.f32.mrb[0].mxu0
      %v2630 = vadd.f32 0.0, %v2629
      %v2631 = vpop.f32.mrb[0].mxu0
      %2632 = vmatprep.mubr.bf16.mxu0 %v1797
      %2633 = vmatmul.mubr.bf16.gmra.mrb[0].mxu0 %v1796
      %v2634 = vpop.f32.mrb[0].mxu0
      %v2635 = vadd.f32 0.0, %v2634
      %v2636 = vpop.f32.mrb[0].mxu0
      %v2637 = vpop.f32.mrb[0].mxu0
      %v2638 = vadd.f32 0.0, %v2637
      %v2639 = vpop.f32.mrb[0].mxu0
      %2640 = vdwg.mxu0
      %v2641 = vpack.c.bf16 %v1998, %v1995
      %v2642 = vpack.c.bf16 %v2006, %v2003
      %v2643 = vpack.c.bf16 %v2014, %v2011
      %v2644 = vpack.c.bf16 %v2022, %v2019
      %v2645 = vpack.c.bf16 %v2030, %v2027
      %v2646 = vpack.c.bf16 %v2038, %v2035
      %v2647 = vpack.c.bf16 %v2046, %v2043
      %v2648 = vpack.c.bf16 %v2054, %v2051
      %v2649 = vpack.c.bf16 %v2062, %v2059
      %v2650 = vpack.c.bf16 %v2070, %v2067
      %v2651 = vpack.c.bf16 %v2078, %v2075
      %v2652 = vpack.c.bf16 %v2086, %v2083
      %v2653 = vpack.c.bf16 %v2094, %v2091
      %v2654 = vpack.c.bf16 %v2102, %v2099
      %v2655 = vpack.c.bf16 %v2110, %v2107
      %v2656 = vpack.c.bf16 %v2118, %v2115
      %v2657 = vpack.c.bf16 %v2126, %v2123
      %v2658 = vpack.c.bf16 %v2134, %v2131
      %v2659 = vpack.c.bf16 %v2142, %v2139
      %v2660 = vpack.c.bf16 %v2150, %v2147
      %v2661 = vpack.c.bf16 %v2158, %v2155
      %v2662 = vpack.c.bf16 %v2166, %v2163
      %v2663 = vpack.c.bf16 %v2174, %v2171
      %v2664 = vpack.c.bf16 %v2182, %v2179
      %v2665 = vpack.c.bf16 %v2190, %v2187
      %v2666 = vpack.c.bf16 %v2198, %v2195
      %v2667 = vpack.c.bf16 %v2206, %v2203
      %v2668 = vpack.c.bf16 %v2214, %v2211
      %v2669 = vpack.c.bf16 %v2222, %v2219
      %v2670 = vpack.c.bf16 %v2230, %v2227
      %v2671 = vpack.c.bf16 %v2238, %v2235
      %v2672 = vpack.c.bf16 %v2246, %v2243
      %v2673 = vpack.c.bf16 %v2254, %v2251
      %v2674 = vpack.c.bf16 %v2262, %v2259
      %v2675 = vpack.c.bf16 %v2270, %v2267
      %v2676 = vpack.c.bf16 %v2278, %v2275
      %v2677 = vpack.c.bf16 %v2286, %v2283
      %v2678 = vpack.c.bf16 %v2294, %v2291
      %v2679 = vpack.c.bf16 %v2302, %v2299
      %v2680 = vpack.c.bf16 %v2310, %v2307
      %v2681 = vpack.c.bf16 %v2318, %v2315
      %v2682 = vpack.c.bf16 %v2326, %v2323
      %v2683 = vpack.c.bf16 %v2334, %v2331
      %v2684 = vpack.c.bf16 %v2342, %v2339
      %v2685 = vpack.c.bf16 %v2350, %v2347
      %v2686 = vpack.c.bf16 %v2358, %v2355
      %v2687 = vpack.c.bf16 %v2366, %v2363
      %v2688 = vpack.c.bf16 %v2374, %v2371
      %v2689 = vpack.c.bf16 %v2382, %v2379
      %v2690 = vpack.c.bf16 %v2390, %v2387
      %v2691 = vpack.c.bf16 %v2398, %v2395
      %v2692 = vpack.c.bf16 %v2406, %v2403
      %v2693 = vpack.c.bf16 %v2414, %v2411
      %v2694 = vpack.c.bf16 %v2422, %v2419
      %v2695 = vpack.c.bf16 %v2430, %v2427
      %v2696 = vpack.c.bf16 %v2438, %v2435
      %v2697 = vpack.c.bf16 %v2446, %v2443
      %v2698 = vpack.c.bf16 %v2454, %v2451
      %v2699 = vpack.c.bf16 %v2462, %v2459
      %v2700 = vpack.c.bf16 %v2470, %v2467
      %v2701 = vpack.c.bf16 %v2478, %v2475
      %v2702 = vpack.c.bf16 %v2486, %v2483
      %v2703 = vpack.c.bf16 %v2494, %v2491
      %v2704 = vpack.c.bf16 %v2502, %v2499
      %v2705 = vpack.c.bf16 %v2510, %v2507
      %v2706 = vpack.c.bf16 %v2518, %v2515
      %v2707 = vpack.c.bf16 %v2526, %v2523
      %v2708 = vpack.c.bf16 %v2534, %v2531
      %v2709 = vpack.c.bf16 %v2542, %v2539
      %v2710 = vpack.c.bf16 %v2550, %v2547
      %v2711 = vpack.c.bf16 %v2558, %v2555
      %v2712 = vpack.c.bf16 %v2566, %v2563
      %v2713 = vpack.c.bf16 %v2574, %v2571
      %v2714 = vpack.c.bf16 %v2582, %v2579
      %v2715 = vpack.c.bf16 %v2590, %v2587
      %v2716 = vpack.c.bf16 %v2598, %v2595
      %v2717 = vpack.c.bf16 %v2606, %v2603
      %v2718 = vpack.c.bf16 %v2614, %v2611
      %v2719 = vpack.c.bf16 %v2622, %v2619
      %v2720 = vpack.c.bf16 %v2630, %v2627
      %v2721 = vpack.c.bf16 %v2638, %v2635
      %vm2722 = vsmask.f32 7424
      %v2724 = vshrl.u32 %v2646, 16
      %v2726 = vshll.u32 %v2646, 16
      %v2728 = vrot.slane %v2726, 1
      %v2729 = vor.u32 %v2724, %v2728
      %v2731 = vshll.u32 %v2647, 16
      %v2733 = vrot.slane %v2731, 1
      %v2734 = vsel %vm2722, %v2729, %v2733
      %v2735 = vshrl.u32 %v2647, 16
      %v2737 = vor.u32 %v2735, %v2733
      %v2739 = vshll.u32 %v2648, 16
      %v2741 = vrot.slane %v2739, 1
      %v2742 = vsel %vm2722, %v2737, %v2741
      %v2743 = vshrl.u32 %v2648, 16
      %v2745 = vor.u32 %v2743, %v2741
      %v2747 = vshll.u32 %v2649, 16
      %v2749 = vrot.slane %v2747, 1
      %v2750 = vsel %vm2722, %v2745, %v2749
      %v2751 = vshrl.u32 %v2649, 16
      %v2753 = vor.u32 %v2751, %v2749
      %v2755 = vshll.u32 %v2650, 16
      %v2757 = vrot.slane %v2755, 1
      %v2758 = vsel %vm2722, %v2753, %v2757
      %v2759 = vshrl.u32 %v2650, 16
      %v2761 = vor.u32 %v2759, %v2757
      %v2763 = vshll.u32 %v2651, 16
      %v2765 = vrot.slane %v2763, 1
      %v2766 = vsel %vm2722, %v2761, %v2765
      %v2767 = vshrl.u32 %v2651, 16
      %2769 = vrot.lane.b32.xlu0 %v2734, 16
      %v2770 = vpop.permute.xlu0 %2769
      %2771 = vrot.lane.b32.xlu0 %v2742, 16
      %v2772 = vpop.permute.xlu0 %2771
      %2773 = vrot.lane.b32.xlu0 %v2750, 16
      %v2774 = vpop.permute.xlu0 %2773
      %2775 = vrot.lane.b32.xlu0 %v2758, 16
      %v2776 = vpop.permute.xlu0 %2775
      %2777 = vrot.lane.b32.xlu0 %v2766, 16
      %v2778 = vpop.permute.xlu0 %2777
      %2779 = vrot.lane.b32.xlu0 %v2767, 16
      %v2780 = vpop.permute.xlu0 %2779
      %vm2787 = vcmask 1046528
      %v2788 = vrot.slane %v2651, 1
      %v2789 = vrot.slane %v2652, 1
      %v2790 = vsel %vm2787, %v2788, %v2789
      %v2791 = vrot.slane %v2653, 1
      %v2792 = vsel %vm2787, %v2789, %v2791
      %v2793 = vrot.slane %v2654, 1
      %v2794 = vsel %vm2787, %v2791, %v2793
      %v2795 = vrot.slane %v2655, 1
      %v2796 = vsel %vm2787, %v2793, %v2795
      %v2797 = vrot.slane %v2656, 1
      %v2798 = vsel %vm2787, %v2795, %v2797
      %2799 = vrot.lane.b32.xlu0 %v2790, 32
      %v2800 = vpop.permute.xlu0 %2799
      %2801 = vrot.lane.b32.xlu0 %v2792, 32
      %v2802 = vpop.permute.xlu0 %2801
      %2803 = vrot.lane.b32.xlu0 %v2794, 32
      %v2804 = vpop.permute.xlu0 %2803
      %2805 = vrot.lane.b32.xlu0 %v2796, 32
      %v2806 = vpop.permute.xlu0 %2805
      %2807 = vrot.lane.b32.xlu0 %v2798, 32
      %v2808 = vpop.permute.xlu0 %2807
      %2809 = vrot.lane.b32.xlu0 %v2797, 32
      %v2810 = vpop.permute.xlu0 %2809
      %vm2811 = vsmask.f32 6400
      %v2813 = vshrl.u32 %v2656, 16
      %v2815 = vrot.slane %v2813, 1
      %v2816 = vshll.u32 %v2656, 16
      %v2818 = vrot.slane %v2816, 2
      %v2819 = vor.u32 %v2815, %v2818
      %v2821 = vshrl.u32 %v2657, 16
      %v2823 = vrot.slane %v2821, 1
      %v2824 = vshll.u32 %v2657, 16
      %v2826 = vrot.slane %v2824, 2
      %v2827 = vor.u32 %v2823, %v2826
      %v2828 = vsel %vm2811, %v2819, %v2827
      %v2830 = vshrl.u32 %v2658, 16
      %v2832 = vrot.slane %v2830, 1
      %v2833 = vshll.u32 %v2658, 16
      %v2835 = vrot.slane %v2833, 2
      %v2836 = vor.u32 %v2832, %v2835
      %v2837 = vsel %vm2811, %v2827, %v2836
      %v2839 = vshrl.u32 %v2659, 16
      %v2841 = vrot.slane %v2839, 1
      %v2842 = vshll.u32 %v2659, 16
      %v2844 = vrot.slane %v2842, 2
      %v2845 = vor.u32 %v2841, %v2844
      %v2846 = vsel %vm2811, %v2836, %v2845
      %v2848 = vshrl.u32 %v2660, 16
      %v2850 = vrot.slane %v2848, 1
      %v2851 = vshll.u32 %v2660, 16
      %v2853 = vrot.slane %v2851, 2
      %v2854 = vor.u32 %v2850, %v2853
      %v2855 = vsel %vm2811, %v2845, %v2854
      %v2857 = vshrl.u32 %v2661, 16
      %v2859 = vrot.slane %v2857, 1
      %v2860 = vshll.u32 %v2661, 16
      %v2862 = vrot.slane %v2860, 2
      %v2863 = vor.u32 %v2859, %v2862
      %v2864 = vsel %vm2811, %v2854, %v2863
      %2865 = vrot.lane.b32.xlu0 %v2828, 48
      %v2866 = vpop.permute.xlu0 %2865
      %2867 = vrot.lane.b32.xlu0 %v2837, 48
      %v2868 = vpop.permute.xlu0 %2867
      %2869 = vrot.lane.b32.xlu0 %v2846, 48
      %v2870 = vpop.permute.xlu0 %2869
      %2871 = vrot.lane.b32.xlu0 %v2855, 48
      %v2872 = vpop.permute.xlu0 %2871
      %2873 = vrot.lane.b32.xlu0 %v2864, 48
      %v2874 = vpop.permute.xlu0 %2873
      %2875 = vrot.lane.b32.xlu0 %v2859, 48
      %v2876 = vpop.permute.xlu0 %2875
      %vm2883 = vcmask 1045504
      %v2884 = vrot.slane %v2661, 2
      %v2885 = vrot.slane %v2662, 2
      %v2886 = vsel %vm2883, %v2884, %v2885
      %v2887 = vrot.slane %v2663, 2
      %v2888 = vsel %vm2883, %v2885, %v2887
      %v2889 = vrot.slane %v2664, 2
      %v2890 = vsel %vm2883, %v2887, %v2889
      %v2891 = vrot.slane %v2665, 2
      %v2892 = vsel %vm2883, %v2889, %v2891
      %v2893 = vrot.slane %v2666, 2
      %v2894 = vsel %vm2883, %v2891, %v2893
      %2895 = vrot.lane.b32.xlu0 %v2886, 64
      %v2896 = vpop.permute.xlu0 %2895
      %2897 = vrot.lane.b32.xlu0 %v2888, 64
      %v2898 = vpop.permute.xlu0 %2897
      %2899 = vrot.lane.b32.xlu0 %v2890, 64
      %v2900 = vpop.permute.xlu0 %2899
      %2901 = vrot.lane.b32.xlu0 %v2892, 64
      %v2902 = vpop.permute.xlu0 %2901
      %2903 = vrot.lane.b32.xlu0 %v2894, 64
      %v2904 = vpop.permute.xlu0 %2903
      %2905 = vrot.lane.b32.xlu0 %v2893, 64
      %v2906 = vpop.permute.xlu0 %2905
      %vm2907 = vsmask.f32 5376
      %v2909 = vshrl.u32 %v2666, 16
      %v2911 = vrot.slane %v2909, 2
      %v2912 = vshll.u32 %v2666, 16
      %v2914 = vrot.slane %v2912, 3
      %v2915 = vor.u32 %v2911, %v2914
      %v2917 = vshrl.u32 %v2667, 16
      %v2919 = vrot.slane %v2917, 2
      %v2920 = vshll.u32 %v2667, 16
      %v2922 = vrot.slane %v2920, 3
      %v2923 = vor.u32 %v2919, %v2922
      %v2924 = vsel %vm2907, %v2915, %v2923
      %v2926 = vshrl.u32 %v2668, 16
      %v2928 = vrot.slane %v2926, 2
      %v2929 = vshll.u32 %v2668, 16
      %v2931 = vrot.slane %v2929, 3
      %v2932 = vor.u32 %v2928, %v2931
      %v2933 = vsel %vm2907, %v2923, %v2932
      %v2935 = vshrl.u32 %v2669, 16
      %v2937 = vrot.slane %v2935, 2
      %v2938 = vshll.u32 %v2669, 16
      %v2940 = vrot.slane %v2938, 3
      %v2941 = vor.u32 %v2937, %v2940
      %v2942 = vsel %vm2907, %v2932, %v2941
      %v2944 = vshrl.u32 %v2670, 16
      %v2946 = vrot.slane %v2944, 2
      %v2947 = vshll.u32 %v2670, 16
      %v2949 = vrot.slane %v2947, 3
      %v2950 = vor.u32 %v2946, %v2949
      %v2951 = vsel %vm2907, %v2941, %v2950
      %v2953 = vshrl.u32 %v2671, 16
      %v2955 = vrot.slane %v2953, 2
      %v2956 = vshll.u32 %v2671, 16
      %v2958 = vrot.slane %v2956, 3
      %v2959 = vor.u32 %v2955, %v2958
      %v2960 = vsel %vm2907, %v2950, %v2959
      %2961 = vrot.lane.b32.xlu0 %v2924, 80
      %v2962 = vpop.permute.xlu0 %2961
      %2963 = vrot.lane.b32.xlu0 %v2933, 80
      %v2964 = vpop.permute.xlu0 %2963
      %2965 = vrot.lane.b32.xlu0 %v2942, 80
      %v2966 = vpop.permute.xlu0 %2965
      %2967 = vrot.lane.b32.xlu0 %v2951, 80
      %v2968 = vpop.permute.xlu0 %2967
      %2969 = vrot.lane.b32.xlu0 %v2960, 80
      %v2970 = vpop.permute.xlu0 %2969
      %2971 = vrot.lane.b32.xlu0 %v2955, 80
      %v2972 = vpop.permute.xlu0 %2971
      %vm2979 = vcmask 1044480
      %v2980 = vrot.slane %v2671, 3
      %v2981 = vrot.slane %v2672, 3
      %v2982 = vsel %vm2979, %v2980, %v2981
      %v2983 = vrot.slane %v2673, 3
      %v2984 = vsel %vm2979, %v2981, %v2983
      %v2985 = vrot.slane %v2674, 3
      %v2986 = vsel %vm2979, %v2983, %v2985
      %v2987 = vrot.slane %v2675, 3
      %v2988 = vsel %vm2979, %v2985, %v2987
      %v2989 = vrot.slane %v2676, 3
      %v2990 = vsel %vm2979, %v2987, %v2989
      %2991 = vrot.lane.b32.xlu0 %v2982, 96
      %v2992 = vpop.permute.xlu0 %2991
      %2993 = vrot.lane.b32.xlu0 %v2984, 96
      %v2994 = vpop.permute.xlu0 %2993
      %2995 = vrot.lane.b32.xlu0 %v2986, 96
      %v2996 = vpop.permute.xlu0 %2995
      %2997 = vrot.lane.b32.xlu0 %v2988, 96
      %v2998 = vpop.permute.xlu0 %2997
      %2999 = vrot.lane.b32.xlu0 %v2990, 96
      %v3000 = vpop.permute.xlu0 %2999
      %3001 = vrot.lane.b32.xlu0 %v2989, 96
      %v3002 = vpop.permute.xlu0 %3001
      %vm3003 = vsmask.f32 4352
      %v3005 = vshrl.u32 %v2676, 16
      %v3007 = vrot.slane %v3005, 3
      %v3008 = vshll.u32 %v2676, 16
      %v3010 = vrot.slane %v3008, 4
      %v3011 = vor.u32 %v3007, %v3010
      %v3013 = vshrl.u32 %v2677, 16
      %v3015 = vrot.slane %v3013, 3
      %v3016 = vshll.u32 %v2677, 16
      %v3018 = vrot.slane %v3016, 4
      %v3019 = vor.u32 %v3015, %v3018
      %v3020 = vsel %vm3003, %v3011, %v3019
      %v3022 = vshrl.u32 %v2678, 16
      %v3024 = vrot.slane %v3022, 3
      %v3025 = vshll.u32 %v2678, 16
      %v3027 = vrot.slane %v3025, 4
      %v3028 = vor.u32 %v3024, %v3027
      %v3029 = vsel %vm3003, %v3019, %v3028
      %v3031 = vshrl.u32 %v2679, 16
      %v3033 = vrot.slane %v3031, 3
      %v3034 = vshll.u32 %v2679, 16
      %v3036 = vrot.slane %v3034, 4
      %v3037 = vor.u32 %v3033, %v3036
      %v3038 = vsel %vm3003, %v3028, %v3037
      %v3040 = vshrl.u32 %v2680, 16
      %v3042 = vrot.slane %v3040, 3
      %v3043 = vshll.u32 %v2680, 16
      %v3045 = vrot.slane %v3043, 4
      %v3046 = vor.u32 %v3042, %v3045
      %v3047 = vsel %vm3003, %v3037, %v3046
      %v3049 = vshrl.u32 %v2681, 16
      %v3051 = vrot.slane %v3049, 3
      %v3052 = vshll.u32 %v2681, 16
      %v3054 = vrot.slane %v3052, 4
      %v3055 = vor.u32 %v3051, %v3054
      %v3056 = vsel %vm3003, %v3046, %v3055
      %3057 = vrot.lane.b32.xlu0 %v3020, 112
      %v3058 = vpop.permute.xlu0 %3057
      %3059 = vrot.lane.b32.xlu0 %v3029, 112
      %v3060 = vpop.permute.xlu0 %3059
      %3061 = vrot.lane.b32.xlu0 %v3038, 112
      %v3062 = vpop.permute.xlu0 %3061
      %3063 = vrot.lane.b32.xlu0 %v3047, 112
      %v3064 = vpop.permute.xlu0 %3063
      %3065 = vrot.lane.b32.xlu0 %v3056, 112
      %v3066 = vpop.permute.xlu0 %3065
      %3067 = vrot.lane.b32.xlu0 %v3051, 112
      %v3068 = vpop.permute.xlu0 %3067
      %vm3075 = vcmask 1043456
      %v3076 = vrot.slane %v2681, 4
      %v3077 = vrot.slane %v2682, 4
      %v3078 = vsel %vm3075, %v3076, %v3077
      %v3079 = vrot.slane %v2683, 4
      %v3080 = vsel %vm3075, %v3077, %v3079
      %v3081 = vrot.slane %v2684, 4
      %v3082 = vsel %vm3075, %v3079, %v3081
      %v3083 = vrot.slane %v2685, 4
      %v3084 = vsel %vm3075, %v3081, %v3083
      %v3085 = vrot.slane %v2686, 4
      %v3086 = vsel %vm3075, %v3083, %v3085
      %vm3087 = vsmask.f32 3328
      %v3089 = vshrl.u32 %v2686, 16
      %v3091 = vrot.slane %v3089, 4
      %v3092 = vshll.u32 %v2686, 16
      %v3094 = vrot.slane %v3092, 5
      %v3095 = vor.u32 %v3091, %v3094
      %v3097 = vshrl.u32 %v2687, 16
      %v3099 = vrot.slane %v3097, 4
      %v3100 = vshll.u32 %v2687, 16
      %v3102 = vrot.slane %v3100, 5
      %v3103 = vor.u32 %v3099, %v3102
      %v3104 = vsel %vm3087, %v3095, %v3103
      %v3106 = vshrl.u32 %v2688, 16
      %v3108 = vrot.slane %v3106, 4
      %v3109 = vshll.u32 %v2688, 16
      %v3111 = vrot.slane %v3109, 5
      %v3112 = vor.u32 %v3108, %v3111
      %v3113 = vsel %vm3087, %v3103, %v3112
      %v3115 = vshrl.u32 %v2689, 16
      %v3117 = vrot.slane %v3115, 4
      %v3118 = vshll.u32 %v2689, 16
      %v3120 = vrot.slane %v3118, 5
      %v3121 = vor.u32 %v3117, %v3120
      %v3122 = vsel %vm3087, %v3112, %v3121
      %v3124 = vshrl.u32 %v2690, 16
      %v3126 = vrot.slane %v3124, 4
      %v3127 = vshll.u32 %v2690, 16
      %v3129 = vrot.slane %v3127, 5
      %v3130 = vor.u32 %v3126, %v3129
      %v3131 = vsel %vm3087, %v3121, %v3130
      %v3133 = vshrl.u32 %v2691, 16
      %v3135 = vrot.slane %v3133, 4
      %v3136 = vshll.u32 %v2691, 16
      %v3138 = vrot.slane %v3136, 5
      %v3139 = vor.u32 %v3135, %v3138
      %v3140 = vsel %vm3087, %v3130, %v3139
      %3141 = vrot.lane.b32.xlu0 %v3104, 16
      %v3142 = vpop.permute.xlu0 %3141
      %3143 = vrot.lane.b32.xlu0 %v3113, 16
      %v3144 = vpop.permute.xlu0 %3143
      %3145 = vrot.lane.b32.xlu0 %v3122, 16
      %v3146 = vpop.permute.xlu0 %3145
      %3147 = vrot.lane.b32.xlu0 %v3131, 16
      %v3148 = vpop.permute.xlu0 %3147
      %3149 = vrot.lane.b32.xlu0 %v3140, 16
      %v3150 = vpop.permute.xlu0 %3149
      %3151 = vrot.lane.b32.xlu0 %v3135, 16
      %v3152 = vpop.permute.xlu0 %3151
      %vm3159 = vcmask 1042432
      %v3160 = vrot.slane %v2691, 5
      %v3161 = vrot.slane %v2692, 5
      %v3162 = vsel %vm3159, %v3160, %v3161
      %v3163 = vrot.slane %v2693, 5
      %v3164 = vsel %vm3159, %v3161, %v3163
      %v3165 = vrot.slane %v2694, 5
      %v3166 = vsel %vm3159, %v3163, %v3165
      %v3167 = vrot.slane %v2695, 5
      %v3168 = vsel %vm3159, %v3165, %v3167
      %v3169 = vrot.slane %v2696, 5
      %v3170 = vsel %vm3159, %v3167, %v3169
      %3171 = vrot.lane.b32.xlu0 %v3162, 32
      %v3172 = vpop.permute.xlu0 %3171
      %3173 = vrot.lane.b32.xlu0 %v3164, 32
      %v3174 = vpop.permute.xlu0 %3173
      %3175 = vrot.lane.b32.xlu0 %v3166, 32
      %v3176 = vpop.permute.xlu0 %3175
      %3177 = vrot.lane.b32.xlu0 %v3168, 32
      %v3178 = vpop.permute.xlu0 %3177
      %3179 = vrot.lane.b32.xlu0 %v3170, 32
      %v3180 = vpop.permute.xlu0 %3179
      %3181 = vrot.lane.b32.xlu0 %v3169, 32
      %v3182 = vpop.permute.xlu0 %3181
      %vm3183 = vsmask.f32 2304
      %v3185 = vshrl.u32 %v2696, 16
      %v3187 = vrot.slane %v3185, 5
      %v3188 = vshll.u32 %v2696, 16
      %v3190 = vrot.slane %v3188, 6
      %v3191 = vor.u32 %v3187, %v3190
      %v3193 = vshrl.u32 %v2697, 16
      %v3195 = vrot.slane %v3193, 5
      %v3196 = vshll.u32 %v2697, 16
      %v3198 = vrot.slane %v3196, 6
      %v3199 = vor.u32 %v3195, %v3198
      %v3200 = vsel %vm3183, %v3191, %v3199
      %v3202 = vshrl.u32 %v2698, 16
      %v3204 = vrot.slane %v3202, 5
      %v3205 = vshll.u32 %v2698, 16
      %v3207 = vrot.slane %v3205, 6
      %v3208 = vor.u32 %v3204, %v3207
      %v3209 = vsel %vm3183, %v3199, %v3208
      %v3211 = vshrl.u32 %v2699, 16
      %v3213 = vrot.slane %v3211, 5
      %v3214 = vshll.u32 %v2699, 16
      %v3216 = vrot.slane %v3214, 6
      %v3217 = vor.u32 %v3213, %v3216
      %v3218 = vsel %vm3183, %v3208, %v3217
      %v3220 = vshrl.u32 %v2700, 16
      %v3222 = vrot.slane %v3220, 5
      %v3223 = vshll.u32 %v2700, 16
      %v3225 = vrot.slane %v3223, 6
      %v3226 = vor.u32 %v3222, %v3225
      %v3227 = vsel %vm3183, %v3217, %v3226
      %v3229 = vshrl.u32 %v2701, 16
      %v3231 = vrot.slane %v3229, 5
      %v3232 = vshll.u32 %v2701, 16
      %v3234 = vrot.slane %v3232, 6
      %v3235 = vor.u32 %v3231, %v3234
      %v3236 = vsel %vm3183, %v3226, %v3235
      %3237 = vrot.lane.b32.xlu0 %v3200, 48
      %v3238 = vpop.permute.xlu0 %3237
      %3239 = vrot.lane.b32.xlu0 %v3209, 48
      %v3240 = vpop.permute.xlu0 %3239
      %3241 = vrot.lane.b32.xlu0 %v3218, 48
      %v3242 = vpop.permute.xlu0 %3241
      %3243 = vrot.lane.b32.xlu0 %v3227, 48
      %v3244 = vpop.permute.xlu0 %3243
      %3245 = vrot.lane.b32.xlu0 %v3236, 48
      %v3246 = vpop.permute.xlu0 %3245
      %3247 = vrot.lane.b32.xlu0 %v3231, 48
      %v3248 = vpop.permute.xlu0 %3247
      %vm3255 = vcmask 1041408
      %v3256 = vrot.slane %v2701, 6
      %v3257 = vrot.slane %v2702, 6
      %v3258 = vsel %vm3255, %v3256, %v3257
      %v3259 = vrot.slane %v2703, 6
      %v3260 = vsel %vm3255, %v3257, %v3259
      %v3261 = vrot.slane %v2704, 6
      %v3262 = vsel %vm3255, %v3259, %v3261
      %v3263 = vrot.slane %v2705, 6
      %v3264 = vsel %vm3255, %v3261, %v3263
      %v3265 = vrot.slane %v2706, 6
      %v3266 = vsel %vm3255, %v3263, %v3265
      %3267 = vrot.lane.b32.xlu0 %v3258, 64
      %v3268 = vpop.permute.xlu0 %3267
      %3269 = vrot.lane.b32.xlu0 %v3260, 64
      %v3270 = vpop.permute.xlu0 %3269
      %3271 = vrot.lane.b32.xlu0 %v3262, 64
      %v3272 = vpop.permute.xlu0 %3271
      %3273 = vrot.lane.b32.xlu0 %v3264, 64
      %v3274 = vpop.permute.xlu0 %3273
      %3275 = vrot.lane.b32.xlu0 %v3266, 64
      %v3276 = vpop.permute.xlu0 %3275
      %3277 = vrot.lane.b32.xlu0 %v3265, 64
      %v3278 = vpop.permute.xlu0 %3277
      %vm3279 = vsmask.f32 1280
      %v3281 = vshrl.u32 %v2706, 16
      %v3283 = vrot.slane %v3281, 6
      %v3284 = vshll.u32 %v2706, 16
      %v3286 = vrot.slane %v3284, 7
      %v3287 = vor.u32 %v3283, %v3286
      %v3289 = vshrl.u32 %v2707, 16
      %v3291 = vrot.slane %v3289, 6
      %v3292 = vshll.u32 %v2707, 16
      %v3294 = vrot.slane %v3292, 7
      %v3295 = vor.u32 %v3291, %v3294
      %v3296 = vsel %vm3279, %v3287, %v3295
      %v3298 = vshrl.u32 %v2708, 16
      %v3300 = vrot.slane %v3298, 6
      %v3301 = vshll.u32 %v2708, 16
      %v3303 = vrot.slane %v3301, 7
      %v3304 = vor.u32 %v3300, %v3303
      %v3305 = vsel %vm3279, %v3295, %v3304
      %v3307 = vshrl.u32 %v2709, 16
      %v3309 = vrot.slane %v3307, 6
      %v3310 = vshll.u32 %v2709, 16
      %v3312 = vrot.slane %v3310, 7
      %v3313 = vor.u32 %v3309, %v3312
      %v3314 = vsel %vm3279, %v3304, %v3313
      %v3316 = vshrl.u32 %v2710, 16
      %v3318 = vrot.slane %v3316, 6
      %v3319 = vshll.u32 %v2710, 16
      %v3321 = vrot.slane %v3319, 7
      %v3322 = vor.u32 %v3318, %v3321
      %v3323 = vsel %vm3279, %v3313, %v3322
      %v3325 = vshrl.u32 %v2711, 16
      %v3327 = vrot.slane %v3325, 6
      %v3328 = vshll.u32 %v2711, 16
      %v3330 = vrot.slane %v3328, 7
      %v3331 = vor.u32 %v3327, %v3330
      %v3332 = vsel %vm3279, %v3322, %v3331
      %3333 = vrot.lane.b32.xlu0 %v3296, 80
      %v3334 = vpop.permute.xlu0 %3333
      %3335 = vrot.lane.b32.xlu0 %v3305, 80
      %v3336 = vpop.permute.xlu0 %3335
      %3337 = vrot.lane.b32.xlu0 %v3314, 80
      %v3338 = vpop.permute.xlu0 %3337
      %3339 = vrot.lane.b32.xlu0 %v3323, 80
      %v3340 = vpop.permute.xlu0 %3339
      %3341 = vrot.lane.b32.xlu0 %v3332, 80
      %v3342 = vpop.permute.xlu0 %3341
      %3343 = vrot.lane.b32.xlu0 %v3327, 80
      %v3344 = vpop.permute.xlu0 %3343
      %vm3351 = vcmask 1040384
      %v3352 = vrot.slane %v2711, 7
      %v3353 = vrot.slane %v2712, 7
      %v3354 = vsel %vm3351, %v3352, %v3353
      %v3355 = vrot.slane %v2713, 7
      %v3356 = vsel %vm3351, %v3353, %v3355
      %v3357 = vrot.slane %v2714, 7
      %v3358 = vsel %vm3351, %v3355, %v3357
      %v3359 = vrot.slane %v2715, 7
      %v3360 = vsel %vm3351, %v3357, %v3359
      %v3361 = vrot.slane %v2716, 7
      %v3362 = vsel %vm3351, %v3359, %v3361
      %3363 = vrot.lane.b32.xlu0 %v3354, 96
      %v3364 = vpop.permute.xlu0 %3363
      %3365 = vrot.lane.b32.xlu0 %v3356, 96
      %v3366 = vpop.permute.xlu0 %3365
      %3367 = vrot.lane.b32.xlu0 %v3358, 96
      %v3368 = vpop.permute.xlu0 %3367
      %3369 = vrot.lane.b32.xlu0 %v3360, 96
      %v3370 = vpop.permute.xlu0 %3369
      %3371 = vrot.lane.b32.xlu0 %v3362, 96
      %v3372 = vpop.permute.xlu0 %3371
      %3373 = vrot.lane.b32.xlu0 %v3361, 96
      %v3374 = vpop.permute.xlu0 %3373
      %vm3375 = vsmask.f32 256
      %v3377 = vshrl.u32 %v2716, 16
      %v3379 = vrot.slane %v3377, 7
      %v3381 = vshrl.u32 %v2717, 16
      %v3383 = vrot.slane %v3381, 7
      %v3384 = vshll.u32 %v2717, 16
      %v3386 = vor.u32 %v3383, %v3384
      %v3387 = vsel %vm3375, %v3379, %v3386
      %v3389 = vshrl.u32 %v2718, 16
      %v3391 = vrot.slane %v3389, 7
      %v3392 = vshll.u32 %v2718, 16
      %v3394 = vor.u32 %v3391, %v3392
      %v3395 = vsel %vm3375, %v3383, %v3394
      %v3397 = vshrl.u32 %v2719, 16
      %v3399 = vrot.slane %v3397, 7
      %v3400 = vshll.u32 %v2719, 16
      %v3402 = vor.u32 %v3399, %v3400
      %v3403 = vsel %vm3375, %v3391, %v3402
      %v3405 = vshrl.u32 %v2720, 16
      %v3407 = vrot.slane %v3405, 7
      %v3408 = vshll.u32 %v2720, 16
      %v3410 = vor.u32 %v3407, %v3408
      %v3411 = vsel %vm3375, %v3399, %v3410
      %v3413 = vshrl.u32 %v2721, 16
      %v3415 = vrot.slane %v3413, 7
      %v3416 = vshll.u32 %v2721, 16
      %v3418 = vor.u32 %v3415, %v3416
      %v3419 = vsel %vm3375, %v3407, %v3418
      %3420 = vrot.lane.b32.xlu0 %v3387, 112
      %v3421 = vpop.permute.xlu0 %3420
      %3422 = vrot.lane.b32.xlu0 %v3395, 112
      %v3423 = vpop.permute.xlu0 %3422
      %3424 = vrot.lane.b32.xlu0 %v3403, 112
      %v3425 = vpop.permute.xlu0 %3424
      %3426 = vrot.lane.b32.xlu0 %v3411, 112
      %v3427 = vpop.permute.xlu0 %3426
      %3428 = vrot.lane.b32.xlu0 %v3419, 112
      %v3429 = vpop.permute.xlu0 %3428
      %3430 = vrot.lane.b32.xlu0 %v3415, 112
      %v3431 = vpop.permute.xlu0 %3430
      %vm3432 = vcmask 130048
      %v3435 = vsel %vm3432, %v2641, %v2770
      %v3438 = vsel %vm3432, %v2642, %v2772
      %v3441 = vsel %vm3432, %v2643, %v2774
      %v3444 = vsel %vm3432, %v2644, %v2776
      %v3447 = vsel %vm3432, %v2645, %v2778
      %v3449 = vsel %vm3432, %v2646, %v2780
      %v3451 = vsel %vm633, %v3435, %v2800
      %v3453 = vsel %vm633, %v3438, %v2802
      %v3455 = vsel %vm633, %v3441, %v2804
      %v3457 = vsel %vm633, %v3444, %v2806
      %v3459 = vsel %vm633, %v3447, %v2808
      %v3461 = vsel %vm633, %v3449, %v2810
      %vm3462 = vcmask 392192
      %v3464 = vsel %vm3462, %v3451, %v2866
      %v3466 = vsel %vm3462, %v3453, %v2868
      %v3468 = vsel %vm3462, %v3455, %v2870
      %v3470 = vsel %vm3462, %v3457, %v2872
      %v3472 = vsel %vm3462, %v3459, %v2874
      %v3474 = vsel %vm3462, %v3461, %v2876
      %vm3475 = vcmask 523264
      %v3477 = vsel %vm3475, %v3464, %v2896
      %v3479 = vsel %vm3475, %v3466, %v2898
      %v3481 = vsel %vm3475, %v3468, %v2900
      %v3483 = vsel %vm3475, %v3470, %v2902
      %v3485 = vsel %vm3475, %v3472, %v2904
      %v3487 = vsel %vm3475, %v3474, %v2906
      %vm3488 = vcmask 654336
      %v3490 = vsel %vm3488, %v3477, %v2962
      %v3492 = vsel %vm3488, %v3479, %v2964
      %v3494 = vsel %vm3488, %v3481, %v2966
      %v3496 = vsel %vm3488, %v3483, %v2968
      %v3498 = vsel %vm3488, %v3485, %v2970
      %v3500 = vsel %vm3488, %v3487, %v2972
      %vm3501 = vcmask 785408
      %v3503 = vsel %vm3501, %v3490, %v2992
      %v3505 = vsel %vm3501, %v3492, %v2994
      %v3507 = vsel %vm3501, %v3494, %v2996
      %v3509 = vsel %vm3501, %v3496, %v2998
      %v3511 = vsel %vm3501, %v3498, %v3000
      %v3513 = vsel %vm3501, %v3500, %v3002
      %vm3514 = vcmask 916480
      %v3516 = vsel %vm3514, %v3503, %v3058
      %v3519 = vsel %vm3514, %v3505, %v3060
      %v3522 = vsel %vm3514, %v3507, %v3062
      %v3525 = vsel %vm3514, %v3509, %v3064
      %v3528 = vsel %vm3514, %v3511, %v3066
      %v3531 = vsel %vm3514, %v3513, %v3068
      %v3535 = vsel %vm3432, %v3078, %v3142
      %v3538 = vsel %vm3432, %v3080, %v3144
      %v3541 = vsel %vm3432, %v3082, %v3146
      %v3544 = vsel %vm3432, %v3084, %v3148
      %v3547 = vsel %vm3432, %v3086, %v3150
      %v3550 = vsel %vm3432, %v3085, %v3152
      %v3552 = vsel %vm633, %v3535, %v3172
      %v3554 = vsel %vm633, %v3538, %v3174
      %v3556 = vsel %vm633, %v3541, %v3176
      %v3558 = vsel %vm633, %v3544, %v3178
      %v3560 = vsel %vm633, %v3547, %v3180
      %v3562 = vsel %vm633, %v3550, %v3182
      %v3564 = vsel %vm3462, %v3552, %v3238
      %v3566 = vsel %vm3462, %v3554, %v3240
      %v3568 = vsel %vm3462, %v3556, %v3242
      %v3570 = vsel %vm3462, %v3558, %v3244
      %v3572 = vsel %vm3462, %v3560, %v3246
      %v3574 = vsel %vm3462, %v3562, %v3248
      %v3576 = vsel %vm3475, %v3564, %v3268
      %v3578 = vsel %vm3475, %v3566, %v3270
      %v3580 = vsel %vm3475, %v3568, %v3272
      %v3582 = vsel %vm3475, %v3570, %v3274
      %v3584 = vsel %vm3475, %v3572, %v3276
      %v3586 = vsel %vm3475, %v3574, %v3278
      %v3588 = vsel %vm3488, %v3576, %v3334
      %v3590 = vsel %vm3488, %v3578, %v3336
      %v3592 = vsel %vm3488, %v3580, %v3338
      %v3594 = vsel %vm3488, %v3582, %v3340
      %v3596 = vsel %vm3488, %v3584, %v3342
      %v3598 = vsel %vm3488, %v3586, %v3344
      %v3600 = vsel %vm3501, %v3588, %v3364
      %v3602 = vsel %vm3501, %v3590, %v3366
      %v3604 = vsel %vm3501, %v3592, %v3368
      %v3606 = vsel %vm3501, %v3594, %v3370
      %v3608 = vsel %vm3501, %v3596, %v3372
      %v3610 = vsel %vm3501, %v3598, %v3374
      %v3612 = vsel %vm3514, %v3600, %v3421
      %v3615 = vsel %vm3514, %v3602, %v3423
      %v3618 = vsel %vm3514, %v3604, %v3425
      %v3621 = vsel %vm3514, %v3606, %v3427
      %v3624 = vsel %vm3514, %v3608, %v3429
      %v3627 = vsel %vm3514, %v3610, %v3431
      %v3630 = vlaneseq
      %v3631 = vshrl.u32 %v3630, 7
      %v3632 = vsub.s32 0, %v3631
      %v3633 = vrot.slane %v1149, %v3632
      %v3667 = vunpack.c.l.b16 %v1117
      %v3668 = vunpack.c.l.b16 %v1118
      %v3669 = vunpack.c.l.b16 %v1119
      %v3670 = vunpack.c.l.b16 %v1120
      %v3671 = vunpack.c.l.b16 %v1121
      %v3672 = vunpack.c.l.b16 %v1122
      %v3673 = vunpack.c.l.b16 %v1123
      %v3674 = vunpack.c.l.b16 %v1124
      %v3675 = vunpack.c.l.b16 %v1125
      %v3676 = vunpack.c.l.b16 %v1126
      %v3677 = vunpack.c.l.b16 %v1127
      %v3678 = vunpack.c.l.b16 %v1128
      %v3679 = vunpack.c.l.b16 %v1129
      %v3680 = vunpack.c.l.b16 %v1130
      %v3681 = vunpack.c.l.b16 %v1131
      %v3682 = vunpack.c.l.b16 %v1132
      %v3683 = vunpack.c.l.b16 %v1133
      %v3684 = vunpack.c.l.b16 %v1134
      %v3685 = vunpack.c.l.b16 %v1135
      %v3686 = vunpack.c.l.b16 %v1136
      %v3687 = vunpack.c.l.b16 %v1137
      %v3688 = vunpack.c.l.b16 %v1138
      %v3689 = vunpack.c.l.b16 %v1139
      %v3690 = vunpack.c.l.b16 %v1140
      %v3691 = vunpack.c.l.b16 %v1141
      %v3692 = vunpack.c.l.b16 %v1142
      %v3693 = vunpack.c.l.b16 %v1143
      %v3694 = vunpack.c.l.b16 %v1144
      %v3695 = vunpack.c.l.b16 %v1145
      %v3696 = vunpack.c.l.b16 %v1146
      %v3697 = vunpack.c.l.b16 %v1147
      %v3698 = vunpack.c.l.b16 %v1148
      %v3699 = vpack.c.b16 %v3668, %v3667
      %v3700 = vpack.c.b16 %v3670, %v3669
      %v3701 = vpack.c.b16 %v3672, %v3671
      %v3702 = vpack.c.b16 %v3674, %v3673
      %v3703 = vpack.c.b16 %v3676, %v3675
      %v3704 = vpack.c.b16 %v3678, %v3677
      %v3705 = vpack.c.b16 %v3680, %v3679
      %v3706 = vpack.c.b16 %v3682, %v3681
      %v3707 = vpack.c.b16 %v3684, %v3683
      %v3708 = vpack.c.b16 %v3686, %v3685
      %v3709 = vpack.c.b16 %v3688, %v3687
      %v3710 = vpack.c.b16 %v3690, %v3689
      %v3711 = vpack.c.b16 %v3692, %v3691
      %v3712 = vpack.c.b16 %v3694, %v3693
      %v3713 = vpack.c.b16 %v3696, %v3695
      %v3714 = vpack.c.b16 %v3698, %v3697
      %3731 = vmatprep.subr.bf16.mxu0 0
      %3732 = vmatpush1.bf16.msra.mxu0 %v3699
      %3733 = vmatprep.subr.bf16.mxu0 0
      %3734 = vmatpush1.bf16.msra.mxu0 %v3700
      %3735 = vmatprep.subr.bf16.mxu0 0
      %3736 = vmatpush1.bf16.msra.mxu0 %v3701
      %3737 = vmatprep.subr.bf16.mxu0 0
      %3738 = vmatpush1.bf16.msra.mxu0 %v3702
      %3739 = vmatprep.subr.bf16.mxu0 0
      %3740 = vmatpush1.bf16.msra.mxu0 %v3703
      %3741 = vmatprep.subr.bf16.mxu0 0
      %3742 = vmatpush1.bf16.msra.mxu0 %v3704
      %3743 = vmatprep.subr.bf16.mxu0 0
      %3744 = vmatpush1.bf16.msra.mxu0 %v3705
      %3745 = vmatprep.subr.bf16.mxu0 0
      %3746 = vmatpush1.bf16.msra.mxu0 %v3706
      %3747 = vmatprep.subr.bf16.mxu0 0
      %3748 = vmatpush1.bf16.msra.mxu0 %v3707
      %3749 = vmatprep.subr.bf16.mxu0 0
      %3750 = vmatpush1.bf16.msra.mxu0 %v3708
      %3751 = vmatprep.subr.bf16.mxu0 0
      %3752 = vmatpush1.bf16.msra.mxu0 %v3709
      %3753 = vmatprep.subr.bf16.mxu0 0
      %3754 = vmatpush1.bf16.msra.mxu0 %v3710
      %3755 = vmatprep.subr.bf16.mxu0 0
      %3756 = vmatpush1.bf16.msra.mxu0 %v3711
      %3757 = vmatprep.subr.bf16.mxu0 0
      %3758 = vmatpush1.bf16.msra.mxu0 %v3712
      %3759 = vmatprep.subr.bf16.mxu0 0
      %3760 = vmatpush1.bf16.msra.mxu0 %v3713
      %3761 = vmatprep.subr.bf16.mxu0 0
      %3762 = vmatpush1.bf16.msra.mxu0 %v3714
      %3763 = vmatprep.mubr.bf16.mxu0 %v3612
      %3764 = vmatmul.mubr.bf16.gmra.mrb[0].mxu0 %v3516
      %v3765 = vpop.f32.mrb[0].mxu0
      %v3766 = vadd.f32 %v3633, %v3765
      %v3767 = vpop.f32.mrb[0].mxu0
      %v3768 = vpop.f32.mrb[0].mxu0
      %v3769 = vadd.f32 %v3633, %v3768
      %v3770 = vpop.f32.mrb[0].mxu0
      %3771 = vmatprep.mubr.bf16.mxu0 %v3615
      %3772 = vmatmul.mubr.bf16.gmra.mrb[0].mxu0 %v3519
      %v3773 = vpop.f32.mrb[0].mxu0
      %v3774 = vadd.f32 %v3633, %v3773
      %v3775 = vpop.f32.mrb[0].mxu0
      %v3776 = vpop.f32.mrb[0].mxu0
      %v3777 = vadd.f32 %v3633, %v3776
      %v3778 = vpop.f32.mrb[0].mxu0
      %3779 = vmatprep.mubr.bf16.mxu0 %v3618
      %3780 = vmatmul.mubr.bf16.gmra.mrb[0].mxu0 %v3522
      %v3781 = vpop.f32.mrb[0].mxu0
      %v3782 = vadd.f32 %v3633, %v3781
      %v3783 = vpop.f32.mrb[0].mxu0
      %v3784 = vpop.f32.mrb[0].mxu0
      %v3785 = vadd.f32 %v3633, %v3784
      %v3786 = vpop.f32.mrb[0].mxu0
      %3787 = vmatprep.mubr.bf16.mxu0 %v3621
      %3788 = vmatmul.mubr.bf16.gmra.mrb[0].mxu0 %v3525
      %v3789 = vpop.f32.mrb[0].mxu0
      %v3790 = vadd.f32 %v3633, %v3789
      %v3791 = vpop.f32.mrb[0].mxu0
      %v3792 = vpop.f32.mrb[0].mxu0
      %v3793 = vadd.f32 %v3633, %v3792
      %v3794 = vpop.f32.mrb[0].mxu0
      %3795 = vmatprep.mubr.bf16.mxu0 %v3624
      %3796 = vmatmul.mubr.bf16.gmra.mrb[0].mxu0 %v3528
      %v3797 = vpop.f32.mrb[0].mxu0
      %v3798 = vadd.f32 %v3633, %v3797
      %v3799 = vpop.f32.mrb[0].mxu0
      %v3800 = vpop.f32.mrb[0].mxu0
      %v3801 = vadd.f32 %v3633, %v3800
      %v3802 = vpop.f32.mrb[0].mxu0
      %3803 = vmatprep.mubr.bf16.mxu0 %v3627
      %3804 = vmatmul.mubr.bf16.gmra.mrb[0].mxu0 %v3531
      %v3805 = vpop.f32.mrb[0].mxu0
      %v3806 = vadd.f32 %v3633, %v3805
      %v3807 = vpop.f32.mrb[0].mxu0
      %v3808 = vpop.f32.mrb[0].mxu0
      %v3809 = vpop.f32.mrb[0].mxu0
      %3810 = vdwg.mxu0
      %vm3811 = vcmp.ge.f32.partialorder %v3766, 0.0
      %vm3812 = vcmp.ge.f32.partialorder %v3769, 0.0
      %vm3813 = vcmp.ge.f32.partialorder %v3774, 0.0
      %vm3814 = vcmp.ge.f32.partialorder %v3777, 0.0
      %vm3815 = vcmp.ge.f32.partialorder %v3782, 0.0
      %vm3816 = vcmp.ge.f32.partialorder %v3785, 0.0
      %vm3817 = vcmp.ge.f32.partialorder %v3790, 0.0
      %vm3818 = vcmp.ge.f32.partialorder %v3793, 0.0
      %vm3819 = vcmp.ge.f32.partialorder %v3798, 0.0
      %vm3820 = vcmp.ge.f32.partialorder %v3801, 0.0
      %vm3821 = vcmp.ge.f32.partialorder %v3806, 0.0
      %v3822 = vmul.f32 %v3766, 0.1
      %v3823 = vmul.f32 %v3769, 0.1
      %v3824 = vmul.f32 %v3774, 0.1
      %v3825 = vmul.f32 %v3777, 0.1
      %v3826 = vmul.f32 %v3782, 0.1
      %v3827 = vmul.f32 %v3785, 0.1
      %v3828 = vmul.f32 %v3790, 0.1
      %v3829 = vmul.f32 %v3793, 0.1
      %v3830 = vmul.f32 %v3798, 0.1
      %v3831 = vmul.f32 %v3801, 0.1
      %v3832 = vmul.f32 %v3806, 0.1
      %v3833 = vsel %vm3811, %v3766, %v3822
      %v3834 = vsel %vm3812, %v3769, %v3823
      %v3835 = vsel %vm3813, %v3774, %v3824
      %v3836 = vsel %vm3814, %v3777, %v3825
      %v3837 = vsel %vm3815, %v3782, %v3826
      %v3838 = vsel %vm3816, %v3785, %v3827
      %v3839 = vsel %vm3817, %v3790, %v3828
      %v3840 = vsel %vm3818, %v3793, %v3829
      %v3841 = vsel %vm3819, %v3798, %v3830
      %v3842 = vsel %vm3820, %v3801, %v3831
      %v3843 = vsel %vm3821, %v3806, %v3832
      %v3844 = vpack.c.bf16 %v3834, %v3833
      %v3845 = vpack.c.bf16 %v3836, %v3835
      %v3846 = vpack.c.bf16 %v3838, %v3837
      %v3847 = vpack.c.bf16 %v3840, %v3839
      %v3848 = vpack.c.bf16 %v3842, %v3841
      %v3849 = vpack.c.bf16 %v3843, %v3843
      %v3850 = vld [vmem:[%s6] sm:$0xf]
      %v3851 = vld [vmem:[%s6 + $0x4] sm:$0xf]
      %v3852 = vld [vmem:[%s6 + $0x8] sm:$0xf]
      %v3853 = vld [vmem:[%s6 + $0xc] sm:$0xf]
      %v3854 = vld [vmem:[%s6 + $0x10] sm:$0xf]
      %v3855 = vld [vmem:[%s6 + $0x14] sm:$0xf]
      %v3856 = vld [vmem:[%s6 + $0x18] sm:$0xf]
      %v3857 = vld [vmem:[%s6 + $0x1c] sm:$0xf]
      %v3858 = vld [vmem:[%s6 + $0x20] sm:$0xf]
      %v3859 = vld [vmem:[%s6 + $0x24] sm:$0xf]
      %v3860 = vld [vmem:[%s6 + $0x28] sm:$0xf]
      %v3861 = vld [vmem:[%s6 + $0x2c] sm:$0xf]
      %v3862 = vld [vmem:[%s6 + $0x30] sm:$0xf]
      %v3863 = vld [vmem:[%s6 + $0x34] sm:$0xf]
      %v3864 = vld [vmem:[%s6 + $0x38] sm:$0xf]
      %v3865 = vld [vmem:[%s6 + $0x3c] sm:$0xf]
      %v3866 = vld [vmem:[%s6 + $0x40] sm:$0xf]
      %v3867 = vld [vmem:[%s6 + $0x44] sm:$0xf]
      %v3868 = vld [vmem:[%s6 + $0x48] sm:$0xf]
      %v3869 = vld [vmem:[%s6 + $0x4c] sm:$0xf]
      %v3870 = vld [vmem:[%s6 + $0x50] sm:$0xf]
      %v3871 = vld [vmem:[%s6 + $0x54] sm:$0xf]
      %v3872 = vld [vmem:[%s6 + $0x58] sm:$0xf]
      %v3873 = vld [vmem:[%s6 + $0x5c] sm:$0xf]
      %v3874 = vld [vmem:[%s6 + $0x60] sm:$0xf]
      %v3875 = vld [vmem:[%s6 + $0x64] sm:$0xf]
      %v3876 = vld [vmem:[%s6 + $0x68] sm:$0xf]
      %v3877 = vld [vmem:[%s6 + $0x6c] sm:$0xf]
      %v3878 = vld [vmem:[%s6 + $0x70] sm:$0xf]
      %v3879 = vld [vmem:[%s6 + $0x74] sm:$0xf]
      %v3880 = vld [vmem:[%s6 + $0x78] sm:$0xf]
      %v3881 = vld [vmem:[%s6 + $0x7c] sm:$0xf]
      %v3882 = vld [vmem:[%s6 + $0x80] sm:$0xf]
      %v3883 = vld [vmem:[%s6 + $0x84] sm:$0xf]
      %v3884 = vld [vmem:[%s6 + $0x88] sm:$0xf]
      %v3885 = vld [vmem:[%s6 + $0x8c] sm:$0xf]
      %v3886 = vld [vmem:[%s6 + $0x90] sm:$0xf]
      %v3887 = vld [vmem:[%s6 + $0x94] sm:$0xf]
      %v3888 = vld [vmem:[%s6 + $0x98] sm:$0xf]
      %v3889 = vld [vmem:[%s6 + $0x9c] sm:$0xf]
      %v3890 = vld [vmem:[%s6 + $0xa0] sm:$0xf]
      %v3891 = vld [vmem:[%s6 + $0xa4] sm:$0xf]
      %v3892 = vld [vmem:[%s6 + $0xa8] sm:$0xf]
      %v3893 = vld [vmem:[%s6 + $0xac] sm:$0xf]
      %v3894 = vld [vmem:[%s6 + $0xb0] sm:$0xf]
      %v3895 = vld [vmem:[%s6 + $0xb4] sm:$0xf]
      %v3896 = vld [vmem:[%s6 + $0xb8] sm:$0xf]
      %v3897 = vld [vmem:[%s6 + $0xbc] sm:$0xf]
      %v3898 = vld [vmem:[%s6 + $0xc0] sm:$0xf]
      %v3899 = vld [vmem:[%s6 + $0xc4] sm:$0xf]
      %v3900 = vld [vmem:[%s7] sm:$0xf]
      %v3901 = vld [vmem:[%s7 + $0x4] sm:$0xf]
      %v3902 = vld [vmem:[%s7 + $0x8] sm:$0xf]
      %v3903 = vld [vmem:[%s7 + $0xc] sm:$0xf]
      %v3904 = vld [vmem:[%s7 + $0x10] sm:$0xf]
      %v3905 = vld [vmem:[%s7 + $0x14] sm:$0xf]
      %v3906 = vld [vmem:[%s7 + $0x18] sm:$0xf]
      %v3907 = vld [vmem:[%s7 + $0x1c] sm:$0xf]
      %v3908 = vld [vmem:[%s7 + $0x20] sm:$0xf]
      %v3909 = vld [vmem:[%s7 + $0x24] sm:$0xf]
      %v3910 = vld [vmem:[%s7 + $0x28] sm:$0xf]
      %v3911 = vld [vmem:[%s7 + $0x2c] sm:$0xf]
      %v3912 = vld [vmem:[%s7 + $0x30] sm:$0xf]
      %v3913 = vld [vmem:[%s7 + $0x34] sm:$0xf]
      %v3914 = vld [vmem:[%s7 + $0x38] sm:$0xf]
      %v3915 = vld [vmem:[%s7 + $0x3c] sm:$0xf]
      %v3916 = vld [vmem:[%s7 + $0x40] sm:$0xf]
      %v3917 = vld [vmem:[%s7 + $0x44] sm:$0xf]
      %v3918 = vld [vmem:[%s7 + $0x48] sm:$0xf]
      %v3919 = vld [vmem:[%s7 + $0x4c] sm:$0xf]
      %v3920 = vld [vmem:[%s7 + $0x50] sm:$0xf]
      %v3921 = vld [vmem:[%s7 + $0x54] sm:$0xf]
      %v3922 = vld [vmem:[%s7 + $0x58] sm:$0xf]
      %v3923 = vld [vmem:[%s7 + $0x5c] sm:$0xf]
      %v3924 = vld [vmem:[%s7 + $0x60] sm:$0xf]
      %v3925 = vld [vmem:[%s7 + $0x64] sm:$0xf]
      %v3926 = vld [vmem:[%s7 + $0x68] sm:$0xf]
      %v3927 = vld [vmem:[%s7 + $0x6c] sm:$0xf]
      %v3928 = vld [vmem:[%s7 + $0x70] sm:$0xf]
      %v3929 = vld [vmem:[%s7 + $0x74] sm:$0xf]
      %v3930 = vld [vmem:[%s7 + $0x78] sm:$0xf]
      %v3931 = vld [vmem:[%s7 + $0x7c] sm:$0xf]
      %v3932 = vld [vmem:[%s7 + $0x80] sm:$0xf]
      %v3933 = vld [vmem:[%s7 + $0x84] sm:$0xf]
      %v3934 = vld [vmem:[%s7 + $0x88] sm:$0xf]
      %v3935 = vld [vmem:[%s7 + $0x8c] sm:$0xf]
      %v3936 = vld [vmem:[%s7 + $0x90] sm:$0xf]
      %v3937 = vld [vmem:[%s7 + $0x94] sm:$0xf]
      %v3938 = vld [vmem:[%s7 + $0x98] sm:$0xf]
      %v3939 = vld [vmem:[%s7 + $0x9c] sm:$0xf]
      %v3940 = vld [vmem:[%s7 + $0xa0] sm:$0xf]
      %v3941 = vld [vmem:[%s7 + $0xa4] sm:$0xf]
      %v3942 = vld [vmem:[%s7 + $0xa8] sm:$0xf]
      %v3943 = vld [vmem:[%s7 + $0xac] sm:$0xf]
      %v3944 = vld [vmem:[%s7 + $0xb0] sm:$0xf]
      %v3945 = vld [vmem:[%s7 + $0xb4] sm:$0xf]
      %v3946 = vld [vmem:[%s7 + $0xb8] sm:$0xf]
      %v3947 = vld [vmem:[%s7 + $0xbc] sm:$0xf]
      %v3948 = vld [vmem:[%s7 + $0xc0] sm:$0xf]
      %v3949 = vld [vmem:[%s7 + $0xc4] sm:$0xf]
      %v3950 = vld [vmem:[%s7 + $0xc8] sm:$0xf]
      %v3951 = vld [vmem:[%s7 + $0xcc] sm:$0xf]
      %v3952 = vld [vmem:[%s7 + $0xd0] sm:$0xf]
      %v3953 = vld [vmem:[%s7 + $0xd4] sm:$0xf]
      %v3954 = vld [vmem:[%s7 + $0xd8] sm:$0xf]
      %v3955 = vld [vmem:[%s7 + $0xdc] sm:$0xf]
      %v3956 = vld [vmem:[%s7 + $0xe0] sm:$0xf]
      %v3957 = vld [vmem:[%s7 + $0xe4] sm:$0xf]
      %v3958 = vld [vmem:[%s7 + $0xe8] sm:$0xf]
      %v3959 = vld [vmem:[%s7 + $0xec] sm:$0xf]
      %v3960 = vld [vmem:[%s7 + $0xf0] sm:$0xf]
      %v3961 = vld [vmem:[%s7 + $0xf4] sm:$0xf]
      %v3962 = vld [vmem:[%s7 + $0xf8] sm:$0xf]
      %v3963 = vld [vmem:[%s7 + $0xfc] sm:$0xf]
      %v3964 = vld [vmem:[%s8] sm:$0x1]
      %v4015 = vunpack.c.l.b16 %v3850
      %v4016 = vunpack.c.l.b16 %v3851
      %v4017 = vunpack.c.l.b16 %v3852
      %v4018 = vunpack.c.l.b16 %v3853
      %v4019 = vunpack.c.l.b16 %v3854
      %v4020 = vunpack.c.l.b16 %v3855
      %v4021 = vunpack.c.l.b16 %v3856
      %v4022 = vunpack.c.l.b16 %v3857
      %v4023 = vunpack.c.l.b16 %v3858
      %v4024 = vunpack.c.l.b16 %v3859
      %v4025 = vunpack.c.l.b16 %v3860
      %v4026 = vunpack.c.l.b16 %v3861
      %v4027 = vunpack.c.l.b16 %v3862
      %v4028 = vunpack.c.l.b16 %v3863
      %v4029 = vunpack.c.l.b16 %v3864
      %v4030 = vunpack.c.l.b16 %v3865
      %v4031 = vunpack.c.l.b16 %v3866
      %v4032 = vunpack.c.l.b16 %v3867
      %v4033 = vunpack.c.l.b16 %v3868
      %v4034 = vunpack.c.l.b16 %v3869
      %v4035 = vunpack.c.l.b16 %v3870
      %v4036 = vunpack.c.l.b16 %v3871
      %v4037 = vunpack.c.l.b16 %v3872
      %v4038 = vunpack.c.l.b16 %v3873
      %v4039 = vunpack.c.l.b16 %v3874
      %v4040 = vunpack.c.l.b16 %v3875
      %v4041 = vunpack.c.l.b16 %v3876
      %v4042 = vunpack.c.l.b16 %v3877
      %v4043 = vunpack.c.l.b16 %v3878
      %v4044 = vunpack.c.l.b16 %v3879
      %v4045 = vunpack.c.l.b16 %v3880
      %v4046 = vunpack.c.l.b16 %v3881
      %v4047 = vunpack.c.l.b16 %v3882
      %v4048 = vunpack.c.l.b16 %v3883
      %v4049 = vunpack.c.l.b16 %v3884
      %v4050 = vunpack.c.l.b16 %v3885
      %v4051 = vunpack.c.l.b16 %v3886
      %v4052 = vunpack.c.l.b16 %v3887
      %v4053 = vunpack.c.l.b16 %v3888
      %v4054 = vunpack.c.l.b16 %v3889
      %v4055 = vunpack.c.l.b16 %v3890
      %v4056 = vunpack.c.l.b16 %v3891
      %v4057 = vunpack.c.l.b16 %v3892
      %v4058 = vunpack.c.l.b16 %v3893
      %v4059 = vunpack.c.l.b16 %v3894
      %v4060 = vunpack.c.l.b16 %v3895
      %v4061 = vunpack.c.l.b16 %v3896
      %v4062 = vunpack.c.l.b16 %v3897
      %v4063 = vunpack.c.l.b16 %v3898
      %v4064 = vunpack.c.l.b16 %v3899
      %v4065 = vpack.c.b16 %v4016, %v4015
      %v4066 = vpack.c.b16 %v4018, %v4017
      %v4067 = vpack.c.b16 %v4020, %v4019
      %v4068 = vpack.c.b16 %v4022, %v4021
      %v4069 = vpack.c.b16 %v4024, %v4023
      %v4070 = vpack.c.b16 %v4026, %v4025
      %v4071 = vpack.c.b16 %v4028, %v4027
      %v4072 = vpack.c.b16 %v4030, %v4029
      %v4073 = vpack.c.b16 %v4032, %v4031
      %v4074 = vpack.c.b16 %v4034, %v4033
      %v4075 = vpack.c.b16 %v4036, %v4035
      %v4076 = vpack.c.b16 %v4038, %v4037
      %v4077 = vpack.c.b16 %v4040, %v4039
      %v4078 = vpack.c.b16 %v4042, %v4041
      %v4079 = vpack.c.b16 %v4044, %v4043
      %v4080 = vpack.c.b16 %v4046, %v4045
      %v4081 = vpack.c.b16 %v4048, %v4047
      %v4082 = vpack.c.b16 %v4050, %v4049
      %v4083 = vpack.c.b16 %v4052, %v4051
      %v4084 = vpack.c.b16 %v4054, %v4053
      %v4085 = vpack.c.b16 %v4056, %v4055
      %v4086 = vpack.c.b16 %v4058, %v4057
      %v4087 = vpack.c.b16 %v4060, %v4059
      %v4088 = vpack.c.b16 %v4062, %v4061
      %v4089 = vpack.c.b16 %v4064, %v4063
      %vm4090 = vcmask 662528
      %v4092 = vsel %vm4090, %v4065, 0
      %v4095 = vsel %vm4090, %v4066, 0
      %v4098 = vsel %vm4090, %v4067, 0
      %v4101 = vsel %vm4090, %v4068, 0
      %v4104 = vsel %vm4090, %v4069, 0
      %v4107 = vsel %vm4090, %v4070, 0
      %v4110 = vsel %vm4090, %v4071, 0
      %v4113 = vsel %vm4090, %v4072, 0
      %v4116 = vsel %vm4090, %v4073, 0
      %v4119 = vsel %vm4090, %v4074, 0
      %v4122 = vsel %vm4090, %v4075, 0
      %v4125 = vsel %vm4090, %v4076, 0
      %v4128 = vsel %vm4090, %v4077, 0
      %v4131 = vsel %vm4090, %v4078, 0
      %v4134 = vsel %vm4090, %v4079, 0
      %v4137 = vsel %vm4090, %v4080, 0
      %v4140 = vsel %vm4090, %v4081, 0
      %v4143 = vsel %vm4090, %v4082, 0
      %v4146 = vsel %vm4090, %v4083, 0
      %v4149 = vsel %vm4090, %v4084, 0
      %v4152 = vsel %vm4090, %v4085, 0
      %v4155 = vsel %vm4090, %v4086, 0
      %v4158 = vsel %vm4090, %v4087, 0
      %v4161 = vsel %vm4090, %v4088, 0
      %v4164 = vsel %vm4090, %v4089, 0
      %vm4166 = vcmask 1040384
      %v4167 = vsel 0, 4294967295, 65535
      %v4168 = vsel %vm4166, %v4167, 0
      %v4170 = vand.u32 %v3849, %v4168
      %4172 = vmatprep.subr.bf16.mxu0 0
      %4173 = vmatpush1.bf16.msra.mxu0 %v3844
      %4174 = vmatprep.subr.bf16.mxu0 0
      %4175 = vmatpush1.bf16.msra.mxu0 %v3845
      %4176 = vmatprep.subr.bf16.mxu0 0
      %4177 = vmatpush1.bf16.msra.mxu0 %v3846
      %4178 = vmatprep.subr.bf16.mxu0 0
      %4179 = vmatpush1.bf16.msra.mxu0 %v3847
      %4180 = vmatprep.subr.bf16.mxu0 0
      %4181 = vmatpush1.bf16.msra.mxu0 %v3848
      %4182 = vmatprep.subr.bf16.mxu0 0
      %4183 = vmatpush1.bf16.msra.mxu0 %v4170
      %4184 = vmatprep.subr.bf16.mxu0 0
      %4185 = vmatpush1.bf16.msra.mxu0 0
      %4186 = vmatprep.subr.bf16.mxu0 0
      %4187 = vmatpush1.bf16.msra.mxu0 0
      %4188 = vmatprep.subr.bf16.mxu0 0
      %4189 = vmatpush1.bf16.msra.mxu0 0
      %4190 = vmatprep.subr.bf16.mxu0 0
      %4191 = vmatpush1.bf16.msra.mxu0 0
      %4192 = vmatprep.subr.bf16.mxu0 0
      %4193 = vmatpush1.bf16.msra.mxu0 0
      %4194 = vmatprep.subr.bf16.mxu0 0
      %4195 = vmatpush1.bf16.msra.mxu0 0
      %4196 = vmatprep.subr.bf16.mxu0 0
      %4197 = vmatpush1.bf16.msra.mxu0 0
      %4198 = vmatprep.subr.bf16.mxu0 0
      %4199 = vmatpush1.bf16.msra.mxu0 0
      %4200 = vmatprep.subr.bf16.mxu0 0
      %4201 = vmatpush1.bf16.msra.mxu0 0
      %4202 = vmatprep.subr.bf16.mxu0 0
      %4203 = vmatpush1.bf16.msra.mxu0 0
      %4204 = vmatprep.mubr.bf16.mxu0 0
      %4205 = vmatmul.mubr.bf16.gmra.mrb[0].mxu0 %v4092
      %v4206 = vpop.f32.mrb[0].mxu0
      %v4207 = vadd.f32 0.0, %v4206
      %v4208 = vpop.f32.mrb[0].mxu0
      %v4209 = vpop.f32.mrb[0].mxu0
      %v4210 = vadd.f32 0.0, %v4209
      %v4211 = vpop.f32.mrb[0].mxu0
      %4212 = vmatprep.mubr.bf16.mxu0 0
      %4213 = vmatmul.mubr.bf16.gmra.mrb[0].mxu0 %v4095
      %v4214 = vpop.f32.mrb[0].mxu0
      %v4215 = vadd.f32 0.0, %v4214
      %v4216 = vpop.f32.mrb[0].mxu0
      %v4217 = vpop.f32.mrb[0].mxu0
      %v4218 = vadd.f32 0.0, %v4217
      %v4219 = vpop.f32.mrb[0].mxu0
      %4220 = vmatprep.mubr.bf16.mxu0 0
      %4221 = vmatmul.mubr.bf16.gmra.mrb[0].mxu0 %v4098
      %v4222 = vpop.f32.mrb[0].mxu0
      %v4223 = vadd.f32 0.0, %v4222
      %v4224 = vpop.f32.mrb[0].mxu0
      %v4225 = vpop.f32.mrb[0].mxu0
      %v4226 = vadd.f32 0.0, %v4225
      %v4227 = vpop.f32.mrb[0].mxu0
      %4228 = vmatprep.mubr.bf16.mxu0 0
      %4229 = vmatmul.mubr.bf16.gmra.mrb[0].mxu0 %v4101
      %v4230 = vpop.f32.mrb[0].mxu0
      %v4231 = vadd.f32 0.0, %v4230
      %v4232 = vpop.f32.mrb[0].mxu0
      %v4233 = vpop.f32.mrb[0].mxu0
      %v4234 = vadd.f32 0.0, %v4233
      %v4235 = vpop.f32.mrb[0].mxu0
      %4236 = vmatprep.mubr.bf16.mxu0 0
      %4237 = vmatmul.mubr.bf16.gmra.mrb[0].mxu0 %v4104
      %v4238 = vpop.f32.mrb[0].mxu0
      %v4239 = vadd.f32 0.0, %v4238
      %v4240 = vpop.f32.mrb[0].mxu0
      %v4241 = vpop.f32.mrb[0].mxu0
      %v4242 = vadd.f32 0.0, %v4241
      %v4243 = vpop.f32.mrb[0].mxu0
      %4244 = vmatprep.mubr.bf16.mxu0 0
      %4245 = vmatmul.mubr.bf16.gmra.mrb[0].mxu0 %v4107
      %v4246 = vpop.f32.mrb[0].mxu0
      %v4247 = vadd.f32 0.0, %v4246
      %v4248 = vpop.f32.mrb[0].mxu0
      %v4249 = vpop.f32.mrb[0].mxu0
      %v4250 = vadd.f32 0.0, %v4249
      %v4251 = vpop.f32.mrb[0].mxu0
      %4252 = vmatprep.mubr.bf16.mxu0 0
      %4253 = vmatmul.mubr.bf16.gmra.mrb[0].mxu0 %v4110
      %v4254 = vpop.f32.mrb[0].mxu0
      %v4255 = vadd.f32 0.0, %v4254
      %v4256 = vpop.f32.mrb[0].mxu0
      %v4257 = vpop.f32.mrb[0].mxu0
      %v4258 = vadd.f32 0.0, %v4257
      %v4259 = vpop.f32.mrb[0].mxu0
      %4260 = vmatprep.mubr.bf16.mxu0 0
      %4261 = vmatmul.mubr.bf16.gmra.mrb[0].mxu0 %v4113
      %v4262 = vpop.f32.mrb[0].mxu0
      %v4263 = vadd.f32 0.0, %v4262
      %v4264 = vpop.f32.mrb[0].mxu0
      %v4265 = vpop.f32.mrb[0].mxu0
      %v4266 = vadd.f32 0.0, %v4265
      %v4267 = vpop.f32.mrb[0].mxu0
      %4268 = vmatprep.mubr.bf16.mxu0 0
      %4269 = vmatmul.mubr.bf16.gmra.mrb[0].mxu0 %v4116
      %v4270 = vpop.f32.mrb[0].mxu0
      %v4271 = vadd.f32 0.0, %v4270
      %v4272 = vpop.f32.mrb[0].mxu0
      %v4273 = vpop.f32.mrb[0].mxu0
      %v4274 = vadd.f32 0.0, %v4273
      %v4275 = vpop.f32.mrb[0].mxu0
      %4276 = vmatprep.mubr.bf16.mxu0 0
      %4277 = vmatmul.mubr.bf16.gmra.mrb[0].mxu0 %v4119
      %v4278 = vpop.f32.mrb[0].mxu0
      %v4279 = vadd.f32 0.0, %v4278
      %v4280 = vpop.f32.mrb[0].mxu0
      %v4281 = vpop.f32.mrb[0].mxu0
      %v4282 = vadd.f32 0.0, %v4281
      %v4283 = vpop.f32.mrb[0].mxu0
      %4284 = vmatprep.mubr.bf16.mxu0 0
      %4285 = vmatmul.mubr.bf16.gmra.mrb[0].mxu0 %v4122
      %v4286 = vpop.f32.mrb[0].mxu0
      %v4287 = vadd.f32 0.0, %v4286
      %v4288 = vpop.f32.mrb[0].mxu0
      %v4289 = vpop.f32.mrb[0].mxu0
      %v4290 = vadd.f32 0.0, %v4289
      %v4291 = vpop.f32.mrb[0].mxu0
      %4292 = vmatprep.mubr.bf16.mxu0 0
      %4293 = vmatmul.mubr.bf16.gmra.mrb[0].mxu0 %v4125
      %v4294 = vpop.f32.mrb[0].mxu0
      %v4295 = vadd.f32 0.0, %v4294
      %v4296 = vpop.f32.mrb[0].mxu0
      %v4297 = vpop.f32.mrb[0].mxu0
      %v4298 = vadd.f32 0.0, %v4297
      %v4299 = vpop.f32.mrb[0].mxu0
      %4300 = vmatprep.mubr.bf16.mxu0 0
      %4301 = vmatmul.mubr.bf16.gmra.mrb[0].mxu0 %v4128
      %v4302 = vpop.f32.mrb[0].mxu0
      %v4303 = vadd.f32 0.0, %v4302
      %v4304 = vpop.f32.mrb[0].mxu0
      %v4305 = vpop.f32.mrb[0].mxu0
      %v4306 = vadd.f32 0.0, %v4305
      %v4307 = vpop.f32.mrb[0].mxu0
      %4308 = vmatprep.mubr.bf16.mxu0 0
      %4309 = vmatmul.mubr.bf16.gmra.mrb[0].mxu0 %v4131
      %v4310 = vpop.f32.mrb[0].mxu0
      %v4311 = vadd.f32 0.0, %v4310
      %v4312 = vpop.f32.mrb[0].mxu0
      %v4313 = vpop.f32.mrb[0].mxu0
      %v4314 = vadd.f32 0.0, %v4313
      %v4315 = vpop.f32.mrb[0].mxu0
      %4316 = vmatprep.mubr.bf16.mxu0 0
      %4317 = vmatmul.mubr.bf16.gmra.mrb[0].mxu0 %v4134
      %v4318 = vpop.f32.mrb[0].mxu0
      %v4319 = vadd.f32 0.0, %v4318
      %v4320 = vpop.f32.mrb[0].mxu0
      %v4321 = vpop.f32.mrb[0].mxu0
      %v4322 = vadd.f32 0.0, %v4321
      %v4323 = vpop.f32.mrb[0].mxu0
      %4324 = vmatprep.mubr.bf16.mxu0 0
      %4325 = vmatmul.mubr.bf16.gmra.mrb[0].mxu0 %v4137
      %v4326 = vpop.f32.mrb[0].mxu0
      %v4327 = vadd.f32 0.0, %v4326
      %v4328 = vpop.f32.mrb[0].mxu0
      %v4329 = vpop.f32.mrb[0].mxu0
      %v4330 = vadd.f32 0.0, %v4329
      %v4331 = vpop.f32.mrb[0].mxu0
      %4332 = vmatprep.mubr.bf16.mxu0 0
      %4333 = vmatmul.mubr.bf16.gmra.mrb[0].mxu0 %v4140
      %v4334 = vpop.f32.mrb[0].mxu0
      %v4335 = vadd.f32 0.0, %v4334
      %v4336 = vpop.f32.mrb[0].mxu0
      %v4337 = vpop.f32.mrb[0].mxu0
      %v4338 = vadd.f32 0.0, %v4337
      %v4339 = vpop.f32.mrb[0].mxu0
      %4340 = vmatprep.mubr.bf16.mxu0 0
      %4341 = vmatmul.mubr.bf16.gmra.mrb[0].mxu0 %v4143
      %v4342 = vpop.f32.mrb[0].mxu0
      %v4343 = vadd.f32 0.0, %v4342
      %v4344 = vpop.f32.mrb[0].mxu0
      %v4345 = vpop.f32.mrb[0].mxu0
      %v4346 = vadd.f32 0.0, %v4345
      %v4347 = vpop.f32.mrb[0].mxu0
      %4348 = vmatprep.mubr.bf16.mxu0 0
      %4349 = vmatmul.mubr.bf16.gmra.mrb[0].mxu0 %v4146
      %v4350 = vpop.f32.mrb[0].mxu0
      %v4351 = vadd.f32 0.0, %v4350
      %v4352 = vpop.f32.mrb[0].mxu0
      %v4353 = vpop.f32.mrb[0].mxu0
      %v4354 = vadd.f32 0.0, %v4353
      %v4355 = vpop.f32.mrb[0].mxu0
      %4356 = vmatprep.mubr.bf16.mxu0 0
      %4357 = vmatmul.mubr.bf16.gmra.mrb[0].mxu0 %v4149
      %v4358 = vpop.f32.mrb[0].mxu0
      %v4359 = vadd.f32 0.0, %v4358
      %v4360 = vpop.f32.mrb[0].mxu0
      %v4361 = vpop.f32.mrb[0].mxu0
      %v4362 = vadd.f32 0.0, %v4361
      %v4363 = vpop.f32.mrb[0].mxu0
      %4364 = vmatprep.mubr.bf16.mxu0 0
      %4365 = vmatmul.mubr.bf16.gmra.mrb[0].mxu0 %v4152
      %v4366 = vpop.f32.mrb[0].mxu0
      %v4367 = vadd.f32 0.0, %v4366
      %v4368 = vpop.f32.mrb[0].mxu0
      %v4369 = vpop.f32.mrb[0].mxu0
      %v4370 = vadd.f32 0.0, %v4369
      %v4371 = vpop.f32.mrb[0].mxu0
      %4372 = vmatprep.mubr.bf16.mxu0 0
      %4373 = vmatmul.mubr.bf16.gmra.mrb[0].mxu0 %v4155
      %v4374 = vpop.f32.mrb[0].mxu0
      %v4375 = vadd.f32 0.0, %v4374
      %v4376 = vpop.f32.mrb[0].mxu0
      %v4377 = vpop.f32.mrb[0].mxu0
      %v4378 = vadd.f32 0.0, %v4377
      %v4379 = vpop.f32.mrb[0].mxu0
      %4380 = vmatprep.mubr.bf16.mxu0 0
      %4381 = vmatmul.mubr.bf16.gmra.mrb[0].mxu0 %v4158
      %v4382 = vpop.f32.mrb[0].mxu0
      %v4383 = vadd.f32 0.0, %v4382
      %v4384 = vpop.f32.mrb[0].mxu0
      %v4385 = vpop.f32.mrb[0].mxu0
      %v4386 = vadd.f32 0.0, %v4385
      %v4387 = vpop.f32.mrb[0].mxu0
      %4388 = vmatprep.mubr.bf16.mxu0 0
      %4389 = vmatmul.mubr.bf16.gmra.mrb[0].mxu0 %v4161
      %v4390 = vpop.f32.mrb[0].mxu0
      %v4391 = vadd.f32 0.0, %v4390
      %v4392 = vpop.f32.mrb[0].mxu0
      %v4393 = vpop.f32.mrb[0].mxu0
      %v4394 = vadd.f32 0.0, %v4393
      %v4395 = vpop.f32.mrb[0].mxu0
      %4396 = vmatprep.mubr.bf16.mxu0 0
      %4397 = vmatmul.mubr.bf16.gmra.mrb[0].mxu0 %v4164
      %v4398 = vpop.f32.mrb[0].mxu0
      %v4399 = vadd.f32 0.0, %v4398
      %v4400 = vpop.f32.mrb[0].mxu0
      %v4401 = vpop.f32.mrb[0].mxu0
      %v4402 = vadd.f32 0.0, %v4401
      %v4403 = vpop.f32.mrb[0].mxu0
      %4404 = vdwg.mxu0
      %v4405 = vpack.c.bf16 %v4210, %v4207
      %v4406 = vpack.c.bf16 %v4218, %v4215
      %v4407 = vpack.c.bf16 %v4226, %v4223
      %v4408 = vpack.c.bf16 %v4234, %v4231
      %v4409 = vpack.c.bf16 %v4242, %v4239
      %v4410 = vpack.c.bf16 %v4250, %v4247
      %v4411 = vpack.c.bf16 %v4258, %v4255
      %v4412 = vpack.c.bf16 %v4266, %v4263
      %v4413 = vpack.c.bf16 %v4274, %v4271
      %v4414 = vpack.c.bf16 %v4282, %v4279
      %v4415 = vpack.c.bf16 %v4290, %v4287
      %v4416 = vpack.c.bf16 %v4298, %v4295
      %v4417 = vpack.c.bf16 %v4306, %v4303
      %v4418 = vpack.c.bf16 %v4314, %v4311
      %v4419 = vpack.c.bf16 %v4322, %v4319
      %v4420 = vpack.c.bf16 %v4330, %v4327
      %v4421 = vpack.c.bf16 %v4338, %v4335
      %v4422 = vpack.c.bf16 %v4346, %v4343
      %v4423 = vpack.c.bf16 %v4354, %v4351
      %v4424 = vpack.c.bf16 %v4362, %v4359
      %v4425 = vpack.c.bf16 %v4370, %v4367
      %v4426 = vpack.c.bf16 %v4378, %v4375
      %v4427 = vpack.c.bf16 %v4386, %v4383
      %v4428 = vpack.c.bf16 %v4394, %v4391
      %v4429 = vpack.c.bf16 %v4402, %v4399
      %v4431 = vshrl.u32 %v4406, 16
      %v4433 = vrot.slane %v4431, 4
      %v4434 = vshll.u32 %v4406, 16
      %v4436 = vrot.slane %v4434, 5
      %v4437 = vor.u32 %v4433, %v4436
      %v4439 = vshrl.u32 %v4407, 16
      %v4441 = vrot.slane %v4439, 4
      %v4442 = vshll.u32 %v4407, 16
      %v4444 = vrot.slane %v4442, 5
      %v4445 = vor.u32 %v4441, %v4444
      %v4446 = vsel %vm3087, %v4437, %v4445
      %v4448 = vshrl.u32 %v4408, 16
      %v4450 = vrot.slane %v4448, 4
      %v4451 = vshll.u32 %v4408, 16
      %v4453 = vrot.slane %v4451, 5
      %v4454 = vor.u32 %v4450, %v4453
      %v4455 = vsel %vm3087, %v4445, %v4454
      %4456 = vrot.lane.b32.xlu0 %v4446, 32
      %v4457 = vpop.permute.xlu0 %4456
      %4458 = vrot.lane.b32.xlu0 %v4455, 32
      %v4459 = vpop.permute.xlu0 %4458
      %v4462 = vrot.slane %v4408, 1
      %v4463 = vrot.slane %v4409, 1
      %v4464 = vsel %vm2787, %v4462, %v4463
      %4465 = vrot.lane.b32.xlu0 %v4464, 64
      %v4466 = vpop.permute.xlu0 %4465
      %4467 = vrot.lane.b32.xlu0 %v4463, 64
      %v4468 = vpop.permute.xlu0 %4467
      %v4470 = vshrl.u32 %v4409, 16
      %v4472 = vrot.slane %v4470, 5
      %v4473 = vshll.u32 %v4409, 16
      %v4475 = vrot.slane %v4473, 6
      %v4476 = vor.u32 %v4472, %v4475
      %v4478 = vshrl.u32 %v4410, 16
      %v4480 = vrot.slane %v4478, 5
      %v4481 = vshll.u32 %v4410, 16
      %v4483 = vrot.slane %v4481, 6
      %v4484 = vor.u32 %v4480, %v4483
      %v4485 = vsel %vm3183, %v4476, %v4484
      %v4487 = vshrl.u32 %v4411, 16
      %v4489 = vrot.slane %v4487, 5
      %v4490 = vshll.u32 %v4411, 16
      %v4492 = vrot.slane %v4490, 6
      %v4493 = vor.u32 %v4489, %v4492
      %v4494 = vsel %vm3183, %v4484, %v4493
      %4495 = vrot.lane.b32.xlu0 %v4485, 96
      %v4496 = vpop.permute.xlu0 %4495
      %4497 = vrot.lane.b32.xlu0 %v4494, 96
      %v4498 = vpop.permute.xlu0 %4497
      %v4501 = vrot.slane %v4411, 2
      %v4502 = vrot.slane %v4412, 2
      %v4503 = vsel %vm2883, %v4501, %v4502
      %v4505 = vshrl.u32 %v4412, 16
      %v4507 = vrot.slane %v4505, 6
      %v4508 = vshll.u32 %v4412, 16
      %v4510 = vrot.slane %v4508, 7
      %v4511 = vor.u32 %v4507, %v4510
      %v4513 = vshrl.u32 %v4413, 16
      %v4515 = vrot.slane %v4513, 6
      %v4516 = vshll.u32 %v4413, 16
      %v4518 = vrot.slane %v4516, 7
      %v4519 = vor.u32 %v4515, %v4518
      %v4520 = vsel %vm3279, %v4511, %v4519
      %v4522 = vshrl.u32 %v4414, 16
      %v4524 = vrot.slane %v4522, 6
      %v4525 = vshll.u32 %v4414, 16
      %v4527 = vrot.slane %v4525, 7
      %v4528 = vor.u32 %v4524, %v4527
      %v4529 = vsel %vm3279, %v4519, %v4528
      %4530 = vrot.lane.b32.xlu0 %v4520, 32
      %v4531 = vpop.permute.xlu0 %4530
      %4532 = vrot.lane.b32.xlu0 %v4529, 32
      %v4533 = vpop.permute.xlu0 %4532
      %v4536 = vrot.slane %v4414, 3
      %v4537 = vrot.slane %v4415, 3
      %v4538 = vsel %vm2979, %v4536, %v4537
      %4539 = vrot.lane.b32.xlu0 %v4538, 64
      %v4540 = vpop.permute.xlu0 %4539
      %4541 = vrot.lane.b32.xlu0 %v4537, 64
      %v4542 = vpop.permute.xlu0 %4541
      %v4544 = vshrl.u32 %v4415, 16
      %v4546 = vrot.slane %v4544, 7
      %v4548 = vshrl.u32 %v4416, 16
      %v4550 = vrot.slane %v4548, 7
      %v4551 = vshll.u32 %v4416, 16
      %v4553 = vor.u32 %v4550, %v4551
      %v4554 = vsel %vm3375, %v4546, %v4553
      %v4556 = vshrl.u32 %v4417, 16
      %v4558 = vrot.slane %v4556, 7
      %v4559 = vshll.u32 %v4417, 16
      %v4561 = vor.u32 %v4558, %v4559
      %v4562 = vsel %vm3375, %v4550, %v4561
      %4563 = vrot.lane.b32.xlu0 %v4554, 96
      %v4564 = vpop.permute.xlu0 %4563
      %4565 = vrot.lane.b32.xlu0 %v4562, 96
      %v4566 = vpop.permute.xlu0 %4565
      %v4570 = vrot.slane %v4417, 4
      %v4571 = vrot.slane %v4418, 4
      %v4572 = vsel %vm3075, %v4570, %v4571
      %v4573 = vrot.slane %v4419, 4
      %v4574 = vsel %vm3075, %v4571, %v4573
      %v4576 = vshrl.u32 %v4419, 16
      %v4578 = vshll.u32 %v4419, 16
      %v4580 = vrot.slane %v4578, 1
      %v4581 = vor.u32 %v4576, %v4580
      %v4583 = vshll.u32 %v4420, 16
      %v4585 = vrot.slane %v4583, 1
      %v4586 = vsel %vm2722, %v4581, %v4585
      %v4587 = vshrl.u32 %v4420, 16
      %v4589 = vor.u32 %v4587, %v4585
      %4590 = vrot.lane.b32.xlu0 %v4586, 32
      %v4591 = vpop.permute.xlu0 %4590
      %4592 = vrot.lane.b32.xlu0 %v4589, 32
      %v4593 = vpop.permute.xlu0 %4592
      %v4597 = vrot.slane %v4420, 5
      %v4598 = vrot.slane %v4421, 5
      %v4599 = vsel %vm3159, %v4597, %v4598
      %v4600 = vrot.slane %v4422, 5
      %v4601 = vsel %vm3159, %v4598, %v4600
      %4602 = vrot.lane.b32.xlu0 %v4599, 64
      %v4603 = vpop.permute.xlu0 %4602
      %4604 = vrot.lane.b32.xlu0 %v4601, 64
      %v4605 = vpop.permute.xlu0 %4604
      %v4607 = vshrl.u32 %v4422, 16
      %v4609 = vrot.slane %v4607, 1
      %v4610 = vshll.u32 %v4422, 16
      %v4612 = vrot.slane %v4610, 2
      %v4613 = vor.u32 %v4609, %v4612
      %v4615 = vshrl.u32 %v4423, 16
      %v4617 = vrot.slane %v4615, 1
      %v4618 = vshll.u32 %v4423, 16
      %v4620 = vrot.slane %v4618, 2
      %v4621 = vor.u32 %v4617, %v4620
      %v4622 = vsel %vm2811, %v4613, %v4621
      %4623 = vrot.lane.b32.xlu0 %v4622, 96
      %v4624 = vpop.permute.xlu0 %4623
      %4625 = vrot.lane.b32.xlu0 %v4621, 96
      %v4626 = vpop.permute.xlu0 %4625
      %v4630 = vrot.slane %v4423, 6
      %v4631 = vrot.slane %v4424, 6
      %v4632 = vsel %vm3255, %v4630, %v4631
      %v4633 = vrot.slane %v4425, 6
      %v4634 = vsel %vm3255, %v4631, %v4633
      %v4636 = vshrl.u32 %v4425, 16
      %v4638 = vrot.slane %v4636, 2
      %v4639 = vshll.u32 %v4425, 16
      %v4641 = vrot.slane %v4639, 3
      %v4642 = vor.u32 %v4638, %v4641
      %v4644 = vshrl.u32 %v4426, 16
      %v4646 = vrot.slane %v4644, 2
      %v4647 = vshll.u32 %v4426, 16
      %v4649 = vrot.slane %v4647, 3
      %v4650 = vor.u32 %v4646, %v4649
      %v4651 = vsel %vm2907, %v4642, %v4650
      %4652 = vrot.lane.b32.xlu0 %v4651, 32
      %v4653 = vpop.permute.xlu0 %4652
      %4654 = vrot.lane.b32.xlu0 %v4650, 32
      %v4655 = vpop.permute.xlu0 %4654
      %v4659 = vrot.slane %v4426, 7
      %v4660 = vrot.slane %v4427, 7
      %v4661 = vsel %vm3351, %v4659, %v4660
      %v4662 = vrot.slane %v4428, 7
      %v4663 = vsel %vm3351, %v4660, %v4662
      %4664 = vrot.lane.b32.xlu0 %v4661, 64
      %v4665 = vpop.permute.xlu0 %4664
      %4666 = vrot.lane.b32.xlu0 %v4663, 64
      %v4667 = vpop.permute.xlu0 %4666
      %v4669 = vshrl.u32 %v4428, 16
      %v4671 = vrot.slane %v4669, 3
      %v4672 = vshll.u32 %v4428, 16
      %v4674 = vrot.slane %v4672, 4
      %v4675 = vor.u32 %v4671, %v4674
      %v4677 = vshrl.u32 %v4429, 16
      %v4679 = vrot.slane %v4677, 3
      %v4680 = vshll.u32 %v4429, 16
      %v4682 = vrot.slane %v4680, 4
      %v4683 = vor.u32 %v4679, %v4682
      %v4684 = vsel %vm3003, %v4675, %v4683
      %4685 = vrot.lane.b32.xlu0 %v4684, 96
      %v4686 = vpop.permute.xlu0 %4685
      %4687 = vrot.lane.b32.xlu0 %v4683, 96
      %v4688 = vpop.permute.xlu0 %4687
      %v4691 = vsel %vm633, %v4405, %v4457
      %v4693 = vsel %vm633, %v4406, %v4459
      %v4695 = vsel %vm3475, %v4691, %v4466
      %v4697 = vsel %vm3475, %v4693, %v4468
      %v4699 = vsel %vm3501, %v4695, %v4496
      %v4702 = vsel %vm3501, %v4697, %v4498
      %v4706 = vsel %vm633, %v4503, %v4531
      %v4709 = vsel %vm633, %v4502, %v4533
      %v4711 = vsel %vm3475, %v4706, %v4540
      %v4713 = vsel %vm3475, %v4709, %v4542
      %v4715 = vsel %vm3501, %v4711, %v4564
      %v4718 = vsel %vm3501, %v4713, %v4566
      %v4722 = vsel %vm633, %v4572, %v4591
      %v4725 = vsel %vm633, %v4574, %v4593
      %v4727 = vsel %vm3475, %v4722, %v4603
      %v4729 = vsel %vm3475, %v4725, %v4605
      %v4731 = vsel %vm3501, %v4727, %v4624
      %v4734 = vsel %vm3501, %v4729, %v4626
      %v4738 = vsel %vm633, %v4632, %v4653
      %v4741 = vsel %vm633, %v4634, %v4655
      %v4743 = vsel %vm3475, %v4738, %v4665
      %v4745 = vsel %vm3475, %v4741, %v4667
      %v4747 = vsel %vm3501, %v4743, %v4686
      %v4750 = vsel %vm3501, %v4745, %v4688
      %v4753 = vlaneseq
      %v4754 = vshrl.u32 %v4753, 7
      %v4755 = vsub.s32 0, %v4754
      %v4756 = vrot.slane %v3964, %v4755
      %v4822 = vunpack.c.l.b16 %v3900
      %v4823 = vunpack.c.l.b16 %v3901
      %v4824 = vunpack.c.l.b16 %v3902
      %v4825 = vunpack.c.l.b16 %v3903
      %v4826 = vunpack.c.l.b16 %v3904
      %v4827 = vunpack.c.l.b16 %v3905
      %v4828 = vunpack.c.l.b16 %v3906
      %v4829 = vunpack.c.l.b16 %v3907
      %v4830 = vunpack.c.l.b16 %v3908
      %v4831 = vunpack.c.l.b16 %v3909
      %v4832 = vunpack.c.l.b16 %v3910
      %v4833 = vunpack.c.l.b16 %v3911
      %v4834 = vunpack.c.l.b16 %v3912
      %v4835 = vunpack.c.l.b16 %v3913
      %v4836 = vunpack.c.l.b16 %v3914
      %v4837 = vunpack.c.l.b16 %v3915
      %v4838 = vunpack.c.l.b16 %v3916
      %v4839 = vunpack.c.l.b16 %v3917
      %v4840 = vunpack.c.l.b16 %v3918
      %v4841 = vunpack.c.l.b16 %v3919
      %v4842 = vunpack.c.l.b16 %v3920
      %v4843 = vunpack.c.l.b16 %v3921
      %v4844 = vunpack.c.l.b16 %v3922
      %v4845 = vunpack.c.l.b16 %v3923
      %v4846 = vunpack.c.l.b16 %v3924
      %v4847 = vunpack.c.l.b16 %v3925
      %v4848 = vunpack.c.l.b16 %v3926
      %v4849 = vunpack.c.l.b16 %v3927
      %v4850 = vunpack.c.l.b16 %v3928
      %v4851 = vunpack.c.l.b16 %v3929
      %v4852 = vunpack.c.l.b16 %v3930
      %v4853 = vunpack.c.l.b16 %v3931
      %v4854 = vunpack.c.l.b16 %v3932
      %v4855 = vunpack.c.l.b16 %v3933
      %v4856 = vunpack.c.l.b16 %v3934
      %v4857 = vunpack.c.l.b16 %v3935
      %v4858 = vunpack.c.l.b16 %v3936
      %v4859 = vunpack.c.l.b16 %v3937
      %v4860 = vunpack.c.l.b16 %v3938
      %v4861 = vunpack.c.l.b16 %v3939
      %v4862 = vunpack.c.l.b16 %v3940
      %v4863 = vunpack.c.l.b16 %v3941
      %v4864 = vunpack.c.l.b16 %v3942
      %v4865 = vunpack.c.l.b16 %v3943
      %v4866 = vunpack.c.l.b16 %v3944
      %v4867 = vunpack.c.l.b16 %v3945
      %v4868 = vunpack.c.l.b16 %v3946
      %v4869 = vunpack.c.l.b16 %v3947
      %v4870 = vunpack.c.l.b16 %v3948
      %v4871 = vunpack.c.l.b16 %v3949
      %v4872 = vunpack.c.l.b16 %v3950
      %v4873 = vunpack.c.l.b16 %v3951
      %v4874 = vunpack.c.l.b16 %v3952
      %v4875 = vunpack.c.l.b16 %v3953
      %v4876 = vunpack.c.l.b16 %v3954
      %v4877 = vunpack.c.l.b16 %v3955
      %v4878 = vunpack.c.l.b16 %v3956
      %v4879 = vunpack.c.l.b16 %v3957
      %v4880 = vunpack.c.l.b16 %v3958
      %v4881 = vunpack.c.l.b16 %v3959
      %v4882 = vunpack.c.l.b16 %v3960
      %v4883 = vunpack.c.l.b16 %v3961
      %v4884 = vunpack.c.l.b16 %v3962
      %v4885 = vunpack.c.l.b16 %v3963
      %v4886 = vpack.c.b16 %v4823, %v4822
      %v4887 = vpack.c.b16 %v4825, %v4824
      %v4888 = vpack.c.b16 %v4827, %v4826
      %v4889 = vpack.c.b16 %v4829, %v4828
      %v4890 = vpack.c.b16 %v4831, %v4830
      %v4891 = vpack.c.b16 %v4833, %v4832
      %v4892 = vpack.c.b16 %v4835, %v4834
      %v4893 = vpack.c.b16 %v4837, %v4836
      %v4894 = vpack.c.b16 %v4839, %v4838
      %v4895 = vpack.c.b16 %v4841, %v4840
      %v4896 = vpack.c.b16 %v4843, %v4842
      %v4897 = vpack.c.b16 %v4845, %v4844
      %v4898 = vpack.c.b16 %v4847, %v4846
      %v4899 = vpack.c.b16 %v4849, %v4848
      %v4900 = vpack.c.b16 %v4851, %v4850
      %v4901 = vpack.c.b16 %v4853, %v4852
      %v4902 = vpack.c.b16 %v4855, %v4854
      %v4903 = vpack.c.b16 %v4857, %v4856
      %v4904 = vpack.c.b16 %v4859, %v4858
      %v4905 = vpack.c.b16 %v4861, %v4860
      %v4906 = vpack.c.b16 %v4863, %v4862
      %v4907 = vpack.c.b16 %v4865, %v4864
      %v4908 = vpack.c.b16 %v4867, %v4866
      %v4909 = vpack.c.b16 %v4869, %v4868
      %v4910 = vpack.c.b16 %v4871, %v4870
      %v4911 = vpack.c.b16 %v4873, %v4872
      %v4912 = vpack.c.b16 %v4875, %v4874
      %v4913 = vpack.c.b16 %v4877, %v4876
      %v4914 = vpack.c.b16 %v4879, %v4878
      %v4915 = vpack.c.b16 %v4881, %v4880
      %v4916 = vpack.c.b16 %v4883, %v4882
      %v4917 = vpack.c.b16 %v4885, %v4884
      %4950 = vmatprep.subr.bf16.mxu0 0
      %4951 = vmatpush1.bf16.msra.mxu0 %v4886
      %4952 = vmatprep.subr.bf16.mxu0 0
      %4953 = vmatpush1.bf16.msra.mxu0 %v4887
      %4954 = vmatprep.subr.bf16.mxu0 0
      %4955 = vmatpush1.bf16.msra.mxu0 %v4888
      %4956 = vmatprep.subr.bf16.mxu0 0
      %4957 = vmatpush1.bf16.msra.mxu0 %v4889
      %4958 = vmatprep.subr.bf16.mxu0 0
      %4959 = vmatpush1.bf16.msra.mxu0 %v4890
      %4960 = vmatprep.subr.bf16.mxu0 0
      %4961 = vmatpush1.bf16.msra.mxu0 %v4891
      %4962 = vmatprep.subr.bf16.mxu0 0
      %4963 = vmatpush1.bf16.msra.mxu0 %v4892
      %4964 = vmatprep.subr.bf16.mxu0 0
      %4965 = vmatpush1.bf16.msra.mxu0 %v4893
      %4966 = vmatprep.subr.bf16.mxu0 0
      %4967 = vmatpush1.bf16.msra.mxu0 %v4894
      %4968 = vmatprep.subr.bf16.mxu0 0
      %4969 = vmatpush1.bf16.msra.mxu0 %v4895
      %4970 = vmatprep.subr.bf16.mxu0 0
      %4971 = vmatpush1.bf16.msra.mxu0 %v4896
      %4972 = vmatprep.subr.bf16.mxu0 0
      %4973 = vmatpush1.bf16.msra.mxu0 %v4897
      %4974 = vmatprep.subr.bf16.mxu0 0
      %4975 = vmatpush1.bf16.msra.mxu0 %v4898
      %4976 = vmatprep.subr.bf16.mxu0 0
      %4977 = vmatpush1.bf16.msra.mxu0 %v4899
      %4978 = vmatprep.subr.bf16.mxu0 0
      %4979 = vmatpush1.bf16.msra.mxu0 %v4900
      %4980 = vmatprep.subr.bf16.mxu0 0
      %4981 = vmatpush1.bf16.msra.mxu0 %v4901
      %4982 = vmatprep.mubr.bf16.mxu0 %v4715
      %4983 = vmatmul.mubr.bf16.gmra.mrb[0].mxu0 %v4699
      %v4984 = vpop.f32.mrb[0].mxu0
      %v4985 = vadd.f32 %v4756, %v4984
      %v4986 = vpop.f32.mrb[0].mxu0
      %v4987 = vpop.f32.mrb[0].mxu0
      %v4988 = vadd.f32 %v4756, %v4987
      %v4989 = vpop.f32.mrb[0].mxu0
      %4990 = vmatprep.mubr.bf16.mxu0 %v4718
      %4991 = vmatmul.mubr.bf16.gmra.mrb[0].mxu0 %v4702
      %v4992 = vpop.f32.mrb[0].mxu0
      %v4993 = vadd.f32 %v4756, %v4992
      %v4994 = vpop.f32.mrb[0].mxu0
      %v4995 = vpop.f32.mrb[0].mxu0
      %v4996 = vadd.f32 %v4756, %v4995
      %v4997 = vpop.f32.mrb[0].mxu0
      %4998 = vdwg.mxu0
      %4999 = vmatprep.subr.bf16.mxu0 0
      %5000 = vmatpush1.bf16.msra.mxu0 %v4902
      %5001 = vmatprep.subr.bf16.mxu0 0
      %5002 = vmatpush1.bf16.msra.mxu0 %v4903
      %5003 = vmatprep.subr.bf16.mxu0 0
      %5004 = vmatpush1.bf16.msra.mxu0 %v4904
      %5005 = vmatprep.subr.bf16.mxu0 0
      %5006 = vmatpush1.bf16.msra.mxu0 %v4905
      %5007 = vmatprep.subr.bf16.mxu0 0
      %5008 = vmatpush1.bf16.msra.mxu0 %v4906
      %5009 = vmatprep.subr.bf16.mxu0 0
      %5010 = vmatpush1.bf16.msra.mxu0 %v4907
      %5011 = vmatprep.subr.bf16.mxu0 0
      %5012 = vmatpush1.bf16.msra.mxu0 %v4908
      %5013 = vmatprep.subr.bf16.mxu0 0
      %5014 = vmatpush1.bf16.msra.mxu0 %v4909
      %5015 = vmatprep.subr.bf16.mxu0 0
      %5016 = vmatpush1.bf16.msra.mxu0 %v4910
      %5017 = vmatprep.subr.bf16.mxu0 0
      %5018 = vmatpush1.bf16.msra.mxu0 %v4911
      %5019 = vmatprep.subr.bf16.mxu0 0
      %5020 = vmatpush1.bf16.msra.mxu0 %v4912
      %5021 = vmatprep.subr.bf16.mxu0 0
      %5022 = vmatpush1.bf16.msra.mxu0 %v4913
      %5023 = vmatprep.subr.bf16.mxu0 0
      %5024 = vmatpush1.bf16.msra.mxu0 %v4914
      %5025 = vmatprep.subr.bf16.mxu0 0
      %5026 = vmatpush1.bf16.msra.mxu0 %v4915
      %5027 = vmatprep.subr.bf16.mxu0 0
      %5028 = vmatpush1.bf16.msra.mxu0 %v4916
      %5029 = vmatprep.subr.bf16.mxu0 0
      %5030 = vmatpush1.bf16.msra.mxu0 %v4917
      %5031 = vmatprep.mubr.bf16.mxu0 %v4747
      %5032 = vmatmul.mubr.bf16.gmra.mrb[0].mxu0 %v4731
      %v5033 = vpop.f32.mrb[0].mxu0
      %v5034 = vadd.f32 %v4985, %v5033
      %v5035 = vpop.f32.mrb[0].mxu0
      %v5036 = vpop.f32.mrb[0].mxu0
      %v5037 = vadd.f32 %v4988, %v5036
      %v5038 = vpop.f32.mrb[0].mxu0
      %5039 = vmatprep.mubr.bf16.mxu0 %v4750
      %5040 = vmatmul.mubr.bf16.gmra.mrb[0].mxu0 %v4734
      %v5041 = vpop.f32.mrb[0].mxu0
      %v5042 = vadd.f32 %v4993, %v5041
      %v5043 = vpop.f32.mrb[0].mxu0
      %v5044 = vpop.f32.mrb[0].mxu0
      %v5045 = vadd.f32 %v4996, %v5044
      %v5046 = vpop.f32.mrb[0].mxu0
      %5047 = vdwg.mxu0
      %vm5048 = vcmp.ge.f32.partialorder %v5034, 0.0
      %vm5049 = vcmp.ge.f32.partialorder %v5037, 0.0
      %vm5050 = vcmp.ge.f32.partialorder %v5042, 0.0
      %vm5051 = vcmp.ge.f32.partialorder %v5045, 0.0
      %v5052 = vmul.f32 %v5034, 0.1
      %v5053 = vmul.f32 %v5037, 0.1
      %v5054 = vmul.f32 %v5042, 0.1
      %v5055 = vmul.f32 %v5045, 0.1
      %v5056 = vsel %vm5048, %v5034, %v5052
      %v5057 = vsel %vm5049, %v5037, %v5053
      %v5058 = vsel %vm5050, %v5042, %v5054
      %v5059 = vsel %vm5051, %v5045, %v5055
      %v5060 = vpack.c.bf16 %v5057, %v5056
      %v5061 = vpack.c.bf16 %v5059, %v5058
      %v5062 = vld [vmem:[%s9] sm:$0xf]
      %v5063 = vld [vmem:[%s9 + $0x4] sm:$0xf]
      %v5064 = vld [vmem:[%s9 + $0x8] sm:$0xf]
      %v5065 = vld [vmem:[%s9 + $0xc] sm:$0xf]
      %v5066 = vld [vmem:[%s9 + $0x10] sm:$0xf]
      %v5067 = vld [vmem:[%s9 + $0x14] sm:$0xf]
      %v5068 = vld [vmem:[%s9 + $0x18] sm:$0xf]
      %v5069 = vld [vmem:[%s9 + $0x1c] sm:$0xf]
      %v5070 = vld [vmem:[%s9 + $0x20] sm:$0xf]
      %v5071 = vld [vmem:[%s9 + $0x24] sm:$0xf]
      %v5072 = vld [vmem:[%s9 + $0x28] sm:$0xf]
      %v5073 = vld [vmem:[%s9 + $0x2c] sm:$0xf]
      %v5074 = vld [vmem:[%s9 + $0x30] sm:$0xf]
      %v5075 = vld [vmem:[%s9 + $0x34] sm:$0xf]
      %v5076 = vld [vmem:[%s9 + $0x38] sm:$0xf]
      %v5077 = vld [vmem:[%s9 + $0x3c] sm:$0xf]
      %v5078 = vld [vmem:[%s9 + $0x40] sm:$0xf]
      %v5079 = vld [vmem:[%s9 + $0x44] sm:$0xf]
      %v5080 = vld [vmem:[%s10] sm:$0xf]
      %v5081 = vld [vmem:[%s10 + $0x4] sm:$0xf]
      %v5082 = vld [vmem:[%s10 + $0x8] sm:$0xf]
      %v5083 = vld [vmem:[%s10 + $0xc] sm:$0xf]
      %v5084 = vld [vmem:[%s10 + $0x10] sm:$0xf]
      %v5085 = vld [vmem:[%s10 + $0x14] sm:$0xf]
      %v5086 = vld [vmem:[%s10 + $0x18] sm:$0xf]
      %v5087 = vld [vmem:[%s10 + $0x1c] sm:$0xf]
      %v5088 = vld [vmem:[%s10 + $0x20] sm:$0xf]
      %v5089 = vld [vmem:[%s10 + $0x24] sm:$0xf]
      %v5090 = vld [vmem:[%s10 + $0x28] sm:$0xf]
      %v5091 = vld [vmem:[%s10 + $0x2c] sm:$0xf]
      %v5092 = vld [vmem:[%s10 + $0x30] sm:$0xf]
      %v5093 = vld [vmem:[%s10 + $0x34] sm:$0xf]
      %v5094 = vld [vmem:[%s10 + $0x38] sm:$0xf]
      %v5095 = vld [vmem:[%s10 + $0x3c] sm:$0xf]
      %v5096 = vld [vmem:[%s10 + $0x40] sm:$0xf]
      %v5097 = vld [vmem:[%s10 + $0x44] sm:$0xf]
      %v5098 = vld [vmem:[%s10 + $0x48] sm:$0xf]
      %v5099 = vld [vmem:[%s10 + $0x4c] sm:$0xf]
      %v5100 = vld [vmem:[%s10 + $0x50] sm:$0xf]
      %v5101 = vld [vmem:[%s10 + $0x54] sm:$0xf]
      %v5102 = vld [vmem:[%s10 + $0x58] sm:$0xf]
      %v5103 = vld [vmem:[%s10 + $0x5c] sm:$0xf]
      %v5104 = vld [vmem:[%s10 + $0x60] sm:$0xf]
      %v5105 = vld [vmem:[%s10 + $0x64] sm:$0xf]
      %v5106 = vld [vmem:[%s10 + $0x68] sm:$0xf]
      %v5107 = vld [vmem:[%s10 + $0x6c] sm:$0xf]
      %v5108 = vld [vmem:[%s10 + $0x70] sm:$0xf]
      %v5109 = vld [vmem:[%s10 + $0x74] sm:$0xf]
      %v5110 = vld [vmem:[%s10 + $0x78] sm:$0xf]
      %v5111 = vld [vmem:[%s10 + $0x7c] sm:$0xf]
      %v5112 = vld [vmem:[%s10 + $0x80] sm:$0xf]
      %v5113 = vld [vmem:[%s10 + $0x84] sm:$0xf]
      %v5114 = vld [vmem:[%s10 + $0x88] sm:$0xf]
      %v5115 = vld [vmem:[%s10 + $0x8c] sm:$0xf]
      %v5116 = vld [vmem:[%s10 + $0x90] sm:$0xf]
      %v5117 = vld [vmem:[%s10 + $0x94] sm:$0xf]
      %v5118 = vld [vmem:[%s10 + $0x98] sm:$0xf]
      %v5119 = vld [vmem:[%s10 + $0x9c] sm:$0xf]
      %v5120 = vld [vmem:[%s10 + $0xa0] sm:$0xf]
      %v5121 = vld [vmem:[%s10 + $0xa4] sm:$0xf]
      %v5122 = vld [vmem:[%s10 + $0xa8] sm:$0xf]
      %v5123 = vld [vmem:[%s10 + $0xac] sm:$0xf]
      %v5124 = vld [vmem:[%s10 + $0xb0] sm:$0xf]
      %v5125 = vld [vmem:[%s10 + $0xb4] sm:$0xf]
      %v5126 = vld [vmem:[%s10 + $0xb8] sm:$0xf]
      %v5127 = vld [vmem:[%s10 + $0xbc] sm:$0xf]
      %v5128 = vld [vmem:[%s10 + $0xc0] sm:$0xf]
      %v5129 = vld [vmem:[%s10 + $0xc4] sm:$0xf]
      %v5130 = vld [vmem:[%s10 + $0xc8] sm:$0xf]
      %v5131 = vld [vmem:[%s10 + $0xcc] sm:$0xf]
      %v5132 = vld [vmem:[%s10 + $0xd0] sm:$0xf]
      %v5133 = vld [vmem:[%s10 + $0xd4] sm:$0xf]
      %v5134 = vld [vmem:[%s10 + $0xd8] sm:$0xf]
      %v5135 = vld [vmem:[%s10 + $0xdc] sm:$0xf]
      %v5136 = vld [vmem:[%s10 + $0xe0] sm:$0xf]
      %v5137 = vld [vmem:[%s10 + $0xe4] sm:$0xf]
      %v5138 = vld [vmem:[%s10 + $0xe8] sm:$0xf]
      %v5139 = vld [vmem:[%s10 + $0xec] sm:$0xf]
      %v5140 = vld [vmem:[%s10 + $0xf0] sm:$0xf]
      %v5141 = vld [vmem:[%s10 + $0xf4] sm:$0xf]
      %v5142 = vld [vmem:[%s10 + $0xf8] sm:$0xf]
      %v5143 = vld [vmem:[%s10 + $0xfc] sm:$0xf]
      %v5144 = vld [vmem:[%s10 + $0x100] sm:$0xf]
      %v5145 = vld [vmem:[%s10 + $0x104] sm:$0xf]
      %v5146 = vld [vmem:[%s10 + $0x108] sm:$0xf]
      %v5147 = vld [vmem:[%s10 + $0x10c] sm:$0xf]
      %v5148 = vld [vmem:[%s10 + $0x110] sm:$0xf]
      %v5149 = vld [vmem:[%s10 + $0x114] sm:$0xf]
      %v5150 = vld [vmem:[%s10 + $0x118] sm:$0xf]
      %v5151 = vld [vmem:[%s10 + $0x11c] sm:$0xf]
      %v5152 = vld [vmem:[%s10 + $0x120] sm:$0xf]
      %v5153 = vld [vmem:[%s10 + $0x124] sm:$0xf]
      %v5154 = vld [vmem:[%s10 + $0x128] sm:$0xf]
      %v5155 = vld [vmem:[%s10 + $0x12c] sm:$0xf]
      %v5156 = vld [vmem:[%s10 + $0x130] sm:$0xf]
      %v5157 = vld [vmem:[%s10 + $0x134] sm:$0xf]
      %v5158 = vld [vmem:[%s10 + $0x138] sm:$0xf]
      %v5159 = vld [vmem:[%s10 + $0x13c] sm:$0xf]
      %v5160 = vld [vmem:[%s10 + $0x140] sm:$0xf]
      %v5161 = vld [vmem:[%s10 + $0x144] sm:$0xf]
      %v5162 = vld [vmem:[%s10 + $0x148] sm:$0xf]
      %v5163 = vld [vmem:[%s10 + $0x14c] sm:$0xf]
      %v5164 = vld [vmem:[%s10 + $0x150] sm:$0xf]
      %v5165 = vld [vmem:[%s10 + $0x154] sm:$0xf]
      %v5166 = vld [vmem:[%s10 + $0x158] sm:$0xf]
      %v5167 = vld [vmem:[%s10 + $0x15c] sm:$0xf]
      %v5168 = vld [vmem:[%s10 + $0x160] sm:$0xf]
      %v5169 = vld [vmem:[%s10 + $0x164] sm:$0xf]
      %v5170 = vld [vmem:[%s10 + $0x168] sm:$0xf]
      %v5171 = vld [vmem:[%s10 + $0x16c] sm:$0xf]
      %v5172 = vld [vmem:[%s10 + $0x170] sm:$0xf]
      %v5173 = vld [vmem:[%s10 + $0x174] sm:$0xf]
      %v5174 = vld [vmem:[%s10 + $0x178] sm:$0xf]
      %v5175 = vld [vmem:[%s10 + $0x17c] sm:$0xf]
      %v5176 = vld [vmem:[%s10 + $0x180] sm:$0xf]
      %v5177 = vld [vmem:[%s10 + $0x184] sm:$0xf]
      %v5178 = vld [vmem:[%s10 + $0x188] sm:$0xf]
      %v5179 = vld [vmem:[%s10 + $0x18c] sm:$0xf]
      %v5180 = vld [vmem:[%s10 + $0x190] sm:$0xf]
      %v5181 = vld [vmem:[%s10 + $0x194] sm:$0xf]
      %v5182 = vld [vmem:[%s10 + $0x198] sm:$0xf]
      %v5183 = vld [vmem:[%s10 + $0x19c] sm:$0xf]
      %v5184 = vld [vmem:[%s10 + $0x1a0] sm:$0xf]
      %v5185 = vld [vmem:[%s10 + $0x1a4] sm:$0xf]
      %v5186 = vld [vmem:[%s10 + $0x1a8] sm:$0xf]
      %v5187 = vld [vmem:[%s10 + $0x1ac] sm:$0xf]
      %v5188 = vld [vmem:[%s10 + $0x1b0] sm:$0xf]
      %v5189 = vld [vmem:[%s10 + $0x1b4] sm:$0xf]
      %v5190 = vld [vmem:[%s10 + $0x1b8] sm:$0xf]
      %v5191 = vld [vmem:[%s10 + $0x1bc] sm:$0xf]
      %v5192 = vld [vmem:[%s10 + $0x1c0] sm:$0xf]
      %v5193 = vld [vmem:[%s10 + $0x1c4] sm:$0xf]
      %v5194 = vld [vmem:[%s10 + $0x1c8] sm:$0xf]
      %v5195 = vld [vmem:[%s10 + $0x1cc] sm:$0xf]
      %v5196 = vld [vmem:[%s10 + $0x1d0] sm:$0xf]
      %v5197 = vld [vmem:[%s10 + $0x1d4] sm:$0xf]
      %v5198 = vld [vmem:[%s10 + $0x1d8] sm:$0xf]
      %v5199 = vld [vmem:[%s10 + $0x1dc] sm:$0xf]
      %v5200 = vld [vmem:[%s10 + $0x1e0] sm:$0xf]
      %v5201 = vld [vmem:[%s10 + $0x1e4] sm:$0xf]
      %v5202 = vld [vmem:[%s10 + $0x1e8] sm:$0xf]
      %v5203 = vld [vmem:[%s10 + $0x1ec] sm:$0xf]
      %v5204 = vld [vmem:[%s10 + $0x1f0] sm:$0xf]
      %v5205 = vld [vmem:[%s10 + $0x1f4] sm:$0xf]
      %v5206 = vld [vmem:[%s10 + $0x1f8] sm:$0xf]
      %v5207 = vld [vmem:[%s10 + $0x1fc] sm:$0xf]
      %v5208 = vld [vmem:[%s11] sm:$0x1]
      %v5227 = vunpack.c.l.b16 %v5062
      %v5228 = vunpack.c.l.b16 %v5063
      %v5229 = vunpack.c.l.b16 %v5064
      %v5230 = vunpack.c.l.b16 %v5065
      %v5231 = vunpack.c.l.b16 %v5066
      %v5232 = vunpack.c.l.b16 %v5067
      %v5233 = vunpack.c.l.b16 %v5068
      %v5234 = vunpack.c.l.b16 %v5069
      %v5235 = vunpack.c.l.b16 %v5070
      %v5236 = vunpack.c.l.b16 %v5071
      %v5237 = vunpack.c.l.b16 %v5072
      %v5238 = vunpack.c.l.b16 %v5073
      %v5239 = vunpack.c.l.b16 %v5074
      %v5240 = vunpack.c.l.b16 %v5075
      %v5241 = vunpack.c.l.b16 %v5076
      %v5242 = vunpack.c.l.b16 %v5077
      %v5243 = vunpack.c.l.b16 %v5078
      %v5244 = vunpack.c.l.b16 %v5079
      %v5245 = vpack.c.b16 %v5228, %v5227
      %v5246 = vpack.c.b16 %v5230, %v5229
      %v5247 = vpack.c.b16 %v5232, %v5231
      %v5248 = vpack.c.b16 %v5234, %v5233
      %v5249 = vpack.c.b16 %v5236, %v5235
      %v5250 = vpack.c.b16 %v5238, %v5237
      %v5251 = vpack.c.b16 %v5240, %v5239
      %v5252 = vpack.c.b16 %v5242, %v5241
      %v5253 = vpack.c.b16 %v5244, %v5243
      %vm5254 = vcmask 203776
      %v5256 = vsel %vm5254, %v5245, 0
      %v5259 = vsel %vm5254, %v5246, 0
      %v5262 = vsel %vm5254, %v5247, 0
      %v5265 = vsel %vm5254, %v5248, 0
      %v5268 = vsel %vm5254, %v5249, 0
      %v5271 = vsel %vm5254, %v5250, 0
      %v5274 = vsel %vm5254, %v5251, 0
      %v5277 = vsel %vm5254, %v5252, 0
      %v5280 = vsel %vm5254, %v5253, 0
      %vm5282 = vcmask 1043456
      %vm5283 = vcmask 1044480
      %v5284 = vsel %vm5282, 4294967295, 65535
      %v5285 = vsel %vm5283, %v5284, 0
      %v5287 = vand.u32 %v5061, %v5285
      %5289 = vmatprep.subr.bf16.mxu0 0
      %5290 = vmatpush1.bf16.msra.mxu0 %v5060
      %5291 = vmatprep.subr.bf16.mxu0 0
      %5292 = vmatpush1.bf16.msra.mxu0 %v5287
      %5293 = vmatprep.subr.bf16.mxu0 0
      %5294 = vmatpush1.bf16.msra.mxu0 0
      %5295 = vmatprep.subr.bf16.mxu0 0
      %5296 = vmatpush1.bf16.msra.mxu0 0
      %5297 = vmatprep.subr.bf16.mxu0 0
      %5298 = vmatpush1.bf16.msra.mxu0 0
      %5299 = vmatprep.subr.bf16.mxu0 0
      %5300 = vmatpush1.bf16.msra.mxu0 0
      %5301 = vmatprep.subr.bf16.mxu0 0
      %5302 = vmatpush1.bf16.msra.mxu0 0
      %5303 = vmatprep.subr.bf16.mxu0 0
      %5304 = vmatpush1.bf16.msra.mxu0 0
      %5305 = vmatprep.subr.bf16.mxu0 0
      %5306 = vmatpush1.bf16.msra.mxu0 0
      %5307 = vmatprep.subr.bf16.mxu0 0
      %5308 = vmatpush1.bf16.msra.mxu0 0
      %5309 = vmatprep.subr.bf16.mxu0 0
      %5310 = vmatpush1.bf16.msra.mxu0 0
      %5311 = vmatprep.subr.bf16.mxu0 0
      %5312 = vmatpush1.bf16.msra.mxu0 0
      %5313 = vmatprep.subr.bf16.mxu0 0
      %5314 = vmatpush1.bf16.msra.mxu0 0
      %5315 = vmatprep.subr.bf16.mxu0 0
      %5316 = vmatpush1.bf16.msra.mxu0 0
      %5317 = vmatprep.subr.bf16.mxu0 0
      %5318 = vmatpush1.bf16.msra.mxu0 0
      %5319 = vmatprep.subr.bf16.mxu0 0
      %5320 = vmatpush1.bf16.msra.mxu0 0
      %5321 = vmatprep.mubr.bf16.mxu0 0
      %5322 = vmatmul.mubr.bf16.gmra.mrb[0].mxu0 %v5256
      %v5323 = vpop.f32.mrb[0].mxu0
      %v5324 = vadd.f32 0.0, %v5323
      %v5325 = vpop.f32.mrb[0].mxu0
      %v5326 = vpop.f32.mrb[0].mxu0
      %v5327 = vadd.f32 0.0, %v5326
      %v5328 = vpop.f32.mrb[0].mxu0
      %5329 = vmatprep.mubr.bf16.mxu0 0
      %5330 = vmatmul.mubr.bf16.gmra.mrb[0].mxu0 %v5259
      %v5331 = vpop.f32.mrb[0].mxu0
      %v5332 = vadd.f32 0.0, %v5331
      %v5333 = vpop.f32.mrb[0].mxu0
      %v5334 = vpop.f32.mrb[0].mxu0
      %v5335 = vadd.f32 0.0, %v5334
      %v5336 = vpop.f32.mrb[0].mxu0
      %5337 = vmatprep.mubr.bf16.mxu0 0
      %5338 = vmatmul.mubr.bf16.gmra.mrb[0].mxu0 %v5262
      %v5339 = vpop.f32.mrb[0].mxu0
      %v5340 = vadd.f32 0.0, %v5339
      %v5341 = vpop.f32.mrb[0].mxu0
      %v5342 = vpop.f32.mrb[0].mxu0
      %v5343 = vadd.f32 0.0, %v5342
      %v5344 = vpop.f32.mrb[0].mxu0
      %5345 = vmatprep.mubr.bf16.mxu0 0
      %5346 = vmatmul.mubr.bf16.gmra.mrb[0].mxu0 %v5265
      %v5347 = vpop.f32.mrb[0].mxu0
      %v5348 = vadd.f32 0.0, %v5347
      %v5349 = vpop.f32.mrb[0].mxu0
      %v5350 = vpop.f32.mrb[0].mxu0
      %v5351 = vadd.f32 0.0, %v5350
      %v5352 = vpop.f32.mrb[0].mxu0
      %5353 = vmatprep.mubr.bf16.mxu0 0
      %5354 = vmatmul.mubr.bf16.gmra.mrb[0].mxu0 %v5268
      %v5355 = vpop.f32.mrb[0].mxu0
      %v5356 = vadd.f32 0.0, %v5355
      %v5357 = vpop.f32.mrb[0].mxu0
      %v5358 = vpop.f32.mrb[0].mxu0
      %v5359 = vadd.f32 0.0, %v5358
      %v5360 = vpop.f32.mrb[0].mxu0
      %5361 = vmatprep.mubr.bf16.mxu0 0
      %5362 = vmatmul.mubr.bf16.gmra.mrb[0].mxu0 %v5271
      %v5363 = vpop.f32.mrb[0].mxu0
      %v5364 = vadd.f32 0.0, %v5363
      %v5365 = vpop.f32.mrb[0].mxu0
      %v5366 = vpop.f32.mrb[0].mxu0
      %v5367 = vadd.f32 0.0, %v5366
      %v5368 = vpop.f32.mrb[0].mxu0
      %5369 = vmatprep.mubr.bf16.mxu0 0
      %5370 = vmatmul.mubr.bf16.gmra.mrb[0].mxu0 %v5274
      %v5371 = vpop.f32.mrb[0].mxu0
      %v5372 = vadd.f32 0.0, %v5371
      %v5373 = vpop.f32.mrb[0].mxu0
      %v5374 = vpop.f32.mrb[0].mxu0
      %v5375 = vadd.f32 0.0, %v5374
      %v5376 = vpop.f32.mrb[0].mxu0
      %5377 = vmatprep.mubr.bf16.mxu0 0
      %5378 = vmatmul.mubr.bf16.gmra.mrb[0].mxu0 %v5277
      %v5379 = vpop.f32.mrb[0].mxu0
      %v5380 = vadd.f32 0.0, %v5379
      %v5381 = vpop.f32.mrb[0].mxu0
      %v5382 = vpop.f32.mrb[0].mxu0
      %v5383 = vadd.f32 0.0, %v5382
      %v5384 = vpop.f32.mrb[0].mxu0
      %5385 = vmatprep.mubr.bf16.mxu0 0
      %5386 = vmatmul.mubr.bf16.gmra.mrb[0].mxu0 %v5280
      %v5387 = vpop.f32.mrb[0].mxu0
      %v5388 = vadd.f32 0.0, %v5387
      %v5389 = vpop.f32.mrb[0].mxu0
      %v5390 = vpop.f32.mrb[0].mxu0
      %v5391 = vadd.f32 0.0, %v5390
      %v5392 = vpop.f32.mrb[0].mxu0
      %5393 = vdwg.mxu0
      %v5394 = vpack.c.bf16 %v5327, %v5324
      %v5395 = vpack.c.bf16 %v5335, %v5332
      %v5396 = vpack.c.bf16 %v5343, %v5340
      %v5397 = vpack.c.bf16 %v5351, %v5348
      %v5398 = vpack.c.bf16 %v5359, %v5356
      %v5399 = vpack.c.bf16 %v5367, %v5364
      %v5400 = vpack.c.bf16 %v5375, %v5372
      %v5401 = vpack.c.bf16 %v5383, %v5380
      %v5402 = vpack.c.bf16 %v5391, %v5388
      %v5404 = vshrl.u32 %v5394, 16
      %v5406 = vrot.slane %v5404, 4
      %v5407 = vshll.u32 %v5394, 16
      %v5409 = vrot.slane %v5407, 5
      %v5410 = vor.u32 %v5406, %v5409
      %v5412 = vshrl.u32 %v5395, 16
      %v5414 = vrot.slane %v5412, 4
      %v5415 = vshll.u32 %v5395, 16
      %v5417 = vrot.slane %v5415, 5
      %v5418 = vor.u32 %v5414, %v5417
      %v5419 = vsel %vm3087, %v5410, %v5418
      %5420 = vrot.lane.b32.xlu0 %v5419, 64
      %v5421 = vpop.permute.xlu0 %5420
      %v5423 = vrot.slane %v5395, 1
      %v5424 = vrot.slane %v5412, 5
      %v5425 = vrot.slane %v5415, 6
      %v5426 = vor.u32 %v5424, %v5425
      %v5428 = vshrl.u32 %v5396, 16
      %v5430 = vrot.slane %v5428, 5
      %v5431 = vshll.u32 %v5396, 16
      %v5433 = vrot.slane %v5431, 6
      %v5434 = vor.u32 %v5430, %v5433
      %v5435 = vsel %vm3183, %v5426, %v5434
      %5436 = vrot.lane.b32.xlu0 %v5435, 64
      %v5437 = vpop.permute.xlu0 %5436
      %v5439 = vrot.slane %v5396, 2
      %v5440 = vrot.slane %v5428, 6
      %v5441 = vrot.slane %v5431, 7
      %v5442 = vor.u32 %v5440, %v5441
      %v5444 = vshrl.u32 %v5397, 16
      %v5446 = vrot.slane %v5444, 6
      %v5447 = vshll.u32 %v5397, 16
      %v5449 = vrot.slane %v5447, 7
      %v5450 = vor.u32 %v5446, %v5449
      %v5451 = vsel %vm3279, %v5442, %v5450
      %5452 = vrot.lane.b32.xlu0 %v5451, 64
      %v5453 = vpop.permute.xlu0 %5452
      %v5455 = vrot.slane %v5397, 3
      %v5456 = vrot.slane %v5444, 7
      %v5458 = vshrl.u32 %v5398, 16
      %v5460 = vrot.slane %v5458, 7
      %v5461 = vshll.u32 %v5398, 16
      %v5463 = vor.u32 %v5460, %v5461
      %v5464 = vsel %vm3375, %v5456, %v5463
      %5465 = vrot.lane.b32.xlu0 %v5464, 64
      %v5466 = vpop.permute.xlu0 %5465
      %v5469 = vrot.slane %v5398, 4
      %v5470 = vrot.slane %v5399, 4
      %v5471 = vsel %vm3075, %v5469, %v5470
      %v5473 = vshrl.u32 %v5399, 16
      %v5475 = vshll.u32 %v5399, 16
      %v5477 = vrot.slane %v5475, 1
      %v5478 = vor.u32 %v5473, %v5477
      %5479 = vrot.lane.b32.xlu0 %v5478, 64
      %v5480 = vpop.permute.xlu0 %5479
      %v5482 = vrot.slane %v5399, 5
      %v5483 = vrot.slane %v5400, 5
      %v5484 = vsel %vm3159, %v5482, %v5483
      %v5486 = vshrl.u32 %v5400, 16
      %v5488 = vrot.slane %v5486, 1
      %v5489 = vshll.u32 %v5400, 16
      %v5491 = vrot.slane %v5489, 2
      %v5492 = vor.u32 %v5488, %v5491
      %5493 = vrot.lane.b32.xlu0 %v5492, 64
      %v5494 = vpop.permute.xlu0 %5493
      %v5496 = vrot.slane %v5400, 6
      %v5497 = vrot.slane %v5401, 6
      %v5498 = vsel %vm3255, %v5496, %v5497
      %v5500 = vshrl.u32 %v5401, 16
      %v5502 = vrot.slane %v5500, 2
      %v5503 = vshll.u32 %v5401, 16
      %v5505 = vrot.slane %v5503, 3
      %v5506 = vor.u32 %v5502, %v5505
      %5507 = vrot.lane.b32.xlu0 %v5506, 64
      %v5508 = vpop.permute.xlu0 %5507
      %v5510 = vrot.slane %v5401, 7
      %v5511 = vrot.slane %v5402, 7
      %v5512 = vsel %vm3351, %v5510, %v5511
      %v5514 = vshrl.u32 %v5402, 16
      %v5516 = vrot.slane %v5514, 3
      %v5517 = vshll.u32 %v5402, 16
      %v5519 = vrot.slane %v5517, 4
      %v5520 = vor.u32 %v5516, %v5519
      %5521 = vrot.lane.b32.xlu0 %v5520, 64
      %v5522 = vpop.permute.xlu0 %5521
      %v5524 = vsel %vm3475, %v5394, %v5421
      %v5528 = vsel %vm3475, %v5423, %v5437
      %v5532 = vsel %vm3475, %v5439, %v5453
      %v5536 = vsel %vm3475, %v5455, %v5466
      %v5540 = vsel %vm3475, %v5471, %v5480
      %v5544 = vsel %vm3475, %v5484, %v5494
      %v5548 = vsel %vm3475, %v5498, %v5508
      %v5552 = vsel %vm3475, %v5512, %v5522
      %v5555 = vlaneseq
      %v5556 = vshrl.u32 %v5555, 7
      %v5557 = vsub.s32 0, %v5556
      %v5558 = vrot.slane %v5208, %v5557
      %v5688 = vunpack.c.l.b16 %v5080
      %v5689 = vunpack.c.l.b16 %v5081
      %v5690 = vunpack.c.l.b16 %v5082
      %v5691 = vunpack.c.l.b16 %v5083
      %v5692 = vunpack.c.l.b16 %v5084
      %v5693 = vunpack.c.l.b16 %v5085
      %v5694 = vunpack.c.l.b16 %v5086
      %v5695 = vunpack.c.l.b16 %v5087
      %v5696 = vunpack.c.l.b16 %v5088
      %v5697 = vunpack.c.l.b16 %v5089
      %v5698 = vunpack.c.l.b16 %v5090
      %v5699 = vunpack.c.l.b16 %v5091
      %v5700 = vunpack.c.l.b16 %v5092
      %v5701 = vunpack.c.l.b16 %v5093
      %v5702 = vunpack.c.l.b16 %v5094
      %v5703 = vunpack.c.l.b16 %v5095
      %v5704 = vunpack.c.l.b16 %v5096
      %v5705 = vunpack.c.l.b16 %v5097
      %v5706 = vunpack.c.l.b16 %v5098
      %v5707 = vunpack.c.l.b16 %v5099
      %v5708 = vunpack.c.l.b16 %v5100
      %v5709 = vunpack.c.l.b16 %v5101
      %v5710 = vunpack.c.l.b16 %v5102
      %v5711 = vunpack.c.l.b16 %v5103
      %v5712 = vunpack.c.l.b16 %v5104
      %v5713 = vunpack.c.l.b16 %v5105
      %v5714 = vunpack.c.l.b16 %v5106
      %v5715 = vunpack.c.l.b16 %v5107
      %v5716 = vunpack.c.l.b16 %v5108
      %v5717 = vunpack.c.l.b16 %v5109
      %v5718 = vunpack.c.l.b16 %v5110
      %v5719 = vunpack.c.l.b16 %v5111
      %v5720 = vunpack.c.l.b16 %v5112
      %v5721 = vunpack.c.l.b16 %v5113
      %v5722 = vunpack.c.l.b16 %v5114
      %v5723 = vunpack.c.l.b16 %v5115
      %v5724 = vunpack.c.l.b16 %v5116
      %v5725 = vunpack.c.l.b16 %v5117
      %v5726 = vunpack.c.l.b16 %v5118
      %v5727 = vunpack.c.l.b16 %v5119
      %v5728 = vunpack.c.l.b16 %v5120
      %v5729 = vunpack.c.l.b16 %v5121
      %v5730 = vunpack.c.l.b16 %v5122
      %v5731 = vunpack.c.l.b16 %v5123
      %v5732 = vunpack.c.l.b16 %v5124
      %v5733 = vunpack.c.l.b16 %v5125
      %v5734 = vunpack.c.l.b16 %v5126
      %v5735 = vunpack.c.l.b16 %v5127
      %v5736 = vunpack.c.l.b16 %v5128
      %v5737 = vunpack.c.l.b16 %v5129
      %v5738 = vunpack.c.l.b16 %v5130
      %v5739 = vunpack.c.l.b16 %v5131
      %v5740 = vunpack.c.l.b16 %v5132
      %v5741 = vunpack.c.l.b16 %v5133
      %v5742 = vunpack.c.l.b16 %v5134
      %v5743 = vunpack.c.l.b16 %v5135
      %v5744 = vunpack.c.l.b16 %v5136
      %v5745 = vunpack.c.l.b16 %v5137
      %v5746 = vunpack.c.l.b16 %v5138
      %v5747 = vunpack.c.l.b16 %v5139
      %v5748 = vunpack.c.l.b16 %v5140
      %v5749 = vunpack.c.l.b16 %v5141
      %v5750 = vunpack.c.l.b16 %v5142
      %v5751 = vunpack.c.l.b16 %v5143
      %v5752 = vunpack.c.l.b16 %v5144
      %v5753 = vunpack.c.l.b16 %v5145
      %v5754 = vunpack.c.l.b16 %v5146
      %v5755 = vunpack.c.l.b16 %v5147
      %v5756 = vunpack.c.l.b16 %v5148
      %v5757 = vunpack.c.l.b16 %v5149
      %v5758 = vunpack.c.l.b16 %v5150
      %v5759 = vunpack.c.l.b16 %v5151
      %v5760 = vunpack.c.l.b16 %v5152
      %v5761 = vunpack.c.l.b16 %v5153
      %v5762 = vunpack.c.l.b16 %v5154
      %v5763 = vunpack.c.l.b16 %v5155
      %v5764 = vunpack.c.l.b16 %v5156
      %v5765 = vunpack.c.l.b16 %v5157
      %v5766 = vunpack.c.l.b16 %v5158
      %v5767 = vunpack.c.l.b16 %v5159
      %v5768 = vunpack.c.l.b16 %v5160
      %v5769 = vunpack.c.l.b16 %v5161
      %v5770 = vunpack.c.l.b16 %v5162
      %v5771 = vunpack.c.l.b16 %v5163
      %v5772 = vunpack.c.l.b16 %v5164
      %v5773 = vunpack.c.l.b16 %v5165
      %v5774 = vunpack.c.l.b16 %v5166
      %v5775 = vunpack.c.l.b16 %v5167
      %v5776 = vunpack.c.l.b16 %v5168
      %v5777 = vunpack.c.l.b16 %v5169
      %v5778 = vunpack.c.l.b16 %v5170
      %v5779 = vunpack.c.l.b16 %v5171
      %v5780 = vunpack.c.l.b16 %v5172
      %v5781 = vunpack.c.l.b16 %v5173
      %v5782 = vunpack.c.l.b16 %v5174
      %v5783 = vunpack.c.l.b16 %v5175
      %v5784 = vunpack.c.l.b16 %v5176
      %v5785 = vunpack.c.l.b16 %v5177
      %v5786 = vunpack.c.l.b16 %v5178
      %v5787 = vunpack.c.l.b16 %v5179
      %v5788 = vunpack.c.l.b16 %v5180
      %v5789 = vunpack.c.l.b16 %v5181
      %v5790 = vunpack.c.l.b16 %v5182
      %v5791 = vunpack.c.l.b16 %v5183
      %v5792 = vunpack.c.l.b16 %v5184
      %v5793 = vunpack.c.l.b16 %v5185
      %v5794 = vunpack.c.l.b16 %v5186
      %v5795 = vunpack.c.l.b16 %v5187
      %v5796 = vunpack.c.l.b16 %v5188
      %v5797 = vunpack.c.l.b16 %v5189
      %v5798 = vunpack.c.l.b16 %v5190
      %v5799 = vunpack.c.l.b16 %v5191
      %v5800 = vunpack.c.l.b16 %v5192
      %v5801 = vunpack.c.l.b16 %v5193
      %v5802 = vunpack.c.l.b16 %v5194
      %v5803 = vunpack.c.l.b16 %v5195
      %v5804 = vunpack.c.l.b16 %v5196
      %v5805 = vunpack.c.l.b16 %v5197
      %v5806 = vunpack.c.l.b16 %v5198
      %v5807 = vunpack.c.l.b16 %v5199
      %v5808 = vunpack.c.l.b16 %v5200
      %v5809 = vunpack.c.l.b16 %v5201
      %v5810 = vunpack.c.l.b16 %v5202
      %v5811 = vunpack.c.l.b16 %v5203
      %v5812 = vunpack.c.l.b16 %v5204
      %v5813 = vunpack.c.l.b16 %v5205
      %v5814 = vunpack.c.l.b16 %v5206
      %v5815 = vunpack.c.l.b16 %v5207
      %v5816 = vpack.c.b16 %v5689, %v5688
      %v5817 = vpack.c.b16 %v5691, %v5690
      %v5818 = vpack.c.b16 %v5693, %v5692
      %v5819 = vpack.c.b16 %v5695, %v5694
      %v5820 = vpack.c.b16 %v5697, %v5696
      %v5821 = vpack.c.b16 %v5699, %v5698
      %v5822 = vpack.c.b16 %v5701, %v5700
      %v5823 = vpack.c.b16 %v5703, %v5702
      %v5824 = vpack.c.b16 %v5705, %v5704
      %v5825 = vpack.c.b16 %v5707, %v5706
      %v5826 = vpack.c.b16 %v5709, %v5708
      %v5827 = vpack.c.b16 %v5711, %v5710
      %v5828 = vpack.c.b16 %v5713, %v5712
      %v5829 = vpack.c.b16 %v5715, %v5714
      %v5830 = vpack.c.b16 %v5717, %v5716
      %v5831 = vpack.c.b16 %v5719, %v5718
      %v5832 = vpack.c.b16 %v5721, %v5720
      %v5833 = vpack.c.b16 %v5723, %v5722
      %v5834 = vpack.c.b16 %v5725, %v5724
      %v5835 = vpack.c.b16 %v5727, %v5726
      %v5836 = vpack.c.b16 %v5729, %v5728
      %v5837 = vpack.c.b16 %v5731, %v5730
      %v5838 = vpack.c.b16 %v5733, %v5732
      %v5839 = vpack.c.b16 %v5735, %v5734
      %v5840 = vpack.c.b16 %v5737, %v5736
      %v5841 = vpack.c.b16 %v5739, %v5738
      %v5842 = vpack.c.b16 %v5741, %v5740
      %v5843 = vpack.c.b16 %v5743, %v5742
      %v5844 = vpack.c.b16 %v5745, %v5744
      %v5845 = vpack.c.b16 %v5747, %v5746
      %v5846 = vpack.c.b16 %v5749, %v5748
      %v5847 = vpack.c.b16 %v5751, %v5750
      %v5848 = vpack.c.b16 %v5753, %v5752
      %v5849 = vpack.c.b16 %v5755, %v5754
      %v5850 = vpack.c.b16 %v5757, %v5756
      %v5851 = vpack.c.b16 %v5759, %v5758
      %v5852 = vpack.c.b16 %v5761, %v5760
      %v5853 = vpack.c.b16 %v5763, %v5762
      %v5854 = vpack.c.b16 %v5765, %v5764
      %v5855 = vpack.c.b16 %v5767, %v5766
      %v5856 = vpack.c.b16 %v5769, %v5768
      %v5857 = vpack.c.b16 %v5771, %v5770
      %v5858 = vpack.c.b16 %v5773, %v5772
      %v5859 = vpack.c.b16 %v5775, %v5774
      %v5860 = vpack.c.b16 %v5777, %v5776
      %v5861 = vpack.c.b16 %v5779, %v5778
      %v5862 = vpack.c.b16 %v5781, %v5780
      %v5863 = vpack.c.b16 %v5783, %v5782
      %v5864 = vpack.c.b16 %v5785, %v5784
      %v5865 = vpack.c.b16 %v5787, %v5786
      %v5866 = vpack.c.b16 %v5789, %v5788
      %v5867 = vpack.c.b16 %v5791, %v5790
      %v5868 = vpack.c.b16 %v5793, %v5792
      %v5869 = vpack.c.b16 %v5795, %v5794
      %v5870 = vpack.c.b16 %v5797, %v5796
      %v5871 = vpack.c.b16 %v5799, %v5798
      %v5872 = vpack.c.b16 %v5801, %v5800
      %v5873 = vpack.c.b16 %v5803, %v5802
      %v5874 = vpack.c.b16 %v5805, %v5804
      %v5875 = vpack.c.b16 %v5807, %v5806
      %v5876 = vpack.c.b16 %v5809, %v5808
      %v5877 = vpack.c.b16 %v5811, %v5810
      %v5878 = vpack.c.b16 %v5813, %v5812
      %v5879 = vpack.c.b16 %v5815, %v5814
      %5944 = vmatprep.subr.bf16.mxu0 0
      %5945 = vmatpush1.bf16.msra.mxu0 %v5816
      %5946 = vmatprep.subr.bf16.mxu0 0
      %5947 = vmatpush1.bf16.msra.mxu0 %v5817
      %5948 = vmatprep.subr.bf16.mxu0 0
      %5949 = vmatpush1.bf16.msra.mxu0 %v5818
      %5950 = vmatprep.subr.bf16.mxu0 0
      %5951 = vmatpush1.bf16.msra.mxu0 %v5819
      %5952 = vmatprep.subr.bf16.mxu0 0
      %5953 = vmatpush1.bf16.msra.mxu0 %v5820
      %5954 = vmatprep.subr.bf16.mxu0 0
      %5955 = vmatpush1.bf16.msra.mxu0 %v5821
      %5956 = vmatprep.subr.bf16.mxu0 0
      %5957 = vmatpush1.bf16.msra.mxu0 %v5822
      %5958 = vmatprep.subr.bf16.mxu0 0
      %5959 = vmatpush1.bf16.msra.mxu0 %v5823
      %5960 = vmatprep.subr.bf16.mxu0 0
      %5961 = vmatpush1.bf16.msra.mxu0 %v5824
      %5962 = vmatprep.subr.bf16.mxu0 0
      %5963 = vmatpush1.bf16.msra.mxu0 %v5825
      %5964 = vmatprep.subr.bf16.mxu0 0
      %5965 = vmatpush1.bf16.msra.mxu0 %v5826
      %5966 = vmatprep.subr.bf16.mxu0 0
      %5967 = vmatpush1.bf16.msra.mxu0 %v5827
      %5968 = vmatprep.subr.bf16.mxu0 0
      %5969 = vmatpush1.bf16.msra.mxu0 %v5828
      %5970 = vmatprep.subr.bf16.mxu0 0
      %5971 = vmatpush1.bf16.msra.mxu0 %v5829
      %5972 = vmatprep.subr.bf16.mxu0 0
      %5973 = vmatpush1.bf16.msra.mxu0 %v5830
      %5974 = vmatprep.subr.bf16.mxu0 0
      %5975 = vmatpush1.bf16.msra.mxu0 %v5831
      %5976 = vmatprep.mubr.bf16.mxu0 %v5528
      %5977 = vmatmul.mubr.bf16.gmra.mrb[0].mxu0 %v5524
      %v5978 = vpop.f32.mrb[0].mxu0
      %v5979 = vadd.f32 %v5558, %v5978
      %v5980 = vpop.f32.mrb[0].mxu0
      %v5981 = vpop.f32.mrb[0].mxu0
      %v5982 = vadd.f32 %v5558, %v5981
      %v5983 = vpop.f32.mrb[0].mxu0
      %5984 = vdwg.mxu0
      %5985 = vmatprep.subr.bf16.mxu0 0
      %5986 = vmatpush1.bf16.msra.mxu0 %v5832
      %5987 = vmatprep.subr.bf16.mxu0 0
      %5988 = vmatpush1.bf16.msra.mxu0 %v5833
      %5989 = vmatprep.subr.bf16.mxu0 0
      %5990 = vmatpush1.bf16.msra.mxu0 %v5834
      %5991 = vmatprep.subr.bf16.mxu0 0
      %5992 = vmatpush1.bf16.msra.mxu0 %v5835
      %5993 = vmatprep.subr.bf16.mxu0 0
      %5994 = vmatpush1.bf16.msra.mxu0 %v5836
      %5995 = vmatprep.subr.bf16.mxu0 0
      %5996 = vmatpush1.bf16.msra.mxu0 %v5837
      %5997 = vmatprep.subr.bf16.mxu0 0
      %5998 = vmatpush1.bf16.msra.mxu0 %v5838
      %5999 = vmatprep.subr.bf16.mxu0 0
      %6000 = vmatpush1.bf16.msra.mxu0 %v5839
      %6001 = vmatprep.subr.bf16.mxu0 0
      %6002 = vmatpush1.bf16.msra.mxu0 %v5840
      %6003 = vmatprep.subr.bf16.mxu0 0
      %6004 = vmatpush1.bf16.msra.mxu0 %v5841
      %6005 = vmatprep.subr.bf16.mxu0 0
      %6006 = vmatpush1.bf16.msra.mxu0 %v5842
      %6007 = vmatprep.subr.bf16.mxu0 0
      %6008 = vmatpush1.bf16.msra.mxu0 %v5843
      %6009 = vmatprep.subr.bf16.mxu0 0
      %6010 = vmatpush1.bf16.msra.mxu0 %v5844
      %6011 = vmatprep.subr.bf16.mxu0 0
      %6012 = vmatpush1.bf16.msra.mxu0 %v5845
      %6013 = vmatprep.subr.bf16.mxu0 0
      %6014 = vmatpush1.bf16.msra.mxu0 %v5846
      %6015 = vmatprep.subr.bf16.mxu0 0
      %6016 = vmatpush1.bf16.msra.mxu0 %v5847
      %6017 = vmatprep.mubr.bf16.mxu0 %v5536
      %6018 = vmatmul.mubr.bf16.gmra.mrb[0].mxu0 %v5532
      %v6019 = vpop.f32.mrb[0].mxu0
      %v6020 = vadd.f32 %v5979, %v6019
      %v6021 = vpop.f32.mrb[0].mxu0
      %v6022 = vpop.f32.mrb[0].mxu0
      %v6023 = vadd.f32 %v5982, %v6022
      %v6024 = vpop.f32.mrb[0].mxu0
      %6025 = vdwg.mxu0
      %6026 = vmatprep.subr.bf16.mxu0 0
      %6027 = vmatpush1.bf16.msra.mxu0 %v5848
      %6028 = vmatprep.subr.bf16.mxu0 0
      %6029 = vmatpush1.bf16.msra.mxu0 %v5849
      %6030 = vmatprep.subr.bf16.mxu0 0
      %6031 = vmatpush1.bf16.msra.mxu0 %v5850
      %6032 = vmatprep.subr.bf16.mxu0 0
      %6033 = vmatpush1.bf16.msra.mxu0 %v5851
      %6034 = vmatprep.subr.bf16.mxu0 0
      %6035 = vmatpush1.bf16.msra.mxu0 %v5852
      %6036 = vmatprep.subr.bf16.mxu0 0
      %6037 = vmatpush1.bf16.msra.mxu0 %v5853
      %6038 = vmatprep.subr.bf16.mxu0 0
      %6039 = vmatpush1.bf16.msra.mxu0 %v5854
      %6040 = vmatprep.subr.bf16.mxu0 0
      %6041 = vmatpush1.bf16.msra.mxu0 %v5855
      %6042 = vmatprep.subr.bf16.mxu0 0
      %6043 = vmatpush1.bf16.msra.mxu0 %v5856
      %6044 = vmatprep.subr.bf16.mxu0 0
      %6045 = vmatpush1.bf16.msra.mxu0 %v5857
      %6046 = vmatprep.subr.bf16.mxu0 0
      %6047 = vmatpush1.bf16.msra.mxu0 %v5858
      %6048 = vmatprep.subr.bf16.mxu0 0
      %6049 = vmatpush1.bf16.msra.mxu0 %v5859
      %6050 = vmatprep.subr.bf16.mxu0 0
      %6051 = vmatpush1.bf16.msra.mxu0 %v5860
      %6052 = vmatprep.subr.bf16.mxu0 0
      %6053 = vmatpush1.bf16.msra.mxu0 %v5861
      %6054 = vmatprep.subr.bf16.mxu0 0
      %6055 = vmatpush1.bf16.msra.mxu0 %v5862
      %6056 = vmatprep.subr.bf16.mxu0 0
      %6057 = vmatpush1.bf16.msra.mxu0 %v5863
      %6058 = vmatprep.mubr.bf16.mxu0 %v5544
      %6059 = vmatmul.mubr.bf16.gmra.mrb[0].mxu0 %v5540
      %v6060 = vpop.f32.mrb[0].mxu0
      %v6061 = vadd.f32 %v6020, %v6060
      %v6062 = vpop.f32.mrb[0].mxu0
      %v6063 = vpop.f32.mrb[0].mxu0
      %v6064 = vadd.f32 %v6023, %v6063
      %v6065 = vpop.f32.mrb[0].mxu0
      %6066 = vdwg.mxu0
      %6067 = vmatprep.subr.bf16.mxu0 0
      %6068 = vmatpush1.bf16.msra.mxu0 %v5864
      %6069 = vmatprep.subr.bf16.mxu0 0
      %6070 = vmatpush1.bf16.msra.mxu0 %v5865
      %6071 = vmatprep.subr.bf16.mxu0 0
      %6072 = vmatpush1.bf16.msra.mxu0 %v5866
      %6073 = vmatprep.subr.bf16.mxu0 0
      %6074 = vmatpush1.bf16.msra.mxu0 %v5867
      %6075 = vmatprep.subr.bf16.mxu0 0
      %6076 = vmatpush1.bf16.msra.mxu0 %v5868
      %6077 = vmatprep.subr.bf16.mxu0 0
      %6078 = vmatpush1.bf16.msra.mxu0 %v5869
      %6079 = vmatprep.subr.bf16.mxu0 0
      %6080 = vmatpush1.bf16.msra.mxu0 %v5870
      %6081 = vmatprep.subr.bf16.mxu0 0
      %6082 = vmatpush1.bf16.msra.mxu0 %v5871
      %6083 = vmatprep.subr.bf16.mxu0 0
      %6084 = vmatpush1.bf16.msra.mxu0 %v5872
      %6085 = vmatprep.subr.bf16.mxu0 0
      %6086 = vmatpush1.bf16.msra.mxu0 %v5873
      %6087 = vmatprep.subr.bf16.mxu0 0
      %6088 = vmatpush1.bf16.msra.mxu0 %v5874
      %6089 = vmatprep.subr.bf16.mxu0 0
      %6090 = vmatpush1.bf16.msra.mxu0 %v5875
      %6091 = vmatprep.subr.bf16.mxu0 0
      %6092 = vmatpush1.bf16.msra.mxu0 %v5876
      %6093 = vmatprep.subr.bf16.mxu0 0
      %6094 = vmatpush1.bf16.msra.mxu0 %v5877
      %6095 = vmatprep.subr.bf16.mxu0 0
      %6096 = vmatpush1.bf16.msra.mxu0 %v5878
      %6097 = vmatprep.subr.bf16.mxu0 0
      %6098 = vmatpush1.bf16.msra.mxu0 %v5879
      %6099 = vmatprep.mubr.bf16.mxu0 %v5552
      %6100 = vmatmul.mubr.bf16.gmra.mrb[0].mxu0 %v5548
      %v6101 = vpop.f32.mrb[0].mxu0
      %v6102 = vadd.f32 %v6061, %v6101
      %v6103 = vpop.f32.mrb[0].mxu0
      %v6104 = vpop.f32.mrb[0].mxu0
      %v6105 = vadd.f32 %v6064, %v6104
      %v6106 = vpop.f32.mrb[0].mxu0
      %6107 = vdwg.mxu0
      %vm6108 = vcmp.ge.f32.partialorder %v6102, 0.0
      %vm6109 = vcmp.ge.f32.partialorder %v6105, 0.0
      %v6110 = vmul.f32 %v6102, 0.1
      %v6111 = vmul.f32 %v6105, 0.1
      %v6112 = vsel %vm6108, %v6102, %v6110
      %v6113 = vsel %vm6109, %v6105, %v6111
      %v6114 = vpack.c.bf16 %v6113, %v6112
      %v6115 = vld [vmem:[%s12] sm:$0xf]
      %v6116 = vld [vmem:[%s12 + $0x4] sm:$0xf]
      %v6117 = vld [vmem:[%s12 + $0x8] sm:$0xf]
      %v6118 = vld [vmem:[%s12 + $0xc] sm:$0xf]
      %v6119 = vld [vmem:[%s12 + $0x10] sm:$0xf]
      %v6120 = vld [vmem:[%s12 + $0x14] sm:$0xf]
      %v6121 = vld [vmem:[%s12 + $0x18] sm:$0xf]
      %v6122 = vld [vmem:[%s12 + $0x1c] sm:$0xf]
      %v6123 = vld [vmem:[%s13] sm:$0xff]
      %v6124 = vld [vmem:[%s13 + $0x8] sm:$0xff]
      %v6125 = vld [vmem:[%s13 + $0x10] sm:$0xff]
      %v6126 = vld [vmem:[%s13 + $0x18] sm:$0xff]
      %v6127 = vld [vmem:[%s13 + $0x20] sm:$0xff]
      %v6128 = vld [vmem:[%s13 + $0x28] sm:$0xff]
      %v6129 = vld [vmem:[%s13 + $0x30] sm:$0xff]
      %v6130 = vld [vmem:[%s13 + $0x38] sm:$0xff]
      %v6131 = vld [vmem:[%s13 + $0x40] sm:$0xff]
      %v6132 = vld [vmem:[%s13 + $0x48] sm:$0xff]
      %v6133 = vld [vmem:[%s13 + $0x50] sm:$0xff]
      %v6134 = vld [vmem:[%s13 + $0x58] sm:$0xff]
      %v6135 = vld [vmem:[%s13 + $0x60] sm:$0xff]
      %v6136 = vld [vmem:[%s13 + $0x68] sm:$0xff]
      %v6137 = vld [vmem:[%s13 + $0x70] sm:$0xff]
      %v6138 = vld [vmem:[%s13 + $0x78] sm:$0xff]
      %v6139 = vld [vmem:[%s13 + $0x80] sm:$0xff]
      %v6140 = vld [vmem:[%s13 + $0x88] sm:$0xff]
      %v6141 = vld [vmem:[%s13 + $0x90] sm:$0xff]
      %v6142 = vld [vmem:[%s13 + $0x98] sm:$0xff]
      %v6143 = vld [vmem:[%s13 + $0xa0] sm:$0xff]
      %v6144 = vld [vmem:[%s13 + $0xa8] sm:$0xff]
      %v6145 = vld [vmem:[%s13 + $0xb0] sm:$0xff]
      %v6146 = vld [vmem:[%s13 + $0xb8] sm:$0xff]
      %v6147 = vld [vmem:[%s13 + $0xc0] sm:$0xff]
      %v6148 = vld [vmem:[%s13 + $0xc8] sm:$0xff]
      %v6149 = vld [vmem:[%s13 + $0xd0] sm:$0xff]
      %v6150 = vld [vmem:[%s13 + $0xd8] sm:$0xff]
      %v6151 = vld [vmem:[%s13 + $0xe0] sm:$0xff]
      %v6152 = vld [vmem:[%s13 + $0xe8] sm:$0xff]
      %v6153 = vld [vmem:[%s13 + $0xf0] sm:$0xff]
      %v6154 = vld [vmem:[%s13 + $0xf8] sm:$0xff]
      %v6155 = vld [vmem:[%s13 + $0x100] sm:$0xff]
      %v6156 = vld [vmem:[%s13 + $0x108] sm:$0xff]
      %v6157 = vld [vmem:[%s13 + $0x110] sm:$0xff]
      %v6158 = vld [vmem:[%s13 + $0x118] sm:$0xff]
      %v6159 = vld [vmem:[%s13 + $0x120] sm:$0xff]
      %v6160 = vld [vmem:[%s13 + $0x128] sm:$0xff]
      %v6161 = vld [vmem:[%s13 + $0x130] sm:$0xff]
      %v6162 = vld [vmem:[%s13 + $0x138] sm:$0xff]
      %v6163 = vld [vmem:[%s13 + $0x140] sm:$0xff]
      %v6164 = vld [vmem:[%s13 + $0x148] sm:$0xff]
      %v6165 = vld [vmem:[%s13 + $0x150] sm:$0xff]
      %v6166 = vld [vmem:[%s13 + $0x158] sm:$0xff]
      %v6167 = vld [vmem:[%s13 + $0x160] sm:$0xff]
      %v6168 = vld [vmem:[%s13 + $0x168] sm:$0xff]
      %v6169 = vld [vmem:[%s13 + $0x170] sm:$0xff]
      %v6170 = vld [vmem:[%s13 + $0x178] sm:$0xff]
      %v6171 = vld [vmem:[%s13 + $0x180] sm:$0xff]
      %v6172 = vld [vmem:[%s13 + $0x188] sm:$0xff]
      %v6173 = vld [vmem:[%s13 + $0x190] sm:$0xff]
      %v6174 = vld [vmem:[%s13 + $0x198] sm:$0xff]
      %v6175 = vld [vmem:[%s13 + $0x1a0] sm:$0xff]
      %v6176 = vld [vmem:[%s13 + $0x1a8] sm:$0xff]
      %v6177 = vld [vmem:[%s13 + $0x1b0] sm:$0xff]
      %v6178 = vld [vmem:[%s13 + $0x1b8] sm:$0xff]
      %v6179 = vld [vmem:[%s13 + $0x1c0] sm:$0xff]
      %v6180 = vld [vmem:[%s13 + $0x1c8] sm:$0xff]
      %v6181 = vld [vmem:[%s13 + $0x1d0] sm:$0xff]
      %v6182 = vld [vmem:[%s13 + $0x1d8] sm:$0xff]
      %v6183 = vld [vmem:[%s13 + $0x1e0] sm:$0xff]
      %v6184 = vld [vmem:[%s13 + $0x1e8] sm:$0xff]
      %v6185 = vld [vmem:[%s13 + $0x1f0] sm:$0xff]
      %v6186 = vld [vmem:[%s13 + $0x1f8] sm:$0xff]
      %v6187 = vld [vmem:[%s13 + $0x200] sm:$0xff]
      %v6188 = vld [vmem:[%s13 + $0x208] sm:$0xff]
      %v6189 = vld [vmem:[%s13 + $0x210] sm:$0xff]
      %v6190 = vld [vmem:[%s13 + $0x218] sm:$0xff]
      %v6191 = vld [vmem:[%s13 + $0x220] sm:$0xff]
      %v6192 = vld [vmem:[%s13 + $0x228] sm:$0xff]
      %v6193 = vld [vmem:[%s13 + $0x230] sm:$0xff]
      %v6194 = vld [vmem:[%s13 + $0x238] sm:$0xff]
      %v6195 = vld [vmem:[%s13 + $0x240] sm:$0xff]
      %v6196 = vld [vmem:[%s13 + $0x248] sm:$0xff]
      %v6197 = vld [vmem:[%s13 + $0x250] sm:$0xff]
      %v6198 = vld [vmem:[%s13 + $0x258] sm:$0xff]
      %v6199 = vld [vmem:[%s13 + $0x260] sm:$0xff]
      %v6200 = vld [vmem:[%s13 + $0x268] sm:$0xff]
      %v6201 = vld [vmem:[%s13 + $0x270] sm:$0xff]
      %v6202 = vld [vmem:[%s13 + $0x278] sm:$0xff]
      %v6203 = vld [vmem:[%s13 + $0x280] sm:$0xff]
      %v6204 = vld [vmem:[%s13 + $0x288] sm:$0xff]
      %v6205 = vld [vmem:[%s13 + $0x290] sm:$0xff]
      %v6206 = vld [vmem:[%s13 + $0x298] sm:$0xff]
      %v6207 = vld [vmem:[%s13 + $0x2a0] sm:$0xff]
      %v6208 = vld [vmem:[%s13 + $0x2a8] sm:$0xff]
      %v6209 = vld [vmem:[%s13 + $0x2b0] sm:$0xff]
      %v6210 = vld [vmem:[%s13 + $0x2b8] sm:$0xff]
      %v6211 = vld [vmem:[%s13 + $0x2c0] sm:$0xff]
      %v6212 = vld [vmem:[%s13 + $0x2c8] sm:$0xff]
      %v6213 = vld [vmem:[%s13 + $0x2d0] sm:$0xff]
      %v6214 = vld [vmem:[%s13 + $0x2d8] sm:$0xff]
      %v6215 = vld [vmem:[%s13 + $0x2e0] sm:$0xff]
      %v6216 = vld [vmem:[%s13 + $0x2e8] sm:$0xff]
      %v6217 = vld [vmem:[%s13 + $0x2f0] sm:$0xff]
      %v6218 = vld [vmem:[%s13 + $0x2f8] sm:$0xff]
      %v6219 = vld [vmem:[%s13 + $0x300] sm:$0xff]
      %v6220 = vld [vmem:[%s13 + $0x308] sm:$0xff]
      %v6221 = vld [vmem:[%s13 + $0x310] sm:$0xff]
      %v6222 = vld [vmem:[%s13 + $0x318] sm:$0xff]
      %v6223 = vld [vmem:[%s13 + $0x320] sm:$0xff]
      %v6224 = vld [vmem:[%s13 + $0x328] sm:$0xff]
      %v6225 = vld [vmem:[%s13 + $0x330] sm:$0xff]
      %v6226 = vld [vmem:[%s13 + $0x338] sm:$0xff]
      %v6227 = vld [vmem:[%s13 + $0x340] sm:$0xff]
      %v6228 = vld [vmem:[%s13 + $0x348] sm:$0xff]
      %v6229 = vld [vmem:[%s13 + $0x350] sm:$0xff]
      %v6230 = vld [vmem:[%s13 + $0x358] sm:$0xff]
      %v6231 = vld [vmem:[%s13 + $0x360] sm:$0xff]
      %v6232 = vld [vmem:[%s13 + $0x368] sm:$0xff]
      %v6233 = vld [vmem:[%s13 + $0x370] sm:$0xff]
      %v6234 = vld [vmem:[%s13 + $0x378] sm:$0xff]
      %v6235 = vld [vmem:[%s13 + $0x380] sm:$0xff]
      %v6236 = vld [vmem:[%s13 + $0x388] sm:$0xff]
      %v6237 = vld [vmem:[%s13 + $0x390] sm:$0xff]
      %v6238 = vld [vmem:[%s13 + $0x398] sm:$0xff]
      %v6239 = vld [vmem:[%s13 + $0x3a0] sm:$0xff]
      %v6240 = vld [vmem:[%s13 + $0x3a8] sm:$0xff]
      %v6241 = vld [vmem:[%s13 + $0x3b0] sm:$0xff]
      %v6242 = vld [vmem:[%s13 + $0x3b8] sm:$0xff]
      %v6243 = vld [vmem:[%s13 + $0x3c0] sm:$0xff]
      %v6244 = vld [vmem:[%s13 + $0x3c8] sm:$0xff]
      %v6245 = vld [vmem:[%s13 + $0x3d0] sm:$0xff]
      %v6246 = vld [vmem:[%s13 + $0x3d8] sm:$0xff]
      %v6247 = vld [vmem:[%s13 + $0x3e0] sm:$0xff]
      %v6248 = vld [vmem:[%s13 + $0x3e8] sm:$0xff]
      %v6249 = vld [vmem:[%s13 + $0x3f0] sm:$0xff]
      %v6250 = vld [vmem:[%s13 + $0x3f8] sm:$0xff]
      %v6251 = vld [vmem:[%s13 + $0x400] sm:$0xff]
      %v6252 = vld [vmem:[%s13 + $0x408] sm:$0xff]
      %v6253 = vld [vmem:[%s13 + $0x410] sm:$0xff]
      %v6254 = vld [vmem:[%s13 + $0x418] sm:$0xff]
      %v6255 = vld [vmem:[%s13 + $0x420] sm:$0xff]
      %v6256 = vld [vmem:[%s13 + $0x428] sm:$0xff]
      %v6257 = vld [vmem:[%s13 + $0x430] sm:$0xff]
      %v6258 = vld [vmem:[%s13 + $0x438] sm:$0xff]
      %v6259 = vld [vmem:[%s13 + $0x440] sm:$0xff]
      %v6260 = vld [vmem:[%s13 + $0x448] sm:$0xff]
      %v6261 = vld [vmem:[%s13 + $0x450] sm:$0xff]
      %v6262 = vld [vmem:[%s13 + $0x458] sm:$0xff]
      %v6263 = vld [vmem:[%s13 + $0x460] sm:$0xff]
      %v6264 = vld [vmem:[%s13 + $0x468] sm:$0xff]
      %v6265 = vld [vmem:[%s13 + $0x470] sm:$0xff]
      %v6266 = vld [vmem:[%s13 + $0x478] sm:$0xff]
      %v6267 = vld [vmem:[%s13 + $0x480] sm:$0xff]
      %v6268 = vld [vmem:[%s13 + $0x488] sm:$0xff]
      %v6269 = vld [vmem:[%s13 + $0x490] sm:$0xff]
      %v6270 = vld [vmem:[%s13 + $0x498] sm:$0xff]
      %v6271 = vld [vmem:[%s13 + $0x4a0] sm:$0xff]
      %v6272 = vld [vmem:[%s13 + $0x4a8] sm:$0xff]
      %v6273 = vld [vmem:[%s13 + $0x4b0] sm:$0xff]
      %v6274 = vld [vmem:[%s13 + $0x4b8] sm:$0xff]
      %v6275 = vld [vmem:[%s13 + $0x4c0] sm:$0xff]
      %v6276 = vld [vmem:[%s13 + $0x4c8] sm:$0xff]
      %v6277 = vld [vmem:[%s13 + $0x4d0] sm:$0xff]
      %v6278 = vld [vmem:[%s13 + $0x4d8] sm:$0xff]
      %v6279 = vld [vmem:[%s13 + $0x4e0] sm:$0xff]
      %v6280 = vld [vmem:[%s13 + $0x4e8] sm:$0xff]
      %v6281 = vld [vmem:[%s13 + $0x4f0] sm:$0xff]
      %v6282 = vld [vmem:[%s13 + $0x4f8] sm:$0xff]
      %v6283 = vld [vmem:[%s13 + $0x500] sm:$0xff]
      %v6284 = vld [vmem:[%s13 + $0x508] sm:$0xff]
      %v6285 = vld [vmem:[%s13 + $0x510] sm:$0xff]
      %v6286 = vld [vmem:[%s13 + $0x518] sm:$0xff]
      %v6287 = vld [vmem:[%s13 + $0x520] sm:$0xff]
      %v6288 = vld [vmem:[%s13 + $0x528] sm:$0xff]
      %v6289 = vld [vmem:[%s13 + $0x530] sm:$0xff]
      %v6290 = vld [vmem:[%s13 + $0x538] sm:$0xff]
      %v6291 = vld [vmem:[%s13 + $0x540] sm:$0xff]
      %v6292 = vld [vmem:[%s13 + $0x548] sm:$0xff]
      %v6293 = vld [vmem:[%s13 + $0x550] sm:$0xff]
      %v6294 = vld [vmem:[%s13 + $0x558] sm:$0xff]
      %v6295 = vld [vmem:[%s13 + $0x560] sm:$0xff]
      %v6296 = vld [vmem:[%s13 + $0x568] sm:$0xff]
      %v6297 = vld [vmem:[%s13 + $0x570] sm:$0xff]
      %v6298 = vld [vmem:[%s13 + $0x578] sm:$0xff]
      %v6299 = vld [vmem:[%s13 + $0x580] sm:$0xff]
      %v6300 = vld [vmem:[%s13 + $0x588] sm:$0xff]
      %v6301 = vld [vmem:[%s13 + $0x590] sm:$0xff]
      %v6302 = vld [vmem:[%s13 + $0x598] sm:$0xff]
      %v6303 = vld [vmem:[%s13 + $0x5a0] sm:$0xff]
      %v6304 = vld [vmem:[%s13 + $0x5a8] sm:$0xff]
      %v6305 = vld [vmem:[%s13 + $0x5b0] sm:$0xff]
      %v6306 = vld [vmem:[%s13 + $0x5b8] sm:$0xff]
      %v6307 = vld [vmem:[%s13 + $0x5c0] sm:$0xff]
      %v6308 = vld [vmem:[%s13 + $0x5c8] sm:$0xff]
      %v6309 = vld [vmem:[%s13 + $0x5d0] sm:$0xff]
      %v6310 = vld [vmem:[%s13 + $0x5d8] sm:$0xff]
      %v6311 = vld [vmem:[%s13 + $0x5e0] sm:$0xff]
      %v6312 = vld [vmem:[%s13 + $0x5e8] sm:$0xff]
      %v6313 = vld [vmem:[%s13 + $0x5f0] sm:$0xff]
      %v6314 = vld [vmem:[%s13 + $0x5f8] sm:$0xff]
      %v6315 = vld [vmem:[%s13 + $0x600] sm:$0xff]
      %v6316 = vld [vmem:[%s13 + $0x608] sm:$0xff]
      %v6317 = vld [vmem:[%s13 + $0x610] sm:$0xff]
      %v6318 = vld [vmem:[%s13 + $0x618] sm:$0xff]
      %v6319 = vld [vmem:[%s13 + $0x620] sm:$0xff]
      %v6320 = vld [vmem:[%s13 + $0x628] sm:$0xff]
      %v6321 = vld [vmem:[%s13 + $0x630] sm:$0xff]
      %v6322 = vld [vmem:[%s13 + $0x638] sm:$0xff]
      %v6323 = vld [vmem:[%s13 + $0x640] sm:$0xff]
      %v6324 = vld [vmem:[%s13 + $0x648] sm:$0xff]
      %v6325 = vld [vmem:[%s13 + $0x650] sm:$0xff]
      %v6326 = vld [vmem:[%s13 + $0x658] sm:$0xff]
      %v6327 = vld [vmem:[%s13 + $0x660] sm:$0xff]
      %v6328 = vld [vmem:[%s13 + $0x668] sm:$0xff]
      %v6329 = vld [vmem:[%s13 + $0x670] sm:$0xff]
      %v6330 = vld [vmem:[%s13 + $0x678] sm:$0xff]
      %v6331 = vld [vmem:[%s13 + $0x680] sm:$0xff]
      %v6332 = vld [vmem:[%s13 + $0x688] sm:$0xff]
      %v6333 = vld [vmem:[%s13 + $0x690] sm:$0xff]
      %v6334 = vld [vmem:[%s13 + $0x698] sm:$0xff]
      %v6335 = vld [vmem:[%s13 + $0x6a0] sm:$0xff]
      %v6336 = vld [vmem:[%s13 + $0x6a8] sm:$0xff]
      %v6337 = vld [vmem:[%s13 + $0x6b0] sm:$0xff]
      %v6338 = vld [vmem:[%s13 + $0x6b8] sm:$0xff]
      %v6339 = vld [vmem:[%s13 + $0x6c0] sm:$0xff]
      %v6340 = vld [vmem:[%s13 + $0x6c8] sm:$0xff]
      %v6341 = vld [vmem:[%s13 + $0x6d0] sm:$0xff]
      %v6342 = vld [vmem:[%s13 + $0x6d8] sm:$0xff]
      %v6343 = vld [vmem:[%s13 + $0x6e0] sm:$0xff]
      %v6344 = vld [vmem:[%s13 + $0x6e8] sm:$0xff]
      %v6345 = vld [vmem:[%s13 + $0x6f0] sm:$0xff]
      %v6346 = vld [vmem:[%s13 + $0x6f8] sm:$0xff]
      %v6347 = vld [vmem:[%s13 + $0x700] sm:$0xff]
      %v6348 = vld [vmem:[%s13 + $0x708] sm:$0xff]
      %v6349 = vld [vmem:[%s13 + $0x710] sm:$0xff]
      %v6350 = vld [vmem:[%s13 + $0x718] sm:$0xff]
      %v6351 = vld [vmem:[%s13 + $0x720] sm:$0xff]
      %v6352 = vld [vmem:[%s13 + $0x728] sm:$0xff]
      %v6353 = vld [vmem:[%s13 + $0x730] sm:$0xff]
      %v6354 = vld [vmem:[%s13 + $0x738] sm:$0xff]
      %v6355 = vld [vmem:[%s13 + $0x740] sm:$0xff]
      %v6356 = vld [vmem:[%s13 + $0x748] sm:$0xff]
      %v6357 = vld [vmem:[%s13 + $0x750] sm:$0xff]
      %v6358 = vld [vmem:[%s13 + $0x758] sm:$0xff]
      %v6359 = vld [vmem:[%s13 + $0x760] sm:$0xff]
      %v6360 = vld [vmem:[%s13 + $0x768] sm:$0xff]
      %v6361 = vld [vmem:[%s13 + $0x770] sm:$0xff]
      %v6362 = vld [vmem:[%s13 + $0x778] sm:$0xff]
      %v6363 = vld [vmem:[%s13 + $0x780] sm:$0xff]
      %v6364 = vld [vmem:[%s13 + $0x788] sm:$0xff]
      %v6365 = vld [vmem:[%s13 + $0x790] sm:$0xff]
      %v6366 = vld [vmem:[%s13 + $0x798] sm:$0xff]
      %v6367 = vld [vmem:[%s13 + $0x7a0] sm:$0xff]
      %v6368 = vld [vmem:[%s13 + $0x7a8] sm:$0xff]
      %v6369 = vld [vmem:[%s13 + $0x7b0] sm:$0xff]
      %v6370 = vld [vmem:[%s13 + $0x7b8] sm:$0xff]
      %v6371 = vld [vmem:[%s13 + $0x7c0] sm:$0xff]
      %v6372 = vld [vmem:[%s13 + $0x7c8] sm:$0xff]
      %v6373 = vld [vmem:[%s13 + $0x7d0] sm:$0xff]
      %v6374 = vld [vmem:[%s13 + $0x7d8] sm:$0xff]
      %v6375 = vld [vmem:[%s13 + $0x7e0] sm:$0xff]
      %v6376 = vld [vmem:[%s13 + $0x7e8] sm:$0xff]
      %v6377 = vld [vmem:[%s13 + $0x7f0] sm:$0xff]
      %v6378 = vld [vmem:[%s13 + $0x7f8] sm:$0xff]
      %v6379 = vld [vmem:[%s14] sm:$0x3]
      %v6388 = vunpack.c.l.b16 %v6115
      %v6389 = vunpack.c.l.b16 %v6116
      %v6390 = vunpack.c.l.b16 %v6117
      %v6391 = vunpack.c.l.b16 %v6118
      %v6392 = vunpack.c.l.b16 %v6119
      %v6393 = vunpack.c.l.b16 %v6120
      %v6394 = vunpack.c.l.b16 %v6121
      %v6395 = vunpack.c.l.b16 %v6122
      %v6396 = vpack.c.b16 %v6389, %v6388
      %v6397 = vpack.c.b16 %v6391, %v6390
      %v6398 = vpack.c.b16 %v6393, %v6392
      %v6399 = vpack.c.b16 %v6395, %v6394
      %vm6400 = vcmask 72704
      %v6402 = vsel %vm6400, %v6396, 0
      %v6405 = vsel %vm6400, %v6397, 0
      %v6408 = vsel %vm6400, %v6398, 0
      %v6411 = vsel %vm6400, %v6399, 0
      %v6414 = vand.u32 %v6114, %v5285
      %6416 = vmatprep.subr.bf16.mxu0 0
      %6417 = vmatpush1.bf16.msra.mxu0 %v6414
      %6418 = vmatprep.subr.bf16.mxu0 0
      %6419 = vmatpush1.bf16.msra.mxu0 0
      %6420 = vmatprep.subr.bf16.mxu0 0
      %6421 = vmatpush1.bf16.msra.mxu0 0
      %6422 = vmatprep.subr.bf16.mxu0 0
      %6423 = vmatpush1.bf16.msra.mxu0 0
      %6424 = vmatprep.subr.bf16.mxu0 0
      %6425 = vmatpush1.bf16.msra.mxu0 0
      %6426 = vmatprep.subr.bf16.mxu0 0
      %6427 = vmatpush1.bf16.msra.mxu0 0
      %6428 = vmatprep.subr.bf16.mxu0 0
      %6429 = vmatpush1.bf16.msra.mxu0 0
      %6430 = vmatprep.subr.bf16.mxu0 0
      %6431 = vmatpush1.bf16.msra.mxu0 0
      %6432 = vmatprep.subr.bf16.mxu0 0
      %6433 = vmatpush1.bf16.msra.mxu0 0
      %6434 = vmatprep.subr.bf16.mxu0 0
      %6435 = vmatpush1.bf16.msra.mxu0 0
      %6436 = vmatprep.subr.bf16.mxu0 0
      %6437 = vmatpush1.bf16.msra.mxu0 0
      %6438 = vmatprep.subr.bf16.mxu0 0
      %6439 = vmatpush1.bf16.msra.mxu0 0
      %6440 = vmatprep.subr.bf16.mxu0 0
      %6441 = vmatpush1.bf16.msra.mxu0 0
      %6442 = vmatprep.subr.bf16.mxu0 0
      %6443 = vmatpush1.bf16.msra.mxu0 0
      %6444 = vmatprep.subr.bf16.mxu0 0
      %6445 = vmatpush1.bf16.msra.mxu0 0
      %6446 = vmatprep.subr.bf16.mxu0 0
      %6447 = vmatpush1.bf16.msra.mxu0 0
      %6448 = vmatprep.mubr.bf16.mxu0 0
      %6449 = vmatmul.mubr.bf16.gmra.mrb[0].mxu0 %v6402
      %v6450 = vpop.f32.mrb[0].mxu0
      %v6451 = vadd.f32 0.0, %v6450
      %v6452 = vpop.f32.mrb[0].mxu0
      %v6453 = vpop.f32.mrb[0].mxu0
      %v6454 = vadd.f32 0.0, %v6453
      %v6455 = vpop.f32.mrb[0].mxu0
      %6456 = vmatprep.mubr.bf16.mxu0 0
      %6457 = vmatmul.mubr.bf16.gmra.mrb[0].mxu0 %v6405
      %v6458 = vpop.f32.mrb[0].mxu0
      %v6459 = vadd.f32 0.0, %v6458
      %v6460 = vpop.f32.mrb[0].mxu0
      %v6461 = vpop.f32.mrb[0].mxu0
      %v6462 = vadd.f32 0.0, %v6461
      %v6463 = vpop.f32.mrb[0].mxu0
      %6464 = vmatprep.mubr.bf16.mxu0 0
      %6465 = vmatmul.mubr.bf16.gmra.mrb[0].mxu0 %v6408
      %v6466 = vpop.f32.mrb[0].mxu0
      %v6467 = vadd.f32 0.0, %v6466
      %v6468 = vpop.f32.mrb[0].mxu0
      %v6469 = vpop.f32.mrb[0].mxu0
      %v6470 = vadd.f32 0.0, %v6469
      %v6471 = vpop.f32.mrb[0].mxu0
      %6472 = vmatprep.mubr.bf16.mxu0 0
      %6473 = vmatmul.mubr.bf16.gmra.mrb[0].mxu0 %v6411
      %v6474 = vpop.f32.mrb[0].mxu0
      %v6475 = vadd.f32 0.0, %v6474
      %v6476 = vpop.f32.mrb[0].mxu0
      %v6477 = vpop.f32.mrb[0].mxu0
      %v6478 = vadd.f32 0.0, %v6477
      %v6479 = vpop.f32.mrb[0].mxu0
      %6480 = vdwg.mxu0
      %v6481 = vpack.c.bf16 %v6454, %v6451
      %v6482 = vpack.c.bf16 %v6462, %v6459
      %v6483 = vpack.c.bf16 %v6470, %v6467
      %v6484 = vpack.c.bf16 %v6478, %v6475
      %v6486 = vrot.slane %v6481, 2
      %v6488 = vrot.slane %v6481, 4
      %v6490 = vrot.slane %v6481, 6
      %v6493 = vrot.slane %v6482, 2
      %v6495 = vrot.slane %v6482, 4
      %v6497 = vrot.slane %v6482, 6
      %v6500 = vrot.slane %v6483, 2
      %v6502 = vrot.slane %v6483, 4
      %v6504 = vrot.slane %v6483, 6
      %v6507 = vrot.slane %v6484, 2
      %v6509 = vrot.slane %v6484, 4
      %v6511 = vrot.slane %v6484, 6
      %v6514 = vlaneseq
      %v6515 = vshrl.u32 %v6514, 7
      %v6516 = vsub.s32 0, %v6515
      %v6517 = vrot.slane %v6379, %v6516
      %v6518 = vlaneseq
      %v6519 = vshrl.u32 %v6518, 7
      %v6520 = vsub.s32 1, %v6519
      %v6521 = vrot.slane %v6379, %v6520
      %v6780 = vunpack.c.l.b16 %v6123
      %v6781 = vunpack.c.h.b16 %v6123
      %v6782 = vunpack.c.l.b16 %v6124
      %v6783 = vunpack.c.h.b16 %v6124
      %v6784 = vunpack.c.l.b16 %v6125
      %v6785 = vunpack.c.h.b16 %v6125
      %v6786 = vunpack.c.l.b16 %v6126
      %v6787 = vunpack.c.h.b16 %v6126
      %v6788 = vunpack.c.l.b16 %v6127
      %v6789 = vunpack.c.h.b16 %v6127
      %v6790 = vunpack.c.l.b16 %v6128
      %v6791 = vunpack.c.h.b16 %v6128
      %v6792 = vunpack.c.l.b16 %v6129
      %v6793 = vunpack.c.h.b16 %v6129
      %v6794 = vunpack.c.l.b16 %v6130
      %v6795 = vunpack.c.h.b16 %v6130
      %v6796 = vunpack.c.l.b16 %v6131
      %v6797 = vunpack.c.h.b16 %v6131
      %v6798 = vunpack.c.l.b16 %v6132
      %v6799 = vunpack.c.h.b16 %v6132
      %v6800 = vunpack.c.l.b16 %v6133
      %v6801 = vunpack.c.h.b16 %v6133
      %v6802 = vunpack.c.l.b16 %v6134
      %v6803 = vunpack.c.h.b16 %v6134
      %v6804 = vunpack.c.l.b16 %v6135
      %v6805 = vunpack.c.h.b16 %v6135
      %v6806 = vunpack.c.l.b16 %v6136
      %v6807 = vunpack.c.h.b16 %v6136
      %v6808 = vunpack.c.l.b16 %v6137
      %v6809 = vunpack.c.h.b16 %v6137
      %v6810 = vunpack.c.l.b16 %v6138
      %v6811 = vunpack.c.h.b16 %v6138
      %v6812 = vunpack.c.l.b16 %v6139
      %v6813 = vunpack.c.h.b16 %v6139
      %v6814 = vunpack.c.l.b16 %v6140
      %v6815 = vunpack.c.h.b16 %v6140
      %v6816 = vunpack.c.l.b16 %v6141
      %v6817 = vunpack.c.h.b16 %v6141
      %v6818 = vunpack.c.l.b16 %v6142
      %v6819 = vunpack.c.h.b16 %v6142
      %v6820 = vunpack.c.l.b16 %v6143
      %v6821 = vunpack.c.h.b16 %v6143
      %v6822 = vunpack.c.l.b16 %v6144
      %v6823 = vunpack.c.h.b16 %v6144
      %v6824 = vunpack.c.l.b16 %v6145
      %v6825 = vunpack.c.h.b16 %v6145
      %v6826 = vunpack.c.l.b16 %v6146
      %v6827 = vunpack.c.h.b16 %v6146
      %v6828 = vunpack.c.l.b16 %v6147
      %v6829 = vunpack.c.h.b16 %v6147
      %v6830 = vunpack.c.l.b16 %v6148
      %v6831 = vunpack.c.h.b16 %v6148
      %v6832 = vunpack.c.l.b16 %v6149
      %v6833 = vunpack.c.h.b16 %v6149
      %v6834 = vunpack.c.l.b16 %v6150
      %v6835 = vunpack.c.h.b16 %v6150
      %v6836 = vunpack.c.l.b16 %v6151
      %v6837 = vunpack.c.h.b16 %v6151
      %v6838 = vunpack.c.l.b16 %v6152
      %v6839 = vunpack.c.h.b16 %v6152
      %v6840 = vunpack.c.l.b16 %v6153
      %v6841 = vunpack.c.h.b16 %v6153
      %v6842 = vunpack.c.l.b16 %v6154
      %v6843 = vunpack.c.h.b16 %v6154
      %v6844 = vunpack.c.l.b16 %v6155
      %v6845 = vunpack.c.h.b16 %v6155
      %v6846 = vunpack.c.l.b16 %v6156
      %v6847 = vunpack.c.h.b16 %v6156
      %v6848 = vunpack.c.l.b16 %v6157
      %v6849 = vunpack.c.h.b16 %v6157
      %v6850 = vunpack.c.l.b16 %v6158
      %v6851 = vunpack.c.h.b16 %v6158
      %v6852 = vunpack.c.l.b16 %v6159
      %v6853 = vunpack.c.h.b16 %v6159
      %v6854 = vunpack.c.l.b16 %v6160
      %v6855 = vunpack.c.h.b16 %v6160
      %v6856 = vunpack.c.l.b16 %v6161
      %v6857 = vunpack.c.h.b16 %v6161
      %v6858 = vunpack.c.l.b16 %v6162
      %v6859 = vunpack.c.h.b16 %v6162
      %v6860 = vunpack.c.l.b16 %v6163
      %v6861 = vunpack.c.h.b16 %v6163
      %v6862 = vunpack.c.l.b16 %v6164
      %v6863 = vunpack.c.h.b16 %v6164
      %v6864 = vunpack.c.l.b16 %v6165
      %v6865 = vunpack.c.h.b16 %v6165
      %v6866 = vunpack.c.l.b16 %v6166
      %v6867 = vunpack.c.h.b16 %v6166
      %v6868 = vunpack.c.l.b16 %v6167
      %v6869 = vunpack.c.h.b16 %v6167
      %v6870 = vunpack.c.l.b16 %v6168
      %v6871 = vunpack.c.h.b16 %v6168
      %v6872 = vunpack.c.l.b16 %v6169
      %v6873 = vunpack.c.h.b16 %v6169
      %v6874 = vunpack.c.l.b16 %v6170
      %v6875 = vunpack.c.h.b16 %v6170
      %v6876 = vunpack.c.l.b16 %v6171
      %v6877 = vunpack.c.h.b16 %v6171
      %v6878 = vunpack.c.l.b16 %v6172
      %v6879 = vunpack.c.h.b16 %v6172
      %v6880 = vunpack.c.l.b16 %v6173
      %v6881 = vunpack.c.h.b16 %v6173
      %v6882 = vunpack.c.l.b16 %v6174
      %v6883 = vunpack.c.h.b16 %v6174
      %v6884 = vunpack.c.l.b16 %v6175
      %v6885 = vunpack.c.h.b16 %v6175
      %v6886 = vunpack.c.l.b16 %v6176
      %v6887 = vunpack.c.h.b16 %v6176
      %v6888 = vunpack.c.l.b16 %v6177
      %v6889 = vunpack.c.h.b16 %v6177
      %v6890 = vunpack.c.l.b16 %v6178
      %v6891 = vunpack.c.h.b16 %v6178
      %v6892 = vunpack.c.l.b16 %v6179
      %v6893 = vunpack.c.h.b16 %v6179
      %v6894 = vunpack.c.l.b16 %v6180
      %v6895 = vunpack.c.h.b16 %v6180
      %v6896 = vunpack.c.l.b16 %v6181
      %v6897 = vunpack.c.h.b16 %v6181
      %v6898 = vunpack.c.l.b16 %v6182
      %v6899 = vunpack.c.h.b16 %v6182
      %v6900 = vunpack.c.l.b16 %v6183
      %v6901 = vunpack.c.h.b16 %v6183
      %v6902 = vunpack.c.l.b16 %v6184
      %v6903 = vunpack.c.h.b16 %v6184
      %v6904 = vunpack.c.l.b16 %v6185
      %v6905 = vunpack.c.h.b16 %v6185
      %v6906 = vunpack.c.l.b16 %v6186
      %v6907 = vunpack.c.h.b16 %v6186
      %v6908 = vunpack.c.l.b16 %v6187
      %v6909 = vunpack.c.h.b16 %v6187
      %v6910 = vunpack.c.l.b16 %v6188
      %v6911 = vunpack.c.h.b16 %v6188
      %v6912 = vunpack.c.l.b16 %v6189
      %v6913 = vunpack.c.h.b16 %v6189
      %v6914 = vunpack.c.l.b16 %v6190
      %v6915 = vunpack.c.h.b16 %v6190
      %v6916 = vunpack.c.l.b16 %v6191
      %v6917 = vunpack.c.h.b16 %v6191
      %v6918 = vunpack.c.l.b16 %v6192
      %v6919 = vunpack.c.h.b16 %v6192
      %v6920 = vunpack.c.l.b16 %v6193
      %v6921 = vunpack.c.h.b16 %v6193
      %v6922 = vunpack.c.l.b16 %v6194
      %v6923 = vunpack.c.h.b16 %v6194
      %v6924 = vunpack.c.l.b16 %v6195
      %v6925 = vunpack.c.h.b16 %v6195
      %v6926 = vunpack.c.l.b16 %v6196
      %v6927 = vunpack.c.h.b16 %v6196
      %v6928 = vunpack.c.l.b16 %v6197
      %v6929 = vunpack.c.h.b16 %v6197
      %v6930 = vunpack.c.l.b16 %v6198
      %v6931 = vunpack.c.h.b16 %v6198
      %v6932 = vunpack.c.l.b16 %v6199
      %v6933 = vunpack.c.h.b16 %v6199
      %v6934 = vunpack.c.l.b16 %v6200
      %v6935 = vunpack.c.h.b16 %v6200
      %v6936 = vunpack.c.l.b16 %v6201
      %v6937 = vunpack.c.h.b16 %v6201
      %v6938 = vunpack.c.l.b16 %v6202
      %v6939 = vunpack.c.h.b16 %v6202
      %v6940 = vunpack.c.l.b16 %v6203
      %v6941 = vunpack.c.h.b16 %v6203
      %v6942 = vunpack.c.l.b16 %v6204
      %v6943 = vunpack.c.h.b16 %v6204
      %v6944 = vunpack.c.l.b16 %v6205
      %v6945 = vunpack.c.h.b16 %v6205
      %v6946 = vunpack.c.l.b16 %v6206
      %v6947 = vunpack.c.h.b16 %v6206
      %v6948 = vunpack.c.l.b16 %v6207
      %v6949 = vunpack.c.h.b16 %v6207
      %v6950 = vunpack.c.l.b16 %v6208
      %v6951 = vunpack.c.h.b16 %v6208
      %v6952 = vunpack.c.l.b16 %v6209
      %v6953 = vunpack.c.h.b16 %v6209
      %v6954 = vunpack.c.l.b16 %v6210
      %v6955 = vunpack.c.h.b16 %v6210
      %v6956 = vunpack.c.l.b16 %v6211
      %v6957 = vunpack.c.h.b16 %v6211
      %v6958 = vunpack.c.l.b16 %v6212
      %v6959 = vunpack.c.h.b16 %v6212
      %v6960 = vunpack.c.l.b16 %v6213
      %v6961 = vunpack.c.h.b16 %v6213
      %v6962 = vunpack.c.l.b16 %v6214
      %v6963 = vunpack.c.h.b16 %v6214
      %v6964 = vunpack.c.l.b16 %v6215
      %v6965 = vunpack.c.h.b16 %v6215
      %v6966 = vunpack.c.l.b16 %v6216
      %v6967 = vunpack.c.h.b16 %v6216
      %v6968 = vunpack.c.l.b16 %v6217
      %v6969 = vunpack.c.h.b16 %v6217
      %v6970 = vunpack.c.l.b16 %v6218
      %v6971 = vunpack.c.h.b16 %v6218
      %v6972 = vunpack.c.l.b16 %v6219
      %v6973 = vunpack.c.h.b16 %v6219
      %v6974 = vunpack.c.l.b16 %v6220
      %v6975 = vunpack.c.h.b16 %v6220
      %v6976 = vunpack.c.l.b16 %v6221
      %v6977 = vunpack.c.h.b16 %v6221
      %v6978 = vunpack.c.l.b16 %v6222
      %v6979 = vunpack.c.h.b16 %v6222
      %v6980 = vunpack.c.l.b16 %v6223
      %v6981 = vunpack.c.h.b16 %v6223
      %v6982 = vunpack.c.l.b16 %v6224
      %v6983 = vunpack.c.h.b16 %v6224
      %v6984 = vunpack.c.l.b16 %v6225
      %v6985 = vunpack.c.h.b16 %v6225
      %v6986 = vunpack.c.l.b16 %v6226
      %v6987 = vunpack.c.h.b16 %v6226
      %v6988 = vunpack.c.l.b16 %v6227
      %v6989 = vunpack.c.h.b16 %v6227
      %v6990 = vunpack.c.l.b16 %v6228
      %v6991 = vunpack.c.h.b16 %v6228
      %v6992 = vunpack.c.l.b16 %v6229
      %v6993 = vunpack.c.h.b16 %v6229
      %v6994 = vunpack.c.l.b16 %v6230
      %v6995 = vunpack.c.h.b16 %v6230
      %v6996 = vunpack.c.l.b16 %v6231
      %v6997 = vunpack.c.h.b16 %v6231
      %v6998 = vunpack.c.l.b16 %v6232
      %v6999 = vunpack.c.h.b16 %v6232
      %v7000 = vunpack.c.l.b16 %v6233
      %v7001 = vunpack.c.h.b16 %v6233
      %v7002 = vunpack.c.l.b16 %v6234
      %v7003 = vunpack.c.h.b16 %v6234
      %v7004 = vunpack.c.l.b16 %v6235
      %v7005 = vunpack.c.h.b16 %v6235
      %v7006 = vunpack.c.l.b16 %v6236
      %v7007 = vunpack.c.h.b16 %v6236
      %v7008 = vunpack.c.l.b16 %v6237
      %v7009 = vunpack.c.h.b16 %v6237
      %v7010 = vunpack.c.l.b16 %v6238
      %v7011 = vunpack.c.h.b16 %v6238
      %v7012 = vunpack.c.l.b16 %v6239
      %v7013 = vunpack.c.h.b16 %v6239
      %v7014 = vunpack.c.l.b16 %v6240
      %v7015 = vunpack.c.h.b16 %v6240
      %v7016 = vunpack.c.l.b16 %v6241
      %v7017 = vunpack.c.h.b16 %v6241
      %v7018 = vunpack.c.l.b16 %v6242
      %v7019 = vunpack.c.h.b16 %v6242
      %v7020 = vunpack.c.l.b16 %v6243
      %v7021 = vunpack.c.h.b16 %v6243
      %v7022 = vunpack.c.l.b16 %v6244
      %v7023 = vunpack.c.h.b16 %v6244
      %v7024 = vunpack.c.l.b16 %v6245
      %v7025 = vunpack.c.h.b16 %v6245
      %v7026 = vunpack.c.l.b16 %v6246
      %v7027 = vunpack.c.h.b16 %v6246
      %v7028 = vunpack.c.l.b16 %v6247
      %v7029 = vunpack.c.h.b16 %v6247
      %v7030 = vunpack.c.l.b16 %v6248
      %v7031 = vunpack.c.h.b16 %v6248
      %v7032 = vunpack.c.l.b16 %v6249
      %v7033 = vunpack.c.h.b16 %v6249
      %v7034 = vunpack.c.l.b16 %v6250
      %v7035 = vunpack.c.h.b16 %v6250
      %v7036 = vunpack.c.l.b16 %v6251
      %v7037 = vunpack.c.h.b16 %v6251
      %v7038 = vunpack.c.l.b16 %v6252
      %v7039 = vunpack.c.h.b16 %v6252
      %v7040 = vunpack.c.l.b16 %v6253
      %v7041 = vunpack.c.h.b16 %v6253
      %v7042 = vunpack.c.l.b16 %v6254
      %v7043 = vunpack.c.h.b16 %v6254
      %v7044 = vunpack.c.l.b16 %v6255
      %v7045 = vunpack.c.h.b16 %v6255
      %v7046 = vunpack.c.l.b16 %v6256
      %v7047 = vunpack.c.h.b16 %v6256
      %v7048 = vunpack.c.l.b16 %v6257
      %v7049 = vunpack.c.h.b16 %v6257
      %v7050 = vunpack.c.l.b16 %v6258
      %v7051 = vunpack.c.h.b16 %v6258
      %v7052 = vunpack.c.l.b16 %v6259
      %v7053 = vunpack.c.h.b16 %v6259
      %v7054 = vunpack.c.l.b16 %v6260
      %v7055 = vunpack.c.h.b16 %v6260
      %v7056 = vunpack.c.l.b16 %v6261
      %v7057 = vunpack.c.h.b16 %v6261
      %v7058 = vunpack.c.l.b16 %v6262
      %v7059 = vunpack.c.h.b16 %v6262
      %v7060 = vunpack.c.l.b16 %v6263
      %v7061 = vunpack.c.h.b16 %v6263
      %v7062 = vunpack.c.l.b16 %v6264
      %v7063 = vunpack.c.h.b16 %v6264
      %v7064 = vunpack.c.l.b16 %v6265
      %v7065 = vunpack.c.h.b16 %v6265
      %v7066 = vunpack.c.l.b16 %v6266
      %v7067 = vunpack.c.h.b16 %v6266
      %v7068 = vunpack.c.l.b16 %v6267
      %v7069 = vunpack.c.h.b16 %v6267
      %v7070 = vunpack.c.l.b16 %v6268
      %v7071 = vunpack.c.h.b16 %v6268
      %v7072 = vunpack.c.l.b16 %v6269
      %v7073 = vunpack.c.h.b16 %v6269
      %v7074 = vunpack.c.l.b16 %v6270
      %v7075 = vunpack.c.h.b16 %v6270
      %v7076 = vunpack.c.l.b16 %v6271
      %v7077 = vunpack.c.h.b16 %v6271
      %v7078 = vunpack.c.l.b16 %v6272
      %v7079 = vunpack.c.h.b16 %v6272
      %v7080 = vunpack.c.l.b16 %v6273
      %v7081 = vunpack.c.h.b16 %v6273
      %v7082 = vunpack.c.l.b16 %v6274
      %v7083 = vunpack.c.h.b16 %v6274
      %v7084 = vunpack.c.l.b16 %v6275
      %v7085 = vunpack.c.h.b16 %v6275
      %v7086 = vunpack.c.l.b16 %v6276
      %v7087 = vunpack.c.h.b16 %v6276
      %v7088 = vunpack.c.l.b16 %v6277
      %v7089 = vunpack.c.h.b16 %v6277
      %v7090 = vunpack.c.l.b16 %v6278
      %v7091 = vunpack.c.h.b16 %v6278
      %v7092 = vunpack.c.l.b16 %v6279
      %v7093 = vunpack.c.h.b16 %v6279
      %v7094 = vunpack.c.l.b16 %v6280
      %v7095 = vunpack.c.h.b16 %v6280
      %v7096 = vunpack.c.l.b16 %v6281
      %v7097 = vunpack.c.h.b16 %v6281
      %v7098 = vunpack.c.l.b16 %v6282
      %v7099 = vunpack.c.h.b16 %v6282
      %v7100 = vunpack.c.l.b16 %v6283
      %v7101 = vunpack.c.h.b16 %v6283
      %v7102 = vunpack.c.l.b16 %v6284
      %v7103 = vunpack.c.h.b16 %v6284
      %v7104 = vunpack.c.l.b16 %v6285
      %v7105 = vunpack.c.h.b16 %v6285
      %v7106 = vunpack.c.l.b16 %v6286
      %v7107 = vunpack.c.h.b16 %v6286
      %v7108 = vunpack.c.l.b16 %v6287
      %v7109 = vunpack.c.h.b16 %v6287
      %v7110 = vunpack.c.l.b16 %v6288
      %v7111 = vunpack.c.h.b16 %v6288
      %v7112 = vunpack.c.l.b16 %v6289
      %v7113 = vunpack.c.h.b16 %v6289
      %v7114 = vunpack.c.l.b16 %v6290
      %v7115 = vunpack.c.h.b16 %v6290
      %v7116 = vunpack.c.l.b16 %v6291
      %v7117 = vunpack.c.h.b16 %v6291
      %v7118 = vunpack.c.l.b16 %v6292
      %v7119 = vunpack.c.h.b16 %v6292
      %v7120 = vunpack.c.l.b16 %v6293
      %v7121 = vunpack.c.h.b16 %v6293
      %v7122 = vunpack.c.l.b16 %v6294
      %v7123 = vunpack.c.h.b16 %v6294
      %v7124 = vunpack.c.l.b16 %v6295
      %v7125 = vunpack.c.h.b16 %v6295
      %v7126 = vunpack.c.l.b16 %v6296
      %v7127 = vunpack.c.h.b16 %v6296
      %v7128 = vunpack.c.l.b16 %v6297
      %v7129 = vunpack.c.h.b16 %v6297
      %v7130 = vunpack.c.l.b16 %v6298
      %v7131 = vunpack.c.h.b16 %v6298
      %v7132 = vunpack.c.l.b16 %v6299
      %v7133 = vunpack.c.h.b16 %v6299
      %v7134 = vunpack.c.l.b16 %v6300
      %v7135 = vunpack.c.h.b16 %v6300
      %v7136 = vunpack.c.l.b16 %v6301
      %v7137 = vunpack.c.h.b16 %v6301
      %v7138 = vunpack.c.l.b16 %v6302
      %v7139 = vunpack.c.h.b16 %v6302
      %v7140 = vunpack.c.l.b16 %v6303
      %v7141 = vunpack.c.h.b16 %v6303
      %v7142 = vunpack.c.l.b16 %v6304
      %v7143 = vunpack.c.h.b16 %v6304
      %v7144 = vunpack.c.l.b16 %v6305
      %v7145 = vunpack.c.h.b16 %v6305
      %v7146 = vunpack.c.l.b16 %v6306
      %v7147 = vunpack.c.h.b16 %v6306
      %v7148 = vunpack.c.l.b16 %v6307
      %v7149 = vunpack.c.h.b16 %v6307
      %v7150 = vunpack.c.l.b16 %v6308
      %v7151 = vunpack.c.h.b16 %v6308
      %v7152 = vunpack.c.l.b16 %v6309
      %v7153 = vunpack.c.h.b16 %v6309
      %v7154 = vunpack.c.l.b16 %v6310
      %v7155 = vunpack.c.h.b16 %v6310
      %v7156 = vunpack.c.l.b16 %v6311
      %v7157 = vunpack.c.h.b16 %v6311
      %v7158 = vunpack.c.l.b16 %v6312
      %v7159 = vunpack.c.h.b16 %v6312
      %v7160 = vunpack.c.l.b16 %v6313
      %v7161 = vunpack.c.h.b16 %v6313
      %v7162 = vunpack.c.l.b16 %v6314
      %v7163 = vunpack.c.h.b16 %v6314
      %v7164 = vunpack.c.l.b16 %v6315
      %v7165 = vunpack.c.h.b16 %v6315
      %v7166 = vunpack.c.l.b16 %v6316
      %v7167 = vunpack.c.h.b16 %v6316
      %v7168 = vunpack.c.l.b16 %v6317
      %v7169 = vunpack.c.h.b16 %v6317
      %v7170 = vunpack.c.l.b16 %v6318
      %v7171 = vunpack.c.h.b16 %v6318
      %v7172 = vunpack.c.l.b16 %v6319
      %v7173 = vunpack.c.h.b16 %v6319
      %v7174 = vunpack.c.l.b16 %v6320
      %v7175 = vunpack.c.h.b16 %v6320
      %v7176 = vunpack.c.l.b16 %v6321
      %v7177 = vunpack.c.h.b16 %v6321
      %v7178 = vunpack.c.l.b16 %v6322
      %v7179 = vunpack.c.h.b16 %v6322
      %v7180 = vunpack.c.l.b16 %v6323
      %v7181 = vunpack.c.h.b16 %v6323
      %v7182 = vunpack.c.l.b16 %v6324
      %v7183 = vunpack.c.h.b16 %v6324
      %v7184 = vunpack.c.l.b16 %v6325
      %v7185 = vunpack.c.h.b16 %v6325
      %v7186 = vunpack.c.l.b16 %v6326
      %v7187 = vunpack.c.h.b16 %v6326
      %v7188 = vunpack.c.l.b16 %v6327
      %v7189 = vunpack.c.h.b16 %v6327
      %v7190 = vunpack.c.l.b16 %v6328
      %v7191 = vunpack.c.h.b16 %v6328
      %v7192 = vunpack.c.l.b16 %v6329
      %v7193 = vunpack.c.h.b16 %v6329
      %v7194 = vunpack.c.l.b16 %v6330
      %v7195 = vunpack.c.h.b16 %v6330
      %v7196 = vunpack.c.l.b16 %v6331
      %v7197 = vunpack.c.h.b16 %v6331
      %v7198 = vunpack.c.l.b16 %v6332
      %v7199 = vunpack.c.h.b16 %v6332
      %v7200 = vunpack.c.l.b16 %v6333
      %v7201 = vunpack.c.h.b16 %v6333
      %v7202 = vunpack.c.l.b16 %v6334
      %v7203 = vunpack.c.h.b16 %v6334
      %v7204 = vunpack.c.l.b16 %v6335
      %v7205 = vunpack.c.h.b16 %v6335
      %v7206 = vunpack.c.l.b16 %v6336
      %v7207 = vunpack.c.h.b16 %v6336
      %v7208 = vunpack.c.l.b16 %v6337
      %v7209 = vunpack.c.h.b16 %v6337
      %v7210 = vunpack.c.l.b16 %v6338
      %v7211 = vunpack.c.h.b16 %v6338
      %v7212 = vunpack.c.l.b16 %v6339
      %v7213 = vunpack.c.h.b16 %v6339
      %v7214 = vunpack.c.l.b16 %v6340
      %v7215 = vunpack.c.h.b16 %v6340
      %v7216 = vunpack.c.l.b16 %v6341
      %v7217 = vunpack.c.h.b16 %v6341
      %v7218 = vunpack.c.l.b16 %v6342
      %v7219 = vunpack.c.h.b16 %v6342
      %v7220 = vunpack.c.l.b16 %v6343
      %v7221 = vunpack.c.h.b16 %v6343
      %v7222 = vunpack.c.l.b16 %v6344
      %v7223 = vunpack.c.h.b16 %v6344
      %v7224 = vunpack.c.l.b16 %v6345
      %v7225 = vunpack.c.h.b16 %v6345
      %v7226 = vunpack.c.l.b16 %v6346
      %v7227 = vunpack.c.h.b16 %v6346
      %v7228 = vunpack.c.l.b16 %v6347
      %v7229 = vunpack.c.h.b16 %v6347
      %v7230 = vunpack.c.l.b16 %v6348
      %v7231 = vunpack.c.h.b16 %v6348
      %v7232 = vunpack.c.l.b16 %v6349
      %v7233 = vunpack.c.h.b16 %v6349
      %v7234 = vunpack.c.l.b16 %v6350
      %v7235 = vunpack.c.h.b16 %v6350
      %v7236 = vunpack.c.l.b16 %v6351
      %v7237 = vunpack.c.h.b16 %v6351
      %v7238 = vunpack.c.l.b16 %v6352
      %v7239 = vunpack.c.h.b16 %v6352
      %v7240 = vunpack.c.l.b16 %v6353
      %v7241 = vunpack.c.h.b16 %v6353
      %v7242 = vunpack.c.l.b16 %v6354
      %v7243 = vunpack.c.h.b16 %v6354
      %v7244 = vunpack.c.l.b16 %v6355
      %v7245 = vunpack.c.h.b16 %v6355
      %v7246 = vunpack.c.l.b16 %v6356
      %v7247 = vunpack.c.h.b16 %v6356
      %v7248 = vunpack.c.l.b16 %v6357
      %v7249 = vunpack.c.h.b16 %v6357
      %v7250 = vunpack.c.l.b16 %v6358
      %v7251 = vunpack.c.h.b16 %v6358
      %v7252 = vunpack.c.l.b16 %v6359
      %v7253 = vunpack.c.h.b16 %v6359
      %v7254 = vunpack.c.l.b16 %v6360
      %v7255 = vunpack.c.h.b16 %v6360
      %v7256 = vunpack.c.l.b16 %v6361
      %v7257 = vunpack.c.h.b16 %v6361
      %v7258 = vunpack.c.l.b16 %v6362
      %v7259 = vunpack.c.h.b16 %v6362
      %v7260 = vunpack.c.l.b16 %v6363
      %v7261 = vunpack.c.h.b16 %v6363
      %v7262 = vunpack.c.l.b16 %v6364
      %v7263 = vunpack.c.h.b16 %v6364
      %v7264 = vunpack.c.l.b16 %v6365
      %v7265 = vunpack.c.h.b16 %v6365
      %v7266 = vunpack.c.l.b16 %v6366
      %v7267 = vunpack.c.h.b16 %v6366
      %v7268 = vunpack.c.l.b16 %v6367
      %v7269 = vunpack.c.h.b16 %v6367
      %v7270 = vunpack.c.l.b16 %v6368
      %v7271 = vunpack.c.h.b16 %v6368
      %v7272 = vunpack.c.l.b16 %v6369
      %v7273 = vunpack.c.h.b16 %v6369
      %v7274 = vunpack.c.l.b16 %v6370
      %v7275 = vunpack.c.h.b16 %v6370
      %v7276 = vunpack.c.l.b16 %v6371
      %v7277 = vunpack.c.h.b16 %v6371
      %v7278 = vunpack.c.l.b16 %v6372
      %v7279 = vunpack.c.h.b16 %v6372
      %v7280 = vunpack.c.l.b16 %v6373
      %v7281 = vunpack.c.h.b16 %v6373
      %v7282 = vunpack.c.l.b16 %v6374
      %v7283 = vunpack.c.h.b16 %v6374
      %v7284 = vunpack.c.l.b16 %v6375
      %v7285 = vunpack.c.h.b16 %v6375
      %v7286 = vunpack.c.l.b16 %v6376
      %v7287 = vunpack.c.h.b16 %v6376
      %v7288 = vunpack.c.l.b16 %v6377
      %v7289 = vunpack.c.h.b16 %v6377
      %v7290 = vunpack.c.l.b16 %v6378
      %v7291 = vunpack.c.h.b16 %v6378
      %v7292 = vpack.c.b16 %v6782, %v6780
      %v7293 = vpack.c.b16 %v6783, %v6781
      %v7294 = vpack.c.b16 %v6786, %v6784
      %v7295 = vpack.c.b16 %v6787, %v6785
      %v7296 = vpack.c.b16 %v6790, %v6788
      %v7297 = vpack.c.b16 %v6791, %v6789
      %v7298 = vpack.c.b16 %v6794, %v6792
      %v7299 = vpack.c.b16 %v6795, %v6793
      %v7300 = vpack.c.b16 %v6798, %v6796
      %v7301 = vpack.c.b16 %v6799, %v6797
      %v7302 = vpack.c.b16 %v6802, %v6800
      %v7303 = vpack.c.b16 %v6803, %v6801
      %v7304 = vpack.c.b16 %v6806, %v6804
      %v7305 = vpack.c.b16 %v6807, %v6805
      %v7306 = vpack.c.b16 %v6810, %v6808
      %v7307 = vpack.c.b16 %v6811, %v6809
      %v7308 = vpack.c.b16 %v6814, %v6812
      %v7309 = vpack.c.b16 %v6815, %v6813
      %v7310 = vpack.c.b16 %v6818, %v6816
      %v7311 = vpack.c.b16 %v6819, %v6817
      %v7312 = vpack.c.b16 %v6822, %v6820
      %v7313 = vpack.c.b16 %v6823, %v6821
      %v7314 = vpack.c.b16 %v6826, %v6824
      %v7315 = vpack.c.b16 %v6827, %v6825
      %v7316 = vpack.c.b16 %v6830, %v6828
      %v7317 = vpack.c.b16 %v6831, %v6829
      %v7318 = vpack.c.b16 %v6834, %v6832
      %v7319 = vpack.c.b16 %v6835, %v6833
      %v7320 = vpack.c.b16 %v6838, %v6836
      %v7321 = vpack.c.b16 %v6839, %v6837
      %v7322 = vpack.c.b16 %v6842, %v6840
      %v7323 = vpack.c.b16 %v6843, %v6841
      %v7324 = vpack.c.b16 %v6846, %v6844
      %v7325 = vpack.c.b16 %v6847, %v6845
      %v7326 = vpack.c.b16 %v6850, %v6848
      %v7327 = vpack.c.b16 %v6851, %v6849
      %v7328 = vpack.c.b16 %v6854, %v6852
      %v7329 = vpack.c.b16 %v6855, %v6853
      %v7330 = vpack.c.b16 %v6858, %v6856
      %v7331 = vpack.c.b16 %v6859, %v6857
      %v7332 = vpack.c.b16 %v6862, %v6860
      %v7333 = vpack.c.b16 %v6863, %v6861
      %v7334 = vpack.c.b16 %v6866, %v6864
      %v7335 = vpack.c.b16 %v6867, %v6865
      %v7336 = vpack.c.b16 %v6870, %v6868
      %v7337 = vpack.c.b16 %v6871, %v6869
      %v7338 = vpack.c.b16 %v6874, %v6872
      %v7339 = vpack.c.b16 %v6875, %v6873
      %v7340 = vpack.c.b16 %v6878, %v6876
      %v7341 = vpack.c.b16 %v6879, %v6877
      %v7342 = vpack.c.b16 %v6882, %v6880
      %v7343 = vpack.c.b16 %v6883, %v6881
      %v7344 = vpack.c.b16 %v6886, %v6884
      %v7345 = vpack.c.b16 %v6887, %v6885
      %v7346 = vpack.c.b16 %v6890, %v6888
      %v7347 = vpack.c.b16 %v6891, %v6889
      %v7348 = vpack.c.b16 %v6894, %v6892
      %v7349 = vpack.c.b16 %v6895, %v6893
      %v7350 = vpack.c.b16 %v6898, %v6896
      %v7351 = vpack.c.b16 %v6899, %v6897
      %v7352 = vpack.c.b16 %v6902, %v6900
      %v7353 = vpack.c.b16 %v6903, %v6901
      %v7354 = vpack.c.b16 %v6906, %v6904
      %v7355 = vpack.c.b16 %v6907, %v6905
      %v7356 = vpack.c.b16 %v6910, %v6908
      %v7357 = vpack.c.b16 %v6911, %v6909
      %v7358 = vpack.c.b16 %v6914, %v6912
      %v7359 = vpack.c.b16 %v6915, %v6913
      %v7360 = vpack.c.b16 %v6918, %v6916
      %v7361 = vpack.c.b16 %v6919, %v6917
      %v7362 = vpack.c.b16 %v6922, %v6920
      %v7363 = vpack.c.b16 %v6923, %v6921
      %v7364 = vpack.c.b16 %v6926, %v6924
      %v7365 = vpack.c.b16 %v6927, %v6925
      %v7366 = vpack.c.b16 %v6930, %v6928
      %v7367 = vpack.c.b16 %v6931, %v6929
      %v7368 = vpack.c.b16 %v6934, %v6932
      %v7369 = vpack.c.b16 %v6935, %v6933
      %v7370 = vpack.c.b16 %v6938, %v6936
      %v7371 = vpack.c.b16 %v6939, %v6937
      %v7372 = vpack.c.b16 %v6942, %v6940
      %v7373 = vpack.c.b16 %v6943, %v6941
      %v7374 = vpack.c.b16 %v6946, %v6944
      %v7375 = vpack.c.b16 %v6947, %v6945
      %v7376 = vpack.c.b16 %v6950, %v6948
      %v7377 = vpack.c.b16 %v6951, %v6949
      %v7378 = vpack.c.b16 %v6954, %v6952
      %v7379 = vpack.c.b16 %v6955, %v6953
      %v7380 = vpack.c.b16 %v6958, %v6956
      %v7381 = vpack.c.b16 %v6959, %v6957
      %v7382 = vpack.c.b16 %v6962, %v6960
      %v7383 = vpack.c.b16 %v6963, %v6961
      %v7384 = vpack.c.b16 %v6966, %v6964
      %v7385 = vpack.c.b16 %v6967, %v6965
      %v7386 = vpack.c.b16 %v6970, %v6968
      %v7387 = vpack.c.b16 %v6971, %v6969
      %v7388 = vpack.c.b16 %v6974, %v6972
      %v7389 = vpack.c.b16 %v6975, %v6973
      %v7390 = vpack.c.b16 %v6978, %v6976
      %v7391 = vpack.c.b16 %v6979, %v6977
      %v7392 = vpack.c.b16 %v6982, %v6980
      %v7393 = vpack.c.b16 %v6983, %v6981
      %v7394 = vpack.c.b16 %v6986, %v6984
      %v7395 = vpack.c.b16 %v6987, %v6985
      %v7396 = vpack.c.b16 %v6990, %v6988
      %v7397 = vpack.c.b16 %v6991, %v6989
      %v7398 = vpack.c.b16 %v6994, %v6992
      %v7399 = vpack.c.b16 %v6995, %v6993
      %v7400 = vpack.c.b16 %v6998, %v6996
      %v7401 = vpack.c.b16 %v6999, %v6997
      %v7402 = vpack.c.b16 %v7002, %v7000
      %v7403 = vpack.c.b16 %v7003, %v7001
      %v7404 = vpack.c.b16 %v7006, %v7004
      %v7405 = vpack.c.b16 %v7007, %v7005
      %v7406 = vpack.c.b16 %v7010, %v7008
      %v7407 = vpack.c.b16 %v7011, %v7009
      %v7408 = vpack.c.b16 %v7014, %v7012
      %v7409 = vpack.c.b16 %v7015, %v7013
      %v7410 = vpack.c.b16 %v7018, %v7016
      %v7411 = vpack.c.b16 %v7019, %v7017
      %v7412 = vpack.c.b16 %v7022, %v7020
      %v7413 = vpack.c.b16 %v7023, %v7021
      %v7414 = vpack.c.b16 %v7026, %v7024
      %v7415 = vpack.c.b16 %v7027, %v7025
      %v7416 = vpack.c.b16 %v7030, %v7028
      %v7417 = vpack.c.b16 %v7031, %v7029
      %v7418 = vpack.c.b16 %v7034, %v7032
      %v7419 = vpack.c.b16 %v7035, %v7033
      %v7420 = vpack.c.b16 %v7038, %v7036
      %v7421 = vpack.c.b16 %v7039, %v7037
      %v7422 = vpack.c.b16 %v7042, %v7040
      %v7423 = vpack.c.b16 %v7043, %v7041
      %v7424 = vpack.c.b16 %v7046, %v7044
      %v7425 = vpack.c.b16 %v7047, %v7045
      %v7426 = vpack.c.b16 %v7050, %v7048
      %v7427 = vpack.c.b16 %v7051, %v7049
      %v7428 = vpack.c.b16 %v7054, %v7052
      %v7429 = vpack.c.b16 %v7055, %v7053
      %v7430 = vpack.c.b16 %v7058, %v7056
      %v7431 = vpack.c.b16 %v7059, %v7057
      %v7432 = vpack.c.b16 %v7062, %v7060
      %v7433 = vpack.c.b16 %v7063, %v7061
      %v7434 = vpack.c.b16 %v7066, %v7064
      %v7435 = vpack.c.b16 %v7067, %v7065
      %v7436 = vpack.c.b16 %v7070, %v7068
      %v7437 = vpack.c.b16 %v7071, %v7069
      %v7438 = vpack.c.b16 %v7074, %v7072
      %v7439 = vpack.c.b16 %v7075, %v7073
      %v7440 = vpack.c.b16 %v7078, %v7076
      %v7441 = vpack.c.b16 %v7079, %v7077
      %v7442 = vpack.c.b16 %v7082, %v7080
      %v7443 = vpack.c.b16 %v7083, %v7081
      %v7444 = vpack.c.b16 %v7086, %v7084
      %v7445 = vpack.c.b16 %v7087, %v7085
      %v7446 = vpack.c.b16 %v7090, %v7088
      %v7447 = vpack.c.b16 %v7091, %v7089
      %v7448 = vpack.c.b16 %v7094, %v7092
      %v7449 = vpack.c.b16 %v7095, %v7093
      %v7450 = vpack.c.b16 %v7098, %v7096
      %v7451 = vpack.c.b16 %v7099, %v7097
      %v7452 = vpack.c.b16 %v7102, %v7100
      %v7453 = vpack.c.b16 %v7103, %v7101
      %v7454 = vpack.c.b16 %v7106, %v7104
      %v7455 = vpack.c.b16 %v7107, %v7105
      %v7456 = vpack.c.b16 %v7110, %v7108
      %v7457 = vpack.c.b16 %v7111, %v7109
      %v7458 = vpack.c.b16 %v7114, %v7112
      %v7459 = vpack.c.b16 %v7115, %v7113
      %v7460 = vpack.c.b16 %v7118, %v7116
      %v7461 = vpack.c.b16 %v7119, %v7117
      %v7462 = vpack.c.b16 %v7122, %v7120
      %v7463 = vpack.c.b16 %v7123, %v7121
      %v7464 = vpack.c.b16 %v7126, %v7124
      %v7465 = vpack.c.b16 %v7127, %v7125
      %v7466 = vpack.c.b16 %v7130, %v7128
      %v7467 = vpack.c.b16 %v7131, %v7129
      %v7468 = vpack.c.b16 %v7134, %v7132
      %v7469 = vpack.c.b16 %v7135, %v7133
      %v7470 = vpack.c.b16 %v7138, %v7136
      %v7471 = vpack.c.b16 %v7139, %v7137
      %v7472 = vpack.c.b16 %v7142, %v7140
      %v7473 = vpack.c.b16 %v7143, %v7141
      %v7474 = vpack.c.b16 %v7146, %v7144
      %v7475 = vpack.c.b16 %v7147, %v7145
      %v7476 = vpack.c.b16 %v7150, %v7148
      %v7477 = vpack.c.b16 %v7151, %v7149
      %v7478 = vpack.c.b16 %v7154, %v7152
      %v7479 = vpack.c.b16 %v7155, %v7153
      %v7480 = vpack.c.b16 %v7158, %v7156
      %v7481 = vpack.c.b16 %v7159, %v7157
      %v7482 = vpack.c.b16 %v7162, %v7160
      %v7483 = vpack.c.b16 %v7163, %v7161
      %v7484 = vpack.c.b16 %v7166, %v7164
      %v7485 = vpack.c.b16 %v7167, %v7165
      %v7486 = vpack.c.b16 %v7170, %v7168
      %v7487 = vpack.c.b16 %v7171, %v7169
      %v7488 = vpack.c.b16 %v7174, %v7172
      %v7489 = vpack.c.b16 %v7175, %v7173
      %v7490 = vpack.c.b16 %v7178, %v7176
      %v7491 = vpack.c.b16 %v7179, %v7177
      %v7492 = vpack.c.b16 %v7182, %v7180
      %v7493 = vpack.c.b16 %v7183, %v7181
      %v7494 = vpack.c.b16 %v7186, %v7184
      %v7495 = vpack.c.b16 %v7187, %v7185
      %v7496 = vpack.c.b16 %v7190, %v7188
      %v7497 = vpack.c.b16 %v7191, %v7189
      %v7498 = vpack.c.b16 %v7194, %v7192
      %v7499 = vpack.c.b16 %v7195, %v7193
      %v7500 = vpack.c.b16 %v7198, %v7196
      %v7501 = vpack.c.b16 %v7199, %v7197
      %v7502 = vpack.c.b16 %v7202, %v7200
      %v7503 = vpack.c.b16 %v7203, %v7201
      %v7504 = vpack.c.b16 %v7206, %v7204
      %v7505 = vpack.c.b16 %v7207, %v7205
      %v7506 = vpack.c.b16 %v7210, %v7208
      %v7507 = vpack.c.b16 %v7211, %v7209
      %v7508 = vpack.c.b16 %v7214, %v7212
      %v7509 = vpack.c.b16 %v7215, %v7213
      %v7510 = vpack.c.b16 %v7218, %v7216
      %v7511 = vpack.c.b16 %v7219, %v7217
      %v7512 = vpack.c.b16 %v7222, %v7220
      %v7513 = vpack.c.b16 %v7223, %v7221
      %v7514 = vpack.c.b16 %v7226, %v7224
      %v7515 = vpack.c.b16 %v7227, %v7225
      %v7516 = vpack.c.b16 %v7230, %v7228
      %v7517 = vpack.c.b16 %v7231, %v7229
      %v7518 = vpack.c.b16 %v7234, %v7232
      %v7519 = vpack.c.b16 %v7235, %v7233
      %v7520 = vpack.c.b16 %v7238, %v7236
      %v7521 = vpack.c.b16 %v7239, %v7237
      %v7522 = vpack.c.b16 %v7242, %v7240
      %v7523 = vpack.c.b16 %v7243, %v7241
      %v7524 = vpack.c.b16 %v7246, %v7244
      %v7525 = vpack.c.b16 %v7247, %v7245
      %v7526 = vpack.c.b16 %v7250, %v7248
      %v7527 = vpack.c.b16 %v7251, %v7249
      %v7528 = vpack.c.b16 %v7254, %v7252
      %v7529 = vpack.c.b16 %v7255, %v7253
      %v7530 = vpack.c.b16 %v7258, %v7256
      %v7531 = vpack.c.b16 %v7259, %v7257
      %v7532 = vpack.c.b16 %v7262, %v7260
      %v7533 = vpack.c.b16 %v7263, %v7261
      %v7534 = vpack.c.b16 %v7266, %v7264
      %v7535 = vpack.c.b16 %v7267, %v7265
      %v7536 = vpack.c.b16 %v7270, %v7268
      %v7537 = vpack.c.b16 %v7271, %v7269
      %v7538 = vpack.c.b16 %v7274, %v7272
      %v7539 = vpack.c.b16 %v7275, %v7273
      %v7540 = vpack.c.b16 %v7278, %v7276
      %v7541 = vpack.c.b16 %v7279, %v7277
      %v7542 = vpack.c.b16 %v7282, %v7280
      %v7543 = vpack.c.b16 %v7283, %v7281
      %v7544 = vpack.c.b16 %v7286, %v7284
      %v7545 = vpack.c.b16 %v7287, %v7285
      %v7546 = vpack.c.b16 %v7290, %v7288
      %v7547 = vpack.c.b16 %v7291, %v7289
      %7804 = vmatprep.subr.bf16.mxu0 %v7293
      %7805 = vmatpush1.bf16.msra.mxu0 %v7292
      %7806 = vmatprep.subr.bf16.mxu0 %v7295
      %7807 = vmatpush1.bf16.msra.mxu0 %v7294
      %7808 = vmatprep.subr.bf16.mxu0 %v7297
      %7809 = vmatpush1.bf16.msra.mxu0 %v7296
      %7810 = vmatprep.subr.bf16.mxu0 %v7299
      %7811 = vmatpush1.bf16.msra.mxu0 %v7298
      %7812 = vmatprep.subr.bf16.mxu0 %v7301
      %7813 = vmatpush1.bf16.msra.mxu0 %v7300
      %7814 = vmatprep.subr.bf16.mxu0 %v7303
      %7815 = vmatpush1.bf16.msra.mxu0 %v7302
      %7816 = vmatprep.subr.bf16.mxu0 %v7305
      %7817 = vmatpush1.bf16.msra.mxu0 %v7304
      %7818 = vmatprep.subr.bf16.mxu0 %v7307
      %7819 = vmatpush1.bf16.msra.mxu0 %v7306
      %7820 = vmatprep.subr.bf16.mxu0 %v7309
      %7821 = vmatpush1.bf16.msra.mxu0 %v7308
      %7822 = vmatprep.subr.bf16.mxu0 %v7311
      %7823 = vmatpush1.bf16.msra.mxu0 %v7310
      %7824 = vmatprep.subr.bf16.mxu0 %v7313
      %7825 = vmatpush1.bf16.msra.mxu0 %v7312
      %7826 = vmatprep.subr.bf16.mxu0 %v7315
      %7827 = vmatpush1.bf16.msra.mxu0 %v7314
      %7828 = vmatprep.subr.bf16.mxu0 %v7317
      %7829 = vmatpush1.bf16.msra.mxu0 %v7316
      %7830 = vmatprep.subr.bf16.mxu0 %v7319
      %7831 = vmatpush1.bf16.msra.mxu0 %v7318
      %7832 = vmatprep.subr.bf16.mxu0 %v7321
      %7833 = vmatpush1.bf16.msra.mxu0 %v7320
      %7834 = vmatprep.subr.bf16.mxu0 %v7323
      %7835 = vmatpush1.bf16.msra.mxu0 %v7322
      %7836 = vmatprep.mubr.bf16.mxu0 %v6486
      %7837 = vmatmul.mubr.bf16.gmra.mrb[0].mxu0 %v6481
      %v7838 = vpop.f32.mrb[0].mxu0
      %v7839 = vadd.f32 %v6517, %v7838
      %v7840 = vpop.f32.mrb[0].mxu0
      %v7841 = vadd.f32 %v6521, %v7840
      %v7842 = vpop.f32.mrb[0].mxu0
      %v7843 = vpop.f32.mrb[0].mxu0
      %7844 = vdwg.mxu0
      %7845 = vmatprep.subr.bf16.mxu0 %v7325
      %7846 = vmatpush1.bf16.msra.mxu0 %v7324
      %7847 = vmatprep.subr.bf16.mxu0 %v7327
      %7848 = vmatpush1.bf16.msra.mxu0 %v7326
      %7849 = vmatprep.subr.bf16.mxu0 %v7329
      %7850 = vmatpush1.bf16.msra.mxu0 %v7328
      %7851 = vmatprep.subr.bf16.mxu0 %v7331
      %7852 = vmatpush1.bf16.msra.mxu0 %v7330
      %7853 = vmatprep.subr.bf16.mxu0 %v7333
      %7854 = vmatpush1.bf16.msra.mxu0 %v7332
      %7855 = vmatprep.subr.bf16.mxu0 %v7335
      %7856 = vmatpush1.bf16.msra.mxu0 %v7334
      %7857 = vmatprep.subr.bf16.mxu0 %v7337
      %7858 = vmatpush1.bf16.msra.mxu0 %v7336
      %7859 = vmatprep.subr.bf16.mxu0 %v7339
      %7860 = vmatpush1.bf16.msra.mxu0 %v7338
      %7861 = vmatprep.subr.bf16.mxu0 %v7341
      %7862 = vmatpush1.bf16.msra.mxu0 %v7340
      %7863 = vmatprep.subr.bf16.mxu0 %v7343
      %7864 = vmatpush1.bf16.msra.mxu0 %v7342
      %7865 = vmatprep.subr.bf16.mxu0 %v7345
      %7866 = vmatpush1.bf16.msra.mxu0 %v7344
      %7867 = vmatprep.subr.bf16.mxu0 %v7347
      %7868 = vmatpush1.bf16.msra.mxu0 %v7346
      %7869 = vmatprep.subr.bf16.mxu0 %v7349
      %7870 = vmatpush1.bf16.msra.mxu0 %v7348
      %7871 = vmatprep.subr.bf16.mxu0 %v7351
      %7872 = vmatpush1.bf16.msra.mxu0 %v7350
      %7873 = vmatprep.subr.bf16.mxu0 %v7353
      %7874 = vmatpush1.bf16.msra.mxu0 %v7352
      %7875 = vmatprep.subr.bf16.mxu0 %v7355
      %7876 = vmatpush1.bf16.msra.mxu0 %v7354
      %7877 = vmatprep.mubr.bf16.mxu0 %v6490
      %7878 = vmatmul.mubr.bf16.gmra.mrb[0].mxu0 %v6488
      %v7879 = vpop.f32.mrb[0].mxu0
      %v7880 = vadd.f32 %v7839, %v7879
      %v7881 = vpop.f32.mrb[0].mxu0
      %v7882 = vadd.f32 %v7841, %v7881
      %v7883 = vpop.f32.mrb[0].mxu0
      %v7884 = vpop.f32.mrb[0].mxu0
      %7885 = vdwg.mxu0
      %7886 = vmatprep.subr.bf16.mxu0 %v7357
      %7887 = vmatpush1.bf16.msra.mxu0 %v7356
      %7888 = vmatprep.subr.bf16.mxu0 %v7359
      %7889 = vmatpush1.bf16.msra.mxu0 %v7358
      %7890 = vmatprep.subr.bf16.mxu0 %v7361
      %7891 = vmatpush1.bf16.msra.mxu0 %v7360
      %7892 = vmatprep.subr.bf16.mxu0 %v7363
      %7893 = vmatpush1.bf16.msra.mxu0 %v7362
      %7894 = vmatprep.subr.bf16.mxu0 %v7365
      %7895 = vmatpush1.bf16.msra.mxu0 %v7364
      %7896 = vmatprep.subr.bf16.mxu0 %v7367
      %7897 = vmatpush1.bf16.msra.mxu0 %v7366
      %7898 = vmatprep.subr.bf16.mxu0 %v7369
      %7899 = vmatpush1.bf16.msra.mxu0 %v7368
      %7900 = vmatprep.subr.bf16.mxu0 %v7371
      %7901 = vmatpush1.bf16.msra.mxu0 %v7370
      %7902 = vmatprep.subr.bf16.mxu0 %v7373
      %7903 = vmatpush1.bf16.msra.mxu0 %v7372
      %7904 = vmatprep.subr.bf16.mxu0 %v7375
      %7905 = vmatpush1.bf16.msra.mxu0 %v7374
      %7906 = vmatprep.subr.bf16.mxu0 %v7377
      %7907 = vmatpush1.bf16.msra.mxu0 %v7376
      %7908 = vmatprep.subr.bf16.mxu0 %v7379
      %7909 = vmatpush1.bf16.msra.mxu0 %v7378
      %7910 = vmatprep.subr.bf16.mxu0 %v7381
      %7911 = vmatpush1.bf16.msra.mxu0 %v7380
      %7912 = vmatprep.subr.bf16.mxu0 %v7383
      %7913 = vmatpush1.bf16.msra.mxu0 %v7382
      %7914 = vmatprep.subr.bf16.mxu0 %v7385
      %7915 = vmatpush1.bf16.msra.mxu0 %v7384
      %7916 = vmatprep.subr.bf16.mxu0 %v7387
      %7917 = vmatpush1.bf16.msra.mxu0 %v7386
      %7918 = vmatprep.mubr.bf16.mxu0 %v6493
      %7919 = vmatmul.mubr.bf16.gmra.mrb[0].mxu0 %v6482
      %v7920 = vpop.f32.mrb[0].mxu0
      %v7921 = vadd.f32 %v7880, %v7920
      %v7922 = vpop.f32.mrb[0].mxu0
      %v7923 = vadd.f32 %v7882, %v7922
      %v7924 = vpop.f32.mrb[0].mxu0
      %v7925 = vpop.f32.mrb[0].mxu0
      %7926 = vdwg.mxu0
      %7927 = vmatprep.subr.bf16.mxu0 %v7389
      %7928 = vmatpush1.bf16.msra.mxu0 %v7388
      %7929 = vmatprep.subr.bf16.mxu0 %v7391
      %7930 = vmatpush1.bf16.msra.mxu0 %v7390
      %7931 = vmatprep.subr.bf16.mxu0 %v7393
      %7932 = vmatpush1.bf16.msra.mxu0 %v7392
      %7933 = vmatprep.subr.bf16.mxu0 %v7395
      %7934 = vmatpush1.bf16.msra.mxu0 %v7394
      %7935 = vmatprep.subr.bf16.mxu0 %v7397
      %7936 = vmatpush1.bf16.msra.mxu0 %v7396
      %7937 = vmatprep.subr.bf16.mxu0 %v7399
      %7938 = vmatpush1.bf16.msra.mxu0 %v7398
      %7939 = vmatprep.subr.bf16.mxu0 %v7401
      %7940 = vmatpush1.bf16.msra.mxu0 %v7400
      %7941 = vmatprep.subr.bf16.mxu0 %v7403
      %7942 = vmatpush1.bf16.msra.mxu0 %v7402
      %7943 = vmatprep.subr.bf16.mxu0 %v7405
      %7944 = vmatpush1.bf16.msra.mxu0 %v7404
      %7945 = vmatprep.subr.bf16.mxu0 %v7407
      %7946 = vmatpush1.bf16.msra.mxu0 %v7406
      %7947 = vmatprep.subr.bf16.mxu0 %v7409
      %7948 = vmatpush1.bf16.msra.mxu0 %v7408
      %7949 = vmatprep.subr.bf16.mxu0 %v7411
      %7950 = vmatpush1.bf16.msra.mxu0 %v7410
      %7951 = vmatprep.subr.bf16.mxu0 %v7413
      %7952 = vmatpush1.bf16.msra.mxu0 %v7412
      %7953 = vmatprep.subr.bf16.mxu0 %v7415
      %7954 = vmatpush1.bf16.msra.mxu0 %v7414
      %7955 = vmatprep.subr.bf16.mxu0 %v7417
      %7956 = vmatpush1.bf16.msra.mxu0 %v7416
      %7957 = vmatprep.subr.bf16.mxu0 %v7419
      %7958 = vmatpush1.bf16.msra.mxu0 %v7418
      %7959 = vmatprep.mubr.bf16.mxu0 %v6497
      %7960 = vmatmul.mubr.bf16.gmra.mrb[0].mxu0 %v6495
      %v7961 = vpop.f32.mrb[0].mxu0
      %v7962 = vadd.f32 %v7921, %v7961
      %v7963 = vpop.f32.mrb[0].mxu0
      %v7964 = vadd.f32 %v7923, %v7963
      %v7965 = vpop.f32.mrb[0].mxu0
      %v7966 = vpop.f32.mrb[0].mxu0
      %7967 = vdwg.mxu0
      %7968 = vmatprep.subr.bf16.mxu0 %v7421
      %7969 = vmatpush1.bf16.msra.mxu0 %v7420
      %7970 = vmatprep.subr.bf16.mxu0 %v7423
      %7971 = vmatpush1.bf16.msra.mxu0 %v7422
      %7972 = vmatprep.subr.bf16.mxu0 %v7425
      %7973 = vmatpush1.bf16.msra.mxu0 %v7424
      %7974 = vmatprep.subr.bf16.mxu0 %v7427
      %7975 = vmatpush1.bf16.msra.mxu0 %v7426
      %7976 = vmatprep.subr.bf16.mxu0 %v7429
      %7977 = vmatpush1.bf16.msra.mxu0 %v7428
      %7978 = vmatprep.subr.bf16.mxu0 %v7431
      %7979 = vmatpush1.bf16.msra.mxu0 %v7430
      %7980 = vmatprep.subr.bf16.mxu0 %v7433
      %7981 = vmatpush1.bf16.msra.mxu0 %v7432
      %7982 = vmatprep.subr.bf16.mxu0 %v7435
      %7983 = vmatpush1.bf16.msra.mxu0 %v7434
      %7984 = vmatprep.subr.bf16.mxu0 %v7437
      %7985 = vmatpush1.bf16.msra.mxu0 %v7436
      %7986 = vmatprep.subr.bf16.mxu0 %v7439
      %7987 = vmatpush1.bf16.msra.mxu0 %v7438
      %7988 = vmatprep.subr.bf16.mxu0 %v7441
      %7989 = vmatpush1.bf16.msra.mxu0 %v7440
      %7990 = vmatprep.subr.bf16.mxu0 %v7443
      %7991 = vmatpush1.bf16.msra.mxu0 %v7442
      %7992 = vmatprep.subr.bf16.mxu0 %v7445
      %7993 = vmatpush1.bf16.msra.mxu0 %v7444
      %7994 = vmatprep.subr.bf16.mxu0 %v7447
      %7995 = vmatpush1.bf16.msra.mxu0 %v7446
      %7996 = vmatprep.subr.bf16.mxu0 %v7449
      %7997 = vmatpush1.bf16.msra.mxu0 %v7448
      %7998 = vmatprep.subr.bf16.mxu0 %v7451
      %7999 = vmatpush1.bf16.msra.mxu0 %v7450
      %8000 = vmatprep.mubr.bf16.mxu0 %v6500
      %8001 = vmatmul.mubr.bf16.gmra.mrb[0].mxu0 %v6483
      %v8002 = vpop.f32.mrb[0].mxu0
      %v8003 = vadd.f32 %v7962, %v8002
      %v8004 = vpop.f32.mrb[0].mxu0
      %v8005 = vadd.f32 %v7964, %v8004
      %v8006 = vpop.f32.mrb[0].mxu0
      %v8007 = vpop.f32.mrb[0].mxu0
      %8008 = vdwg.mxu0
      %8009 = vmatprep.subr.bf16.mxu0 %v7453
      %8010 = vmatpush1.bf16.msra.mxu0 %v7452
      %8011 = vmatprep.subr.bf16.mxu0 %v7455
      %8012 = vmatpush1.bf16.msra.mxu0 %v7454
      %8013 = vmatprep.subr.bf16.mxu0 %v7457
      %8014 = vmatpush1.bf16.msra.mxu0 %v7456
      %8015 = vmatprep.subr.bf16.mxu0 %v7459
      %8016 = vmatpush1.bf16.msra.mxu0 %v7458
      %8017 = vmatprep.subr.bf16.mxu0 %v7461
      %8018 = vmatpush1.bf16.msra.mxu0 %v7460
      %8019 = vmatprep.subr.bf16.mxu0 %v7463
      %8020 = vmatpush1.bf16.msra.mxu0 %v7462
      %8021 = vmatprep.subr.bf16.mxu0 %v7465
      %8022 = vmatpush1.bf16.msra.mxu0 %v7464
      %8023 = vmatprep.subr.bf16.mxu0 %v7467
      %8024 = vmatpush1.bf16.msra.mxu0 %v7466
      %8025 = vmatprep.subr.bf16.mxu0 %v7469
      %8026 = vmatpush1.bf16.msra.mxu0 %v7468
      %8027 = vmatprep.subr.bf16.mxu0 %v7471
      %8028 = vmatpush1.bf16.msra.mxu0 %v7470
      %8029 = vmatprep.subr.bf16.mxu0 %v7473
      %8030 = vmatpush1.bf16.msra.mxu0 %v7472
      %8031 = vmatprep.subr.bf16.mxu0 %v7475
      %8032 = vmatpush1.bf16.msra.mxu0 %v7474
      %8033 = vmatprep.subr.bf16.mxu0 %v7477
      %8034 = vmatpush1.bf16.msra.mxu0 %v7476
      %8035 = vmatprep.subr.bf16.mxu0 %v7479
      %8036 = vmatpush1.bf16.msra.mxu0 %v7478
      %8037 = vmatprep.subr.bf16.mxu0 %v7481
      %8038 = vmatpush1.bf16.msra.mxu0 %v7480
      %8039 = vmatprep.subr.bf16.mxu0 %v7483
      %8040 = vmatpush1.bf16.msra.mxu0 %v7482
      %8041 = vmatprep.mubr.bf16.mxu0 %v6504
      %8042 = vmatmul.mubr.bf16.gmra.mrb[0].mxu0 %v6502
      %v8043 = vpop.f32.mrb[0].mxu0
      %v8044 = vadd.f32 %v8003, %v8043
      %v8045 = vpop.f32.mrb[0].mxu0
      %v8046 = vadd.f32 %v8005, %v8045
      %v8047 = vpop.f32.mrb[0].mxu0
      %v8048 = vpop.f32.mrb[0].mxu0
      %8049 = vdwg.mxu0
      %8050 = vmatprep.subr.bf16.mxu0 %v7485
      %8051 = vmatpush1.bf16.msra.mxu0 %v7484
      %8052 = vmatprep.subr.bf16.mxu0 %v7487
      %8053 = vmatpush1.bf16.msra.mxu0 %v7486
      %8054 = vmatprep.subr.bf16.mxu0 %v7489
      %8055 = vmatpush1.bf16.msra.mxu0 %v7488
      %8056 = vmatprep.subr.bf16.mxu0 %v7491
      %8057 = vmatpush1.bf16.msra.mxu0 %v7490
      %8058 = vmatprep.subr.bf16.mxu0 %v7493
      %8059 = vmatpush1.bf16.msra.mxu0 %v7492
      %8060 = vmatprep.subr.bf16.mxu0 %v7495
      %8061 = vmatpush1.bf16.msra.mxu0 %v7494
      %8062 = vmatprep.subr.bf16.mxu0 %v7497
      %8063 = vmatpush1.bf16.msra.mxu0 %v7496
      %8064 = vmatprep.subr.bf16.mxu0 %v7499
      %8065 = vmatpush1.bf16.msra.mxu0 %v7498
      %8066 = vmatprep.subr.bf16.mxu0 %v7501
      %8067 = vmatpush1.bf16.msra.mxu0 %v7500
      %8068 = vmatprep.subr.bf16.mxu0 %v7503
      %8069 = vmatpush1.bf16.msra.mxu0 %v7502
      %8070 = vmatprep.subr.bf16.mxu0 %v7505
      %8071 = vmatpush1.bf16.msra.mxu0 %v7504
      %8072 = vmatprep.subr.bf16.mxu0 %v7507
      %8073 = vmatpush1.bf16.msra.mxu0 %v7506
      %8074 = vmatprep.subr.bf16.mxu0 %v7509
      %8075 = vmatpush1.bf16.msra.mxu0 %v7508
      %8076 = vmatprep.subr.bf16.mxu0 %v7511
      %8077 = vmatpush1.bf16.msra.mxu0 %v7510
      %8078 = vmatprep.subr.bf16.mxu0 %v7513
      %8079 = vmatpush1.bf16.msra.mxu0 %v7512
      %8080 = vmatprep.subr.bf16.mxu0 %v7515
      %8081 = vmatpush1.bf16.msra.mxu0 %v7514
      %8082 = vmatprep.mubr.bf16.mxu0 %v6507
      %8083 = vmatmul.mubr.bf16.gmra.mrb[0].mxu0 %v6484
      %v8084 = vpop.f32.mrb[0].mxu0
      %v8085 = vadd.f32 %v8044, %v8084
      %v8086 = vpop.f32.mrb[0].mxu0
      %v8087 = vadd.f32 %v8046, %v8086
      %v8088 = vpop.f32.mrb[0].mxu0
      %v8089 = vpop.f32.mrb[0].mxu0
      %8090 = vdwg.mxu0
      %8091 = vmatprep.subr.bf16.mxu0 %v7517
      %8092 = vmatpush1.bf16.msra.mxu0 %v7516
      %8093 = vmatprep.subr.bf16.mxu0 %v7519
      %8094 = vmatpush1.bf16.msra.mxu0 %v7518
      %8095 = vmatprep.subr.bf16.mxu0 %v7521
      %8096 = vmatpush1.bf16.msra.mxu0 %v7520
      %8097 = vmatprep.subr.bf16.mxu0 %v7523
      %8098 = vmatpush1.bf16.msra.mxu0 %v7522
      %8099 = vmatprep.subr.bf16.mxu0 %v7525
      %8100 = vmatpush1.bf16.msra.mxu0 %v7524
      %8101 = vmatprep.subr.bf16.mxu0 %v7527
      %8102 = vmatpush1.bf16.msra.mxu0 %v7526
      %8103 = vmatprep.subr.bf16.mxu0 %v7529
      %8104 = vmatpush1.bf16.msra.mxu0 %v7528
      %8105 = vmatprep.subr.bf16.mxu0 %v7531
      %8106 = vmatpush1.bf16.msra.mxu0 %v7530
      %8107 = vmatprep.subr.bf16.mxu0 %v7533
      %8108 = vmatpush1.bf16.msra.mxu0 %v7532
      %8109 = vmatprep.subr.bf16.mxu0 %v7535
      %8110 = vmatpush1.bf16.msra.mxu0 %v7534
      %8111 = vmatprep.subr.bf16.mxu0 %v7537
      %8112 = vmatpush1.bf16.msra.mxu0 %v7536
      %8113 = vmatprep.subr.bf16.mxu0 %v7539
      %8114 = vmatpush1.bf16.msra.mxu0 %v7538
      %8115 = vmatprep.subr.bf16.mxu0 %v7541
      %8116 = vmatpush1.bf16.msra.mxu0 %v7540
      %8117 = vmatprep.subr.bf16.mxu0 %v7543
      %8118 = vmatpush1.bf16.msra.mxu0 %v7542
      %8119 = vmatprep.subr.bf16.mxu0 %v7545
      %8120 = vmatpush1.bf16.msra.mxu0 %v7544
      %8121 = vmatprep.subr.bf16.mxu0 %v7547
      %8122 = vmatpush1.bf16.msra.mxu0 %v7546
      %8123 = vmatprep.mubr.bf16.mxu0 %v6511
      %8124 = vmatmul.mubr.bf16.gmra.mrb[0].mxu0 %v6509
      %v8125 = vpop.f32.mrb[0].mxu0
      %v8126 = vadd.f32 %v8085, %v8125
      %v8127 = vpop.f32.mrb[0].mxu0
      %v8128 = vadd.f32 %v8087, %v8127
      %v8129 = vpop.f32.mrb[0].mxu0
      %v8130 = vpop.f32.mrb[0].mxu0
      %8131 = vdwg.mxu0
      %vm8132 = vcmp.ge.f32.partialorder %v8126, 0.0
      %vm8133 = vcmp.ge.f32.partialorder %v8128, 0.0
      %v8134 = vmul.f32 %v8126, 0.1
      %v8135 = vmul.f32 %v8128, 0.1
      %v8136 = vsel %vm8132, %v8126, %v8134
      %v8137 = vsel %vm8133, %v8128, %v8135
      %v8140 = vcombine.low %v8136, %v8137
      %8142 = vst [vmem:[%s496] sm:$0xff] %v8140
      %p8143 = scmp.lt.s32.totalorder %s26, 1
      %s8144 = scalar_select %p8143, %s26, 1
      %s8145 = smul.addr %s8144, 2
      %s8146 = smul.addr %s8145, 4
      %s8147 = scalar_lea.vmem %s15, %s8146
      // Predicated region
      $region81: #{cnn_backbone_forward.1} parent=79 // pred_check
        %p8148 = pneg %p364
      $region82: #{cnn_backbone_forward.1} parent=79 // pred_check_branch
        %8150 = sbr.rel (%p8148) target = $region84
      $region83: #{cnn_backbone_forward.1} parent=79 // pred_region
        _
      $region84: #{cnn_backbone_forward.1} parent=79 // pred_fallthru
        _
    $region80: #{cnn_backbone_forward.1} parent=5 // pred_fallthru
      _
    %p8151 = scmp.le.s32.totalorder 2, %s21
    // Predicated region
    $region85: #{cnn_backbone_forward.1} parent=5 // pred_check
      %p8152 = pneg %p8151
    $region86: #{cnn_backbone_forward.1} parent=5 // pred_check_branch
      %8154 = sbr.rel (%p8152) target = $region88
    $region87: #{cnn_backbone_forward.1} parent=5 // pred_region
      %s8155 = ssub.s32 %s21, 2
      // Predicated region
      $region89: #{cnn_backbone_forward.1} parent=87 // pred_check
        %p8156 = pneg %p370
      $region90: #{cnn_backbone_forward.1} parent=87 // pred_check_branch
        %8158 = sbr.rel (%p8156) target = $region92
      $region91: #{cnn_backbone_forward.1} parent=87 // pred_region
        %p8159 = scmp.lt.s32.totalorder %s27, 1
        %s8160 = scalar_select %p8159, %s27, 1
        %s8161 = smul.addr %s8160, 2
        %s8162 = smul.addr %s8161, 4
        %s8163 = scalar_lea.vmem %s15, %s8162
      $region92: #{cnn_backbone_forward.1} parent=87 // pred_fallthru
        _
    $region88: #{cnn_backbone_forward.1} parent=5 // pred_fallthru
      _
  $region6: #{cnn_backbone_forward.1} parent=0 // loop_footer
    %s25 = sadd.s32 1, %s21
  $region7: #{cnn_backbone_forward.1} parent=0 // loop_footer_branch
    %20 = sbr.rel target = $region3
  $region8: #{cnn_backbone_forward.1} parent=0 // loop_exit
    _

</llo_original>
